<compile_context>
chip_gen: v5e
topology: v5e:2x2
jax: 0.10.0
libtpu: 0.0.40
codegen_flags: <defaults>
</compile_context>

<pallas_src>
import functools

import jax
import jax.numpy as jnp
from jax import lax
from jax.experimental import pallas as pl
from jax.experimental.pallas import tpu as pltpu

MINM = -99999999.0


def _sigmoid(x):
    # exact sigmoid (no approx reciprocal inside the recurrence)
    return 1.0 / (1.0 + jnp.exp(-x))


def _vmem_limit_bytes(arrays, extra_bytes=0):
    total = sum(int(a.size) * a.dtype.itemsize for a in arrays) + int(extra_bytes)
    # 2x for double-buffer headroom; floor above default scoped limits,
    # ceiling below v7x physical VMEM (64 MiB).
    return int(min(60 * 1024 * 1024, max(32 * 1024 * 1024, 2 * total + (8 << 20))))


# ----------------------------------------------------------------------------
# Kernel 1: adjacency generator (fc1 / fc2 / sigmoid per candidate graph),
# cosine-similarity selection against the node-feature gram matrix, and
# SmoothSparseUnit -- all fused in one kernel invocation.
# ----------------------------------------------------------------------------
def adjacency_kernel(conv_ref, w1_ref, b1_ref, w2_ref, b2_ref, nf_ref, adj_ref):
    # conv_ref: (G, N, CL) conv1d bank   w1:(CL,E) b1:(1,E) w2:(E,N) b2:(1,N)
    # nf_ref: (N, feat) aggregated node features   adj_ref out: (N, N)
    nf = nf_ref[...]
    # gram matrix nf @ nf.T without a transposed copy
    m = lax.dot_general(nf, nf, (((1,), (1,)), ((), ())),
                        preferred_element_type=jnp.float32)
    norm_m = jnp.sqrt(jnp.sum(m * m))

    w1 = w1_ref[...]
    b1 = b1_ref[...]
    w2 = w2_ref[...]
    b2 = b2_ref[...]

    best_sim = jnp.asarray(MINM, jnp.float32)
    best_adj = jnp.zeros_like(adj_ref)
    for g in range(conv_ref.shape[0]):
        conv_g = conv_ref[g]                                    # (N, CL)
        h1 = jnp.maximum(
            jnp.dot(conv_g, w1, preferred_element_type=jnp.float32) + b1, 0.0)
        graph = _sigmoid(
            jnp.dot(h1, w2, preferred_element_type=jnp.float32) + b2)  # (N, N)
        num = jnp.sum(m * graph)
        norm_g = jnp.sqrt(jnp.sum(graph * graph))
        sim = num / jnp.maximum(norm_m * norm_g,
                                jnp.asarray(1e-20, jnp.float32))
        take = (sim > best_sim).astype(jnp.float32)             # scalar 0/1
        best_sim = take * sim + (1.0 - take) * best_sim
        best_adj = take * graph + (1.0 - take) * best_adj

    # TODO(synk): SmoothSparseUnit(x, 1, 0.1) is not defined in the provided
    # source; reconstructed as a smooth sparsifier x^2/(x^2+0.1) for x > 0.
    s2 = best_adj * best_adj
    adj_ref[...] = jnp.where(best_adj > 0.0, s2 / (s2 + 0.1),
                             jnp.zeros_like(best_adj))


def generate_adjacency(conv_in, w1, b1, w2, b2, nf):
    num_nodes = conv_in.shape[1]
    vmem = pl.BlockSpec(memory_space=pltpu.MemorySpace.VMEM)
    args = (conv_in, w1, b1, w2, b2, nf)
    return pl.pallas_call(
        adjacency_kernel,
        out_shape=jax.ShapeDtypeStruct((num_nodes, num_nodes), jnp.float32),
        in_specs=[vmem] * len(args),
        out_specs=vmem,
        compiler_params=pltpu.CompilerParams(
            vmem_limit_bytes=_vmem_limit_bytes(args)),
    )(*args)


# ----------------------------------------------------------------------------
# Kernel 2: fused seq2seq recurrence (encoder + decoder + projection).
# One invocation per batch chunk; hidden state / feedback live in VMEM
# scratch; time loop is in-kernel (no per-step grid bookkeeping).
# ----------------------------------------------------------------------------
def seq2seq_kernel(x_ref, adj_ref,
                   ewr_ref, ebr_ref, ewu_ref, ebu_ref, ewc_ref, ebc_ref,
                   dwr_ref, dbr_ref, dwu_ref, dbu_ref, dwc_ref, dbc_ref,
                   wp_ref, bp_ref,
                   out_ref, h_ref, fb_ref, *,
                   seq_len, horizon, num_layers, K, units, d_pad, d_out,
                   batch_pc, num_nodes):
    rows = batch_pc * num_nodes
    feat = d_pad + units

    # per-chunk init: zero hidden state, zero decoder go-symbol; the feedback
    # pad columns are zeroed once here (not re-materialized every step).
    h_ref[...] = jnp.zeros_like(h_ref)
    fb_ref[...] = jnp.zeros_like(fb_ref)

    # adjacency broadcast over the batch chunk ONCE; each diffusion step is a
    # batched (bpc,N,N) @ (bpc,N,F) matmul (no kron(I_B, adj)).
    adjb = jnp.broadcast_to(adj_ref[...], (batch_pc, num_nodes, num_nodes))
    dnums = (((2,), (1,)), ((0,), (0,)))     # contract nodes, batch is batch

    def cheb_cat(z2):
        # z2: (rows, feat) -> Chebyshev diffusion over nodes, orders
        # concatenated on the feature axis for one big gate matmul.
        zb = z2.reshape(batch_pc, num_nodes, feat)
        orders = [zb]
        if K >= 1:
            x0 = zb
            x1 = lax.dot_general(adjb, zb, dnums,
                                 preferred_element_type=jnp.float32)
            orders.append(x1)
            for _ in range(2, K + 1):
                x2 = 2.0 * lax.dot_general(adjb, x1, dnums,
                                           preferred_element_type=jnp.float32) - x0
                orders.append(x2)
                x0, x1 = x1, x2
        zcat = jnp.concatenate(orders, axis=-1)        # (bpc, N, (K+1)*feat)
        return zcat.reshape(rows, (K + 1) * feat)

    def gemm(a, w, b):
        # bf16 MXU matmul with f32 accumulate (weights stored in bf16)
        return jnp.dot(a.astype(jnp.bfloat16), w,
                       preferred_element_type=jnp.float32) + b

    def pad_cols(v):
        extra = d_pad - v.shape[-1]
        if extra == 0:
            return v
        return jnp.concatenate(
            [v, jnp.zeros((v.shape[0], extra), v.dtype)], axis=-1)

    def cell(x, h, wr, br, wu, bu, wc, bc):
        zg = cheb_cat(jnp.concatenate([x, h], axis=-1))
        # two matmuls sharing zg (no lane split of a fused 2U output)
        r = _sigmoid(gemm(zg, wr, br))
        u = _sigmoid(gemm(zg, wu, bu))
        zc = cheb_cat(jnp.concatenate([x, r * h], axis=-1))
        c = jnp.tanh(gemm(zc, wc, bc))
        return u * h + (1.0 - u) * c

    def run_stack(x0, wr_s, br_s, wu_s, bu_s, wc_s, bc_s):
        inp = x0
        top = None
        for l in range(num_layers):
            top = cell(inp, h_ref[l], wr_s[l], br_s[l], wu_s[l], bu_s[l],
                       wc_s[l], bc_s[l])
            h_ref[l] = top
            inp = pad_cols(top)
        return top

    # ---- encoder: in-kernel time loop over the VMEM-resident inputs ----
    @pl.loop(0, seq_len)
    def _encode(t):
        run_stack(x_ref[t], ewr_ref, ebr_ref, ewu_ref, ebu_ref,
                  ewc_ref, ebc_ref)

    # ---- decoder: static horizon loop, prediction feedback, projection ----
    # TODO(synk): curriculum-learning scheduled sampling (training-only path)
    # is not implemented; the decoder always feeds back its own prediction.
    for t in range(horizon):
        top = run_stack(fb_ref[...], dwr_ref, dbr_ref, dwu_ref, dbu_ref,
                        dwc_ref, dbc_ref)
        proj = (jnp.dot(top, wp_ref[...], preferred_element_type=jnp.float32)
                + bp_ref[...])
        out_ref[:, t * d_out:(t + 1) * d_out] = proj   # static lane offsets
        fb_ref[:, 0:d_out] = proj                      # feed prediction back


def run_seq2seq(x_enc, adj, enc, dec, wp, bp, *, batch, num_nodes, seq_len,
                horizon, num_layers, max_diffusion_step, units, d_pad, d_out,
                batch_chunks):
    bn = batch * num_nodes
    bpc = batch // batch_chunks
    rows_pc = bpc * num_nodes
    gin = (max_diffusion_step + 1) * (d_pad + units)

    kernel = functools.partial(
        seq2seq_kernel, seq_len=seq_len, horizon=horizon,
        num_layers=num_layers, K=max_diffusion_step, units=units,
        d_pad=d_pad, d_out=d_out, batch_pc=bpc, num_nodes=num_nodes)

    def const2(c):
        return (0, 0)

    def const3(c):
        return (0, 0, 0)

    w_spec = pl.BlockSpec((num_layers, gin, units), const3)
    b_spec = pl.BlockSpec((num_layers, 1, units), const3)

    in_specs = [
        # encoder inputs: blocked over the batch-chunk rows only
        pl.BlockSpec((seq_len, rows_pc, d_pad), lambda c: (0, c, 0)),
        # adjacency and all weights: constant index maps -> VMEM resident
        pl.BlockSpec((num_nodes, num_nodes), const2),
        w_spec, b_spec, w_spec, b_spec, w_spec, b_spec,     # encoder r/u/c
        w_spec, b_spec, w_spec, b_spec, w_spec, b_spec,     # decoder r/u/c
        pl.BlockSpec((units, d_out), const2),
        pl.BlockSpec((1, d_out), const2),
    ]
    out_specs = pl.BlockSpec((rows_pc, horizon * d_out), lambda c: (c, 0))

    args = (x_enc, adj,
            enc["wr"], enc["br"], enc["wu"], enc["bu"], enc["wc"], enc["bc"],
            dec["wr"], dec["br"], dec["wu"], dec["bu"], dec["wc"], dec["bc"],
            wp, bp)
    scratch_bytes = 4 * (num_layers * rows_pc * units + rows_pc * d_pad
                         + bn * horizon * d_out)

    return pl.pallas_call(
        kernel,
        out_shape=jax.ShapeDtypeStruct((bn, horizon * d_out), jnp.float32),
        grid=(batch_chunks,),
        in_specs=in_specs,
        out_specs=out_specs,
        scratch_shapes=[pltpu.VMEM((num_layers, rows_pc, units), jnp.float32),
                        pltpu.VMEM((rows_pc, d_pad), jnp.float32)],
        compiler_params=pltpu.CompilerParams(
            dimension_semantics=("parallel",),
            vmem_limit_bytes=_vmem_limit_bytes(args, scratch_bytes)),
    )(*args)


# ----------------------------------------------------------------------------
# Glue: Adjacency_generator.process() -> im2col of the conv1d input, and the
# node-feature aggregation (setup / wrapper-side XLA).
# ----------------------------------------------------------------------------
def build_im2col(node_feas_series, freq, kernel_size):
    total_t = node_feas_series.shape[0]
    segm = (total_t - 1) // freq
    delta = jnp.concatenate(
        [node_feas_series[:1],
         node_feas_series[1:] - node_feas_series[:-1]], axis=0)
    times = jnp.stack(
        [delta[i * freq + 1:(i + 1) * freq + 1] for i in range(segm)],
        axis=0)                                   # (segm, freq, N)
    ts = jnp.transpose(times, (2, 0, 1))          # (N, segm, freq)
    out_len = freq - kernel_size + 1
    cols = []
    for s in range(segm):
        for j in range(kernel_size):
            cols.append(ts[:, s, j:j + out_len])  # (N, out_len)
    return jnp.stack(cols, axis=0), segm          # (segm*kernel, N, out_len)


def nodes_feature_from_inputs(inputs, num_nodes):
    seq_len, batch, _ = inputs.shape
    nf = inputs.reshape(seq_len, batch, num_nodes, -1)
    nf = jnp.transpose(nf, (1, 2, 3, 0))
    nf = nf.reshape(batch, num_nodes, -1)
    return jnp.sum(nf, axis=0)                    # (N, input_dim*seq_len)


# ----------------------------------------------------------------------------
# Parameter init (deterministic, synthetic)
# ----------------------------------------------------------------------------
def init_dcgru_stack(key, num_layers, gin, units):
    kr, ku, kc = jax.random.split(key, 3)

    def w(k):
        return (jax.random.normal(k, (num_layers, gin, units),
                                  jnp.float32) * 0.1).astype(jnp.bfloat16)

    return dict(
        wr=w(kr), br=jnp.ones((num_layers, 1, units), jnp.float32),
        wu=w(ku), bu=jnp.ones((num_layers, 1, units), jnp.float32),
        wc=w(kc), bc=jnp.zeros((num_layers, 1, units), jnp.float32),
    )


def init_params(key, cfg, segm):
    num_nodes = cfg["num_nodes"]
    units = cfg["rnn_units"]
    k1 = cfg["max_diffusion_step"] + 1
    conv_len = cfg["freq"] - cfg["kernel_size"] + 1
    emb = cfg["embedding_size"]
    graphs = cfg["requires_graph"]
    d_pad = max(cfg["input_dim"], cfg["output_dim"], units)
    gin = k1 * (d_pad + units)

    keys = jax.random.split(key, 6)
    adjgen = dict(
        cw=jax.random.normal(keys[0], (graphs, segm * cfg["kernel_size"]),
                             jnp.float32) * 0.1,
        cb=jnp.zeros((graphs,), jnp.float32),
        w1=jax.random.normal(keys[1], (conv_len, emb), jnp.float32) * 0.1,
        b1=jnp.zeros((1, emb), jnp.float32),
        w2=jax.random.normal(keys[2], (emb, num_nodes), jnp.float32) * 0.1,
        b2=jnp.zeros((1, num_nodes), jnp.float32),
    )
    encoder = init_dcgru_stack(keys[3], cfg["num_rnn_layers"], gin, units)
    decoder = init_dcgru_stack(keys[4], cfg["num_rnn_layers"], gin, units)
    proj_w = jax.random.normal(keys[5], (units, cfg["output_dim"]),
                               jnp.float32) * 0.1
    proj_b = jnp.zeros((1, cfg["output_dim"]), jnp.float32)
    return dict(adjgen=adjgen, encoder=encoder, decoder=decoder,
                proj_w=proj_w, proj_b=proj_b)


# ----------------------------------------------------------------------------
# LSCGFModel.forward (inference path; curriculum learning is training-only)
# ----------------------------------------------------------------------------
def lscgf_forward(params, inputs, x4, cfg):
    num_nodes = cfg["num_nodes"]
    units = cfg["rnn_units"]
    kdiff = cfg["max_diffusion_step"]
    in_dim = cfg["input_dim"]
    out_dim = cfg["output_dim"]
    horizon = cfg["horizon"]
    num_layers = cfg["num_rnn_layers"]
    d_pad = max(in_dim, out_dim, units)
    seq_len, batch, _ = inputs.shape

    # Adjacency generation: the conv1d tap contraction is one small dense
    # einsum (no kron(conv_w, I_N)); the rest is fused in adjacency_kernel.
    ag = params["adjgen"]
    conv_in = jnp.einsum("gf,fnc->gnc", ag["cw"], x4) + ag["cb"][:, None, None]
    nf = nodes_feature_from_inputs(inputs, num_nodes)
    adj = generate_adjacency(conv_in, ag["w1"], ag["b1"], ag["w2"], ag["b2"], nf)

    # Encoder inputs: rows = (batch, node), features zero-padded to d_pad.
    x_enc = inputs.reshape(seq_len, batch * num_nodes, in_dim)
    if d_pad > in_dim:
        x_enc = jnp.pad(x_enc, ((0, 0), (0, 0), (0, d_pad - in_dim)))

    # Batch-chunk 'parallel' grid axis (uses v7x's second TensorCore);
    # fall back to a single chunk when the split is not tile-aligned.
    batch_chunks = 2
    if batch % batch_chunks or ((batch // batch_chunks) * num_nodes) % 8:
        batch_chunks = 1

    out = run_seq2seq(
        x_enc, adj, params["encoder"], params["decoder"],
        params["proj_w"], params["proj_b"],
        batch=batch, num_nodes=num_nodes, seq_len=seq_len, horizon=horizon,
        num_layers=num_layers, max_diffusion_step=kdiff, units=units,
        d_pad=d_pad, d_out=out_dim, batch_chunks=batch_chunks)

    # (B*N, horizon*d_out) -> (horizon, batch, num_nodes*d_out)
    out = out.reshape(batch, num_nodes, horizon, out_dim)
    out = jnp.transpose(out, (2, 0, 1, 3)).reshape(
        horizon, batch, num_nodes * out_dim)
    return out, adj


# ----------------------------------------------------------------------------
if __name__ == "__main__":
    cfg = dict(
        num_nodes=8, input_dim=2, output_dim=1, rnn_units=16,
        num_rnn_layers=2, max_diffusion_step=2,
        seq_len=8, horizon=4,
        embedding_size=16, kernel_size=3, freq=6, requires_graph=3,
    )
    batch = 2

    key = jax.random.PRNGKey(0)
    k_ts, k_in, k_par = jax.random.split(key, 3)

    # node_feas (constructor time series): (T, num_nodes)
    node_feas_series = jax.random.normal(k_ts, (25, cfg["num_nodes"]),
                                         jnp.float32)
    # forward inputs: (seq_len, batch, num_nodes * input_dim)
    inputs = jax.random.normal(
        k_in, (cfg["seq_len"], batch, cfg["num_nodes"] * cfg["input_dim"]),
        jnp.float32)

    x4, segm = build_im2col(node_feas_series, cfg["freq"], cfg["kernel_size"])
    params = init_params(k_par, cfg, segm)

    fwd = jax.jit(functools.partial(lscgf_forward, cfg=cfg))
    outputs, adj = fwd(params, inputs, x4)
    jax.block_until_ready((outputs, adj))

    assert outputs.shape == (cfg["horizon"], batch,
                             cfg["num_nodes"] * cfg["output_dim"])
    assert adj.shape == (cfg["num_nodes"], cfg["num_nodes"])
    print("KERNEL_OK")
</pallas_src>

<mosaic_0001>
module attributes {stable_mosaic.version = 11 : i64} {
  func.func @adjacency_kernel(%arg0: memref<3x8x4xf32, #tpu.memory_space<vmem>>, %arg1: memref<4x16xf32, #tpu.memory_space<vmem>>, %arg2: memref<1x16xf32, #tpu.memory_space<vmem>>, %arg3: memref<16x8xf32, #tpu.memory_space<vmem>>, %arg4: memref<1x8xf32, #tpu.memory_space<vmem>>, %arg5: memref<8x16xf32, #tpu.memory_space<vmem>>, %arg6: memref<8x8xf32, #tpu.memory_space<vmem>>) attributes {dimension_semantics = [], scalar_prefetch = 0 : i64, scratch_operands = 0 : i64, tpu.core_type = #tpu.core_type<tc>} {
    %c0 = arith.constant 0 : index
    %c0_0 = arith.constant 0 : index
    %0 = vector.load %arg5[%c0, %c0_0] : memref<8x16xf32, #tpu.memory_space<vmem>>, vector<8x16xf32>
    %cst = arith.constant dense<0.000000e+00> : vector<8x8xf32>
    %1 = tpu.matmul %0, %0, %cst {dimension_numbers = #tpu.dot_dimension_numbers<[1], [1], [0], [0], [0, 0, 1, 0], [], []>} : vector<8x16xf32>, vector<8x16xf32>, vector<8x8xf32> -> vector<8x8xf32>
    %2 = arith.mulf %1, %1 : vector<8x8xf32>
    %3 = vector.shape_cast %2 : vector<8x8xf32> to vector<1x8x8xf32>
    %cst_1 = arith.constant dense<0.000000e+00> : vector<1xf32>
    %4 = vector.multi_reduction <add>, %3, %cst_1 [1, 2] : vector<1x8x8xf32> to vector<1xf32>
    %5 = vector.shape_cast %4 : vector<1xf32> to vector<1x1x1xf32>
    %6 = vector.extract %5[0, 0, 0] : f32 from vector<1x1x1xf32>
    %7 = math.sqrt %6 : f32
    %c0_2 = arith.constant 0 : index
    %c0_3 = arith.constant 0 : index
    %8 = vector.load %arg1[%c0_2, %c0_3] : memref<4x16xf32, #tpu.memory_space<vmem>>, vector<4x16xf32>
    %c0_4 = arith.constant 0 : index
    %c0_5 = arith.constant 0 : index
    %9 = vector.load %arg2[%c0_4, %c0_5] : memref<1x16xf32, #tpu.memory_space<vmem>>, vector<1x16xf32>
    %c0_6 = arith.constant 0 : index
    %c0_7 = arith.constant 0 : index
    %10 = vector.load %arg3[%c0_6, %c0_7] : memref<16x8xf32, #tpu.memory_space<vmem>>, vector<16x8xf32>
    %c0_8 = arith.constant 0 : index
    %c0_9 = arith.constant 0 : index
    %11 = vector.load %arg4[%c0_8, %c0_9] : memref<1x8xf32, #tpu.memory_space<vmem>>, vector<1x8xf32>
    %cst_10 = arith.constant 0.000000e+00 : f32
    %12 = vector.broadcast %cst_10 : f32 to vector<8x8xf32>
    %c0_11 = arith.constant 0 : index
    %c0_12 = arith.constant 0 : index
    %c0_13 = arith.constant 0 : index
    %13 = vector.load %arg0[%c0_11, %c0_12, %c0_13] : memref<3x8x4xf32, #tpu.memory_space<vmem>>, vector<1x8x4xf32>
    %14 = vector.shape_cast %13 : vector<1x8x4xf32> to vector<8x4xf32>
    %cst_14 = arith.constant dense<0.000000e+00> : vector<8x16xf32>
    %15 = tpu.matmul %14, %8, %cst_14 {dimension_numbers = #tpu.dot_dimension_numbers<[1], [0], [0], [1], [0, 0, 1, 1], [], []>} : vector<8x4xf32>, vector<4x16xf32>, vector<8x16xf32> -> vector<8x16xf32>
    %16 = vector.broadcast %9 : vector<1x16xf32> to vector<8x16xf32>
    %17 = arith.addf %15, %16 : vector<8x16xf32>
    %cst_15 = arith.constant 0.000000e+00 : f32
    %18 = vector.broadcast %cst_15 : f32 to vector<8x16xf32>
    %19 = arith.maximumf %17, %18 : vector<8x16xf32>
    %cst_16 = arith.constant dense<0.000000e+00> : vector<8x8xf32>
    %20 = tpu.matmul %19, %10, %cst_16 {dimension_numbers = #tpu.dot_dimension_numbers<[1], [0], [0], [1], [0, 0, 1, 1], [], []>} : vector<8x16xf32>, vector<16x8xf32>, vector<8x8xf32> -> vector<8x8xf32>
    %21 = vector.broadcast %11 : vector<1x8xf32> to vector<8x8xf32>
    %22 = arith.addf %20, %21 : vector<8x8xf32>
    %cst_17 = arith.constant 0.000000e+00 : f32
    %23 = vector.broadcast %cst_17 : f32 to vector<8x8xf32>
    %24 = arith.subf %23, %22 : vector<8x8xf32>
    %25 = math.exp %24 : vector<8x8xf32>
    %cst_18 = arith.constant 1.000000e+00 : f32
    %26 = vector.broadcast %cst_18 : f32 to vector<8x8xf32>
    %27 = arith.addf %26, %25 : vector<8x8xf32>
    %cst_19 = arith.constant 1.000000e+00 : f32
    %28 = vector.broadcast %cst_19 : f32 to vector<8x8xf32>
    %29 = arith.divf %28, %27 : vector<8x8xf32>
    %30 = arith.mulf %1, %29 : vector<8x8xf32>
    %31 = vector.shape_cast %30 : vector<8x8xf32> to vector<1x8x8xf32>
    %cst_20 = arith.constant dense<0.000000e+00> : vector<1xf32>
    %32 = vector.multi_reduction <add>, %31, %cst_20 [1, 2] : vector<1x8x8xf32> to vector<1xf32>
    %33 = vector.shape_cast %32 : vector<1xf32> to vector<1x1x1xf32>
    %34 = vector.extract %33[0, 0, 0] : f32 from vector<1x1x1xf32>
    %35 = arith.mulf %29, %29 : vector<8x8xf32>
    %36 = vector.shape_cast %35 : vector<8x8xf32> to vector<1x8x8xf32>
    %cst_21 = arith.constant dense<0.000000e+00> : vector<1xf32>
    %37 = vector.multi_reduction <add>, %36, %cst_21 [1, 2] : vector<1x8x8xf32> to vector<1xf32>
    %38 = vector.shape_cast %37 : vector<1xf32> to vector<1x1x1xf32>
    %39 = vector.extract %38[0, 0, 0] : f32 from vector<1x1x1xf32>
    %40 = math.sqrt %39 : f32
    %41 = arith.mulf %7, %40 : f32
    %cst_22 = arith.constant 9.99999968E-21 : f32
    %42 = arith.maximumf %41, %cst_22 : f32
    %43 = arith.divf %34, %42 : f32
    %cst_23 = arith.constant -1.000000e+08 : f32
    %44 = arith.cmpf ogt, %43, %cst_23 : f32
    %45 = arith.extui %44 : i1 to i32
    %46 = arith.sitofp %45 : i32 to f32
    %47 = arith.mulf %46, %43 : f32
    %cst_24 = arith.constant 1.000000e+00 : f32
    %48 = arith.subf %cst_24, %46 : f32
    %cst_25 = arith.constant -1.000000e+08 : f32
    %49 = arith.mulf %48, %cst_25 : f32
    %50 = arith.addf %47, %49 : f32
    %51 = vector.broadcast %46 : f32 to vector<8x8xf32>
    %52 = arith.mulf %51, %29 : vector<8x8xf32>
    %cst_26 = arith.constant 1.000000e+00 : f32
    %53 = arith.subf %cst_26, %46 : f32
    %54 = vector.broadcast %53 : f32 to vector<8x8xf32>
    %55 = arith.mulf %54, %12 : vector<8x8xf32>
    %56 = arith.addf %52, %55 : vector<8x8xf32>
    %c1 = arith.constant 1 : index
    %c0_27 = arith.constant 0 : index
    %c0_28 = arith.constant 0 : index
    %57 = vector.load %arg0[%c1, %c0_27, %c0_28] : memref<3x8x4xf32, #tpu.memory_space<vmem>>, vector<1x8x4xf32>
    %58 = vector.shape_cast %57 : vector<1x8x4xf32> to vector<8x4xf32>
    %cst_29 = arith.constant dense<0.000000e+00> : vector<8x16xf32>
    %59 = tpu.matmul %58, %8, %cst_29 {dimension_numbers = #tpu.dot_dimension_numbers<[1], [0], [0], [1], [0, 0, 1, 1], [], []>} : vector<8x4xf32>, vector<4x16xf32>, vector<8x16xf32> -> vector<8x16xf32>
    %60 = vector.broadcast %9 : vector<1x16xf32> to vector<8x16xf32>
    %61 = arith.addf %59, %60 : vector<8x16xf32>
    %cst_30 = arith.constant 0.000000e+00 : f32
    %62 = vector.broadcast %cst_30 : f32 to vector<8x16xf32>
    %63 = arith.maximumf %61, %62 : vector<8x16xf32>
    %cst_31 = arith.constant dense<0.000000e+00> : vector<8x8xf32>
    %64 = tpu.matmul %63, %10, %cst_31 {dimension_numbers = #tpu.dot_dimension_numbers<[1], [0], [0], [1], [0, 0, 1, 1], [], []>} : vector<8x16xf32>, vector<16x8xf32>, vector<8x8xf32> -> vector<8x8xf32>
    %65 = vector.broadcast %11 : vector<1x8xf32> to vector<8x8xf32>
    %66 = arith.addf %64, %65 : vector<8x8xf32>
    %cst_32 = arith.constant 0.000000e+00 : f32
    %67 = vector.broadcast %cst_32 : f32 to vector<8x8xf32>
    %68 = arith.subf %67, %66 : vector<8x8xf32>
    %69 = math.exp %68 : vector<8x8xf32>
    %cst_33 = arith.constant 1.000000e+00 : f32
    %70 = vector.broadcast %cst_33 : f32 to vector<8x8xf32>
    %71 = arith.addf %70, %69 : vector<8x8xf32>
    %cst_34 = arith.constant 1.000000e+00 : f32
    %72 = vector.broadcast %cst_34 : f32 to vector<8x8xf32>
    %73 = arith.divf %72, %71 : vector<8x8xf32>
    %74 = arith.mulf %1, %73 : vector<8x8xf32>
    %75 = vector.shape_cast %74 : vector<8x8xf32> to vector<1x8x8xf32>
    %cst_35 = arith.constant dense<0.000000e+00> : vector<1xf32>
    %76 = vector.multi_reduction <add>, %75, %cst_35 [1, 2] : vector<1x8x8xf32> to vector<1xf32>
    %77 = vector.shape_cast %76 : vector<1xf32> to vector<1x1x1xf32>
    %78 = vector.extract %77[0, 0, 0] : f32 from vector<1x1x1xf32>
    %79 = arith.mulf %73, %73 : vector<8x8xf32>
    %80 = vector.shape_cast %79 : vector<8x8xf32> to vector<1x8x8xf32>
    %cst_36 = arith.constant dense<0.000000e+00> : vector<1xf32>
    %81 = vector.multi_reduction <add>, %80, %cst_36 [1, 2] : vector<1x8x8xf32> to vector<1xf32>
    %82 = vector.shape_cast %81 : vector<1xf32> to vector<1x1x1xf32>
    %83 = vector.extract %82[0, 0, 0] : f32 from vector<1x1x1xf32>
    %84 = math.sqrt %83 : f32
    %85 = arith.mulf %7, %84 : f32
    %cst_37 = arith.constant 9.99999968E-21 : f32
    %86 = arith.maximumf %85, %cst_37 : f32
    %87 = arith.divf %78, %86 : f32
    %88 = arith.cmpf ogt, %87, %50 : f32
    %89 = arith.extui %88 : i1 to i32
    %90 = arith.sitofp %89 : i32 to f32
    %91 = arith.mulf %90, %87 : f32
    %cst_38 = arith.constant 1.000000e+00 : f32
    %92 = arith.subf %cst_38, %90 : f32
    %93 = arith.mulf %92, %50 : f32
    %94 = arith.addf %91, %93 : f32
    %95 = vector.broadcast %90 : f32 to vector<8x8xf32>
    %96 = arith.mulf %95, %73 : vector<8x8xf32>
    %cst_39 = arith.constant 1.000000e+00 : f32
    %97 = arith.subf %cst_39, %90 : f32
    %98 = vector.broadcast %97 : f32 to vector<8x8xf32>
    %99 = arith.mulf %98, %56 : vector<8x8xf32>
    %100 = arith.addf %96, %99 : vector<8x8xf32>
    %c2 = arith.constant 2 : index
    %c0_40 = arith.constant 0 : index
    %c0_41 = arith.constant 0 : index
    %101 = vector.load %arg0[%c2, %c0_40, %c0_41] : memref<3x8x4xf32, #tpu.memory_space<vmem>>, vector<1x8x4xf32>
    %102 = vector.shape_cast %101 : vector<1x8x4xf32> to vector<8x4xf32>
    %cst_42 = arith.constant dense<0.000000e+00> : vector<8x16xf32>
    %103 = tpu.matmul %102, %8, %cst_42 {dimension_numbers = #tpu.dot_dimension_numbers<[1], [0], [0], [1], [0, 0, 1, 1], [], []>} : vector<8x4xf32>, vector<4x16xf32>, vector<8x16xf32> -> vector<8x16xf32>
    %104 = vector.broadcast %9 : vector<1x16xf32> to vector<8x16xf32>
    %105 = arith.addf %103, %104 : vector<8x16xf32>
    %cst_43 = arith.constant 0.000000e+00 : f32
    %106 = vector.broadcast %cst_43 : f32 to vector<8x16xf32>
    %107 = arith.maximumf %105, %106 : vector<8x16xf32>
    %cst_44 = arith.constant dense<0.000000e+00> : vector<8x8xf32>
    %108 = tpu.matmul %107, %10, %cst_44 {dimension_numbers = #tpu.dot_dimension_numbers<[1], [0], [0], [1], [0, 0, 1, 1], [], []>} : vector<8x16xf32>, vector<16x8xf32>, vector<8x8xf32> -> vector<8x8xf32>
    %109 = vector.broadcast %11 : vector<1x8xf32> to vector<8x8xf32>
    %110 = arith.addf %108, %109 : vector<8x8xf32>
    %cst_45 = arith.constant 0.000000e+00 : f32
    %111 = vector.broadcast %cst_45 : f32 to vector<8x8xf32>
    %112 = arith.subf %111, %110 : vector<8x8xf32>
    %113 = math.exp %112 : vector<8x8xf32>
    %cst_46 = arith.constant 1.000000e+00 : f32
    %114 = vector.broadcast %cst_46 : f32 to vector<8x8xf32>
    %115 = arith.addf %114, %113 : vector<8x8xf32>
    %cst_47 = arith.constant 1.000000e+00 : f32
    %116 = vector.broadcast %cst_47 : f32 to vector<8x8xf32>
    %117 = arith.divf %116, %115 : vector<8x8xf32>
    %118 = arith.mulf %1, %117 : vector<8x8xf32>
    %119 = vector.shape_cast %118 : vector<8x8xf32> to vector<1x8x8xf32>
    %cst_48 = arith.constant dense<0.000000e+00> : vector<1xf32>
    %120 = vector.multi_reduction <add>, %119, %cst_48 [1, 2] : vector<1x8x8xf32> to vector<1xf32>
    %121 = vector.shape_cast %120 : vector<1xf32> to vector<1x1x1xf32>
    %122 = vector.extract %121[0, 0, 0] : f32 from vector<1x1x1xf32>
    %123 = arith.mulf %117, %117 : vector<8x8xf32>
    %124 = vector.shape_cast %123 : vector<8x8xf32> to vector<1x8x8xf32>
    %cst_49 = arith.constant dense<0.000000e+00> : vector<1xf32>
    %125 = vector.multi_reduction <add>, %124, %cst_49 [1, 2] : vector<1x8x8xf32> to vector<1xf32>
    %126 = vector.shape_cast %125 : vector<1xf32> to vector<1x1x1xf32>
    %127 = vector.extract %126[0, 0, 0] : f32 from vector<1x1x1xf32>
    %128 = math.sqrt %127 : f32
    %129 = arith.mulf %7, %128 : f32
    %cst_50 = arith.constant 9.99999968E-21 : f32
    %130 = arith.maximumf %129, %cst_50 : f32
    %131 = arith.divf %122, %130 : f32
    %132 = arith.cmpf ogt, %131, %94 : f32
    %133 = arith.extui %132 : i1 to i32
    %134 = arith.sitofp %133 : i32 to f32
    %135 = vector.broadcast %134 : f32 to vector<8x8xf32>
    %136 = arith.mulf %135, %117 : vector<8x8xf32>
    %cst_51 = arith.constant 1.000000e+00 : f32
    %137 = arith.subf %cst_51, %134 : f32
    %138 = vector.broadcast %137 : f32 to vector<8x8xf32>
    %139 = arith.mulf %138, %100 : vector<8x8xf32>
    %140 = arith.addf %136, %139 : vector<8x8xf32>
    %141 = arith.mulf %140, %140 : vector<8x8xf32>
    %cst_52 = arith.constant 0.000000e+00 : f32
    %142 = vector.broadcast %cst_52 : f32 to vector<8x8xf32>
    %143 = arith.cmpf ogt, %140, %142 : vector<8x8xf32>
    %cst_53 = arith.constant 1.000000e-01 : f32
    %144 = vector.broadcast %cst_53 : f32 to vector<8x8xf32>
    %145 = arith.addf %141, %144 : vector<8x8xf32>
    %146 = arith.divf %141, %145 : vector<8x8xf32>
    %cst_54 = arith.constant 0.000000e+00 : f32
    %147 = vector.broadcast %cst_54 : f32 to vector<8x8xf32>
    %148 = arith.select %143, %146, %147 : vector<8x8xi1>, vector<8x8xf32>
    %c0_55 = arith.constant 0 : index
    %c0_56 = arith.constant 0 : index
    %149 = vector.load %arg6[%c0_55, %c0_56] : memref<8x8xf32, #tpu.memory_space<vmem>>, vector<8x8xf32>
    tpu.vector_store %arg6[%c0_55, %c0_56], %148 {strides = array<i32>} : memref<8x8xf32, #tpu.memory_space<vmem>>, vector<8x8xf32>,
    return
  }
}

module attributes {stable_mosaic.version = 11 : i64} {
  func.func @seq2seq_kernel(%arg0: i32, %arg1: memref<8x8x16xf32, #tpu.memory_space<vmem>>, %arg2: memref<8x8xf32, #tpu.memory_space<vmem>>, %arg3: memref<2x96x16xbf16, #tpu.memory_space<vmem>>, %arg4: memref<2x1x16xf32, #tpu.memory_space<vmem>>, %arg5: memref<2x96x16xbf16, #tpu.memory_space<vmem>>, %arg6: memref<2x1x16xf32, #tpu.memory_space<vmem>>, %arg7: memref<2x96x16xbf16, #tpu.memory_space<vmem>>, %arg8: memref<2x1x16xf32, #tpu.memory_space<vmem>>, %arg9: memref<2x96x16xbf16, #tpu.memory_space<vmem>>, %arg10: memref<2x1x16xf32, #tpu.memory_space<vmem>>, %arg11: memref<2x96x16xbf16, #tpu.memory_space<vmem>>, %arg12: memref<2x1x16xf32, #tpu.memory_space<vmem>>, %arg13: memref<2x96x16xbf16, #tpu.memory_space<vmem>>, %arg14: memref<2x1x16xf32, #tpu.memory_space<vmem>>, %arg15: memref<16x1xf32, #tpu.memory_space<vmem>>, %arg16: memref<1x1xf32, #tpu.memory_space<vmem>>, %arg17: memref<8x4xf32, #tpu.memory_space<vmem>>, %arg18: memref<2x8x16xf32, #tpu.memory_space<vmem>>, %arg19: memref<8x16xf32, #tpu.memory_space<vmem>>) attributes {dimension_semantics = [#tpu.dimension_semantics<parallel>], iteration_bounds = array<i64: 2>, scalar_prefetch = 0 : i64, scratch_operands = 2 : i64, tpu.core_type = #tpu.core_type<tc>, window_params = [{transform_indices = @transform_0, window_bounds = array<i64: 8, 8, 16>}, {pipeline_mode = #tpu.pipeline_mode<synchronous>, transform_indices = @transform_1, window_bounds = array<i64: 8, 8>}, {pipeline_mode = #tpu.pipeline_mode<synchronous>, transform_indices = @transform_2, window_bounds = array<i64: 2, 96, 16>}, {pipeline_mode = #tpu.pipeline_mode<synchronous>, transform_indices = @transform_3, window_bounds = array<i64: 2, 1, 16>}, {pipeline_mode = #tpu.pipeline_mode<synchronous>, transform_indices = @transform_4, window_bounds = array<i64: 2, 96, 16>}, {pipeline_mode = #tpu.pipeline_mode<synchronous>, transform_indices = @transform_5, window_bounds = array<i64: 2, 1, 16>}, {pipeline_mode = #tpu.pipeline_mode<synchronous>, transform_indices = @transform_6, window_bounds = array<i64: 2, 96, 16>}, {pipeline_mode = #tpu.pipeline_mode<synchronous>, transform_indices = @transform_7, window_bounds = array<i64: 2, 1, 16>}, {pipeline_mode = #tpu.pipeline_mode<synchronous>, transform_indices = @transform_8, window_bounds = array<i64: 2, 96, 16>}, {pipeline_mode = #tpu.pipeline_mode<synchronous>, transform_indices = @transform_9, window_bounds = array<i64: 2, 1, 16>}, {pipeline_mode = #tpu.pipeline_mode<synchronous>, transform_indices = @transform_10, window_bounds = array<i64: 2, 96, 16>}, {pipeline_mode = #tpu.pipeline_mode<synchronous>, transform_indices = @transform_11, window_bounds = array<i64: 2, 1, 16>}, {pipeline_mode = #tpu.pipeline_mode<synchronous>, transform_indices = @transform_12, window_bounds = array<i64: 2, 96, 16>}, {pipeline_mode = #tpu.pipeline_mode<synchronous>, transform_indices = @transform_13, window_bounds = array<i64: 2, 1, 16>}, {pipeline_mode = #tpu.pipeline_mode<synchronous>, transform_indices = @transform_14, window_bounds = array<i64: 16, 1>}, {pipeline_mode = #tpu.pipeline_mode<synchronous>, transform_indices = @transform_15, window_bounds = array<i64: 1, 1>}, {transform_indices = @transform_16, window_bounds = array<i64: 8, 4>}]} {
    %cst = arith.constant 0.000000e+00 : f32
    %0 = vector.broadcast %cst : f32 to vector<2x8x16xf32>
    %c0 = arith.constant 0 : index
    %c0_0 = arith.constant 0 : index
    %c0_1 = arith.constant 0 : index
    %1 = vector.load %arg18[%c0, %c0_0, %c0_1] : memref<2x8x16xf32, #tpu.memory_space<vmem>>, vector<2x8x16xf32>
    tpu.vector_store %arg18[%c0, %c0_0, %c0_1], %0 {strides = array<i32>} : memref<2x8x16xf32, #tpu.memory_space<vmem>>, vector<2x8x16xf32>,
    %cst_2 = arith.constant 0.000000e+00 : f32
    %2 = vector.broadcast %cst_2 : f32 to vector<8x16xf32>
    %c0_3 = arith.constant 0 : index
    %c0_4 = arith.constant 0 : index
    %3 = vector.load %arg19[%c0_3, %c0_4] : memref<8x16xf32, #tpu.memory_space<vmem>>, vector<8x16xf32>
    tpu.vector_store %arg19[%c0_3, %c0_4], %2 {strides = array<i32>} : memref<8x16xf32, #tpu.memory_space<vmem>>, vector<8x16xf32>,
    %c0_5 = arith.constant 0 : index
    %c0_6 = arith.constant 0 : index
    %4 = vector.load %arg2[%c0_5, %c0_6] : memref<8x8xf32, #tpu.memory_space<vmem>>, vector<8x8xf32>
    %5 = vector.shape_cast %4 : vector<8x8xf32> to vector<1x8x8xf32>
    %c0_i32 = arith.constant 0 : i32
    %c8_i32 = arith.constant 8 : i32
    %6 = arith.addi %c0_i32, %c8_i32 : i32
    %c1_i32 = arith.constant 1 : i32
    scf.for %arg20 = %c0_i32 to %6 step %c1_i32  : i32 {
      %c1_i32_369 = arith.constant 1 : i32
      %583 = arith.muli %arg20, %c1_i32_369 : i32
      %c0_i32_370 = arith.constant 0 : i32
      %584 = arith.addi %c0_i32_370, %583 : i32
      %585 = arith.index_cast %584 : i32 to index
      %c0_371 = arith.constant 0 : index
      %c0_372 = arith.constant 0 : index
      %586 = vector.load %arg1[%585, %c0_371, %c0_372] : memref<8x8x16xf32, #tpu.memory_space<vmem>>, vector<1x8x16xf32>
      %587 = vector.shape_cast %586 : vector<1x8x16xf32> to vector<8x16xf32>
      %c0_373 = arith.constant 0 : index
      %c0_374 = arith.constant 0 : index
      %c0_375 = arith.constant 0 : index
      %588 = vector.load %arg18[%c0_373, %c0_374, %c0_375] : memref<2x8x16xf32, #tpu.memory_space<vmem>>, vector<1x8x16xf32>
      %589 = vector.shape_cast %588 : vector<1x8x16xf32> to vector<8x16xf32>
      %c0_376 = arith.constant 0 : index
      %c0_377 = arith.constant 0 : index
      %c0_378 = arith.constant 0 : index
      %590 = vector.load %arg3[%c0_376, %c0_377, %c0_378] : memref<2x96x16xbf16, #tpu.memory_space<vmem>>, vector<1x96x16xbf16>
      %591 = vector.shape_cast %590 : vector<1x96x16xbf16> to vector<96x16xbf16>
      %c0_379 = arith.constant 0 : index
      %c0_380 = arith.constant 0 : index
      %c0_381 = arith.constant 0 : index
      %592 = vector.load %arg4[%c0_379, %c0_380, %c0_381] : memref<2x1x16xf32, #tpu.memory_space<vmem>>, vector<1x1x16xf32>
      %593 = vector.shape_cast %592 : vector<1x1x16xf32> to vector<1x16xf32>
      %c0_382 = arith.constant 0 : index
      %c0_383 = arith.constant 0 : index
      %c0_384 = arith.constant 0 : index
      %594 = vector.load %arg5[%c0_382, %c0_383, %c0_384] : memref<2x96x16xbf16, #tpu.memory_space<vmem>>, vector<1x96x16xbf16>
      %595 = vector.shape_cast %594 : vector<1x96x16xbf16> to vector<96x16xbf16>
      %c0_385 = arith.constant 0 : index
      %c0_386 = arith.constant 0 : index
      %c0_387 = arith.constant 0 : index
      %596 = vector.load %arg6[%c0_385, %c0_386, %c0_387] : memref<2x1x16xf32, #tpu.memory_space<vmem>>, vector<1x1x16xf32>
      %597 = vector.shape_cast %596 : vector<1x1x16xf32> to vector<1x16xf32>
      %c0_388 = arith.constant 0 : index
      %c0_389 = arith.constant 0 : index
      %c0_390 = arith.constant 0 : index
      %598 = vector.load %arg7[%c0_388, %c0_389, %c0_390] : memref<2x96x16xbf16, #tpu.memory_space<vmem>>, vector<1x96x16xbf16>
      %599 = vector.shape_cast %598 : vector<1x96x16xbf16> to vector<96x16xbf16>
      %c0_391 = arith.constant 0 : index
      %c0_392 = arith.constant 0 : index
      %c0_393 = arith.constant 0 : index
      %600 = vector.load %arg8[%c0_391, %c0_392, %c0_393] : memref<2x1x16xf32, #tpu.memory_space<vmem>>, vector<1x1x16xf32>
      %601 = vector.shape_cast %600 : vector<1x1x16xf32> to vector<1x16xf32>
      %602 = tpu.concatenate %587, %589 in 1 : vector<8x16xf32>, vector<8x16xf32> -> vector<8x32xf32>
      %603 = vector.shape_cast %602 : vector<8x32xf32> to vector<1x8x32xf32>
      %cst_394 = arith.constant dense<0.000000e+00> : vector<1x8x32xf32>
      %604 = tpu.matmul %5, %603, %cst_394 {dimension_numbers = #tpu.dot_dimension_numbers<[2], [1], [1], [2], [0, 0, 0, 1, 1, 2], [0], [0]>} : vector<1x8x8xf32>, vector<1x8x32xf32>, vector<1x8x32xf32> -> vector<1x8x32xf32>
      %cst_395 = arith.constant dense<0.000000e+00> : vector<1x8x32xf32>
      %605 = tpu.matmul %5, %604, %cst_395 {dimension_numbers = #tpu.dot_dimension_numbers<[2], [1], [1], [2], [0, 0, 0, 1, 1, 2], [0], [0]>} : vector<1x8x8xf32>, vector<1x8x32xf32>, vector<1x8x32xf32> -> vector<1x8x32xf32>
      %cst_396 = arith.constant 2.000000e+00 : f32
      %606 = vector.broadcast %cst_396 : f32 to vector<1x8x32xf32>
      %607 = arith.mulf %606, %605 : vector<1x8x32xf32>
      %608 = arith.subf %607, %603 : vector<1x8x32xf32>
      %609 = tpu.concatenate %603, %604, %608 in 2 : vector<1x8x32xf32>, vector<1x8x32xf32>, vector<1x8x32xf32> -> vector<1x8x96xf32>
      %610 = vector.shape_cast %609 : vector<1x8x96xf32> to vector<8x96xf32>
      %611 = arith.truncf %610 : vector<8x96xf32> to vector<8x96xbf16>
      %cst_397 = arith.constant dense<0.000000e+00> : vector<8x16xf32>
      %612 = tpu.matmul %611, %591, %cst_397 {dimension_numbers = #tpu.dot_dimension_numbers<[1], [0], [0], [1], [0, 0, 1, 1], [], []>} : vector<8x96xbf16>, vector<96x16xbf16>, vector<8x16xf32> -> vector<8x16xf32>
      %613 = vector.broadcast %593 : vector<1x16xf32> to vector<8x16xf32>
      %614 = arith.addf %612, %613 : vector<8x16xf32>
      %cst_398 = arith.constant 0.000000e+00 : f32
      %615 = vector.broadcast %cst_398 : f32 to vector<8x16xf32>
      %616 = arith.subf %615, %614 : vector<8x16xf32>
      %617 = math.exp %616 : vector<8x16xf32>
      %cst_399 = arith.constant 1.000000e+00 : f32
      %618 = vector.broadcast %cst_399 : f32 to vector<8x16xf32>
      %619 = arith.addf %618, %617 : vector<8x16xf32>
      %cst_400 = arith.constant 1.000000e+00 : f32
      %620 = vector.broadcast %cst_400 : f32 to vector<8x16xf32>
      %621 = arith.divf %620, %619 : vector<8x16xf32>
      %622 = arith.truncf %610 : vector<8x96xf32> to vector<8x96xbf16>
      %cst_401 = arith.constant dense<0.000000e+00> : vector<8x16xf32>
      %623 = tpu.matmul %622, %595, %cst_401 {dimension_numbers = #tpu.dot_dimension_numbers<[1], [0], [0], [1], [0, 0, 1, 1], [], []>} : vector<8x96xbf16>, vector<96x16xbf16>, vector<8x16xf32> -> vector<8x16xf32>
      %624 = vector.broadcast %597 : vector<1x16xf32> to vector<8x16xf32>
      %625 = arith.addf %623, %624 : vector<8x16xf32>
      %cst_402 = arith.constant 0.000000e+00 : f32
      %626 = vector.broadcast %cst_402 : f32 to vector<8x16xf32>
      %627 = arith.subf %626, %625 : vector<8x16xf32>
      %628 = math.exp %627 : vector<8x16xf32>
      %cst_403 = arith.constant 1.000000e+00 : f32
      %629 = vector.broadcast %cst_403 : f32 to vector<8x16xf32>
      %630 = arith.addf %629, %628 : vector<8x16xf32>
      %cst_404 = arith.constant 1.000000e+00 : f32
      %631 = vector.broadcast %cst_404 : f32 to vector<8x16xf32>
      %632 = arith.divf %631, %630 : vector<8x16xf32>
      %633 = arith.mulf %621, %589 : vector<8x16xf32>
      %634 = tpu.concatenate %587, %633 in 1 : vector<8x16xf32>, vector<8x16xf32> -> vector<8x32xf32>
      %635 = vector.shape_cast %634 : vector<8x32xf32> to vector<1x8x32xf32>
      %cst_405 = arith.constant dense<0.000000e+00> : vector<1x8x32xf32>
      %636 = tpu.matmul %5, %635, %cst_405 {dimension_numbers = #tpu.dot_dimension_numbers<[2], [1], [1], [2], [0, 0, 0, 1, 1, 2], [0], [0]>} : vector<1x8x8xf32>, vector<1x8x32xf32>, vector<1x8x32xf32> -> vector<1x8x32xf32>
      %cst_406 = arith.constant dense<0.000000e+00> : vector<1x8x32xf32>
      %637 = tpu.matmul %5, %636, %cst_406 {dimension_numbers = #tpu.dot_dimension_numbers<[2], [1], [1], [2], [0, 0, 0, 1, 1, 2], [0], [0]>} : vector<1x8x8xf32>, vector<1x8x32xf32>, vector<1x8x32xf32> -> vector<1x8x32xf32>
      %cst_407 = arith.constant 2.000000e+00 : f32
      %638 = vector.broadcast %cst_407 : f32 to vector<1x8x32xf32>
      %639 = arith.mulf %638, %637 : vector<1x8x32xf32>
      %640 = arith.subf %639, %635 : vector<1x8x32xf32>
      %641 = tpu.concatenate %635, %636, %640 in 2 : vector<1x8x32xf32>, vector<1x8x32xf32>, vector<1x8x32xf32> -> vector<1x8x96xf32>
      %642 = vector.shape_cast %641 : vector<1x8x96xf32> to vector<8x96xf32>
      %643 = arith.truncf %642 : vector<8x96xf32> to vector<8x96xbf16>
      %cst_408 = arith.constant dense<0.000000e+00> : vector<8x16xf32>
      %644 = tpu.matmul %643, %599, %cst_408 {dimension_numbers = #tpu.dot_dimension_numbers<[1], [0], [0], [1], [0, 0, 1, 1], [], []>} : vector<8x96xbf16>, vector<96x16xbf16>, vector<8x16xf32> -> vector<8x16xf32>
      %645 = vector.broadcast %601 : vector<1x16xf32> to vector<8x16xf32>
      %646 = arith.addf %644, %645 : vector<8x16xf32>
      %647 = math.tanh %646 : vector<8x16xf32>
      %648 = arith.mulf %632, %589 : vector<8x16xf32>
      %cst_409 = arith.constant 1.000000e+00 : f32
      %649 = vector.broadcast %cst_409 : f32 to vector<8x16xf32>
      %650 = arith.subf %649, %632 : vector<8x16xf32>
      %651 = arith.mulf %650, %647 : vector<8x16xf32>
      %652 = arith.addf %648, %651 : vector<8x16xf32>
      %c0_410 = arith.constant 0 : index
      %c0_411 = arith.constant 0 : index
      %c0_412 = arith.constant 0 : index
      %653 = vector.load %arg18[%c0_410, %c0_411, %c0_412] : memref<2x8x16xf32, #tpu.memory_space<vmem>>, vector<1x8x16xf32>
      %654 = vector.shape_cast %653 : vector<1x8x16xf32> to vector<8x16xf32>
      %655 = vector.shape_cast %652 : vector<8x16xf32> to vector<1x8x16xf32>
      tpu.vector_store %arg18[%c0_410, %c0_411, %c0_412], %655 {strides = array<i32>} : memref<2x8x16xf32, #tpu.memory_space<vmem>>, vector<1x8x16xf32>,
      %c1_413 = arith.constant 1 : index
      %c0_414 = arith.constant 0 : index
      %c0_415 = arith.constant 0 : index
      %656 = vector.load %arg18[%c1_413, %c0_414, %c0_415] : memref<2x8x16xf32, #tpu.memory_space<vmem>>, vector<1x8x16xf32>
      %657 = vector.shape_cast %656 : vector<1x8x16xf32> to vector<8x16xf32>
      %c1_416 = arith.constant 1 : index
      %c0_417 = arith.constant 0 : index
      %c0_418 = arith.constant 0 : index
      %658 = vector.load %arg3[%c1_416, %c0_417, %c0_418] : memref<2x96x16xbf16, #tpu.memory_space<vmem>>, vector<1x96x16xbf16>
      %659 = vector.shape_cast %658 : vector<1x96x16xbf16> to vector<96x16xbf16>
      %c1_419 = arith.constant 1 : index
      %c0_420 = arith.constant 0 : index
      %c0_421 = arith.constant 0 : index
      %660 = vector.load %arg4[%c1_419, %c0_420, %c0_421] : memref<2x1x16xf32, #tpu.memory_space<vmem>>, vector<1x1x16xf32>
      %661 = vector.shape_cast %660 : vector<1x1x16xf32> to vector<1x16xf32>
      %c1_422 = arith.constant 1 : index
      %c0_423 = arith.constant 0 : index
      %c0_424 = arith.constant 0 : index
      %662 = vector.load %arg5[%c1_422, %c0_423, %c0_424] : memref<2x96x16xbf16, #tpu.memory_space<vmem>>, vector<1x96x16xbf16>
      %663 = vector.shape_cast %662 : vector<1x96x16xbf16> to vector<96x16xbf16>
      %c1_425 = arith.constant 1 : index
      %c0_426 = arith.constant 0 : index
      %c0_427 = arith.constant 0 : index
      %664 = vector.load %arg6[%c1_425, %c0_426, %c0_427] : memref<2x1x16xf32, #tpu.memory_space<vmem>>, vector<1x1x16xf32>
      %665 = vector.shape_cast %664 : vector<1x1x16xf32> to vector<1x16xf32>
      %c1_428 = arith.constant 1 : index
      %c0_429 = arith.constant 0 : index
      %c0_430 = arith.constant 0 : index
      %666 = vector.load %arg7[%c1_428, %c0_429, %c0_430] : memref<2x96x16xbf16, #tpu.memory_space<vmem>>, vector<1x96x16xbf16>
      %667 = vector.shape_cast %666 : vector<1x96x16xbf16> to vector<96x16xbf16>
      %c1_431 = arith.constant 1 : index
      %c0_432 = arith.constant 0 : index
      %c0_433 = arith.constant 0 : index
      %668 = vector.load %arg8[%c1_431, %c0_432, %c0_433] : memref<2x1x16xf32, #tpu.memory_space<vmem>>, vector<1x1x16xf32>
      %669 = vector.shape_cast %668 : vector<1x1x16xf32> to vector<1x16xf32>
      %670 = tpu.concatenate %652, %657 in 1 : vector<8x16xf32>, vector<8x16xf32> -> vector<8x32xf32>
      %671 = vector.shape_cast %670 : vector<8x32xf32> to vector<1x8x32xf32>
      %cst_434 = arith.constant dense<0.000000e+00> : vector<1x8x32xf32>
      %672 = tpu.matmul %5, %671, %cst_434 {dimension_numbers = #tpu.dot_dimension_numbers<[2], [1], [1], [2], [0, 0, 0, 1, 1, 2], [0], [0]>} : vector<1x8x8xf32>, vector<1x8x32xf32>, vector<1x8x32xf32> -> vector<1x8x32xf32>
      %cst_435 = arith.constant dense<0.000000e+00> : vector<1x8x32xf32>
      %673 = tpu.matmul %5, %672, %cst_435 {dimension_numbers = #tpu.dot_dimension_numbers<[2], [1], [1], [2], [0, 0, 0, 1, 1, 2], [0], [0]>} : vector<1x8x8xf32>, vector<1x8x32xf32>, vector<1x8x32xf32> -> vector<1x8x32xf32>
      %cst_436 = arith.constant 2.000000e+00 : f32
      %674 = vector.broadcast %cst_436 : f32 to vector<1x8x32xf32>
      %675 = arith.mulf %674, %673 : vector<1x8x32xf32>
      %676 = arith.subf %675, %671 : vector<1x8x32xf32>
      %677 = tpu.concatenate %671, %672, %676 in 2 : vector<1x8x32xf32>, vector<1x8x32xf32>, vector<1x8x32xf32> -> vector<1x8x96xf32>
      %678 = vector.shape_cast %677 : vector<1x8x96xf32> to vector<8x96xf32>
      %679 = arith.truncf %678 : vector<8x96xf32> to vector<8x96xbf16>
      %cst_437 = arith.constant dense<0.000000e+00> : vector<8x16xf32>
      %680 = tpu.matmul %679, %659, %cst_437 {dimension_numbers = #tpu.dot_dimension_numbers<[1], [0], [0], [1], [0, 0, 1, 1], [], []>} : vector<8x96xbf16>, vector<96x16xbf16>, vector<8x16xf32> -> vector<8x16xf32>
      %681 = vector.broadcast %661 : vector<1x16xf32> to vector<8x16xf32>
      %682 = arith.addf %680, %681 : vector<8x16xf32>
      %cst_438 = arith.constant 0.000000e+00 : f32
      %683 = vector.broadcast %cst_438 : f32 to vector<8x16xf32>
      %684 = arith.subf %683, %682 : vector<8x16xf32>
      %685 = math.exp %684 : vector<8x16xf32>
      %cst_439 = arith.constant 1.000000e+00 : f32
      %686 = vector.broadcast %cst_439 : f32 to vector<8x16xf32>
      %687 = arith.addf %686, %685 : vector<8x16xf32>
      %cst_440 = arith.constant 1.000000e+00 : f32
      %688 = vector.broadcast %cst_440 : f32 to vector<8x16xf32>
      %689 = arith.divf %688, %687 : vector<8x16xf32>
      %690 = arith.truncf %678 : vector<8x96xf32> to vector<8x96xbf16>
      %cst_441 = arith.constant dense<0.000000e+00> : vector<8x16xf32>
      %691 = tpu.matmul %690, %663, %cst_441 {dimension_numbers = #tpu.dot_dimension_numbers<[1], [0], [0], [1], [0, 0, 1, 1], [], []>} : vector<8x96xbf16>, vector<96x16xbf16>, vector<8x16xf32> -> vector<8x16xf32>
      %692 = vector.broadcast %665 : vector<1x16xf32> to vector<8x16xf32>
      %693 = arith.addf %691, %692 : vector<8x16xf32>
      %cst_442 = arith.constant 0.000000e+00 : f32
      %694 = vector.broadcast %cst_442 : f32 to vector<8x16xf32>
      %695 = arith.subf %694, %693 : vector<8x16xf32>
      %696 = math.exp %695 : vector<8x16xf32>
      %cst_443 = arith.constant 1.000000e+00 : f32
      %697 = vector.broadcast %cst_443 : f32 to vector<8x16xf32>
      %698 = arith.addf %697, %696 : vector<8x16xf32>
      %cst_444 = arith.constant 1.000000e+00 : f32
      %699 = vector.broadcast %cst_444 : f32 to vector<8x16xf32>
      %700 = arith.divf %699, %698 : vector<8x16xf32>
      %701 = arith.mulf %689, %657 : vector<8x16xf32>
      %702 = tpu.concatenate %652, %701 in 1 : vector<8x16xf32>, vector<8x16xf32> -> vector<8x32xf32>
      %703 = vector.shape_cast %702 : vector<8x32xf32> to vector<1x8x32xf32>
      %cst_445 = arith.constant dense<0.000000e+00> : vector<1x8x32xf32>
      %704 = tpu.matmul %5, %703, %cst_445 {dimension_numbers = #tpu.dot_dimension_numbers<[2], [1], [1], [2], [0, 0, 0, 1, 1, 2], [0], [0]>} : vector<1x8x8xf32>, vector<1x8x32xf32>, vector<1x8x32xf32> -> vector<1x8x32xf32>
      %cst_446 = arith.constant dense<0.000000e+00> : vector<1x8x32xf32>
      %705 = tpu.matmul %5, %704, %cst_446 {dimension_numbers = #tpu.dot_dimension_numbers<[2], [1], [1], [2], [0, 0, 0, 1, 1, 2], [0], [0]>} : vector<1x8x8xf32>, vector<1x8x32xf32>, vector<1x8x32xf32> -> vector<1x8x32xf32>
      %cst_447 = arith.constant 2.000000e+00 : f32
      %706 = vector.broadcast %cst_447 : f32 to vector<1x8x32xf32>
      %707 = arith.mulf %706, %705 : vector<1x8x32xf32>
      %708 = arith.subf %707, %703 : vector<1x8x32xf32>
      %709 = tpu.concatenate %703, %704, %708 in 2 : vector<1x8x32xf32>, vector<1x8x32xf32>, vector<1x8x32xf32> -> vector<1x8x96xf32>
      %710 = vector.shape_cast %709 : vector<1x8x96xf32> to vector<8x96xf32>
      %711 = arith.truncf %710 : vector<8x96xf32> to vector<8x96xbf16>
      %cst_448 = arith.constant dense<0.000000e+00> : vector<8x16xf32>
      %712 = tpu.matmul %711, %667, %cst_448 {dimension_numbers = #tpu.dot_dimension_numbers<[1], [0], [0], [1], [0, 0, 1, 1], [], []>} : vector<8x96xbf16>, vector<96x16xbf16>, vector<8x16xf32> -> vector<8x16xf32>
      %713 = vector.broadcast %669 : vector<1x16xf32> to vector<8x16xf32>
      %714 = arith.addf %712, %713 : vector<8x16xf32>
      %715 = math.tanh %714 : vector<8x16xf32>
      %716 = arith.mulf %700, %657 : vector<8x16xf32>
      %cst_449 = arith.constant 1.000000e+00 : f32
      %717 = vector.broadcast %cst_449 : f32 to vector<8x16xf32>
      %718 = arith.subf %717, %700 : vector<8x16xf32>
      %719 = arith.mulf %718, %715 : vector<8x16xf32>
      %720 = arith.addf %716, %719 : vector<8x16xf32>
      %c1_450 = arith.constant 1 : index
      %c0_451 = arith.constant 0 : index
      %c0_452 = arith.constant 0 : index
      %721 = vector.load %arg18[%c1_450, %c0_451, %c0_452] : memref<2x8x16xf32, #tpu.memory_space<vmem>>, vector<1x8x16xf32>
      %722 = vector.shape_cast %721 : vector<1x8x16xf32> to vector<8x16xf32>
      %723 = vector.shape_cast %720 : vector<8x16xf32> to vector<1x8x16xf32>
      tpu.vector_store %arg18[%c1_450, %c0_451, %c0_452], %723 {strides = array<i32>} : memref<2x8x16xf32, #tpu.memory_space<vmem>>, vector<1x8x16xf32>,
    }
    %c8_i32_7 = arith.constant 8 : i32
    %c0_8 = arith.constant 0 : index
    %c0_9 = arith.constant 0 : index
    %7 = vector.load %arg19[%c0_8, %c0_9] : memref<8x16xf32, #tpu.memory_space<vmem>>, vector<8x16xf32>
    %c0_10 = arith.constant 0 : index
    %c0_11 = arith.constant 0 : index
    %c0_12 = arith.constant 0 : index
    %8 = vector.load %arg18[%c0_10, %c0_11, %c0_12] : memref<2x8x16xf32, #tpu.memory_space<vmem>>, vector<1x8x16xf32>
    %9 = vector.shape_cast %8 : vector<1x8x16xf32> to vector<8x16xf32>
    %c0_13 = arith.constant 0 : index
    %c0_14 = arith.constant 0 : index
    %c0_15 = arith.constant 0 : index
    %10 = vector.load %arg9[%c0_13, %c0_14, %c0_15] : memref<2x96x16xbf16, #tpu.memory_space<vmem>>, vector<1x96x16xbf16>
    %11 = vector.shape_cast %10 : vector<1x96x16xbf16> to vector<96x16xbf16>
    %c0_16 = arith.constant 0 : index
    %c0_17 = arith.constant 0 : index
    %c0_18 = arith.constant 0 : index
    %12 = vector.load %arg10[%c0_16, %c0_17, %c0_18] : memref<2x1x16xf32, #tpu.memory_space<vmem>>, vector<1x1x16xf32>
    %13 = vector.shape_cast %12 : vector<1x1x16xf32> to vector<1x16xf32>
    %c0_19 = arith.constant 0 : index
    %c0_20 = arith.constant 0 : index
    %c0_21 = arith.constant 0 : index
    %14 = vector.load %arg11[%c0_19, %c0_20, %c0_21] : memref<2x96x16xbf16, #tpu.memory_space<vmem>>, vector<1x96x16xbf16>
    %15 = vector.shape_cast %14 : vector<1x96x16xbf16> to vector<96x16xbf16>
    %c0_22 = arith.constant 0 : index
    %c0_23 = arith.constant 0 : index
    %c0_24 = arith.constant 0 : index
    %16 = vector.load %arg12[%c0_22, %c0_23, %c0_24] : memref<2x1x16xf32, #tpu.memory_space<vmem>>, vector<1x1x16xf32>
    %17 = vector.shape_cast %16 : vector<1x1x16xf32> to vector<1x16xf32>
    %c0_25 = arith.constant 0 : index
    %c0_26 = arith.constant 0 : index
    %c0_27 = arith.constant 0 : index
    %18 = vector.load %arg13[%c0_25, %c0_26, %c0_27] : memref<2x96x16xbf16, #tpu.memory_space<vmem>>, vector<1x96x16xbf16>
    %19 = vector.shape_cast %18 : vector<1x96x16xbf16> to vector<96x16xbf16>
    %c0_28 = arith.constant 0 : index
    %c0_29 = arith.constant 0 : index
    %c0_30 = arith.constant 0 : index
    %20 = vector.load %arg14[%c0_28, %c0_29, %c0_30] : memref<2x1x16xf32, #tpu.memory_space<vmem>>, vector<1x1x16xf32>
    %21 = vector.shape_cast %20 : vector<1x1x16xf32> to vector<1x16xf32>
    %22 = tpu.concatenate %7, %9 in 1 : vector<8x16xf32>, vector<8x16xf32> -> vector<8x32xf32>
    %23 = vector.shape_cast %22 : vector<8x32xf32> to vector<1x8x32xf32>
    %cst_31 = arith.constant dense<0.000000e+00> : vector<1x8x32xf32>
    %24 = tpu.matmul %5, %23, %cst_31 {dimension_numbers = #tpu.dot_dimension_numbers<[2], [1], [1], [2], [0, 0, 0, 1, 1, 2], [0], [0]>} : vector<1x8x8xf32>, vector<1x8x32xf32>, vector<1x8x32xf32> -> vector<1x8x32xf32>
    %cst_32 = arith.constant dense<0.000000e+00> : vector<1x8x32xf32>
    %25 = tpu.matmul %5, %24, %cst_32 {dimension_numbers = #tpu.dot_dimension_numbers<[2], [1], [1], [2], [0, 0, 0, 1, 1, 2], [0], [0]>} : vector<1x8x8xf32>, vector<1x8x32xf32>, vector<1x8x32xf32> -> vector<1x8x32xf32>
    %cst_33 = arith.constant 2.000000e+00 : f32
    %26 = vector.broadcast %cst_33 : f32 to vector<1x8x32xf32>
    %27 = arith.mulf %26, %25 : vector<1x8x32xf32>
    %28 = arith.subf %27, %23 : vector<1x8x32xf32>
    %29 = tpu.concatenate %23, %24, %28 in 2 : vector<1x8x32xf32>, vector<1x8x32xf32>, vector<1x8x32xf32> -> vector<1x8x96xf32>
    %30 = vector.shape_cast %29 : vector<1x8x96xf32> to vector<8x96xf32>
    %31 = arith.truncf %30 : vector<8x96xf32> to vector<8x96xbf16>
    %cst_34 = arith.constant dense<0.000000e+00> : vector<8x16xf32>
    %32 = tpu.matmul %31, %11, %cst_34 {dimension_numbers = #tpu.dot_dimension_numbers<[1], [0], [0], [1], [0, 0, 1, 1], [], []>} : vector<8x96xbf16>, vector<96x16xbf16>, vector<8x16xf32> -> vector<8x16xf32>
    %33 = vector.broadcast %13 : vector<1x16xf32> to vector<8x16xf32>
    %34 = arith.addf %32, %33 : vector<8x16xf32>
    %cst_35 = arith.constant 0.000000e+00 : f32
    %35 = vector.broadcast %cst_35 : f32 to vector<8x16xf32>
    %36 = arith.subf %35, %34 : vector<8x16xf32>
    %37 = math.exp %36 : vector<8x16xf32>
    %cst_36 = arith.constant 1.000000e+00 : f32
    %38 = vector.broadcast %cst_36 : f32 to vector<8x16xf32>
    %39 = arith.addf %38, %37 : vector<8x16xf32>
    %cst_37 = arith.constant 1.000000e+00 : f32
    %40 = vector.broadcast %cst_37 : f32 to vector<8x16xf32>
    %41 = arith.divf %40, %39 : vector<8x16xf32>
    %42 = arith.truncf %30 : vector<8x96xf32> to vector<8x96xbf16>
    %cst_38 = arith.constant dense<0.000000e+00> : vector<8x16xf32>
    %43 = tpu.matmul %42, %15, %cst_38 {dimension_numbers = #tpu.dot_dimension_numbers<[1], [0], [0], [1], [0, 0, 1, 1], [], []>} : vector<8x96xbf16>, vector<96x16xbf16>, vector<8x16xf32> -> vector<8x16xf32>
    %44 = vector.broadcast %17 : vector<1x16xf32> to vector<8x16xf32>
    %45 = arith.addf %43, %44 : vector<8x16xf32>
    %cst_39 = arith.constant 0.000000e+00 : f32
    %46 = vector.broadcast %cst_39 : f32 to vector<8x16xf32>
    %47 = arith.subf %46, %45 : vector<8x16xf32>
    %48 = math.exp %47 : vector<8x16xf32>
    %cst_40 = arith.constant 1.000000e+00 : f32
    %49 = vector.broadcast %cst_40 : f32 to vector<8x16xf32>
    %50 = arith.addf %49, %48 : vector<8x16xf32>
    %cst_41 = arith.constant 1.000000e+00 : f32
    %51 = vector.broadcast %cst_41 : f32 to vector<8x16xf32>
    %52 = arith.divf %51, %50 : vector<8x16xf32>
    %53 = arith.mulf %41, %9 : vector<8x16xf32>
    %54 = tpu.concatenate %7, %53 in 1 : vector<8x16xf32>, vector<8x16xf32> -> vector<8x32xf32>
    %55 = vector.shape_cast %54 : vector<8x32xf32> to vector<1x8x32xf32>
    %cst_42 = arith.constant dense<0.000000e+00> : vector<1x8x32xf32>
    %56 = tpu.matmul %5, %55, %cst_42 {dimension_numbers = #tpu.dot_dimension_numbers<[2], [1], [1], [2], [0, 0, 0, 1, 1, 2], [0], [0]>} : vector<1x8x8xf32>, vector<1x8x32xf32>, vector<1x8x32xf32> -> vector<1x8x32xf32>
    %cst_43 = arith.constant dense<0.000000e+00> : vector<1x8x32xf32>
    %57 = tpu.matmul %5, %56, %cst_43 {dimension_numbers = #tpu.dot_dimension_numbers<[2], [1], [1], [2], [0, 0, 0, 1, 1, 2], [0], [0]>} : vector<1x8x8xf32>, vector<1x8x32xf32>, vector<1x8x32xf32> -> vector<1x8x32xf32>
    %cst_44 = arith.constant 2.000000e+00 : f32
    %58 = vector.broadcast %cst_44 : f32 to vector<1x8x32xf32>
    %59 = arith.mulf %58, %57 : vector<1x8x32xf32>
    %60 = arith.subf %59, %55 : vector<1x8x32xf32>
    %61 = tpu.concatenate %55, %56, %60 in 2 : vector<1x8x32xf32>, vector<1x8x32xf32>, vector<1x8x32xf32> -> vector<1x8x96xf32>
    %62 = vector.shape_cast %61 : vector<1x8x96xf32> to vector<8x96xf32>
    %63 = arith.truncf %62 : vector<8x96xf32> to vector<8x96xbf16>
    %cst_45 = arith.constant dense<0.000000e+00> : vector<8x16xf32>
    %64 = tpu.matmul %63, %19, %cst_45 {dimension_numbers = #tpu.dot_dimension_numbers<[1], [0], [0], [1], [0, 0, 1, 1], [], []>} : vector<8x96xbf16>, vector<96x16xbf16>, vector<8x16xf32> -> vector<8x16xf32>
    %65 = vector.broadcast %21 : vector<1x16xf32> to vector<8x16xf32>
    %66 = arith.addf %64, %65 : vector<8x16xf32>
    %67 = math.tanh %66 : vector<8x16xf32>
    %68 = arith.mulf %52, %9 : vector<8x16xf32>
    %cst_46 = arith.constant 1.000000e+00 : f32
    %69 = vector.broadcast %cst_46 : f32 to vector<8x16xf32>
    %70 = arith.subf %69, %52 : vector<8x16xf32>
    %71 = arith.mulf %70, %67 : vector<8x16xf32>
    %72 = arith.addf %68, %71 : vector<8x16xf32>
    %c0_47 = arith.constant 0 : index
    %c0_48 = arith.constant 0 : index
    %c0_49 = arith.constant 0 : index
    %73 = vector.load %arg18[%c0_47, %c0_48, %c0_49] : memref<2x8x16xf32, #tpu.memory_space<vmem>>, vector<1x8x16xf32>
    %74 = vector.shape_cast %73 : vector<1x8x16xf32> to vector<8x16xf32>
    %75 = vector.shape_cast %72 : vector<8x16xf32> to vector<1x8x16xf32>
    tpu.vector_store %arg18[%c0_47, %c0_48, %c0_49], %75 {strides = array<i32>} : memref<2x8x16xf32, #tpu.memory_space<vmem>>, vector<1x8x16xf32>,
    %c1 = arith.constant 1 : index
    %c0_50 = arith.constant 0 : index
    %c0_51 = arith.constant 0 : index
    %76 = vector.load %arg18[%c1, %c0_50, %c0_51] : memref<2x8x16xf32, #tpu.memory_space<vmem>>, vector<1x8x16xf32>
    %77 = vector.shape_cast %76 : vector<1x8x16xf32> to vector<8x16xf32>
    %c1_52 = arith.constant 1 : index
    %c0_53 = arith.constant 0 : index
    %c0_54 = arith.constant 0 : index
    %78 = vector.load %arg9[%c1_52, %c0_53, %c0_54] : memref<2x96x16xbf16, #tpu.memory_space<vmem>>, vector<1x96x16xbf16>
    %79 = vector.shape_cast %78 : vector<1x96x16xbf16> to vector<96x16xbf16>
    %c1_55 = arith.constant 1 : index
    %c0_56 = arith.constant 0 : index
    %c0_57 = arith.constant 0 : index
    %80 = vector.load %arg10[%c1_55, %c0_56, %c0_57] : memref<2x1x16xf32, #tpu.memory_space<vmem>>, vector<1x1x16xf32>
    %81 = vector.shape_cast %80 : vector<1x1x16xf32> to vector<1x16xf32>
    %c1_58 = arith.constant 1 : index
    %c0_59 = arith.constant 0 : index
    %c0_60 = arith.constant 0 : index
    %82 = vector.load %arg11[%c1_58, %c0_59, %c0_60] : memref<2x96x16xbf16, #tpu.memory_space<vmem>>, vector<1x96x16xbf16>
    %83 = vector.shape_cast %82 : vector<1x96x16xbf16> to vector<96x16xbf16>
    %c1_61 = arith.constant 1 : index
    %c0_62 = arith.constant 0 : index
    %c0_63 = arith.constant 0 : index
    %84 = vector.load %arg12[%c1_61, %c0_62, %c0_63] : memref<2x1x16xf32, #tpu.memory_space<vmem>>, vector<1x1x16xf32>
    %85 = vector.shape_cast %84 : vector<1x1x16xf32> to vector<1x16xf32>
    %c1_64 = arith.constant 1 : index
    %c0_65 = arith.constant 0 : index
    %c0_66 = arith.constant 0 : index
    %86 = vector.load %arg13[%c1_64, %c0_65, %c0_66] : memref<2x96x16xbf16, #tpu.memory_space<vmem>>, vector<1x96x16xbf16>
    %87 = vector.shape_cast %86 : vector<1x96x16xbf16> to vector<96x16xbf16>
    %c1_67 = arith.constant 1 : index
    %c0_68 = arith.constant 0 : index
    %c0_69 = arith.constant 0 : index
    %88 = vector.load %arg14[%c1_67, %c0_68, %c0_69] : memref<2x1x16xf32, #tpu.memory_space<vmem>>, vector<1x1x16xf32>
    %89 = vector.shape_cast %88 : vector<1x1x16xf32> to vector<1x16xf32>
    %90 = tpu.concatenate %72, %77 in 1 : vector<8x16xf32>, vector<8x16xf32> -> vector<8x32xf32>
    %91 = vector.shape_cast %90 : vector<8x32xf32> to vector<1x8x32xf32>
    %cst_70 = arith.constant dense<0.000000e+00> : vector<1x8x32xf32>
    %92 = tpu.matmul %5, %91, %cst_70 {dimension_numbers = #tpu.dot_dimension_numbers<[2], [1], [1], [2], [0, 0, 0, 1, 1, 2], [0], [0]>} : vector<1x8x8xf32>, vector<1x8x32xf32>, vector<1x8x32xf32> -> vector<1x8x32xf32>
    %cst_71 = arith.constant dense<0.000000e+00> : vector<1x8x32xf32>
    %93 = tpu.matmul %5, %92, %cst_71 {dimension_numbers = #tpu.dot_dimension_numbers<[2], [1], [1], [2], [0, 0, 0, 1, 1, 2], [0], [0]>} : vector<1x8x8xf32>, vector<1x8x32xf32>, vector<1x8x32xf32> -> vector<1x8x32xf32>
    %cst_72 = arith.constant 2.000000e+00 : f32
    %94 = vector.broadcast %cst_72 : f32 to vector<1x8x32xf32>
    %95 = arith.mulf %94, %93 : vector<1x8x32xf32>
    %96 = arith.subf %95, %91 : vector<1x8x32xf32>
    %97 = tpu.concatenate %91, %92, %96 in 2 : vector<1x8x32xf32>, vector<1x8x32xf32>, vector<1x8x32xf32> -> vector<1x8x96xf32>
    %98 = vector.shape_cast %97 : vector<1x8x96xf32> to vector<8x96xf32>
    %99 = arith.truncf %98 : vector<8x96xf32> to vector<8x96xbf16>
    %cst_73 = arith.constant dense<0.000000e+00> : vector<8x16xf32>
    %100 = tpu.matmul %99, %79, %cst_73 {dimension_numbers = #tpu.dot_dimension_numbers<[1], [0], [0], [1], [0, 0, 1, 1], [], []>} : vector<8x96xbf16>, vector<96x16xbf16>, vector<8x16xf32> -> vector<8x16xf32>
    %101 = vector.broadcast %81 : vector<1x16xf32> to vector<8x16xf32>
    %102 = arith.addf %100, %101 : vector<8x16xf32>
    %cst_74 = arith.constant 0.000000e+00 : f32
    %103 = vector.broadcast %cst_74 : f32 to vector<8x16xf32>
    %104 = arith.subf %103, %102 : vector<8x16xf32>
    %105 = math.exp %104 : vector<8x16xf32>
    %cst_75 = arith.constant 1.000000e+00 : f32
    %106 = vector.broadcast %cst_75 : f32 to vector<8x16xf32>
    %107 = arith.addf %106, %105 : vector<8x16xf32>
    %cst_76 = arith.constant 1.000000e+00 : f32
    %108 = vector.broadcast %cst_76 : f32 to vector<8x16xf32>
    %109 = arith.divf %108, %107 : vector<8x16xf32>
    %110 = arith.truncf %98 : vector<8x96xf32> to vector<8x96xbf16>
    %cst_77 = arith.constant dense<0.000000e+00> : vector<8x16xf32>
    %111 = tpu.matmul %110, %83, %cst_77 {dimension_numbers = #tpu.dot_dimension_numbers<[1], [0], [0], [1], [0, 0, 1, 1], [], []>} : vector<8x96xbf16>, vector<96x16xbf16>, vector<8x16xf32> -> vector<8x16xf32>
    %112 = vector.broadcast %85 : vector<1x16xf32> to vector<8x16xf32>
    %113 = arith.addf %111, %112 : vector<8x16xf32>
    %cst_78 = arith.constant 0.000000e+00 : f32
    %114 = vector.broadcast %cst_78 : f32 to vector<8x16xf32>
    %115 = arith.subf %114, %113 : vector<8x16xf32>
    %116 = math.exp %115 : vector<8x16xf32>
    %cst_79 = arith.constant 1.000000e+00 : f32
    %117 = vector.broadcast %cst_79 : f32 to vector<8x16xf32>
    %118 = arith.addf %117, %116 : vector<8x16xf32>
    %cst_80 = arith.constant 1.000000e+00 : f32
    %119 = vector.broadcast %cst_80 : f32 to vector<8x16xf32>
    %120 = arith.divf %119, %118 : vector<8x16xf32>
    %121 = arith.mulf %109, %77 : vector<8x16xf32>
    %122 = tpu.concatenate %72, %121 in 1 : vector<8x16xf32>, vector<8x16xf32> -> vector<8x32xf32>
    %123 = vector.shape_cast %122 : vector<8x32xf32> to vector<1x8x32xf32>
    %cst_81 = arith.constant dense<0.000000e+00> : vector<1x8x32xf32>
    %124 = tpu.matmul %5, %123, %cst_81 {dimension_numbers = #tpu.dot_dimension_numbers<[2], [1], [1], [2], [0, 0, 0, 1, 1, 2], [0], [0]>} : vector<1x8x8xf32>, vector<1x8x32xf32>, vector<1x8x32xf32> -> vector<1x8x32xf32>
    %cst_82 = arith.constant dense<0.000000e+00> : vector<1x8x32xf32>
    %125 = tpu.matmul %5, %124, %cst_82 {dimension_numbers = #tpu.dot_dimension_numbers<[2], [1], [1], [2], [0, 0, 0, 1, 1, 2], [0], [0]>} : vector<1x8x8xf32>, vector<1x8x32xf32>, vector<1x8x32xf32> -> vector<1x8x32xf32>
    %cst_83 = arith.constant 2.000000e+00 : f32
    %126 = vector.broadcast %cst_83 : f32 to vector<1x8x32xf32>
    %127 = arith.mulf %126, %125 : vector<1x8x32xf32>
    %128 = arith.subf %127, %123 : vector<1x8x32xf32>
    %129 = tpu.concatenate %123, %124, %128 in 2 : vector<1x8x32xf32>, vector<1x8x32xf32>, vector<1x8x32xf32> -> vector<1x8x96xf32>
    %130 = vector.shape_cast %129 : vector<1x8x96xf32> to vector<8x96xf32>
    %131 = arith.truncf %130 : vector<8x96xf32> to vector<8x96xbf16>
    %cst_84 = arith.constant dense<0.000000e+00> : vector<8x16xf32>
    %132 = tpu.matmul %131, %87, %cst_84 {dimension_numbers = #tpu.dot_dimension_numbers<[1], [0], [0], [1], [0, 0, 1, 1], [], []>} : vector<8x96xbf16>, vector<96x16xbf16>, vector<8x16xf32> -> vector<8x16xf32>
    %133 = vector.broadcast %89 : vector<1x16xf32> to vector<8x16xf32>
    %134 = arith.addf %132, %133 : vector<8x16xf32>
    %135 = math.tanh %134 : vector<8x16xf32>
    %136 = arith.mulf %120, %77 : vector<8x16xf32>
    %cst_85 = arith.constant 1.000000e+00 : f32
    %137 = vector.broadcast %cst_85 : f32 to vector<8x16xf32>
    %138 = arith.subf %137, %120 : vector<8x16xf32>
    %139 = arith.mulf %138, %135 : vector<8x16xf32>
    %140 = arith.addf %136, %139 : vector<8x16xf32>
    %c1_86 = arith.constant 1 : index
    %c0_87 = arith.constant 0 : index
    %c0_88 = arith.constant 0 : index
    %141 = vector.load %arg18[%c1_86, %c0_87, %c0_88] : memref<2x8x16xf32, #tpu.memory_space<vmem>>, vector<1x8x16xf32>
    %142 = vector.shape_cast %141 : vector<1x8x16xf32> to vector<8x16xf32>
    %143 = vector.shape_cast %140 : vector<8x16xf32> to vector<1x8x16xf32>
    tpu.vector_store %arg18[%c1_86, %c0_87, %c0_88], %143 {strides = array<i32>} : memref<2x8x16xf32, #tpu.memory_space<vmem>>, vector<1x8x16xf32>,
    %c0_89 = arith.constant 0 : index
    %c0_90 = arith.constant 0 : index
    %144 = vector.load %arg15[%c0_89, %c0_90] : memref<16x1xf32, #tpu.memory_space<vmem>>, vector<16x1xf32>
    %cst_91 = arith.constant dense<0.000000e+00> : vector<8x1xf32>
    %145 = tpu.matmul %140, %144, %cst_91 {dimension_numbers = #tpu.dot_dimension_numbers<[1], [0], [0], [1], [0, 0, 1, 1], [], []>} : vector<8x16xf32>, vector<16x1xf32>, vector<8x1xf32> -> vector<8x1xf32>
    %c0_92 = arith.constant 0 : index
    %c0_93 = arith.constant 0 : index
    %146 = vector.load %arg16[%c0_92, %c0_93] : memref<1x1xf32, #tpu.memory_space<vmem>>, vector<1x1xf32>
    %147 = vector.broadcast %146 : vector<1x1xf32> to vector<8x1xf32>
    %148 = arith.addf %145, %147 : vector<8x1xf32>
    %c0_94 = arith.constant 0 : index
    %c0_95 = arith.constant 0 : index
    %149 = vector.load %arg17[%c0_94, %c0_95] : memref<8x4xf32, #tpu.memory_space<vmem>>, vector<8x1xf32>
    tpu.vector_store %arg17[%c0_94, %c0_95], %148 {strides = array<i32>} : memref<8x4xf32, #tpu.memory_space<vmem>>, vector<8x1xf32>,
    %c0_96 = arith.constant 0 : index
    %c0_97 = arith.constant 0 : index
    %150 = vector.load %arg19[%c0_96, %c0_97] : memref<8x16xf32, #tpu.memory_space<vmem>>, vector<8x1xf32>
    tpu.vector_store %arg19[%c0_96, %c0_97], %148 {strides = array<i32>} : memref<8x16xf32, #tpu.memory_space<vmem>>, vector<8x1xf32>,
    %c0_98 = arith.constant 0 : index
    %c0_99 = arith.constant 0 : index
    %151 = vector.load %arg19[%c0_98, %c0_99] : memref<8x16xf32, #tpu.memory_space<vmem>>, vector<8x16xf32>
    %c0_100 = arith.constant 0 : index
    %c0_101 = arith.constant 0 : index
    %c0_102 = arith.constant 0 : index
    %152 = vector.load %arg18[%c0_100, %c0_101, %c0_102] : memref<2x8x16xf32, #tpu.memory_space<vmem>>, vector<1x8x16xf32>
    %153 = vector.shape_cast %152 : vector<1x8x16xf32> to vector<8x16xf32>
    %c0_103 = arith.constant 0 : index
    %c0_104 = arith.constant 0 : index
    %c0_105 = arith.constant 0 : index
    %154 = vector.load %arg9[%c0_103, %c0_104, %c0_105] : memref<2x96x16xbf16, #tpu.memory_space<vmem>>, vector<1x96x16xbf16>
    %155 = vector.shape_cast %154 : vector<1x96x16xbf16> to vector<96x16xbf16>
    %c0_106 = arith.constant 0 : index
    %c0_107 = arith.constant 0 : index
    %c0_108 = arith.constant 0 : index
    %156 = vector.load %arg10[%c0_106, %c0_107, %c0_108] : memref<2x1x16xf32, #tpu.memory_space<vmem>>, vector<1x1x16xf32>
    %157 = vector.shape_cast %156 : vector<1x1x16xf32> to vector<1x16xf32>
    %c0_109 = arith.constant 0 : index
    %c0_110 = arith.constant 0 : index
    %c0_111 = arith.constant 0 : index
    %158 = vector.load %arg11[%c0_109, %c0_110, %c0_111] : memref<2x96x16xbf16, #tpu.memory_space<vmem>>, vector<1x96x16xbf16>
    %159 = vector.shape_cast %158 : vector<1x96x16xbf16> to vector<96x16xbf16>
    %c0_112 = arith.constant 0 : index
    %c0_113 = arith.constant 0 : index
    %c0_114 = arith.constant 0 : index
    %160 = vector.load %arg12[%c0_112, %c0_113, %c0_114] : memref<2x1x16xf32, #tpu.memory_space<vmem>>, vector<1x1x16xf32>
    %161 = vector.shape_cast %160 : vector<1x1x16xf32> to vector<1x16xf32>
    %c0_115 = arith.constant 0 : index
    %c0_116 = arith.constant 0 : index
    %c0_117 = arith.constant 0 : index
    %162 = vector.load %arg13[%c0_115, %c0_116, %c0_117] : memref<2x96x16xbf16, #tpu.memory_space<vmem>>, vector<1x96x16xbf16>
    %163 = vector.shape_cast %162 : vector<1x96x16xbf16> to vector<96x16xbf16>
    %c0_118 = arith.constant 0 : index
    %c0_119 = arith.constant 0 : index
    %c0_120 = arith.constant 0 : index
    %164 = vector.load %arg14[%c0_118, %c0_119, %c0_120] : memref<2x1x16xf32, #tpu.memory_space<vmem>>, vector<1x1x16xf32>
    %165 = vector.shape_cast %164 : vector<1x1x16xf32> to vector<1x16xf32>
    %166 = tpu.concatenate %151, %153 in 1 : vector<8x16xf32>, vector<8x16xf32> -> vector<8x32xf32>
    %167 = vector.shape_cast %166 : vector<8x32xf32> to vector<1x8x32xf32>
    %cst_121 = arith.constant dense<0.000000e+00> : vector<1x8x32xf32>
    %168 = tpu.matmul %5, %167, %cst_121 {dimension_numbers = #tpu.dot_dimension_numbers<[2], [1], [1], [2], [0, 0, 0, 1, 1, 2], [0], [0]>} : vector<1x8x8xf32>, vector<1x8x32xf32>, vector<1x8x32xf32> -> vector<1x8x32xf32>
    %cst_122 = arith.constant dense<0.000000e+00> : vector<1x8x32xf32>
    %169 = tpu.matmul %5, %168, %cst_122 {dimension_numbers = #tpu.dot_dimension_numbers<[2], [1], [1], [2], [0, 0, 0, 1, 1, 2], [0], [0]>} : vector<1x8x8xf32>, vector<1x8x32xf32>, vector<1x8x32xf32> -> vector<1x8x32xf32>
    %cst_123 = arith.constant 2.000000e+00 : f32
    %170 = vector.broadcast %cst_123 : f32 to vector<1x8x32xf32>
    %171 = arith.mulf %170, %169 : vector<1x8x32xf32>
    %172 = arith.subf %171, %167 : vector<1x8x32xf32>
    %173 = tpu.concatenate %167, %168, %172 in 2 : vector<1x8x32xf32>, vector<1x8x32xf32>, vector<1x8x32xf32> -> vector<1x8x96xf32>
    %174 = vector.shape_cast %173 : vector<1x8x96xf32> to vector<8x96xf32>
    %175 = arith.truncf %174 : vector<8x96xf32> to vector<8x96xbf16>
    %cst_124 = arith.constant dense<0.000000e+00> : vector<8x16xf32>
    %176 = tpu.matmul %175, %155, %cst_124 {dimension_numbers = #tpu.dot_dimension_numbers<[1], [0], [0], [1], [0, 0, 1, 1], [], []>} : vector<8x96xbf16>, vector<96x16xbf16>, vector<8x16xf32> -> vector<8x16xf32>
    %177 = vector.broadcast %157 : vector<1x16xf32> to vector<8x16xf32>
    %178 = arith.addf %176, %177 : vector<8x16xf32>
    %cst_125 = arith.constant 0.000000e+00 : f32
    %179 = vector.broadcast %cst_125 : f32 to vector<8x16xf32>
    %180 = arith.subf %179, %178 : vector<8x16xf32>
    %181 = math.exp %180 : vector<8x16xf32>
    %cst_126 = arith.constant 1.000000e+00 : f32
    %182 = vector.broadcast %cst_126 : f32 to vector<8x16xf32>
    %183 = arith.addf %182, %181 : vector<8x16xf32>
    %cst_127 = arith.constant 1.000000e+00 : f32
    %184 = vector.broadcast %cst_127 : f32 to vector<8x16xf32>
    %185 = arith.divf %184, %183 : vector<8x16xf32>
    %186 = arith.truncf %174 : vector<8x96xf32> to vector<8x96xbf16>
    %cst_128 = arith.constant dense<0.000000e+00> : vector<8x16xf32>
    %187 = tpu.matmul %186, %159, %cst_128 {dimension_numbers = #tpu.dot_dimension_numbers<[1], [0], [0], [1], [0, 0, 1, 1], [], []>} : vector<8x96xbf16>, vector<96x16xbf16>, vector<8x16xf32> -> vector<8x16xf32>
    %188 = vector.broadcast %161 : vector<1x16xf32> to vector<8x16xf32>
    %189 = arith.addf %187, %188 : vector<8x16xf32>
    %cst_129 = arith.constant 0.000000e+00 : f32
    %190 = vector.broadcast %cst_129 : f32 to vector<8x16xf32>
    %191 = arith.subf %190, %189 : vector<8x16xf32>
    %192 = math.exp %191 : vector<8x16xf32>
    %cst_130 = arith.constant 1.000000e+00 : f32
    %193 = vector.broadcast %cst_130 : f32 to vector<8x16xf32>
    %194 = arith.addf %193, %192 : vector<8x16xf32>
    %cst_131 = arith.constant 1.000000e+00 : f32
    %195 = vector.broadcast %cst_131 : f32 to vector<8x16xf32>
    %196 = arith.divf %195, %194 : vector<8x16xf32>
    %197 = arith.mulf %185, %153 : vector<8x16xf32>
    %198 = tpu.concatenate %151, %197 in 1 : vector<8x16xf32>, vector<8x16xf32> -> vector<8x32xf32>
    %199 = vector.shape_cast %198 : vector<8x32xf32> to vector<1x8x32xf32>
    %cst_132 = arith.constant dense<0.000000e+00> : vector<1x8x32xf32>
    %200 = tpu.matmul %5, %199, %cst_132 {dimension_numbers = #tpu.dot_dimension_numbers<[2], [1], [1], [2], [0, 0, 0, 1, 1, 2], [0], [0]>} : vector<1x8x8xf32>, vector<1x8x32xf32>, vector<1x8x32xf32> -> vector<1x8x32xf32>
    %cst_133 = arith.constant dense<0.000000e+00> : vector<1x8x32xf32>
    %201 = tpu.matmul %5, %200, %cst_133 {dimension_numbers = #tpu.dot_dimension_numbers<[2], [1], [1], [2], [0, 0, 0, 1, 1, 2], [0], [0]>} : vector<1x8x8xf32>, vector<1x8x32xf32>, vector<1x8x32xf32> -> vector<1x8x32xf32>
    %cst_134 = arith.constant 2.000000e+00 : f32
    %202 = vector.broadcast %cst_134 : f32 to vector<1x8x32xf32>
    %203 = arith.mulf %202, %201 : vector<1x8x32xf32>
    %204 = arith.subf %203, %199 : vector<1x8x32xf32>
    %205 = tpu.concatenate %199, %200, %204 in 2 : vector<1x8x32xf32>, vector<1x8x32xf32>, vector<1x8x32xf32> -> vector<1x8x96xf32>
    %206 = vector.shape_cast %205 : vector<1x8x96xf32> to vector<8x96xf32>
    %207 = arith.truncf %206 : vector<8x96xf32> to vector<8x96xbf16>
    %cst_135 = arith.constant dense<0.000000e+00> : vector<8x16xf32>
    %208 = tpu.matmul %207, %163, %cst_135 {dimension_numbers = #tpu.dot_dimension_numbers<[1], [0], [0], [1], [0, 0, 1, 1], [], []>} : vector<8x96xbf16>, vector<96x16xbf16>, vector<8x16xf32> -> vector<8x16xf32>
    %209 = vector.broadcast %165 : vector<1x16xf32> to vector<8x16xf32>
    %210 = arith.addf %208, %209 : vector<8x16xf32>
    %211 = math.tanh %210 : vector<8x16xf32>
    %212 = arith.mulf %196, %153 : vector<8x16xf32>
    %cst_136 = arith.constant 1.000000e+00 : f32
    %213 = vector.broadcast %cst_136 : f32 to vector<8x16xf32>
    %214 = arith.subf %213, %196 : vector<8x16xf32>
    %215 = arith.mulf %214, %211 : vector<8x16xf32>
    %216 = arith.addf %212, %215 : vector<8x16xf32>
    %c0_137 = arith.constant 0 : index
    %c0_138 = arith.constant 0 : index
    %c0_139 = arith.constant 0 : index
    %217 = vector.load %arg18[%c0_137, %c0_138, %c0_139] : memref<2x8x16xf32, #tpu.memory_space<vmem>>, vector<1x8x16xf32>
    %218 = vector.shape_cast %217 : vector<1x8x16xf32> to vector<8x16xf32>
    %219 = vector.shape_cast %216 : vector<8x16xf32> to vector<1x8x16xf32>
    tpu.vector_store %arg18[%c0_137, %c0_138, %c0_139], %219 {strides = array<i32>} : memref<2x8x16xf32, #tpu.memory_space<vmem>>, vector<1x8x16xf32>,
    %c1_140 = arith.constant 1 : index
    %c0_141 = arith.constant 0 : index
    %c0_142 = arith.constant 0 : index
    %220 = vector.load %arg18[%c1_140, %c0_141, %c0_142] : memref<2x8x16xf32, #tpu.memory_space<vmem>>, vector<1x8x16xf32>
    %221 = vector.shape_cast %220 : vector<1x8x16xf32> to vector<8x16xf32>
    %c1_143 = arith.constant 1 : index
    %c0_144 = arith.constant 0 : index
    %c0_145 = arith.constant 0 : index
    %222 = vector.load %arg9[%c1_143, %c0_144, %c0_145] : memref<2x96x16xbf16, #tpu.memory_space<vmem>>, vector<1x96x16xbf16>
    %223 = vector.shape_cast %222 : vector<1x96x16xbf16> to vector<96x16xbf16>
    %c1_146 = arith.constant 1 : index
    %c0_147 = arith.constant 0 : index
    %c0_148 = arith.constant 0 : index
    %224 = vector.load %arg10[%c1_146, %c0_147, %c0_148] : memref<2x1x16xf32, #tpu.memory_space<vmem>>, vector<1x1x16xf32>
    %225 = vector.shape_cast %224 : vector<1x1x16xf32> to vector<1x16xf32>
    %c1_149 = arith.constant 1 : index
    %c0_150 = arith.constant 0 : index
    %c0_151 = arith.constant 0 : index
    %226 = vector.load %arg11[%c1_149, %c0_150, %c0_151] : memref<2x96x16xbf16, #tpu.memory_space<vmem>>, vector<1x96x16xbf16>
    %227 = vector.shape_cast %226 : vector<1x96x16xbf16> to vector<96x16xbf16>
    %c1_152 = arith.constant 1 : index
    %c0_153 = arith.constant 0 : index
    %c0_154 = arith.constant 0 : index
    %228 = vector.load %arg12[%c1_152, %c0_153, %c0_154] : memref<2x1x16xf32, #tpu.memory_space<vmem>>, vector<1x1x16xf32>
    %229 = vector.shape_cast %228 : vector<1x1x16xf32> to vector<1x16xf32>
    %c1_155 = arith.constant 1 : index
    %c0_156 = arith.constant 0 : index
    %c0_157 = arith.constant 0 : index
    %230 = vector.load %arg13[%c1_155, %c0_156, %c0_157] : memref<2x96x16xbf16, #tpu.memory_space<vmem>>, vector<1x96x16xbf16>
    %231 = vector.shape_cast %230 : vector<1x96x16xbf16> to vector<96x16xbf16>
    %c1_158 = arith.constant 1 : index
    %c0_159 = arith.constant 0 : index
    %c0_160 = arith.constant 0 : index
    %232 = vector.load %arg14[%c1_158, %c0_159, %c0_160] : memref<2x1x16xf32, #tpu.memory_space<vmem>>, vector<1x1x16xf32>
    %233 = vector.shape_cast %232 : vector<1x1x16xf32> to vector<1x16xf32>
    %234 = tpu.concatenate %216, %221 in 1 : vector<8x16xf32>, vector<8x16xf32> -> vector<8x32xf32>
    %235 = vector.shape_cast %234 : vector<8x32xf32> to vector<1x8x32xf32>
    %cst_161 = arith.constant dense<0.000000e+00> : vector<1x8x32xf32>
    %236 = tpu.matmul %5, %235, %cst_161 {dimension_numbers = #tpu.dot_dimension_numbers<[2], [1], [1], [2], [0, 0, 0, 1, 1, 2], [0], [0]>} : vector<1x8x8xf32>, vector<1x8x32xf32>, vector<1x8x32xf32> -> vector<1x8x32xf32>
    %cst_162 = arith.constant dense<0.000000e+00> : vector<1x8x32xf32>
    %237 = tpu.matmul %5, %236, %cst_162 {dimension_numbers = #tpu.dot_dimension_numbers<[2], [1], [1], [2], [0, 0, 0, 1, 1, 2], [0], [0]>} : vector<1x8x8xf32>, vector<1x8x32xf32>, vector<1x8x32xf32> -> vector<1x8x32xf32>
    %cst_163 = arith.constant 2.000000e+00 : f32
    %238 = vector.broadcast %cst_163 : f32 to vector<1x8x32xf32>
    %239 = arith.mulf %238, %237 : vector<1x8x32xf32>
    %240 = arith.subf %239, %235 : vector<1x8x32xf32>
    %241 = tpu.concatenate %235, %236, %240 in 2 : vector<1x8x32xf32>, vector<1x8x32xf32>, vector<1x8x32xf32> -> vector<1x8x96xf32>
    %242 = vector.shape_cast %241 : vector<1x8x96xf32> to vector<8x96xf32>
    %243 = arith.truncf %242 : vector<8x96xf32> to vector<8x96xbf16>
    %cst_164 = arith.constant dense<0.000000e+00> : vector<8x16xf32>
    %244 = tpu.matmul %243, %223, %cst_164 {dimension_numbers = #tpu.dot_dimension_numbers<[1], [0], [0], [1], [0, 0, 1, 1], [], []>} : vector<8x96xbf16>, vector<96x16xbf16>, vector<8x16xf32> -> vector<8x16xf32>
    %245 = vector.broadcast %225 : vector<1x16xf32> to vector<8x16xf32>
    %246 = arith.addf %244, %245 : vector<8x16xf32>
    %cst_165 = arith.constant 0.000000e+00 : f32
    %247 = vector.broadcast %cst_165 : f32 to vector<8x16xf32>
    %248 = arith.subf %247, %246 : vector<8x16xf32>
    %249 = math.exp %248 : vector<8x16xf32>
    %cst_166 = arith.constant 1.000000e+00 : f32
    %250 = vector.broadcast %cst_166 : f32 to vector<8x16xf32>
    %251 = arith.addf %250, %249 : vector<8x16xf32>
    %cst_167 = arith.constant 1.000000e+00 : f32
    %252 = vector.broadcast %cst_167 : f32 to vector<8x16xf32>
    %253 = arith.divf %252, %251 : vector<8x16xf32>
    %254 = arith.truncf %242 : vector<8x96xf32> to vector<8x96xbf16>
    %cst_168 = arith.constant dense<0.000000e+00> : vector<8x16xf32>
    %255 = tpu.matmul %254, %227, %cst_168 {dimension_numbers = #tpu.dot_dimension_numbers<[1], [0], [0], [1], [0, 0, 1, 1], [], []>} : vector<8x96xbf16>, vector<96x16xbf16>, vector<8x16xf32> -> vector<8x16xf32>
    %256 = vector.broadcast %229 : vector<1x16xf32> to vector<8x16xf32>
    %257 = arith.addf %255, %256 : vector<8x16xf32>
    %cst_169 = arith.constant 0.000000e+00 : f32
    %258 = vector.broadcast %cst_169 : f32 to vector<8x16xf32>
    %259 = arith.subf %258, %257 : vector<8x16xf32>
    %260 = math.exp %259 : vector<8x16xf32>
    %cst_170 = arith.constant 1.000000e+00 : f32
    %261 = vector.broadcast %cst_170 : f32 to vector<8x16xf32>
    %262 = arith.addf %261, %260 : vector<8x16xf32>
    %cst_171 = arith.constant 1.000000e+00 : f32
    %263 = vector.broadcast %cst_171 : f32 to vector<8x16xf32>
    %264 = arith.divf %263, %262 : vector<8x16xf32>
    %265 = arith.mulf %253, %221 : vector<8x16xf32>
    %266 = tpu.concatenate %216, %265 in 1 : vector<8x16xf32>, vector<8x16xf32> -> vector<8x32xf32>
    %267 = vector.shape_cast %266 : vector<8x32xf32> to vector<1x8x32xf32>
    %cst_172 = arith.constant dense<0.000000e+00> : vector<1x8x32xf32>
    %268 = tpu.matmul %5, %267, %cst_172 {dimension_numbers = #tpu.dot_dimension_numbers<[2], [1], [1], [2], [0, 0, 0, 1, 1, 2], [0], [0]>} : vector<1x8x8xf32>, vector<1x8x32xf32>, vector<1x8x32xf32> -> vector<1x8x32xf32>
    %cst_173 = arith.constant dense<0.000000e+00> : vector<1x8x32xf32>
    %269 = tpu.matmul %5, %268, %cst_173 {dimension_numbers = #tpu.dot_dimension_numbers<[2], [1], [1], [2], [0, 0, 0, 1, 1, 2], [0], [0]>} : vector<1x8x8xf32>, vector<1x8x32xf32>, vector<1x8x32xf32> -> vector<1x8x32xf32>
    %cst_174 = arith.constant 2.000000e+00 : f32
    %270 = vector.broadcast %cst_174 : f32 to vector<1x8x32xf32>
    %271 = arith.mulf %270, %269 : vector<1x8x32xf32>
    %272 = arith.subf %271, %267 : vector<1x8x32xf32>
    %273 = tpu.concatenate %267, %268, %272 in 2 : vector<1x8x32xf32>, vector<1x8x32xf32>, vector<1x8x32xf32> -> vector<1x8x96xf32>
    %274 = vector.shape_cast %273 : vector<1x8x96xf32> to vector<8x96xf32>
    %275 = arith.truncf %274 : vector<8x96xf32> to vector<8x96xbf16>
    %cst_175 = arith.constant dense<0.000000e+00> : vector<8x16xf32>
    %276 = tpu.matmul %275, %231, %cst_175 {dimension_numbers = #tpu.dot_dimension_numbers<[1], [0], [0], [1], [0, 0, 1, 1], [], []>} : vector<8x96xbf16>, vector<96x16xbf16>, vector<8x16xf32> -> vector<8x16xf32>
    %277 = vector.broadcast %233 : vector<1x16xf32> to vector<8x16xf32>
    %278 = arith.addf %276, %277 : vector<8x16xf32>
    %279 = math.tanh %278 : vector<8x16xf32>
    %280 = arith.mulf %264, %221 : vector<8x16xf32>
    %cst_176 = arith.constant 1.000000e+00 : f32
    %281 = vector.broadcast %cst_176 : f32 to vector<8x16xf32>
    %282 = arith.subf %281, %264 : vector<8x16xf32>
    %283 = arith.mulf %282, %279 : vector<8x16xf32>
    %284 = arith.addf %280, %283 : vector<8x16xf32>
    %c1_177 = arith.constant 1 : index
    %c0_178 = arith.constant 0 : index
    %c0_179 = arith.constant 0 : index
    %285 = vector.load %arg18[%c1_177, %c0_178, %c0_179] : memref<2x8x16xf32, #tpu.memory_space<vmem>>, vector<1x8x16xf32>
    %286 = vector.shape_cast %285 : vector<1x8x16xf32> to vector<8x16xf32>
    %287 = vector.shape_cast %284 : vector<8x16xf32> to vector<1x8x16xf32>
    tpu.vector_store %arg18[%c1_177, %c0_178, %c0_179], %287 {strides = array<i32>} : memref<2x8x16xf32, #tpu.memory_space<vmem>>, vector<1x8x16xf32>,
    %c0_180 = arith.constant 0 : index
    %c0_181 = arith.constant 0 : index
    %288 = vector.load %arg15[%c0_180, %c0_181] : memref<16x1xf32, #tpu.memory_space<vmem>>, vector<16x1xf32>
    %cst_182 = arith.constant dense<0.000000e+00> : vector<8x1xf32>
    %289 = tpu.matmul %284, %288, %cst_182 {dimension_numbers = #tpu.dot_dimension_numbers<[1], [0], [0], [1], [0, 0, 1, 1], [], []>} : vector<8x16xf32>, vector<16x1xf32>, vector<8x1xf32> -> vector<8x1xf32>
    %c0_183 = arith.constant 0 : index
    %c0_184 = arith.constant 0 : index
    %290 = vector.load %arg16[%c0_183, %c0_184] : memref<1x1xf32, #tpu.memory_space<vmem>>, vector<1x1xf32>
    %291 = vector.broadcast %290 : vector<1x1xf32> to vector<8x1xf32>
    %292 = arith.addf %289, %291 : vector<8x1xf32>
    %c0_185 = arith.constant 0 : index
    %c1_186 = arith.constant 1 : index
    %293 = vector.load %arg17[%c0_185, %c1_186] : memref<8x4xf32, #tpu.memory_space<vmem>>, vector<8x1xf32>
    tpu.vector_store %arg17[%c0_185, %c1_186], %292 {strides = array<i32>} : memref<8x4xf32, #tpu.memory_space<vmem>>, vector<8x1xf32>,
    %c0_187 = arith.constant 0 : index
    %c0_188 = arith.constant 0 : index
    %294 = vector.load %arg19[%c0_187, %c0_188] : memref<8x16xf32, #tpu.memory_space<vmem>>, vector<8x1xf32>
    tpu.vector_store %arg19[%c0_187, %c0_188], %292 {strides = array<i32>} : memref<8x16xf32, #tpu.memory_space<vmem>>, vector<8x1xf32>,
    %c0_189 = arith.constant 0 : index
    %c0_190 = arith.constant 0 : index
    %295 = vector.load %arg19[%c0_189, %c0_190] : memref<8x16xf32, #tpu.memory_space<vmem>>, vector<8x16xf32>
    %c0_191 = arith.constant 0 : index
    %c0_192 = arith.constant 0 : index
    %c0_193 = arith.constant 0 : index
    %296 = vector.load %arg18[%c0_191, %c0_192, %c0_193] : memref<2x8x16xf32, #tpu.memory_space<vmem>>, vector<1x8x16xf32>
    %297 = vector.shape_cast %296 : vector<1x8x16xf32> to vector<8x16xf32>
    %c0_194 = arith.constant 0 : index
    %c0_195 = arith.constant 0 : index
    %c0_196 = arith.constant 0 : index
    %298 = vector.load %arg9[%c0_194, %c0_195, %c0_196] : memref<2x96x16xbf16, #tpu.memory_space<vmem>>, vector<1x96x16xbf16>
    %299 = vector.shape_cast %298 : vector<1x96x16xbf16> to vector<96x16xbf16>
    %c0_197 = arith.constant 0 : index
    %c0_198 = arith.constant 0 : index
    %c0_199 = arith.constant 0 : index
    %300 = vector.load %arg10[%c0_197, %c0_198, %c0_199] : memref<2x1x16xf32, #tpu.memory_space<vmem>>, vector<1x1x16xf32>
    %301 = vector.shape_cast %300 : vector<1x1x16xf32> to vector<1x16xf32>
    %c0_200 = arith.constant 0 : index
    %c0_201 = arith.constant 0 : index
    %c0_202 = arith.constant 0 : index
    %302 = vector.load %arg11[%c0_200, %c0_201, %c0_202] : memref<2x96x16xbf16, #tpu.memory_space<vmem>>, vector<1x96x16xbf16>
    %303 = vector.shape_cast %302 : vector<1x96x16xbf16> to vector<96x16xbf16>
    %c0_203 = arith.constant 0 : index
    %c0_204 = arith.constant 0 : index
    %c0_205 = arith.constant 0 : index
    %304 = vector.load %arg12[%c0_203, %c0_204, %c0_205] : memref<2x1x16xf32, #tpu.memory_space<vmem>>, vector<1x1x16xf32>
    %305 = vector.shape_cast %304 : vector<1x1x16xf32> to vector<1x16xf32>
    %c0_206 = arith.constant 0 : index
    %c0_207 = arith.constant 0 : index
    %c0_208 = arith.constant 0 : index
    %306 = vector.load %arg13[%c0_206, %c0_207, %c0_208] : memref<2x96x16xbf16, #tpu.memory_space<vmem>>, vector<1x96x16xbf16>
    %307 = vector.shape_cast %306 : vector<1x96x16xbf16> to vector<96x16xbf16>
    %c0_209 = arith.constant 0 : index
    %c0_210 = arith.constant 0 : index
    %c0_211 = arith.constant 0 : index
    %308 = vector.load %arg14[%c0_209, %c0_210, %c0_211] : memref<2x1x16xf32, #tpu.memory_space<vmem>>, vector<1x1x16xf32>
    %309 = vector.shape_cast %308 : vector<1x1x16xf32> to vector<1x16xf32>
    %310 = tpu.concatenate %295, %297 in 1 : vector<8x16xf32>, vector<8x16xf32> -> vector<8x32xf32>
    %311 = vector.shape_cast %310 : vector<8x32xf32> to vector<1x8x32xf32>
    %cst_212 = arith.constant dense<0.000000e+00> : vector<1x8x32xf32>
    %312 = tpu.matmul %5, %311, %cst_212 {dimension_numbers = #tpu.dot_dimension_numbers<[2], [1], [1], [2], [0, 0, 0, 1, 1, 2], [0], [0]>} : vector<1x8x8xf32>, vector<1x8x32xf32>, vector<1x8x32xf32> -> vector<1x8x32xf32>
    %cst_213 = arith.constant dense<0.000000e+00> : vector<1x8x32xf32>
    %313 = tpu.matmul %5, %312, %cst_213 {dimension_numbers = #tpu.dot_dimension_numbers<[2], [1], [1], [2], [0, 0, 0, 1, 1, 2], [0], [0]>} : vector<1x8x8xf32>, vector<1x8x32xf32>, vector<1x8x32xf32> -> vector<1x8x32xf32>
    %cst_214 = arith.constant 2.000000e+00 : f32
    %314 = vector.broadcast %cst_214 : f32 to vector<1x8x32xf32>
    %315 = arith.mulf %314, %313 : vector<1x8x32xf32>
    %316 = arith.subf %315, %311 : vector<1x8x32xf32>
    %317 = tpu.concatenate %311, %312, %316 in 2 : vector<1x8x32xf32>, vector<1x8x32xf32>, vector<1x8x32xf32> -> vector<1x8x96xf32>
    %318 = vector.shape_cast %317 : vector<1x8x96xf32> to vector<8x96xf32>
    %319 = arith.truncf %318 : vector<8x96xf32> to vector<8x96xbf16>
    %cst_215 = arith.constant dense<0.000000e+00> : vector<8x16xf32>
    %320 = tpu.matmul %319, %299, %cst_215 {dimension_numbers = #tpu.dot_dimension_numbers<[1], [0], [0], [1], [0, 0, 1, 1], [], []>} : vector<8x96xbf16>, vector<96x16xbf16>, vector<8x16xf32> -> vector<8x16xf32>
    %321 = vector.broadcast %301 : vector<1x16xf32> to vector<8x16xf32>
    %322 = arith.addf %320, %321 : vector<8x16xf32>
    %cst_216 = arith.constant 0.000000e+00 : f32
    %323 = vector.broadcast %cst_216 : f32 to vector<8x16xf32>
    %324 = arith.subf %323, %322 : vector<8x16xf32>
    %325 = math.exp %324 : vector<8x16xf32>
    %cst_217 = arith.constant 1.000000e+00 : f32
    %326 = vector.broadcast %cst_217 : f32 to vector<8x16xf32>
    %327 = arith.addf %326, %325 : vector<8x16xf32>
    %cst_218 = arith.constant 1.000000e+00 : f32
    %328 = vector.broadcast %cst_218 : f32 to vector<8x16xf32>
    %329 = arith.divf %328, %327 : vector<8x16xf32>
    %330 = arith.truncf %318 : vector<8x96xf32> to vector<8x96xbf16>
    %cst_219 = arith.constant dense<0.000000e+00> : vector<8x16xf32>
    %331 = tpu.matmul %330, %303, %cst_219 {dimension_numbers = #tpu.dot_dimension_numbers<[1], [0], [0], [1], [0, 0, 1, 1], [], []>} : vector<8x96xbf16>, vector<96x16xbf16>, vector<8x16xf32> -> vector<8x16xf32>
    %332 = vector.broadcast %305 : vector<1x16xf32> to vector<8x16xf32>
    %333 = arith.addf %331, %332 : vector<8x16xf32>
    %cst_220 = arith.constant 0.000000e+00 : f32
    %334 = vector.broadcast %cst_220 : f32 to vector<8x16xf32>
    %335 = arith.subf %334, %333 : vector<8x16xf32>
    %336 = math.exp %335 : vector<8x16xf32>
    %cst_221 = arith.constant 1.000000e+00 : f32
    %337 = vector.broadcast %cst_221 : f32 to vector<8x16xf32>
    %338 = arith.addf %337, %336 : vector<8x16xf32>
    %cst_222 = arith.constant 1.000000e+00 : f32
    %339 = vector.broadcast %cst_222 : f32 to vector<8x16xf32>
    %340 = arith.divf %339, %338 : vector<8x16xf32>
    %341 = arith.mulf %329, %297 : vector<8x16xf32>
    %342 = tpu.concatenate %295, %341 in 1 : vector<8x16xf32>, vector<8x16xf32> -> vector<8x32xf32>
    %343 = vector.shape_cast %342 : vector<8x32xf32> to vector<1x8x32xf32>
    %cst_223 = arith.constant dense<0.000000e+00> : vector<1x8x32xf32>
    %344 = tpu.matmul %5, %343, %cst_223 {dimension_numbers = #tpu.dot_dimension_numbers<[2], [1], [1], [2], [0, 0, 0, 1, 1, 2], [0], [0]>} : vector<1x8x8xf32>, vector<1x8x32xf32>, vector<1x8x32xf32> -> vector<1x8x32xf32>
    %cst_224 = arith.constant dense<0.000000e+00> : vector<1x8x32xf32>
    %345 = tpu.matmul %5, %344, %cst_224 {dimension_numbers = #tpu.dot_dimension_numbers<[2], [1], [1], [2], [0, 0, 0, 1, 1, 2], [0], [0]>} : vector<1x8x8xf32>, vector<1x8x32xf32>, vector<1x8x32xf32> -> vector<1x8x32xf32>
    %cst_225 = arith.constant 2.000000e+00 : f32
    %346 = vector.broadcast %cst_225 : f32 to vector<1x8x32xf32>
    %347 = arith.mulf %346, %345 : vector<1x8x32xf32>
    %348 = arith.subf %347, %343 : vector<1x8x32xf32>
    %349 = tpu.concatenate %343, %344, %348 in 2 : vector<1x8x32xf32>, vector<1x8x32xf32>, vector<1x8x32xf32> -> vector<1x8x96xf32>
    %350 = vector.shape_cast %349 : vector<1x8x96xf32> to vector<8x96xf32>
    %351 = arith.truncf %350 : vector<8x96xf32> to vector<8x96xbf16>
    %cst_226 = arith.constant dense<0.000000e+00> : vector<8x16xf32>
    %352 = tpu.matmul %351, %307, %cst_226 {dimension_numbers = #tpu.dot_dimension_numbers<[1], [0], [0], [1], [0, 0, 1, 1], [], []>} : vector<8x96xbf16>, vector<96x16xbf16>, vector<8x16xf32> -> vector<8x16xf32>
    %353 = vector.broadcast %309 : vector<1x16xf32> to vector<8x16xf32>
    %354 = arith.addf %352, %353 : vector<8x16xf32>
    %355 = math.tanh %354 : vector<8x16xf32>
    %356 = arith.mulf %340, %297 : vector<8x16xf32>
    %cst_227 = arith.constant 1.000000e+00 : f32
    %357 = vector.broadcast %cst_227 : f32 to vector<8x16xf32>
    %358 = arith.subf %357, %340 : vector<8x16xf32>
    %359 = arith.mulf %358, %355 : vector<8x16xf32>
    %360 = arith.addf %356, %359 : vector<8x16xf32>
    %c0_228 = arith.constant 0 : index
    %c0_229 = arith.constant 0 : index
    %c0_230 = arith.constant 0 : index
    %361 = vector.load %arg18[%c0_228, %c0_229, %c0_230] : memref<2x8x16xf32, #tpu.memory_space<vmem>>, vector<1x8x16xf32>
    %362 = vector.shape_cast %361 : vector<1x8x16xf32> to vector<8x16xf32>
    %363 = vector.shape_cast %360 : vector<8x16xf32> to vector<1x8x16xf32>
    tpu.vector_store %arg18[%c0_228, %c0_229, %c0_230], %363 {strides = array<i32>} : memref<2x8x16xf32, #tpu.memory_space<vmem>>, vector<1x8x16xf32>,
    %c1_231 = arith.constant 1 : index
    %c0_232 = arith.constant 0 : index
    %c0_233 = arith.constant 0 : index
    %364 = vector.load %arg18[%c1_231, %c0_232, %c0_233] : memref<2x8x16xf32, #tpu.memory_space<vmem>>, vector<1x8x16xf32>
    %365 = vector.shape_cast %364 : vector<1x8x16xf32> to vector<8x16xf32>
    %c1_234 = arith.constant 1 : index
    %c0_235 = arith.constant 0 : index
    %c0_236 = arith.constant 0 : index
    %366 = vector.load %arg9[%c1_234, %c0_235, %c0_236] : memref<2x96x16xbf16, #tpu.memory_space<vmem>>, vector<1x96x16xbf16>
    %367 = vector.shape_cast %366 : vector<1x96x16xbf16> to vector<96x16xbf16>
    %c1_237 = arith.constant 1 : index
    %c0_238 = arith.constant 0 : index
    %c0_239 = arith.constant 0 : index
    %368 = vector.load %arg10[%c1_237, %c0_238, %c0_239] : memref<2x1x16xf32, #tpu.memory_space<vmem>>, vector<1x1x16xf32>
    %369 = vector.shape_cast %368 : vector<1x1x16xf32> to vector<1x16xf32>
    %c1_240 = arith.constant 1 : index
    %c0_241 = arith.constant 0 : index
    %c0_242 = arith.constant 0 : index
    %370 = vector.load %arg11[%c1_240, %c0_241, %c0_242] : memref<2x96x16xbf16, #tpu.memory_space<vmem>>, vector<1x96x16xbf16>
    %371 = vector.shape_cast %370 : vector<1x96x16xbf16> to vector<96x16xbf16>
    %c1_243 = arith.constant 1 : index
    %c0_244 = arith.constant 0 : index
    %c0_245 = arith.constant 0 : index
    %372 = vector.load %arg12[%c1_243, %c0_244, %c0_245] : memref<2x1x16xf32, #tpu.memory_space<vmem>>, vector<1x1x16xf32>
    %373 = vector.shape_cast %372 : vector<1x1x16xf32> to vector<1x16xf32>
    %c1_246 = arith.constant 1 : index
    %c0_247 = arith.constant 0 : index
    %c0_248 = arith.constant 0 : index
    %374 = vector.load %arg13[%c1_246, %c0_247, %c0_248] : memref<2x96x16xbf16, #tpu.memory_space<vmem>>, vector<1x96x16xbf16>
    %375 = vector.shape_cast %374 : vector<1x96x16xbf16> to vector<96x16xbf16>
    %c1_249 = arith.constant 1 : index
    %c0_250 = arith.constant 0 : index
    %c0_251 = arith.constant 0 : index
    %376 = vector.load %arg14[%c1_249, %c0_250, %c0_251] : memref<2x1x16xf32, #tpu.memory_space<vmem>>, vector<1x1x16xf32>
    %377 = vector.shape_cast %376 : vector<1x1x16xf32> to vector<1x16xf32>
    %378 = tpu.concatenate %360, %365 in 1 : vector<8x16xf32>, vector<8x16xf32> -> vector<8x32xf32>
    %379 = vector.shape_cast %378 : vector<8x32xf32> to vector<1x8x32xf32>
    %cst_252 = arith.constant dense<0.000000e+00> : vector<1x8x32xf32>
    %380 = tpu.matmul %5, %379, %cst_252 {dimension_numbers = #tpu.dot_dimension_numbers<[2], [1], [1], [2], [0, 0, 0, 1, 1, 2], [0], [0]>} : vector<1x8x8xf32>, vector<1x8x32xf32>, vector<1x8x32xf32> -> vector<1x8x32xf32>
    %cst_253 = arith.constant dense<0.000000e+00> : vector<1x8x32xf32>
    %381 = tpu.matmul %5, %380, %cst_253 {dimension_numbers = #tpu.dot_dimension_numbers<[2], [1], [1], [2], [0, 0, 0, 1, 1, 2], [0], [0]>} : vector<1x8x8xf32>, vector<1x8x32xf32>, vector<1x8x32xf32> -> vector<1x8x32xf32>
    %cst_254 = arith.constant 2.000000e+00 : f32
    %382 = vector.broadcast %cst_254 : f32 to vector<1x8x32xf32>
    %383 = arith.mulf %382, %381 : vector<1x8x32xf32>
    %384 = arith.subf %383, %379 : vector<1x8x32xf32>
    %385 = tpu.concatenate %379, %380, %384 in 2 : vector<1x8x32xf32>, vector<1x8x32xf32>, vector<1x8x32xf32> -> vector<1x8x96xf32>
    %386 = vector.shape_cast %385 : vector<1x8x96xf32> to vector<8x96xf32>
    %387 = arith.truncf %386 : vector<8x96xf32> to vector<8x96xbf16>
    %cst_255 = arith.constant dense<0.000000e+00> : vector<8x16xf32>
    %388 = tpu.matmul %387, %367, %cst_255 {dimension_numbers = #tpu.dot_dimension_numbers<[1], [0], [0], [1], [0, 0, 1, 1], [], []>} : vector<8x96xbf16>, vector<96x16xbf16>, vector<8x16xf32> -> vector<8x16xf32>
    %389 = vector.broadcast %369 : vector<1x16xf32> to vector<8x16xf32>
    %390 = arith.addf %388, %389 : vector<8x16xf32>
    %cst_256 = arith.constant 0.000000e+00 : f32
    %391 = vector.broadcast %cst_256 : f32 to vector<8x16xf32>
    %392 = arith.subf %391, %390 : vector<8x16xf32>
    %393 = math.exp %392 : vector<8x16xf32>
    %cst_257 = arith.constant 1.000000e+00 : f32
    %394 = vector.broadcast %cst_257 : f32 to vector<8x16xf32>
    %395 = arith.addf %394, %393 : vector<8x16xf32>
    %cst_258 = arith.constant 1.000000e+00 : f32
    %396 = vector.broadcast %cst_258 : f32 to vector<8x16xf32>
    %397 = arith.divf %396, %395 : vector<8x16xf32>
    %398 = arith.truncf %386 : vector<8x96xf32> to vector<8x96xbf16>
    %cst_259 = arith.constant dense<0.000000e+00> : vector<8x16xf32>
    %399 = tpu.matmul %398, %371, %cst_259 {dimension_numbers = #tpu.dot_dimension_numbers<[1], [0], [0], [1], [0, 0, 1, 1], [], []>} : vector<8x96xbf16>, vector<96x16xbf16>, vector<8x16xf32> -> vector<8x16xf32>
    %400 = vector.broadcast %373 : vector<1x16xf32> to vector<8x16xf32>
    %401 = arith.addf %399, %400 : vector<8x16xf32>
    %cst_260 = arith.constant 0.000000e+00 : f32
    %402 = vector.broadcast %cst_260 : f32 to vector<8x16xf32>
    %403 = arith.subf %402, %401 : vector<8x16xf32>
    %404 = math.exp %403 : vector<8x16xf32>
    %cst_261 = arith.constant 1.000000e+00 : f32
    %405 = vector.broadcast %cst_261 : f32 to vector<8x16xf32>
    %406 = arith.addf %405, %404 : vector<8x16xf32>
    %cst_262 = arith.constant 1.000000e+00 : f32
    %407 = vector.broadcast %cst_262 : f32 to vector<8x16xf32>
    %408 = arith.divf %407, %406 : vector<8x16xf32>
    %409 = arith.mulf %397, %365 : vector<8x16xf32>
    %410 = tpu.concatenate %360, %409 in 1 : vector<8x16xf32>, vector<8x16xf32> -> vector<8x32xf32>
    %411 = vector.shape_cast %410 : vector<8x32xf32> to vector<1x8x32xf32>
    %cst_263 = arith.constant dense<0.000000e+00> : vector<1x8x32xf32>
    %412 = tpu.matmul %5, %411, %cst_263 {dimension_numbers = #tpu.dot_dimension_numbers<[2], [1], [1], [2], [0, 0, 0, 1, 1, 2], [0], [0]>} : vector<1x8x8xf32>, vector<1x8x32xf32>, vector<1x8x32xf32> -> vector<1x8x32xf32>
    %cst_264 = arith.constant dense<0.000000e+00> : vector<1x8x32xf32>
    %413 = tpu.matmul %5, %412, %cst_264 {dimension_numbers = #tpu.dot_dimension_numbers<[2], [1], [1], [2], [0, 0, 0, 1, 1, 2], [0], [0]>} : vector<1x8x8xf32>, vector<1x8x32xf32>, vector<1x8x32xf32> -> vector<1x8x32xf32>
    %cst_265 = arith.constant 2.000000e+00 : f32
    %414 = vector.broadcast %cst_265 : f32 to vector<1x8x32xf32>
    %415 = arith.mulf %414, %413 : vector<1x8x32xf32>
    %416 = arith.subf %415, %411 : vector<1x8x32xf32>
    %417 = tpu.concatenate %411, %412, %416 in 2 : vector<1x8x32xf32>, vector<1x8x32xf32>, vector<1x8x32xf32> -> vector<1x8x96xf32>
    %418 = vector.shape_cast %417 : vector<1x8x96xf32> to vector<8x96xf32>
    %419 = arith.truncf %418 : vector<8x96xf32> to vector<8x96xbf16>
    %cst_266 = arith.constant dense<0.000000e+00> : vector<8x16xf32>
    %420 = tpu.matmul %419, %375, %cst_266 {dimension_numbers = #tpu.dot_dimension_numbers<[1], [0], [0], [1], [0, 0, 1, 1], [], []>} : vector<8x96xbf16>, vector<96x16xbf16>, vector<8x16xf32> -> vector<8x16xf32>
    %421 = vector.broadcast %377 : vector<1x16xf32> to vector<8x16xf32>
    %422 = arith.addf %420, %421 : vector<8x16xf32>
    %423 = math.tanh %422 : vector<8x16xf32>
    %424 = arith.mulf %408, %365 : vector<8x16xf32>
    %cst_267 = arith.constant 1.000000e+00 : f32
    %425 = vector.broadcast %cst_267 : f32 to vector<8x16xf32>
    %426 = arith.subf %425, %408 : vector<8x16xf32>
    %427 = arith.mulf %426, %423 : vector<8x16xf32>
    %428 = arith.addf %424, %427 : vector<8x16xf32>
    %c1_268 = arith.constant 1 : index
    %c0_269 = arith.constant 0 : index
    %c0_270 = arith.constant 0 : index
    %429 = vector.load %arg18[%c1_268, %c0_269, %c0_270] : memref<2x8x16xf32, #tpu.memory_space<vmem>>, vector<1x8x16xf32>
    %430 = vector.shape_cast %429 : vector<1x8x16xf32> to vector<8x16xf32>
    %431 = vector.shape_cast %428 : vector<8x16xf32> to vector<1x8x16xf32>
    tpu.vector_store %arg18[%c1_268, %c0_269, %c0_270], %431 {strides = array<i32>} : memref<2x8x16xf32, #tpu.memory_space<vmem>>, vector<1x8x16xf32>,
    %c0_271 = arith.constant 0 : index
    %c0_272 = arith.constant 0 : index
    %432 = vector.load %arg15[%c0_271, %c0_272] : memref<16x1xf32, #tpu.memory_space<vmem>>, vector<16x1xf32>
    %cst_273 = arith.constant dense<0.000000e+00> : vector<8x1xf32>
    %433 = tpu.matmul %428, %432, %cst_273 {dimension_numbers = #tpu.dot_dimension_numbers<[1], [0], [0], [1], [0, 0, 1, 1], [], []>} : vector<8x16xf32>, vector<16x1xf32>, vector<8x1xf32> -> vector<8x1xf32>
    %c0_274 = arith.constant 0 : index
    %c0_275 = arith.constant 0 : index
    %434 = vector.load %arg16[%c0_274, %c0_275] : memref<1x1xf32, #tpu.memory_space<vmem>>, vector<1x1xf32>
    %435 = vector.broadcast %434 : vector<1x1xf32> to vector<8x1xf32>
    %436 = arith.addf %433, %435 : vector<8x1xf32>
    %c0_276 = arith.constant 0 : index
    %c2 = arith.constant 2 : index
    %437 = vector.load %arg17[%c0_276, %c2] : memref<8x4xf32, #tpu.memory_space<vmem>>, vector<8x1xf32>
    tpu.vector_store %arg17[%c0_276, %c2], %436 {strides = array<i32>} : memref<8x4xf32, #tpu.memory_space<vmem>>, vector<8x1xf32>,
    %c0_277 = arith.constant 0 : index
    %c0_278 = arith.constant 0 : index
    %438 = vector.load %arg19[%c0_277, %c0_278] : memref<8x16xf32, #tpu.memory_space<vmem>>, vector<8x1xf32>
    tpu.vector_store %arg19[%c0_277, %c0_278], %436 {strides = array<i32>} : memref<8x16xf32, #tpu.memory_space<vmem>>, vector<8x1xf32>,
    %c0_279 = arith.constant 0 : index
    %c0_280 = arith.constant 0 : index
    %439 = vector.load %arg19[%c0_279, %c0_280] : memref<8x16xf32, #tpu.memory_space<vmem>>, vector<8x16xf32>
    %c0_281 = arith.constant 0 : index
    %c0_282 = arith.constant 0 : index
    %c0_283 = arith.constant 0 : index
    %440 = vector.load %arg18[%c0_281, %c0_282, %c0_283] : memref<2x8x16xf32, #tpu.memory_space<vmem>>, vector<1x8x16xf32>
    %441 = vector.shape_cast %440 : vector<1x8x16xf32> to vector<8x16xf32>
    %c0_284 = arith.constant 0 : index
    %c0_285 = arith.constant 0 : index
    %c0_286 = arith.constant 0 : index
    %442 = vector.load %arg9[%c0_284, %c0_285, %c0_286] : memref<2x96x16xbf16, #tpu.memory_space<vmem>>, vector<1x96x16xbf16>
    %443 = vector.shape_cast %442 : vector<1x96x16xbf16> to vector<96x16xbf16>
    %c0_287 = arith.constant 0 : index
    %c0_288 = arith.constant 0 : index
    %c0_289 = arith.constant 0 : index
    %444 = vector.load %arg10[%c0_287, %c0_288, %c0_289] : memref<2x1x16xf32, #tpu.memory_space<vmem>>, vector<1x1x16xf32>
    %445 = vector.shape_cast %444 : vector<1x1x16xf32> to vector<1x16xf32>
    %c0_290 = arith.constant 0 : index
    %c0_291 = arith.constant 0 : index
    %c0_292 = arith.constant 0 : index
    %446 = vector.load %arg11[%c0_290, %c0_291, %c0_292] : memref<2x96x16xbf16, #tpu.memory_space<vmem>>, vector<1x96x16xbf16>
    %447 = vector.shape_cast %446 : vector<1x96x16xbf16> to vector<96x16xbf16>
    %c0_293 = arith.constant 0 : index
    %c0_294 = arith.constant 0 : index
    %c0_295 = arith.constant 0 : index
    %448 = vector.load %arg12[%c0_293, %c0_294, %c0_295] : memref<2x1x16xf32, #tpu.memory_space<vmem>>, vector<1x1x16xf32>
    %449 = vector.shape_cast %448 : vector<1x1x16xf32> to vector<1x16xf32>
    %c0_296 = arith.constant 0 : index
    %c0_297 = arith.constant 0 : index
    %c0_298 = arith.constant 0 : index
    %450 = vector.load %arg13[%c0_296, %c0_297, %c0_298] : memref<2x96x16xbf16, #tpu.memory_space<vmem>>, vector<1x96x16xbf16>
    %451 = vector.shape_cast %450 : vector<1x96x16xbf16> to vector<96x16xbf16>
    %c0_299 = arith.constant 0 : index
    %c0_300 = arith.constant 0 : index
    %c0_301 = arith.constant 0 : index
    %452 = vector.load %arg14[%c0_299, %c0_300, %c0_301] : memref<2x1x16xf32, #tpu.memory_space<vmem>>, vector<1x1x16xf32>
    %453 = vector.shape_cast %452 : vector<1x1x16xf32> to vector<1x16xf32>
    %454 = tpu.concatenate %439, %441 in 1 : vector<8x16xf32>, vector<8x16xf32> -> vector<8x32xf32>
    %455 = vector.shape_cast %454 : vector<8x32xf32> to vector<1x8x32xf32>
    %cst_302 = arith.constant dense<0.000000e+00> : vector<1x8x32xf32>
    %456 = tpu.matmul %5, %455, %cst_302 {dimension_numbers = #tpu.dot_dimension_numbers<[2], [1], [1], [2], [0, 0, 0, 1, 1, 2], [0], [0]>} : vector<1x8x8xf32>, vector<1x8x32xf32>, vector<1x8x32xf32> -> vector<1x8x32xf32>
    %cst_303 = arith.constant dense<0.000000e+00> : vector<1x8x32xf32>
    %457 = tpu.matmul %5, %456, %cst_303 {dimension_numbers = #tpu.dot_dimension_numbers<[2], [1], [1], [2], [0, 0, 0, 1, 1, 2], [0], [0]>} : vector<1x8x8xf32>, vector<1x8x32xf32>, vector<1x8x32xf32> -> vector<1x8x32xf32>
    %cst_304 = arith.constant 2.000000e+00 : f32
    %458 = vector.broadcast %cst_304 : f32 to vector<1x8x32xf32>
    %459 = arith.mulf %458, %457 : vector<1x8x32xf32>
    %460 = arith.subf %459, %455 : vector<1x8x32xf32>
    %461 = tpu.concatenate %455, %456, %460 in 2 : vector<1x8x32xf32>, vector<1x8x32xf32>, vector<1x8x32xf32> -> vector<1x8x96xf32>
    %462 = vector.shape_cast %461 : vector<1x8x96xf32> to vector<8x96xf32>
    %463 = arith.truncf %462 : vector<8x96xf32> to vector<8x96xbf16>
    %cst_305 = arith.constant dense<0.000000e+00> : vector<8x16xf32>
    %464 = tpu.matmul %463, %443, %cst_305 {dimension_numbers = #tpu.dot_dimension_numbers<[1], [0], [0], [1], [0, 0, 1, 1], [], []>} : vector<8x96xbf16>, vector<96x16xbf16>, vector<8x16xf32> -> vector<8x16xf32>
    %465 = vector.broadcast %445 : vector<1x16xf32> to vector<8x16xf32>
    %466 = arith.addf %464, %465 : vector<8x16xf32>
    %cst_306 = arith.constant 0.000000e+00 : f32
    %467 = vector.broadcast %cst_306 : f32 to vector<8x16xf32>
    %468 = arith.subf %467, %466 : vector<8x16xf32>
    %469 = math.exp %468 : vector<8x16xf32>
    %cst_307 = arith.constant 1.000000e+00 : f32
    %470 = vector.broadcast %cst_307 : f32 to vector<8x16xf32>
    %471 = arith.addf %470, %469 : vector<8x16xf32>
    %cst_308 = arith.constant 1.000000e+00 : f32
    %472 = vector.broadcast %cst_308 : f32 to vector<8x16xf32>
    %473 = arith.divf %472, %471 : vector<8x16xf32>
    %474 = arith.truncf %462 : vector<8x96xf32> to vector<8x96xbf16>
    %cst_309 = arith.constant dense<0.000000e+00> : vector<8x16xf32>
    %475 = tpu.matmul %474, %447, %cst_309 {dimension_numbers = #tpu.dot_dimension_numbers<[1], [0], [0], [1], [0, 0, 1, 1], [], []>} : vector<8x96xbf16>, vector<96x16xbf16>, vector<8x16xf32> -> vector<8x16xf32>
    %476 = vector.broadcast %449 : vector<1x16xf32> to vector<8x16xf32>
    %477 = arith.addf %475, %476 : vector<8x16xf32>
    %cst_310 = arith.constant 0.000000e+00 : f32
    %478 = vector.broadcast %cst_310 : f32 to vector<8x16xf32>
    %479 = arith.subf %478, %477 : vector<8x16xf32>
    %480 = math.exp %479 : vector<8x16xf32>
    %cst_311 = arith.constant 1.000000e+00 : f32
    %481 = vector.broadcast %cst_311 : f32 to vector<8x16xf32>
    %482 = arith.addf %481, %480 : vector<8x16xf32>
    %cst_312 = arith.constant 1.000000e+00 : f32
    %483 = vector.broadcast %cst_312 : f32 to vector<8x16xf32>
    %484 = arith.divf %483, %482 : vector<8x16xf32>
    %485 = arith.mulf %473, %441 : vector<8x16xf32>
    %486 = tpu.concatenate %439, %485 in 1 : vector<8x16xf32>, vector<8x16xf32> -> vector<8x32xf32>
    %487 = vector.shape_cast %486 : vector<8x32xf32> to vector<1x8x32xf32>
    %cst_313 = arith.constant dense<0.000000e+00> : vector<1x8x32xf32>
    %488 = tpu.matmul %5, %487, %cst_313 {dimension_numbers = #tpu.dot_dimension_numbers<[2], [1], [1], [2], [0, 0, 0, 1, 1, 2], [0], [0]>} : vector<1x8x8xf32>, vector<1x8x32xf32>, vector<1x8x32xf32> -> vector<1x8x32xf32>
    %cst_314 = arith.constant dense<0.000000e+00> : vector<1x8x32xf32>
    %489 = tpu.matmul %5, %488, %cst_314 {dimension_numbers = #tpu.dot_dimension_numbers<[2], [1], [1], [2], [0, 0, 0, 1, 1, 2], [0], [0]>} : vector<1x8x8xf32>, vector<1x8x32xf32>, vector<1x8x32xf32> -> vector<1x8x32xf32>
    %cst_315 = arith.constant 2.000000e+00 : f32
    %490 = vector.broadcast %cst_315 : f32 to vector<1x8x32xf32>
    %491 = arith.mulf %490, %489 : vector<1x8x32xf32>
    %492 = arith.subf %491, %487 : vector<1x8x32xf32>
    %493 = tpu.concatenate %487, %488, %492 in 2 : vector<1x8x32xf32>, vector<1x8x32xf32>, vector<1x8x32xf32> -> vector<1x8x96xf32>
    %494 = vector.shape_cast %493 : vector<1x8x96xf32> to vector<8x96xf32>
    %495 = arith.truncf %494 : vector<8x96xf32> to vector<8x96xbf16>
    %cst_316 = arith.constant dense<0.000000e+00> : vector<8x16xf32>
    %496 = tpu.matmul %495, %451, %cst_316 {dimension_numbers = #tpu.dot_dimension_numbers<[1], [0], [0], [1], [0, 0, 1, 1], [], []>} : vector<8x96xbf16>, vector<96x16xbf16>, vector<8x16xf32> -> vector<8x16xf32>
    %497 = vector.broadcast %453 : vector<1x16xf32> to vector<8x16xf32>
    %498 = arith.addf %496, %497 : vector<8x16xf32>
    %499 = math.tanh %498 : vector<8x16xf32>
    %500 = arith.mulf %484, %441 : vector<8x16xf32>
    %cst_317 = arith.constant 1.000000e+00 : f32
    %501 = vector.broadcast %cst_317 : f32 to vector<8x16xf32>
    %502 = arith.subf %501, %484 : vector<8x16xf32>
    %503 = arith.mulf %502, %499 : vector<8x16xf32>
    %504 = arith.addf %500, %503 : vector<8x16xf32>
    %c0_318 = arith.constant 0 : index
    %c0_319 = arith.constant 0 : index
    %c0_320 = arith.constant 0 : index
    %505 = vector.load %arg18[%c0_318, %c0_319, %c0_320] : memref<2x8x16xf32, #tpu.memory_space<vmem>>, vector<1x8x16xf32>
    %506 = vector.shape_cast %505 : vector<1x8x16xf32> to vector<8x16xf32>
    %507 = vector.shape_cast %504 : vector<8x16xf32> to vector<1x8x16xf32>
    tpu.vector_store %arg18[%c0_318, %c0_319, %c0_320], %507 {strides = array<i32>} : memref<2x8x16xf32, #tpu.memory_space<vmem>>, vector<1x8x16xf32>,
    %c1_321 = arith.constant 1 : index
    %c0_322 = arith.constant 0 : index
    %c0_323 = arith.constant 0 : index
    %508 = vector.load %arg18[%c1_321, %c0_322, %c0_323] : memref<2x8x16xf32, #tpu.memory_space<vmem>>, vector<1x8x16xf32>
    %509 = vector.shape_cast %508 : vector<1x8x16xf32> to vector<8x16xf32>
    %c1_324 = arith.constant 1 : index
    %c0_325 = arith.constant 0 : index
    %c0_326 = arith.constant 0 : index
    %510 = vector.load %arg9[%c1_324, %c0_325, %c0_326] : memref<2x96x16xbf16, #tpu.memory_space<vmem>>, vector<1x96x16xbf16>
    %511 = vector.shape_cast %510 : vector<1x96x16xbf16> to vector<96x16xbf16>
    %c1_327 = arith.constant 1 : index
    %c0_328 = arith.constant 0 : index
    %c0_329 = arith.constant 0 : index
    %512 = vector.load %arg10[%c1_327, %c0_328, %c0_329] : memref<2x1x16xf32, #tpu.memory_space<vmem>>, vector<1x1x16xf32>
    %513 = vector.shape_cast %512 : vector<1x1x16xf32> to vector<1x16xf32>
    %c1_330 = arith.constant 1 : index
    %c0_331 = arith.constant 0 : index
    %c0_332 = arith.constant 0 : index
    %514 = vector.load %arg11[%c1_330, %c0_331, %c0_332] : memref<2x96x16xbf16, #tpu.memory_space<vmem>>, vector<1x96x16xbf16>
    %515 = vector.shape_cast %514 : vector<1x96x16xbf16> to vector<96x16xbf16>
    %c1_333 = arith.constant 1 : index
    %c0_334 = arith.constant 0 : index
    %c0_335 = arith.constant 0 : index
    %516 = vector.load %arg12[%c1_333, %c0_334, %c0_335] : memref<2x1x16xf32, #tpu.memory_space<vmem>>, vector<1x1x16xf32>
    %517 = vector.shape_cast %516 : vector<1x1x16xf32> to vector<1x16xf32>
    %c1_336 = arith.constant 1 : index
    %c0_337 = arith.constant 0 : index
    %c0_338 = arith.constant 0 : index
    %518 = vector.load %arg13[%c1_336, %c0_337, %c0_338] : memref<2x96x16xbf16, #tpu.memory_space<vmem>>, vector<1x96x16xbf16>
    %519 = vector.shape_cast %518 : vector<1x96x16xbf16> to vector<96x16xbf16>
    %c1_339 = arith.constant 1 : index
    %c0_340 = arith.constant 0 : index
    %c0_341 = arith.constant 0 : index
    %520 = vector.load %arg14[%c1_339, %c0_340, %c0_341] : memref<2x1x16xf32, #tpu.memory_space<vmem>>, vector<1x1x16xf32>
    %521 = vector.shape_cast %520 : vector<1x1x16xf32> to vector<1x16xf32>
    %522 = tpu.concatenate %504, %509 in 1 : vector<8x16xf32>, vector<8x16xf32> -> vector<8x32xf32>
    %523 = vector.shape_cast %522 : vector<8x32xf32> to vector<1x8x32xf32>
    %cst_342 = arith.constant dense<0.000000e+00> : vector<1x8x32xf32>
    %524 = tpu.matmul %5, %523, %cst_342 {dimension_numbers = #tpu.dot_dimension_numbers<[2], [1], [1], [2], [0, 0, 0, 1, 1, 2], [0], [0]>} : vector<1x8x8xf32>, vector<1x8x32xf32>, vector<1x8x32xf32> -> vector<1x8x32xf32>
    %cst_343 = arith.constant dense<0.000000e+00> : vector<1x8x32xf32>
    %525 = tpu.matmul %5, %524, %cst_343 {dimension_numbers = #tpu.dot_dimension_numbers<[2], [1], [1], [2], [0, 0, 0, 1, 1, 2], [0], [0]>} : vector<1x8x8xf32>, vector<1x8x32xf32>, vector<1x8x32xf32> -> vector<1x8x32xf32>
    %cst_344 = arith.constant 2.000000e+00 : f32
    %526 = vector.broadcast %cst_344 : f32 to vector<1x8x32xf32>
    %527 = arith.mulf %526, %525 : vector<1x8x32xf32>
    %528 = arith.subf %527, %523 : vector<1x8x32xf32>
    %529 = tpu.concatenate %523, %524, %528 in 2 : vector<1x8x32xf32>, vector<1x8x32xf32>, vector<1x8x32xf32> -> vector<1x8x96xf32>
    %530 = vector.shape_cast %529 : vector<1x8x96xf32> to vector<8x96xf32>
    %531 = arith.truncf %530 : vector<8x96xf32> to vector<8x96xbf16>
    %cst_345 = arith.constant dense<0.000000e+00> : vector<8x16xf32>
    %532 = tpu.matmul %531, %511, %cst_345 {dimension_numbers = #tpu.dot_dimension_numbers<[1], [0], [0], [1], [0, 0, 1, 1], [], []>} : vector<8x96xbf16>, vector<96x16xbf16>, vector<8x16xf32> -> vector<8x16xf32>
    %533 = vector.broadcast %513 : vector<1x16xf32> to vector<8x16xf32>
    %534 = arith.addf %532, %533 : vector<8x16xf32>
    %cst_346 = arith.constant 0.000000e+00 : f32
    %535 = vector.broadcast %cst_346 : f32 to vector<8x16xf32>
    %536 = arith.subf %535, %534 : vector<8x16xf32>
    %537 = math.exp %536 : vector<8x16xf32>
    %cst_347 = arith.constant 1.000000e+00 : f32
    %538 = vector.broadcast %cst_347 : f32 to vector<8x16xf32>
    %539 = arith.addf %538, %537 : vector<8x16xf32>
    %cst_348 = arith.constant 1.000000e+00 : f32
    %540 = vector.broadcast %cst_348 : f32 to vector<8x16xf32>
    %541 = arith.divf %540, %539 : vector<8x16xf32>
    %542 = arith.truncf %530 : vector<8x96xf32> to vector<8x96xbf16>
    %cst_349 = arith.constant dense<0.000000e+00> : vector<8x16xf32>
    %543 = tpu.matmul %542, %515, %cst_349 {dimension_numbers = #tpu.dot_dimension_numbers<[1], [0], [0], [1], [0, 0, 1, 1], [], []>} : vector<8x96xbf16>, vector<96x16xbf16>, vector<8x16xf32> -> vector<8x16xf32>
    %544 = vector.broadcast %517 : vector<1x16xf32> to vector<8x16xf32>
    %545 = arith.addf %543, %544 : vector<8x16xf32>
    %cst_350 = arith.constant 0.000000e+00 : f32
    %546 = vector.broadcast %cst_350 : f32 to vector<8x16xf32>
    %547 = arith.subf %546, %545 : vector<8x16xf32>
    %548 = math.exp %547 : vector<8x16xf32>
    %cst_351 = arith.constant 1.000000e+00 : f32
    %549 = vector.broadcast %cst_351 : f32 to vector<8x16xf32>
    %550 = arith.addf %549, %548 : vector<8x16xf32>
    %cst_352 = arith.constant 1.000000e+00 : f32
    %551 = vector.broadcast %cst_352 : f32 to vector<8x16xf32>
    %552 = arith.divf %551, %550 : vector<8x16xf32>
    %553 = arith.mulf %541, %509 : vector<8x16xf32>
    %554 = tpu.concatenate %504, %553 in 1 : vector<8x16xf32>, vector<8x16xf32> -> vector<8x32xf32>
    %555 = vector.shape_cast %554 : vector<8x32xf32> to vector<1x8x32xf32>
    %cst_353 = arith.constant dense<0.000000e+00> : vector<1x8x32xf32>
    %556 = tpu.matmul %5, %555, %cst_353 {dimension_numbers = #tpu.dot_dimension_numbers<[2], [1], [1], [2], [0, 0, 0, 1, 1, 2], [0], [0]>} : vector<1x8x8xf32>, vector<1x8x32xf32>, vector<1x8x32xf32> -> vector<1x8x32xf32>
    %cst_354 = arith.constant dense<0.000000e+00> : vector<1x8x32xf32>
    %557 = tpu.matmul %5, %556, %cst_354 {dimension_numbers = #tpu.dot_dimension_numbers<[2], [1], [1], [2], [0, 0, 0, 1, 1, 2], [0], [0]>} : vector<1x8x8xf32>, vector<1x8x32xf32>, vector<1x8x32xf32> -> vector<1x8x32xf32>
    %cst_355 = arith.constant 2.000000e+00 : f32
    %558 = vector.broadcast %cst_355 : f32 to vector<1x8x32xf32>
    %559 = arith.mulf %558, %557 : vector<1x8x32xf32>
    %560 = arith.subf %559, %555 : vector<1x8x32xf32>
    %561 = tpu.concatenate %555, %556, %560 in 2 : vector<1x8x32xf32>, vector<1x8x32xf32>, vector<1x8x32xf32> -> vector<1x8x96xf32>
    %562 = vector.shape_cast %561 : vector<1x8x96xf32> to vector<8x96xf32>
    %563 = arith.truncf %562 : vector<8x96xf32> to vector<8x96xbf16>
    %cst_356 = arith.constant dense<0.000000e+00> : vector<8x16xf32>
    %564 = tpu.matmul %563, %519, %cst_356 {dimension_numbers = #tpu.dot_dimension_numbers<[1], [0], [0], [1], [0, 0, 1, 1], [], []>} : vector<8x96xbf16>, vector<96x16xbf16>, vector<8x16xf32> -> vector<8x16xf32>
    %565 = vector.broadcast %521 : vector<1x16xf32> to vector<8x16xf32>
    %566 = arith.addf %564, %565 : vector<8x16xf32>
    %567 = math.tanh %566 : vector<8x16xf32>
    %568 = arith.mulf %552, %509 : vector<8x16xf32>
    %cst_357 = arith.constant 1.000000e+00 : f32
    %569 = vector.broadcast %cst_357 : f32 to vector<8x16xf32>
    %570 = arith.subf %569, %552 : vector<8x16xf32>
    %571 = arith.mulf %570, %567 : vector<8x16xf32>
    %572 = arith.addf %568, %571 : vector<8x16xf32>
    %c1_358 = arith.constant 1 : index
    %c0_359 = arith.constant 0 : index
    %c0_360 = arith.constant 0 : index
    %573 = vector.load %arg18[%c1_358, %c0_359, %c0_360] : memref<2x8x16xf32, #tpu.memory_space<vmem>>, vector<1x8x16xf32>
    %574 = vector.shape_cast %573 : vector<1x8x16xf32> to vector<8x16xf32>
    %575 = vector.shape_cast %572 : vector<8x16xf32> to vector<1x8x16xf32>
    tpu.vector_store %arg18[%c1_358, %c0_359, %c0_360], %575 {strides = array<i32>} : memref<2x8x16xf32, #tpu.memory_space<vmem>>, vector<1x8x16xf32>,
    %c0_361 = arith.constant 0 : index
    %c0_362 = arith.constant 0 : index
    %576 = vector.load %arg15[%c0_361, %c0_362] : memref<16x1xf32, #tpu.memory_space<vmem>>, vector<16x1xf32>
    %cst_363 = arith.constant dense<0.000000e+00> : vector<8x1xf32>
    %577 = tpu.matmul %572, %576, %cst_363 {dimension_numbers = #tpu.dot_dimension_numbers<[1], [0], [0], [1], [0, 0, 1, 1], [], []>} : vector<8x16xf32>, vector<16x1xf32>, vector<8x1xf32> -> vector<8x1xf32>
    %c0_364 = arith.constant 0 : index
    %c0_365 = arith.constant 0 : index
    %578 = vector.load %arg16[%c0_364, %c0_365] : memref<1x1xf32, #tpu.memory_space<vmem>>, vector<1x1xf32>
    %579 = vector.broadcast %578 : vector<1x1xf32> to vector<8x1xf32>
    %580 = arith.addf %577, %579 : vector<8x1xf32>
    %c0_366 = arith.constant 0 : index
    %c3 = arith.constant 3 : index
    %581 = vector.load %arg17[%c0_366, %c3] : memref<8x4xf32, #tpu.memory_space<vmem>>, vector<8x1xf32>
    tpu.vector_store %arg17[%c0_366, %c3], %580 {strides = array<i32>} : memref<8x4xf32, #tpu.memory_space<vmem>>, vector<8x1xf32>,
    %c0_367 = arith.constant 0 : index
    %c0_368 = arith.constant 0 : index
    %582 = vector.load %arg19[%c0_367, %c0_368] : memref<8x16xf32, #tpu.memory_space<vmem>>, vector<8x1xf32>
    tpu.vector_store %arg19[%c0_367, %c0_368], %580 {strides = array<i32>} : memref<8x16xf32, #tpu.memory_space<vmem>>, vector<8x1xf32>,
    return
  }
  func.func @transform_0(%arg0: i32) -> (i32, i32, i32) {
    %c0_i32 = arith.constant 0 : i32
    %c0_i32_0 = arith.constant 0 : i32
    %c0_i32_1 = arith.constant 0 : i32
    return %c0_i32, %arg0, %c0_i32_0 : i32, i32, i32
  }
  func.func @transform_1(%arg0: i32) -> (i32, i32) {
    %c0_i32 = arith.constant 0 : i32
    %c0_i32_0 = arith.constant 0 : i32
    %c0_i32_1 = arith.constant 0 : i32
    return %c0_i32, %c0_i32_0 : i32, i32
  }
  func.func @transform_2(%arg0: i32) -> (i32, i32, i32) {
    %c0_i32 = arith.constant 0 : i32
    %c0_i32_0 = arith.constant 0 : i32
    %c0_i32_1 = arith.constant 0 : i32
    %c0_i32_2 = arith.constant 0 : i32
    return %c0_i32, %c0_i32_0, %c0_i32_1 : i32, i32, i32
  }
  func.func @transform_3(%arg0: i32) -> (i32, i32, i32) {
    %c0_i32 = arith.constant 0 : i32
    %c0_i32_0 = arith.constant 0 : i32
    %c0_i32_1 = arith.constant 0 : i32
    %c0_i32_2 = arith.constant 0 : i32
    return %c0_i32, %c0_i32_0, %c0_i32_1 : i32, i32, i32
  }
  func.func @transform_4(%arg0: i32) -> (i32, i32, i32) {
    %c0_i32 = arith.constant 0 : i32
    %c0_i32_0 = arith.constant 0 : i32
    %c0_i32_1 = arith.constant 0 : i32
    %c0_i32_2 = arith.constant 0 : i32
    return %c0_i32, %c0_i32_0, %c0_i32_1 : i32, i32, i32
  }
  func.func @transform_5(%arg0: i32) -> (i32, i32, i32) {
    %c0_i32 = arith.constant 0 : i32
    %c0_i32_0 = arith.constant 0 : i32
    %c0_i32_1 = arith.constant 0 : i32
    %c0_i32_2 = arith.constant 0 : i32
    return %c0_i32, %c0_i32_0, %c0_i32_1 : i32, i32, i32
  }
  func.func @transform_6(%arg0: i32) -> (i32, i32, i32) {
    %c0_i32 = arith.constant 0 : i32
    %c0_i32_0 = arith.constant 0 : i32
    %c0_i32_1 = arith.constant 0 : i32
    %c0_i32_2 = arith.constant 0 : i32
    return %c0_i32, %c0_i32_0, %c0_i32_1 : i32, i32, i32
  }
  func.func @transform_7(%arg0: i32) -> (i32, i32, i32) {
    %c0_i32 = arith.constant 0 : i32
    %c0_i32_0 = arith.constant 0 : i32
    %c0_i32_1 = arith.constant 0 : i32
    %c0_i32_2 = arith.constant 0 : i32
    return %c0_i32, %c0_i32_0, %c0_i32_1 : i32, i32, i32
  }
  func.func @transform_8(%arg0: i32) -> (i32, i32, i32) {
    %c0_i32 = arith.constant 0 : i32
    %c0_i32_0 = arith.constant 0 : i32
    %c0_i32_1 = arith.constant 0 : i32
    %c0_i32_2 = arith.constant 0 : i32
    return %c0_i32, %c0_i32_0, %c0_i32_1 : i32, i32, i32
  }
  func.func @transform_9(%arg0: i32) -> (i32, i32, i32) {
    %c0_i32 = arith.constant 0 : i32
    %c0_i32_0 = arith.constant 0 : i32
    %c0_i32_1 = arith.constant 0 : i32
    %c0_i32_2 = arith.constant 0 : i32
    return %c0_i32, %c0_i32_0, %c0_i32_1 : i32, i32, i32
  }
  func.func @transform_10(%arg0: i32) -> (i32, i32, i32) {
    %c0_i32 = arith.constant 0 : i32
    %c0_i32_0 = arith.constant 0 : i32
    %c0_i32_1 = arith.constant 0 : i32
    %c0_i32_2 = arith.constant 0 : i32
    return %c0_i32, %c0_i32_0, %c0_i32_1 : i32, i32, i32
  }
  func.func @transform_11(%arg0: i32) -> (i32, i32, i32) {
    %c0_i32 = arith.constant 0 : i32
    %c0_i32_0 = arith.constant 0 : i32
    %c0_i32_1 = arith.constant 0 : i32
    %c0_i32_2 = arith.constant 0 : i32
    return %c0_i32, %c0_i32_0, %c0_i32_1 : i32, i32, i32
  }
  func.func @transform_12(%arg0: i32) -> (i32, i32, i32) {
    %c0_i32 = arith.constant 0 : i32
    %c0_i32_0 = arith.constant 0 : i32
    %c0_i32_1 = arith.constant 0 : i32
    %c0_i32_2 = arith.constant 0 : i32
    return %c0_i32, %c0_i32_0, %c0_i32_1 : i32, i32, i32
  }
  func.func @transform_13(%arg0: i32) -> (i32, i32, i32) {
    %c0_i32 = arith.constant 0 : i32
    %c0_i32_0 = arith.constant 0 : i32
    %c0_i32_1 = arith.constant 0 : i32
    %c0_i32_2 = arith.constant 0 : i32
    return %c0_i32, %c0_i32_0, %c0_i32_1 : i32, i32, i32
  }
  func.func @transform_14(%arg0: i32) -> (i32, i32) {
    %c0_i32 = arith.constant 0 : i32
    %c0_i32_0 = arith.constant 0 : i32
    %c0_i32_1 = arith.constant 0 : i32
    return %c0_i32, %c0_i32_0 : i32, i32
  }
  func.func @transform_15(%arg0: i32) -> (i32, i32) {
    %c0_i32 = arith.constant 0 : i32
    %c0_i32_0 = arith.constant 0 : i32
    %c0_i32_1 = arith.constant 0 : i32
    return %c0_i32, %c0_i32_0 : i32, i32
  }
  func.func @transform_16(%arg0: i32) -> (i32, i32) {
    %c0_i32 = arith.constant 0 : i32
    %c0_i32_0 = arith.constant 0 : i32
    return %arg0, %c0_i32 : i32, i32
  }
}

</mosaic_0001>

<llo_original>
// kernel: lscgf_forward.2
$region0: #{lscgf_forward.2}
  #allocation0 [shape = 'u32[]', space=smem, size = 0x4, offset = 0x4, fixed_abs, tag = 'smem constant byte address 0x4 - core index']
  #allocation1 [shape = 'u32[72,128]{1,0:T(1,128)}', space=vmem, size = 0x9000, scoped, tag = 'internal scratch']
  %s0 = inlined_call_operand.vmem [shape: f32[3,8,4], index: 0, kind: input, shape index: {}]
  %s1 = inlined_call_operand.vmem [shape: f32[4,16], index: 1, kind: input, shape index: {}]
  %s2 = inlined_call_operand.vmem [shape: f32[1,16], index: 2, kind: input, shape index: {}]
  %s3 = inlined_call_operand.vmem [shape: f32[16,8], index: 3, kind: input, shape index: {}]
  %s4 = inlined_call_operand.vmem [shape: f32[1,8], index: 4, kind: input, shape index: {}]
  %s5 = inlined_call_operand.vmem [shape: f32[8,16], index: 5, kind: input, shape index: {}]
  %s6 = inlined_call_operand.vmem [shape: f32[8,8], index: 6, kind: output, shape index: {}]
  %s7 = sld [smem:[#allocation0]]
  $region34: #{lscgf_forward.2} parent=0
    _
  %s9 = ssub.s32 1, %s7
  %s10 = scalar_select 0, %s9, %s7
  // Predicated region
  $region2: #{lscgf_forward.2} parent=0 // pred_check
    _
  $region3: #{lscgf_forward.2} parent=0 // pred_check_branch
    %12 = sbr.rel (0) target = $region5
  $region4: #{lscgf_forward.2} parent=0 // pred_region
    _
  $region5: #{lscgf_forward.2} parent=0 // pred_fallthru
    _
  // Predicated region
  $region6: #{lscgf_forward.2} parent=0 // pred_check
    _
  $region7: #{lscgf_forward.2} parent=0 // pred_check_branch
    %14 = sbr.rel (0) target = $region9
  $region8: #{lscgf_forward.2} parent=0 // pred_region
    _
  $region9: #{lscgf_forward.2} parent=0 // pred_fallthru
    _
  // Predicated region
  $region10: #{lscgf_forward.2} parent=0 // pred_check
    _
  $region11: #{lscgf_forward.2} parent=0 // pred_check_branch
    %16 = sbr.rel (0) target = $region13
  $region12: #{lscgf_forward.2} parent=0 // pred_region
    _
  $region13: #{lscgf_forward.2} parent=0 // pred_fallthru
    _
  // Predicated region
  $region14: #{lscgf_forward.2} parent=0 // pred_check
    _
  $region15: #{lscgf_forward.2} parent=0 // pred_check_branch
    %18 = sbr.rel (0) target = $region17
  $region16: #{lscgf_forward.2} parent=0 // pred_region
    _
  $region17: #{lscgf_forward.2} parent=0 // pred_fallthru
    _
  // Predicated region
  $region18: #{lscgf_forward.2} parent=0 // pred_check
    _
  $region19: #{lscgf_forward.2} parent=0 // pred_check_branch
    %20 = sbr.rel (0) target = $region21
  $region20: #{lscgf_forward.2} parent=0 // pred_region
    _
  $region21: #{lscgf_forward.2} parent=0 // pred_fallthru
    _
  // Predicated region
  $region22: #{lscgf_forward.2} parent=0 // pred_check
    _
  $region23: #{lscgf_forward.2} parent=0 // pred_check_branch
    %22 = sbr.rel (0) target = $region25
  $region24: #{lscgf_forward.2} parent=0 // pred_region
    _
  $region25: #{lscgf_forward.2} parent=0 // pred_fallthru
    _
  %v23 = vld [vmem:[%s5] sm:$0xff]
  %vm24 = vcmask 130048
  %v26 = vsel %vm24, %v23, 0
  %28 = vmatpush.xpose.msra.mxu0 0.0
  %29 = vmatpush.xpose.msra.mxu0 0.0
  %30 = vmatpush.xpose.msra.mxu0 0.0
  %31 = vmatpush.xpose.msra.mxu0 0.0
  %32 = vmatpush.xpose.msra.mxu0 0.0
  %33 = vmatpush.xpose.msra.mxu0 0.0
  %34 = vmatpush.xpose.msra.mxu0 0.0
  %35 = vmatpush.xpose.msra.mxu0 0.0
  %36 = vmatpush.xpose.msra.mxu0 0.0
  %37 = vmatpush.xpose.msra.mxu0 0.0
  %38 = vmatpush.xpose.msra.mxu0 0.0
  %39 = vmatpush.xpose.msra.mxu0 0.0
  %40 = vmatpush.xpose.msra.mxu0 0.0
  %41 = vmatpush.xpose.msra.mxu0 0.0
  %42 = vmatpush.xpose.msra.mxu0 0.0
  %43 = vmatpush.xpose.msra.mxu0 %v26
  %44 = vmatmul.f32.gmra.mxu0 %v26
  %v45 = vpop.f32.mrf.mxu0
  %v46 = vadd.f32 0.0, %v45
  %47 = vdwg.mxu0
  %v48 = vmul.f32 %v46, %v46
  %vm49 = vcmask 64512
  %v50 = vsel %vm49, %v48, 0.0
  %51 = vadd.xlane.f32.xlu0 %v50
  %v52 = vpop.xlane.xlu0 %51
  %v53 = vrot.slane %v52, 4
  %v54 = vadd.f32 %v52, %v53
  %v55 = vrot.slane %v54, 2
  %v56 = vadd.f32 %v54, %v55
  %v57 = vrot.slane %v56, 1
  %v58 = vadd.f32 %v56, %v57
  %s59 = vtos %v58
  %v60 = vstv %s59
  %v61 = vrsqrt.pop %v60
  %v62 = vmul.f32 %v61, %v60
  %v63 = vmul.f32 %v62, %v61
  %v64 = vmul.f32 0.5, %v63
  %v65 = vsub.f32 1.5, %v64
  %v66 = vmul.f32 %v61, %v65
  %v67 = vmul.f32 %v60, %v66
  %vm68 = vcmp.eq.f32.partialorder %v60, inf
  %v69 = vsel %vm68, %v60, %v67
  %vm70 = vcmp.eq.f32.partialorder %v60, 0.0
  %v71 = vand.u32 %v60, 2147483648
  %v72 = vsel %vm70, %v71, %v69
  %s73 = vtos %v72
  %v74 = vld [vmem:[%s1] sm:$0xf]
  %v75 = vld [vmem:[%s2] sm:$0x1]
  %v76 = vld [vmem:[%s3] sm:$0xff]
  %v77 = vld [vmem:[%s3 + $0x8] sm:$0xff]
  %v78 = vld [vmem:[%s4] sm:$0x1]
  %v79 = vld [vmem:[%s0] sm:$0xff]
  %v81 = vperm.slane %v75, 0
  %vm83 = vcmask 31744
  %v85 = vsel %vm83, %v79, 0
  %vm87 = vcmask 1043456
  %v89 = vsel %vm87, %v74, 0
  %91 = vmatpush.msra.mxu0 0.0
  %92 = vmatpush.msra.mxu0 0.0
  %93 = vmatpush.msra.mxu0 0.0
  %94 = vmatpush.msra.mxu0 0.0
  %95 = vmatpush.msra.mxu0 0.0
  %96 = vmatpush.msra.mxu0 0.0
  %97 = vmatpush.msra.mxu0 0.0
  %98 = vmatpush.msra.mxu0 0.0
  %99 = vmatpush.msra.mxu0 0.0
  %100 = vmatpush.msra.mxu0 0.0
  %101 = vmatpush.msra.mxu0 0.0
  %102 = vmatpush.msra.mxu0 0.0
  %103 = vmatpush.msra.mxu0 0.0
  %104 = vmatpush.msra.mxu0 0.0
  %105 = vmatpush.msra.mxu0 0.0
  %106 = vmatpush.msra.mxu0 %v89
  %107 = vmatmul.f32.gmra.mxu0 %v85
  %v108 = vpop.f32.mrf.mxu0
  %v109 = vadd.f32 %v81, %v108
  %110 = vdwg.mxu0
  %v111 = vmax.f32 %v109, 0.0
  %v113 = vperm.slane %v78, 0
  %v116 = vsel %vm24, %v111, 0
  %118 = vmatpush.msra.mxu0 0.0
  %119 = vmatpush.msra.mxu0 0.0
  %120 = vmatpush.msra.mxu0 0.0
  %121 = vmatpush.msra.mxu0 0.0
  %122 = vmatpush.msra.mxu0 0.0
  %123 = vmatpush.msra.mxu0 0.0
  %124 = vmatpush.msra.mxu0 0.0
  %125 = vmatpush.msra.mxu0 0.0
  %126 = vmatpush.msra.mxu0 0.0
  %127 = vmatpush.msra.mxu0 0.0
  %128 = vmatpush.msra.mxu0 0.0
  %129 = vmatpush.msra.mxu0 0.0
  %130 = vmatpush.msra.mxu0 0.0
  %131 = vmatpush.msra.mxu0 0.0
  %132 = vmatpush.msra.mxu0 %v77
  %133 = vmatpush.msra.mxu0 %v76
  %134 = vmatmul.f32.gmra.mxu0 %v116
  %v135 = vpop.f32.mrf.mxu0
  %v136 = vadd.f32 %v113, %v135
  %137 = vdwg.mxu0
  %v138 = vsub.f32 0.0, %v136
  %v139 = vmul.f32 %v138, 1.442695
  %v140 = vpow.pop %v139
  %v141 = vadd.f32 %v140, 1.0
  %v142 = vrcp.pop %v141
  %v143 = vmul.f32 %v141, %v142
  %v144 = vsub.f32 1.0, %v143
  %v145 = vmul.f32 %v142, %v144
  %v146 = vadd.f32 %v142, %v145
  %vm147 = vweird.f32 %v141
  %vm148 = vweird.f32 %v142
  %vm149 = vmor %vm147, %vm148
  %v150 = vsel %vm149, %v142, %v146
  %v151 = vand.u32 2147483647, %v141
  %vm152 = vcmp.eq.f32.partialorder %v151, 8.507059e+37
  %v153 = vand.u32 %v141, 2147483648
  %v154 = vor.u32 1.1754944e-38, %v153
  %v155 = vsel %vm152, %v154, %v150
  %v156 = vmul.f32 1.0, %v155
  %v157 = vmul.f32 %v46, %v156
  %v158 = vsel %vm49, %v157, 0.0
  %159 = vadd.xlane.f32.xlu0 %v158
  %v160 = vpop.xlane.xlu0 %159
  %v161 = vrot.slane %v160, 4
  %v162 = vadd.f32 %v160, %v161
  %v163 = vrot.slane %v162, 2
  %v164 = vadd.f32 %v162, %v163
  %v165 = vrot.slane %v164, 1
  %v166 = vadd.f32 %v164, %v165
  %s167 = vtos %v166
  %v168 = vmul.f32 %v156, %v156
  %v169 = vsel %vm49, %v168, 0.0
  %170 = vadd.xlane.f32.xlu0 %v169
  %v171 = vpop.xlane.xlu0 %170
  %v172 = vrot.slane %v171, 4
  %v173 = vadd.f32 %v171, %v172
  %v174 = vrot.slane %v173, 2
  %v175 = vadd.f32 %v173, %v174
  %v176 = vrot.slane %v175, 1
  %v177 = vadd.f32 %v175, %v176
  %s178 = vtos %v177
  %v179 = vstv %s178
  %v180 = vrsqrt.pop %v179
  %v181 = vmul.f32 %v180, %v179
  %v182 = vmul.f32 %v181, %v180
  %v183 = vmul.f32 0.5, %v182
  %v184 = vsub.f32 1.5, %v183
  %v185 = vmul.f32 %v180, %v184
  %v186 = vmul.f32 %v179, %v185
  %vm187 = vcmp.eq.f32.partialorder %v179, inf
  %v188 = vsel %vm187, %v179, %v186
  %vm189 = vcmp.eq.f32.partialorder %v179, 0.0
  %v190 = vand.u32 %v179, 2147483648
  %v191 = vsel %vm189, %v190, %v188
  %s192 = vtos %v191
  %s193 = smul.f32 %s73, %s192
  %s194 = smax.f32 %s193, 1e-20
  %v195 = vstv %s194
  %v196 = vrcp.pop %v195
  %v197 = vmul.f32 %v195, %v196
  %v198 = vsub.f32 1.0, %v197
  %v199 = vmul.f32 %v196, %v198
  %v200 = vadd.f32 %v196, %v199
  %vm201 = vweird.f32 %v195
  %vm202 = vweird.f32 %v196
  %vm203 = vmor %vm201, %vm202
  %v204 = vsel %vm203, %v196, %v200
  %v205 = vand.u32 2147483647, %v195
  %vm206 = vcmp.eq.f32.partialorder %v205, 8.507059e+37
  %v207 = vand.u32 %v195, 2147483648
  %v208 = vor.u32 1.1754944e-38, %v207
  %v209 = vsel %vm206, %v208, %v204
  %s210 = vtos %v209
  %s211 = smul.f32 %s167, %s210
  %p212 = scmp.gt.f32.partialorder %s211, -1e+08
  %s213 = scalar_select %p212, 1, 0
  %s214 = scvt.s32.f32 %s213
  %s215 = smul.f32 %s214, %s211
  %s216 = ssub.f32 1.0, %s214
  %s217 = smul.f32 %s216, -1e+08
  %s218 = sadd.f32 %s215, %s217
  %v219 = vstv %s214
  %v220 = vmul.f32 %v219, %v156
  %v221 = vstv %s216
  %v222 = vmul.f32 %v221, 0.0
  %v223 = vadd.f32 %v220, %v222
  %s224 = scalar_lea.vmem %s0, 8
  %v225 = vld [vmem:[%s224] sm:$0xff]
  %v227 = vsel %vm83, %v225, 0
  %229 = vmatpush.msra.mxu0 0.0
  %230 = vmatpush.msra.mxu0 0.0
  %231 = vmatpush.msra.mxu0 0.0
  %232 = vmatpush.msra.mxu0 0.0
  %233 = vmatpush.msra.mxu0 0.0
  %234 = vmatpush.msra.mxu0 0.0
  %235 = vmatpush.msra.mxu0 0.0
  %236 = vmatpush.msra.mxu0 0.0
  %237 = vmatpush.msra.mxu0 0.0
  %238 = vmatpush.msra.mxu0 0.0
  %239 = vmatpush.msra.mxu0 0.0
  %240 = vmatpush.msra.mxu0 0.0
  %241 = vmatpush.msra.mxu0 0.0
  %242 = vmatpush.msra.mxu0 0.0
  %243 = vmatpush.msra.mxu0 0.0
  %244 = vmatpush.msra.mxu0 %v89
  %245 = vmatmul.f32.gmra.mxu0 %v227
  %v246 = vpop.f32.mrf.mxu0
  %v247 = vadd.f32 %v81, %v246
  %248 = vdwg.mxu0
  %v249 = vmax.f32 %v247, 0.0
  %v251 = vsel %vm24, %v249, 0
  %253 = vmatpush.msra.mxu0 0.0
  %254 = vmatpush.msra.mxu0 0.0
  %255 = vmatpush.msra.mxu0 0.0
  %256 = vmatpush.msra.mxu0 0.0
  %257 = vmatpush.msra.mxu0 0.0
  %258 = vmatpush.msra.mxu0 0.0
  %259 = vmatpush.msra.mxu0 0.0
  %260 = vmatpush.msra.mxu0 0.0
  %261 = vmatpush.msra.mxu0 0.0
  %262 = vmatpush.msra.mxu0 0.0
  %263 = vmatpush.msra.mxu0 0.0
  %264 = vmatpush.msra.mxu0 0.0
  %265 = vmatpush.msra.mxu0 0.0
  %266 = vmatpush.msra.mxu0 0.0
  %267 = vmatpush.msra.mxu0 %v77
  %268 = vmatpush.msra.mxu0 %v76
  %269 = vmatmul.f32.gmra.mxu0 %v251
  %v270 = vpop.f32.mrf.mxu0
  %v271 = vadd.f32 %v113, %v270
  %272 = vdwg.mxu0
  %v273 = vsub.f32 0.0, %v271
  %v274 = vmul.f32 %v273, 1.442695
  %v275 = vpow.pop %v274
  %v276 = vadd.f32 %v275, 1.0
  %v277 = vrcp.pop %v276
  %v278 = vmul.f32 %v276, %v277
  %v279 = vsub.f32 1.0, %v278
  %v280 = vmul.f32 %v277, %v279
  %v281 = vadd.f32 %v277, %v280
  %vm282 = vweird.f32 %v276
  %vm283 = vweird.f32 %v277
  %vm284 = vmor %vm282, %vm283
  %v285 = vsel %vm284, %v277, %v281
  %v286 = vand.u32 2147483647, %v276
  %vm287 = vcmp.eq.f32.partialorder %v286, 8.507059e+37
  %v288 = vand.u32 %v276, 2147483648
  %v289 = vor.u32 1.1754944e-38, %v288
  %v290 = vsel %vm287, %v289, %v285
  %v291 = vmul.f32 1.0, %v290
  %v292 = vmul.f32 %v46, %v291
  %v293 = vsel %vm49, %v292, 0.0
  %294 = vadd.xlane.f32.xlu0 %v293
  %v295 = vpop.xlane.xlu0 %294
  %v296 = vrot.slane %v295, 4
  %v297 = vadd.f32 %v295, %v296
  %v298 = vrot.slane %v297, 2
  %v299 = vadd.f32 %v297, %v298
  %v300 = vrot.slane %v299, 1
  %v301 = vadd.f32 %v299, %v300
  %s302 = vtos %v301
  %v303 = vmul.f32 %v291, %v291
  %v304 = vsel %vm49, %v303, 0.0
  %305 = vadd.xlane.f32.xlu0 %v304
  %v306 = vpop.xlane.xlu0 %305
  %v307 = vrot.slane %v306, 4
  %v308 = vadd.f32 %v306, %v307
  %v309 = vrot.slane %v308, 2
  %v310 = vadd.f32 %v308, %v309
  %v311 = vrot.slane %v310, 1
  %v312 = vadd.f32 %v310, %v311
  %s313 = vtos %v312
  %v314 = vstv %s313
  %v315 = vrsqrt.pop %v314
  %v316 = vmul.f32 %v315, %v314
  %v317 = vmul.f32 %v316, %v315
  %v318 = vmul.f32 0.5, %v317
  %v319 = vsub.f32 1.5, %v318
  %v320 = vmul.f32 %v315, %v319
  %v321 = vmul.f32 %v314, %v320
  %vm322 = vcmp.eq.f32.partialorder %v314, inf
  %v323 = vsel %vm322, %v314, %v321
  %vm324 = vcmp.eq.f32.partialorder %v314, 0.0
  %v325 = vand.u32 %v314, 2147483648
  %v326 = vsel %vm324, %v325, %v323
  %s327 = vtos %v326
  %s328 = smul.f32 %s73, %s327
  %s329 = smax.f32 %s328, 1e-20
  %v330 = vstv %s329
  %v331 = vrcp.pop %v330
  %v332 = vmul.f32 %v330, %v331
  %v333 = vsub.f32 1.0, %v332
  %v334 = vmul.f32 %v331, %v333
  %v335 = vadd.f32 %v331, %v334
  %vm336 = vweird.f32 %v330
  %vm337 = vweird.f32 %v331
  %vm338 = vmor %vm336, %vm337
  %v339 = vsel %vm338, %v331, %v335
  %v340 = vand.u32 2147483647, %v330
  %vm341 = vcmp.eq.f32.partialorder %v340, 8.507059e+37
  %v342 = vand.u32 %v330, 2147483648
  %v343 = vor.u32 1.1754944e-38, %v342
  %v344 = vsel %vm341, %v343, %v339
  %s345 = vtos %v344
  %s346 = smul.f32 %s302, %s345
  %p347 = scmp.gt.f32.partialorder %s346, %s218
  %s348 = scalar_select %p347, 1, 0
  %s349 = scvt.s32.f32 %s348
  %s350 = smul.f32 %s349, %s346
  %s351 = ssub.f32 1.0, %s349
  %s352 = smul.f32 %s351, %s218
  %s353 = sadd.f32 %s350, %s352
  %v354 = vstv %s349
  %v355 = vmul.f32 %v354, %v291
  %v356 = vstv %s351
  %v357 = vmul.f32 %v356, %v223
  %v358 = vadd.f32 %v355, %v357
  %s359 = scalar_lea.vmem %s0, 16
  %v360 = vld [vmem:[%s359] sm:$0xff]
  %v362 = vsel %vm83, %v360, 0
  %364 = vmatpush.msra.mxu0 0.0
  %365 = vmatpush.msra.mxu0 0.0
  %366 = vmatpush.msra.mxu0 0.0
  %367 = vmatpush.msra.mxu0 0.0
  %368 = vmatpush.msra.mxu0 0.0
  %369 = vmatpush.msra.mxu0 0.0
  %370 = vmatpush.msra.mxu0 0.0
  %371 = vmatpush.msra.mxu0 0.0
  %372 = vmatpush.msra.mxu0 0.0
  %373 = vmatpush.msra.mxu0 0.0
  %374 = vmatpush.msra.mxu0 0.0
  %375 = vmatpush.msra.mxu0 0.0
  %376 = vmatpush.msra.mxu0 0.0
  %377 = vmatpush.msra.mxu0 0.0
  %378 = vmatpush.msra.mxu0 0.0
  %379 = vmatpush.msra.mxu0 %v89
  %380 = vmatmul.f32.gmra.mxu0 %v362
  %v381 = vpop.f32.mrf.mxu0
  %v382 = vadd.f32 %v81, %v381
  %383 = vdwg.mxu0
  %v384 = vmax.f32 %v382, 0.0
  %v386 = vsel %vm24, %v384, 0
  %388 = vmatpush.msra.mxu0 0.0
  %389 = vmatpush.msra.mxu0 0.0
  %390 = vmatpush.msra.mxu0 0.0
  %391 = vmatpush.msra.mxu0 0.0
  %392 = vmatpush.msra.mxu0 0.0
  %393 = vmatpush.msra.mxu0 0.0
  %394 = vmatpush.msra.mxu0 0.0
  %395 = vmatpush.msra.mxu0 0.0
  %396 = vmatpush.msra.mxu0 0.0
  %397 = vmatpush.msra.mxu0 0.0
  %398 = vmatpush.msra.mxu0 0.0
  %399 = vmatpush.msra.mxu0 0.0
  %400 = vmatpush.msra.mxu0 0.0
  %401 = vmatpush.msra.mxu0 0.0
  %402 = vmatpush.msra.mxu0 %v77
  %403 = vmatpush.msra.mxu0 %v76
  %404 = vmatmul.f32.gmra.mxu0 %v386
  %v405 = vpop.f32.mrf.mxu0
  %v406 = vadd.f32 %v113, %v405
  %407 = vdwg.mxu0
  %v408 = vsub.f32 0.0, %v406
  %v409 = vmul.f32 %v408, 1.442695
  %v410 = vpow.pop %v409
  %v411 = vadd.f32 %v410, 1.0
  %v412 = vrcp.pop %v411
  %v413 = vmul.f32 %v411, %v412
  %v414 = vsub.f32 1.0, %v413
  %v415 = vmul.f32 %v412, %v414
  %v416 = vadd.f32 %v412, %v415
  %vm417 = vweird.f32 %v411
  %vm418 = vweird.f32 %v412
  %vm419 = vmor %vm417, %vm418
  %v420 = vsel %vm419, %v412, %v416
  %v421 = vand.u32 2147483647, %v411
  %vm422 = vcmp.eq.f32.partialorder %v421, 8.507059e+37
  %v423 = vand.u32 %v411, 2147483648
  %v424 = vor.u32 1.1754944e-38, %v423
  %v425 = vsel %vm422, %v424, %v420
  %v426 = vmul.f32 1.0, %v425
  %v427 = vmul.f32 %v46, %v426
  %v428 = vsel %vm49, %v427, 0.0
  %429 = vadd.xlane.f32.xlu0 %v428
  %v430 = vpop.xlane.xlu0 %429
  %v431 = vrot.slane %v430, 4
  %v432 = vadd.f32 %v430, %v431
  %v433 = vrot.slane %v432, 2
  %v434 = vadd.f32 %v432, %v433
  %v435 = vrot.slane %v434, 1
  %v436 = vadd.f32 %v434, %v435
  %s437 = vtos %v436
  %v438 = vmul.f32 %v426, %v426
  %v439 = vsel %vm49, %v438, 0.0
  %440 = vadd.xlane.f32.xlu0 %v439
  %v441 = vpop.xlane.xlu0 %440
  %v442 = vrot.slane %v441, 4
  %v443 = vadd.f32 %v441, %v442
  %v444 = vrot.slane %v443, 2
  %v445 = vadd.f32 %v443, %v444
  %v446 = vrot.slane %v445, 1
  %v447 = vadd.f32 %v445, %v446
  %s448 = vtos %v447
  %v449 = vstv %s448
  %v450 = vrsqrt.pop %v449
  %v451 = vmul.f32 %v450, %v449
  %v452 = vmul.f32 %v451, %v450
  %v453 = vmul.f32 0.5, %v452
  %v454 = vsub.f32 1.5, %v453
  %v455 = vmul.f32 %v450, %v454
  %v456 = vmul.f32 %v449, %v455
  %vm457 = vcmp.eq.f32.partialorder %v449, inf
  %v458 = vsel %vm457, %v449, %v456
  %vm459 = vcmp.eq.f32.partialorder %v449, 0.0
  %v460 = vand.u32 %v449, 2147483648
  %v461 = vsel %vm459, %v460, %v458
  %s462 = vtos %v461
  %s463 = smul.f32 %s73, %s462
  %s464 = smax.f32 %s463, 1e-20
  %v465 = vstv %s464
  %v466 = vrcp.pop %v465
  %v467 = vmul.f32 %v465, %v466
  %v468 = vsub.f32 1.0, %v467
  %v469 = vmul.f32 %v466, %v468
  %v470 = vadd.f32 %v466, %v469
  %vm471 = vweird.f32 %v465
  %vm472 = vweird.f32 %v466
  %vm473 = vmor %vm471, %vm472
  %v474 = vsel %vm473, %v466, %v470
  %v475 = vand.u32 2147483647, %v465
  %vm476 = vcmp.eq.f32.partialorder %v475, 8.507059e+37
  %v477 = vand.u32 %v465, 2147483648
  %v478 = vor.u32 1.1754944e-38, %v477
  %v479 = vsel %vm476, %v478, %v474
  %s480 = vtos %v479
  %s481 = smul.f32 %s437, %s480
  %p482 = scmp.gt.f32.partialorder %s481, %s353
  %s483 = scalar_select %p482, 1, 0
  %s484 = scvt.s32.f32 %s483
  %v485 = vstv %s484
  %v486 = vmul.f32 %v485, %v426
  %s487 = ssub.f32 1.0, %s484
  %v488 = vstv %s487
  %v489 = vmul.f32 %v488, %v358
  %v490 = vadd.f32 %v486, %v489
  %v491 = vmul.f32 %v490, %v490
  %vm492 = vcmp.gt.f32.partialorder %v490, 0.0
  %v493 = vadd.f32 %v491, 0.1
  %v494 = vrcp.pop %v493
  %v495 = vmul.f32 %v493, %v494
  %v496 = vsub.f32 1.0, %v495
  %v497 = vmul.f32 %v494, %v496
  %v498 = vadd.f32 %v494, %v497
  %vm499 = vweird.f32 %v493
  %vm500 = vweird.f32 %v494
  %vm501 = vmor %vm499, %vm500
  %v502 = vsel %vm501, %v494, %v498
  %v503 = vand.u32 2147483647, %v493
  %vm504 = vcmp.eq.f32.partialorder %v503, 8.507059e+37
  %v505 = vand.u32 %v493, 2147483648
  %v506 = vor.u32 1.1754944e-38, %v505
  %v507 = vsel %vm504, %v506, %v502
  %v508 = vmul.f32 %v491, %v507
  %v509 = vsel %vm492, %v508, 0.0
  %510 = vst.msk [vmem:[%s6] sm:$0xff] %vm49, %v509
  // Predicated region
  $region26: #{lscgf_forward.2} parent=0 // pred_check
    _
  $region27: #{lscgf_forward.2} parent=0 // pred_check_branch
    %512 = sbr.rel (0) target = $region29
  $region28: #{lscgf_forward.2} parent=0 // pred_region
    _
  $region29: #{lscgf_forward.2} parent=0 // pred_fallthru
    _
  // Predicated region
  $region30: #{lscgf_forward.2} parent=0 // pred_check
    _
  $region31: #{lscgf_forward.2} parent=0 // pred_check_branch
    %514 = sbr.rel (0) target = $region33
  $region32: #{lscgf_forward.2} parent=0 // pred_region
    _
  $region33: #{lscgf_forward.2} parent=0 // pred_fallthru
    _

// kernel: lscgf_forward.3
$region0: #{lscgf_forward.3}
  #allocation0 [shape = 'u32[]', space=smem, size = 0x4, offset = 0x4, fixed_abs, tag = 'smem constant byte address 0x4 - core index']
  #allocation1 [shape = 'u32[72,128]{1,0:T(1,128)}', space=vmem, size = 0x9000, scoped, tag = 'internal scratch']
  #allocation2 [shape = 'f32[2,8,16]{2,1,0:T(8,128)}', space=vmem, size = 0x2000, scoped, tag = 'scratch operand']
  #allocation3 [shape = 'f32[8,16]{1,0:T(8,128)}', space=vmem, size = 0x1000, scoped, tag = 'scratch operand']
  #allocation4 [shape = 'f32[1,1]{1,0:T(1,128)S(1)}', space=vmem, size = 0x200, scoped, tag = 'scoped memory for lscgf_forward.3']
  %s0 = inlined_call_operand.vmem [shape: f32[8,16,16], index: 0, kind: input, shape index: {}]
  %s1 = inlined_call_operand.vmem [shape: f32[8,8], index: 1, kind: input, shape index: {}]
  %s2 = inlined_call_operand.vmem [shape: bf16[2,96,16], index: 2, kind: input, shape index: {}]
  %s3 = inlined_call_operand.vmem [shape: f32[2,1,16], index: 3, kind: input, shape index: {}]
  %s4 = inlined_call_operand.vmem [shape: bf16[2,96,16], index: 4, kind: input, shape index: {}]
  %s5 = inlined_call_operand.vmem [shape: f32[2,1,16], index: 5, kind: input, shape index: {}]
  %s6 = inlined_call_operand.vmem [shape: bf16[2,96,16], index: 6, kind: input, shape index: {}]
  %s7 = inlined_call_operand.vmem [shape: f32[2,1,16], index: 7, kind: input, shape index: {}]
  %s8 = inlined_call_operand.vmem [shape: bf16[2,96,16], index: 8, kind: input, shape index: {}]
  %s9 = inlined_call_operand.vmem [shape: f32[2,1,16], index: 9, kind: input, shape index: {}]
  %s10 = inlined_call_operand.vmem [shape: bf16[2,96,16], index: 10, kind: input, shape index: {}]
  %s11 = inlined_call_operand.vmem [shape: f32[2,1,16], index: 11, kind: input, shape index: {}]
  %s12 = inlined_call_operand.vmem [shape: bf16[2,96,16], index: 12, kind: input, shape index: {}]
  %s13 = inlined_call_operand.vmem [shape: f32[2,1,16], index: 13, kind: input, shape index: {}]
  %s14 = inlined_call_operand.vmem [shape: f32[16,1], index: 14, kind: input, shape index: {}]
  %s15 = inlined_call_operand.<no memory space> [shape: f32[1,1], index: 15, kind: input, shape index: {}]
  %s16 = inlined_call_operand.vmem [shape: f32[16,4], index: 16, kind: output, shape index: {}]
  %s17 = sld [smem:[#allocation0]]
  $region142: #{lscgf_forward.3} parent=0
    _
  %s19 = ssub.s32 1, %s17
  %s20 = scalar_select 0, %s19, %s17
  %v21 = vstv %s15
  %22 = vst [vmem:[#allocation4] sm:$0x1] %v21
  $region1: #{lscgf_forward.3} parent=0
    #allocation5 [shape = 'u8[65536]{0}', space=vmem, size = 0x10000, scoped, tag = 'input window, operand 0']
    loop: start=0, step=1, limit=4
    $region2: #{lscgf_forward.3} parent=1 // loop_pre_header
      _
    $region3: #{lscgf_forward.3} parent=1 // loop_header
      %s24 = sphi 0, %s28
      %p25 = scmp.ge.s32.totalorder %s24, 4
      %s34 = sphi 0, %s36
      %s37 = sphi 0, %s34
      %s38 = sphi 0, %s37
      %s54 = sphi 0, %s38
      %s58 = sphi 0, %s58
      %s60 = sphi 0, %s58
      %s61 = sphi 0, %s60
      %s75 = sphi 0, %s61
      %s79 = sphi 0, %s79
      %s81 = sphi 0, %s79
      %s82 = sphi 0, %s81
      %s96 = sphi 0, %s82
      %s100 = sphi 0, %s100
      %s102 = sphi 0, %s100
      %s103 = sphi 0, %s102
      %s117 = sphi 0, %s103
      %s121 = sphi 0, %s121
      %s123 = sphi 0, %s121
      %s124 = sphi 0, %s123
      %s138 = sphi 0, %s124
      %s142 = sphi 0, %s142
      %s144 = sphi 0, %s142
      %s145 = sphi 0, %s144
      %s159 = sphi 0, %s145
      %s163 = sphi 0, %s163
      %s165 = sphi 0, %s163
      %s166 = sphi 0, %s165
      %s180 = sphi 0, %s166
      %s184 = sphi 0, %s184
      %s186 = sphi 0, %s184
      %s187 = sphi 0, %s186
      %s201 = sphi 0, %s187
      %s205 = sphi 0, %s205
      %s207 = sphi 0, %s205
      %s208 = sphi 0, %s207
      %s222 = sphi 0, %s208
      %s226 = sphi 0, %s226
      %s228 = sphi 0, %s226
      %s229 = sphi 0, %s228
      %s243 = sphi 0, %s229
      %s247 = sphi 0, %s247
      %s249 = sphi 0, %s247
      %s250 = sphi 0, %s249
      %s264 = sphi 0, %s250
      %s268 = sphi 0, %s268
      %s270 = sphi 0, %s268
      %s271 = sphi 0, %s270
      %s285 = sphi 0, %s271
      %s289 = sphi 0, %s289
      %s291 = sphi 0, %s289
      %s292 = sphi 0, %s291
      %s306 = sphi 0, %s292
      %s310 = sphi 0, %s310
      %s312 = sphi 0, %s310
      %s313 = sphi 0, %s312
      %s327 = sphi 0, %s313
      %s331 = sphi 0, %s331
      %s333 = sphi 0, %s331
      %s334 = sphi 0, %s333
      %s348 = sphi 0, %s334
      %s352 = sphi 0, %s352
      %s354 = sphi 0, %s352
      %s355 = sphi 0, %s354
      %s369 = sphi 0, %s355
      %s375 = sphi 0, %s377
      %s378 = sphi 0, %s375
      %s379 = sphi 0, %s378
      %s395 = sphi 0, %s379
    $region4: #{lscgf_forward.3} parent=1 // loop_header_branch
      %27 = sbr.rel (%p25) target = $region8
    $region5: #{lscgf_forward.3} parent=1 // loop_body
      %s29 = ssub.s32 %s24, 1
      %s30 = ssub.s32 %s24, 2
      %s31 = sadd.s32 %s24, 1
      %s32 = ssub.s32 %s24, %s31
      %p33 = scmp.eq.s32.totalorder %s32, 0
      %s35 = sadd.s32 %s34, 1
      %s36 = scalar_select %p33, %s34, %s35
      %p39 = pneg %p33
      %p40 = scmp.eq.s32.totalorder %s24, 1
      %p41 = por %p39, %p40
      %p42 = scmp.ne.s32.totalorder %s34, %s37
      %p43 = scmp.eq.s32.totalorder %s24, 0
      %p44 = por %p42, %p43
      %p45 = scmp.ne.s32.totalorder %s34, %s37
      %p46 = scmp.eq.s32.totalorder %s29, 1
      %p47 = por %p45, %p46
      %p48 = scmp.ne.s32.totalorder %s37, %s38
      %p49 = scmp.eq.s32.totalorder %s29, 0
      %p50 = por %p48, %p49
      %p51 = scmp.ne.s32.totalorder %s37, %s38
      %p52 = scmp.eq.s32.totalorder %s30, 1
      %p53 = por %p51, %p52
      %p55 = scmp.ne.s32.totalorder %s38, %s54
      %p56 = scmp.eq.s32.totalorder %s30, 0
      %p57 = por %p55, %p56
      %s59 = sadd.s32 %s58, 1
      %p62 = scmp.eq.s32.totalorder %s24, 1
      %p63 = scmp.ne.s32.totalorder %s58, %s60
      %p64 = scmp.eq.s32.totalorder %s24, 0
      %p65 = por %p63, %p64
      %p66 = scmp.ne.s32.totalorder %s58, %s60
      %p67 = scmp.eq.s32.totalorder %s29, 1
      %p68 = por %p66, %p67
      %p69 = scmp.ne.s32.totalorder %s60, %s61
      %p70 = scmp.eq.s32.totalorder %s29, 0
      %p71 = por %p69, %p70
      %p72 = scmp.ne.s32.totalorder %s60, %s61
      %p73 = scmp.eq.s32.totalorder %s30, 1
      %p74 = por %p72, %p73
      %p76 = scmp.ne.s32.totalorder %s61, %s75
      %p77 = scmp.eq.s32.totalorder %s30, 0
      %p78 = por %p76, %p77
      %s80 = sadd.s32 %s79, 1
      %p83 = scmp.eq.s32.totalorder %s24, 1
      %p84 = scmp.ne.s32.totalorder %s79, %s81
      %p85 = scmp.eq.s32.totalorder %s24, 0
      %p86 = por %p84, %p85
      %p87 = scmp.ne.s32.totalorder %s79, %s81
      %p88 = scmp.eq.s32.totalorder %s29, 1
      %p89 = por %p87, %p88
      %p90 = scmp.ne.s32.totalorder %s81, %s82
      %p91 = scmp.eq.s32.totalorder %s29, 0
      %p92 = por %p90, %p91
      %p93 = scmp.ne.s32.totalorder %s81, %s82
      %p94 = scmp.eq.s32.totalorder %s30, 1
      %p95 = por %p93, %p94
      %p97 = scmp.ne.s32.totalorder %s82, %s96
      %p98 = scmp.eq.s32.totalorder %s30, 0
      %p99 = por %p97, %p98
      %s101 = sadd.s32 %s100, 1
      %p104 = scmp.eq.s32.totalorder %s24, 1
      %p105 = scmp.ne.s32.totalorder %s100, %s102
      %p106 = scmp.eq.s32.totalorder %s24, 0
      %p107 = por %p105, %p106
      %p108 = scmp.ne.s32.totalorder %s100, %s102
      %p109 = scmp.eq.s32.totalorder %s29, 1
      %p110 = por %p108, %p109
      %p111 = scmp.ne.s32.totalorder %s102, %s103
      %p112 = scmp.eq.s32.totalorder %s29, 0
      %p113 = por %p111, %p112
      %p114 = scmp.ne.s32.totalorder %s102, %s103
      %p115 = scmp.eq.s32.totalorder %s30, 1
      %p116 = por %p114, %p115
      %p118 = scmp.ne.s32.totalorder %s103, %s117
      %p119 = scmp.eq.s32.totalorder %s30, 0
      %p120 = por %p118, %p119
      %s122 = sadd.s32 %s121, 1
      %p125 = scmp.eq.s32.totalorder %s24, 1
      %p126 = scmp.ne.s32.totalorder %s121, %s123
      %p127 = scmp.eq.s32.totalorder %s24, 0
      %p128 = por %p126, %p127
      %p129 = scmp.ne.s32.totalorder %s121, %s123
      %p130 = scmp.eq.s32.totalorder %s29, 1
      %p131 = por %p129, %p130
      %p132 = scmp.ne.s32.totalorder %s123, %s124
      %p133 = scmp.eq.s32.totalorder %s29, 0
      %p134 = por %p132, %p133
      %p135 = scmp.ne.s32.totalorder %s123, %s124
      %p136 = scmp.eq.s32.totalorder %s30, 1
      %p137 = por %p135, %p136
      %p139 = scmp.ne.s32.totalorder %s124, %s138
      %p140 = scmp.eq.s32.totalorder %s30, 0
      %p141 = por %p139, %p140
      %s143 = sadd.s32 %s142, 1
      %p146 = scmp.eq.s32.totalorder %s24, 1
      %p147 = scmp.ne.s32.totalorder %s142, %s144
      %p148 = scmp.eq.s32.totalorder %s24, 0
      %p149 = por %p147, %p148
      %p150 = scmp.ne.s32.totalorder %s142, %s144
      %p151 = scmp.eq.s32.totalorder %s29, 1
      %p152 = por %p150, %p151
      %p153 = scmp.ne.s32.totalorder %s144, %s145
      %p154 = scmp.eq.s32.totalorder %s29, 0
      %p155 = por %p153, %p154
      %p156 = scmp.ne.s32.totalorder %s144, %s145
      %p157 = scmp.eq.s32.totalorder %s30, 1
      %p158 = por %p156, %p157
      %p160 = scmp.ne.s32.totalorder %s145, %s159
      %p161 = scmp.eq.s32.totalorder %s30, 0
      %p162 = por %p160, %p161
      %s164 = sadd.s32 %s163, 1
      %p167 = scmp.eq.s32.totalorder %s24, 1
      %p168 = scmp.ne.s32.totalorder %s163, %s165
      %p169 = scmp.eq.s32.totalorder %s24, 0
      %p170 = por %p168, %p169
      %p171 = scmp.ne.s32.totalorder %s163, %s165
      %p172 = scmp.eq.s32.totalorder %s29, 1
      %p173 = por %p171, %p172
      %p174 = scmp.ne.s32.totalorder %s165, %s166
      %p175 = scmp.eq.s32.totalorder %s29, 0
      %p176 = por %p174, %p175
      %p177 = scmp.ne.s32.totalorder %s165, %s166
      %p178 = scmp.eq.s32.totalorder %s30, 1
      %p179 = por %p177, %p178
      %p181 = scmp.ne.s32.totalorder %s166, %s180
      %p182 = scmp.eq.s32.totalorder %s30, 0
      %p183 = por %p181, %p182
      %s185 = sadd.s32 %s184, 1
      %p188 = scmp.eq.s32.totalorder %s24, 1
      %p189 = scmp.ne.s32.totalorder %s184, %s186
      %p190 = scmp.eq.s32.totalorder %s24, 0
      %p191 = por %p189, %p190
      %p192 = scmp.ne.s32.totalorder %s184, %s186
      %p193 = scmp.eq.s32.totalorder %s29, 1
      %p194 = por %p192, %p193
      %p195 = scmp.ne.s32.totalorder %s186, %s187
      %p196 = scmp.eq.s32.totalorder %s29, 0
      %p197 = por %p195, %p196
      %p198 = scmp.ne.s32.totalorder %s186, %s187
      %p199 = scmp.eq.s32.totalorder %s30, 1
      %p200 = por %p198, %p199
      %p202 = scmp.ne.s32.totalorder %s187, %s201
      %p203 = scmp.eq.s32.totalorder %s30, 0
      %p204 = por %p202, %p203
      %s206 = sadd.s32 %s205, 1
      %p209 = scmp.eq.s32.totalorder %s24, 1
      %p210 = scmp.ne.s32.totalorder %s205, %s207
      %p211 = scmp.eq.s32.totalorder %s24, 0
      %p212 = por %p210, %p211
      %p213 = scmp.ne.s32.totalorder %s205, %s207
      %p214 = scmp.eq.s32.totalorder %s29, 1
      %p215 = por %p213, %p214
      %p216 = scmp.ne.s32.totalorder %s207, %s208
      %p217 = scmp.eq.s32.totalorder %s29, 0
      %p218 = por %p216, %p217
      %p219 = scmp.ne.s32.totalorder %s207, %s208
      %p220 = scmp.eq.s32.totalorder %s30, 1
      %p221 = por %p219, %p220
      %p223 = scmp.ne.s32.totalorder %s208, %s222
      %p224 = scmp.eq.s32.totalorder %s30, 0
      %p225 = por %p223, %p224
      %s227 = sadd.s32 %s226, 1
      %p230 = scmp.eq.s32.totalorder %s24, 1
      %p231 = scmp.ne.s32.totalorder %s226, %s228
      %p232 = scmp.eq.s32.totalorder %s24, 0
      %p233 = por %p231, %p232
      %p234 = scmp.ne.s32.totalorder %s226, %s228
      %p235 = scmp.eq.s32.totalorder %s29, 1
      %p236 = por %p234, %p235
      %p237 = scmp.ne.s32.totalorder %s228, %s229
      %p238 = scmp.eq.s32.totalorder %s29, 0
      %p239 = por %p237, %p238
      %p240 = scmp.ne.s32.totalorder %s228, %s229
      %p241 = scmp.eq.s32.totalorder %s30, 1
      %p242 = por %p240, %p241
      %p244 = scmp.ne.s32.totalorder %s229, %s243
      %p245 = scmp.eq.s32.totalorder %s30, 0
      %p246 = por %p244, %p245
      %s248 = sadd.s32 %s247, 1
      %p251 = scmp.eq.s32.totalorder %s24, 1
      %p252 = scmp.ne.s32.totalorder %s247, %s249
      %p253 = scmp.eq.s32.totalorder %s24, 0
      %p254 = por %p252, %p253
      %p255 = scmp.ne.s32.totalorder %s247, %s249
      %p256 = scmp.eq.s32.totalorder %s29, 1
      %p257 = por %p255, %p256
      %p258 = scmp.ne.s32.totalorder %s249, %s250
      %p259 = scmp.eq.s32.totalorder %s29, 0
      %p260 = por %p258, %p259
      %p261 = scmp.ne.s32.totalorder %s249, %s250
      %p262 = scmp.eq.s32.totalorder %s30, 1
      %p263 = por %p261, %p262
      %p265 = scmp.ne.s32.totalorder %s250, %s264
      %p266 = scmp.eq.s32.totalorder %s30, 0
      %p267 = por %p265, %p266
      %s269 = sadd.s32 %s268, 1
      %p272 = scmp.eq.s32.totalorder %s24, 1
      %p273 = scmp.ne.s32.totalorder %s268, %s270
      %p274 = scmp.eq.s32.totalorder %s24, 0
      %p275 = por %p273, %p274
      %p276 = scmp.ne.s32.totalorder %s268, %s270
      %p277 = scmp.eq.s32.totalorder %s29, 1
      %p278 = por %p276, %p277
      %p279 = scmp.ne.s32.totalorder %s270, %s271
      %p280 = scmp.eq.s32.totalorder %s29, 0
      %p281 = por %p279, %p280
      %p282 = scmp.ne.s32.totalorder %s270, %s271
      %p283 = scmp.eq.s32.totalorder %s30, 1
      %p284 = por %p282, %p283
      %p286 = scmp.ne.s32.totalorder %s271, %s285
      %p287 = scmp.eq.s32.totalorder %s30, 0
      %p288 = por %p286, %p287
      %s290 = sadd.s32 %s289, 1
      %p293 = scmp.eq.s32.totalorder %s24, 1
      %p294 = scmp.ne.s32.totalorder %s289, %s291
      %p295 = scmp.eq.s32.totalorder %s24, 0
      %p296 = por %p294, %p295
      %p297 = scmp.ne.s32.totalorder %s289, %s291
      %p298 = scmp.eq.s32.totalorder %s29, 1
      %p299 = por %p297, %p298
      %p300 = scmp.ne.s32.totalorder %s291, %s292
      %p301 = scmp.eq.s32.totalorder %s29, 0
      %p302 = por %p300, %p301
      %p303 = scmp.ne.s32.totalorder %s291, %s292
      %p304 = scmp.eq.s32.totalorder %s30, 1
      %p305 = por %p303, %p304
      %p307 = scmp.ne.s32.totalorder %s292, %s306
      %p308 = scmp.eq.s32.totalorder %s30, 0
      %p309 = por %p307, %p308
      %s311 = sadd.s32 %s310, 1
      %p314 = scmp.eq.s32.totalorder %s24, 1
      %p315 = scmp.ne.s32.totalorder %s310, %s312
      %p316 = scmp.eq.s32.totalorder %s24, 0
      %p317 = por %p315, %p316
      %p318 = scmp.ne.s32.totalorder %s310, %s312
      %p319 = scmp.eq.s32.totalorder %s29, 1
      %p320 = por %p318, %p319
      %p321 = scmp.ne.s32.totalorder %s312, %s313
      %p322 = scmp.eq.s32.totalorder %s29, 0
      %p323 = por %p321, %p322
      %p324 = scmp.ne.s32.totalorder %s312, %s313
      %p325 = scmp.eq.s32.totalorder %s30, 1
      %p326 = por %p324, %p325
      %p328 = scmp.ne.s32.totalorder %s313, %s327
      %p329 = scmp.eq.s32.totalorder %s30, 0
      %p330 = por %p328, %p329
      %s332 = sadd.s32 %s331, 1
      %p335 = scmp.eq.s32.totalorder %s24, 1
      %p336 = scmp.ne.s32.totalorder %s331, %s333
      %p337 = scmp.eq.s32.totalorder %s24, 0
      %p338 = por %p336, %p337
      %p339 = scmp.ne.s32.totalorder %s331, %s333
      %p340 = scmp.eq.s32.totalorder %s29, 1
      %p341 = por %p339, %p340
      %p342 = scmp.ne.s32.totalorder %s333, %s334
      %p343 = scmp.eq.s32.totalorder %s29, 0
      %p344 = por %p342, %p343
      %p345 = scmp.ne.s32.totalorder %s333, %s334
      %p346 = scmp.eq.s32.totalorder %s30, 1
      %p347 = por %p345, %p346
      %p349 = scmp.ne.s32.totalorder %s334, %s348
      %p350 = scmp.eq.s32.totalorder %s30, 0
      %p351 = por %p349, %p350
      %s353 = sadd.s32 %s352, 1
      %p356 = scmp.eq.s32.totalorder %s24, 1
      %p357 = scmp.ne.s32.totalorder %s352, %s354
      %p358 = scmp.eq.s32.totalorder %s24, 0
      %p359 = por %p357, %p358
      %p360 = scmp.ne.s32.totalorder %s352, %s354
      %p361 = scmp.eq.s32.totalorder %s29, 1
      %p362 = por %p360, %p361
      %p363 = scmp.ne.s32.totalorder %s354, %s355
      %p364 = scmp.eq.s32.totalorder %s29, 0
      %p365 = por %p363, %p364
      %p366 = scmp.ne.s32.totalorder %s354, %s355
      %p367 = scmp.eq.s32.totalorder %s30, 1
      %p368 = por %p366, %p367
      %p370 = scmp.ne.s32.totalorder %s355, %s369
      %p371 = scmp.eq.s32.totalorder %s30, 0
      %p372 = por %p370, %p371
      %s373 = ssub.s32 %s24, %s31
      %p374 = scmp.eq.s32.totalorder %s373, 0
      %s376 = sadd.s32 %s375, 1
      %s377 = scalar_select %p374, %s375, %s376
      %p380 = pneg %p374
      %p381 = scmp.eq.s32.totalorder %s24, 1
      %p382 = por %p380, %p381
      %p383 = scmp.ne.s32.totalorder %s375, %s378
      %p384 = scmp.eq.s32.totalorder %s24, 0
      %p385 = por %p383, %p384
      %p386 = scmp.ne.s32.totalorder %s375, %s378
      %p387 = scmp.eq.s32.totalorder %s29, 1
      %p388 = por %p386, %p387
      %p389 = scmp.ne.s32.totalorder %s378, %s379
      %p390 = scmp.eq.s32.totalorder %s29, 0
      %p391 = por %p389, %p390
      %p392 = scmp.ne.s32.totalorder %s378, %s379
      %p393 = scmp.eq.s32.totalorder %s30, 1
      %p394 = por %p392, %p393
      %p396 = scmp.ne.s32.totalorder %s379, %s395
      %p397 = scmp.eq.s32.totalorder %s30, 0
      %p398 = por %p396, %p397
      %p399 = scmp.le.s32.totalorder 1, %s24
      %p400 = scmp.lt.s32.totalorder %s24, 3
      %p401 = pnand %p399, %p400
      %p402 = pneg %p401
      // Predicated region
      $region9: #{lscgf_forward.3} parent=5 // pred_check
        _
      $region10: #{lscgf_forward.3} parent=5 // pred_check_branch
        %404 = sbr.rel (%p401) target = $region12
      $region11: #{lscgf_forward.3} parent=5 // pred_region
        %s405 = ssub.s32 %s24, 1
        // Predicated region
        $region13: #{lscgf_forward.3} parent=11 // pred_check
          %p406 = pneg %p71
        $region14: #{lscgf_forward.3} parent=11 // pred_check_branch
          %408 = sbr.rel (%p406) target = $region16
        $region15: #{lscgf_forward.3} parent=11 // pred_region
          _
        $region16: #{lscgf_forward.3} parent=11 // pred_fallthru
          _
        // Predicated region
        $region17: #{lscgf_forward.3} parent=11 // pred_check
          %p409 = pneg %p92
        $region18: #{lscgf_forward.3} parent=11 // pred_check_branch
          %411 = sbr.rel (%p409) target = $region20
        $region19: #{lscgf_forward.3} parent=11 // pred_region
          _
        $region20: #{lscgf_forward.3} parent=11 // pred_fallthru
          _
        // Predicated region
        $region21: #{lscgf_forward.3} parent=11 // pred_check
          %p412 = pneg %p113
        $region22: #{lscgf_forward.3} parent=11 // pred_check_branch
          %414 = sbr.rel (%p412) target = $region24
        $region23: #{lscgf_forward.3} parent=11 // pred_region
          _
        $region24: #{lscgf_forward.3} parent=11 // pred_fallthru
          _
        // Predicated region
        $region25: #{lscgf_forward.3} parent=11 // pred_check
          %p415 = pneg %p134
        $region26: #{lscgf_forward.3} parent=11 // pred_check_branch
          %417 = sbr.rel (%p415) target = $region28
        $region27: #{lscgf_forward.3} parent=11 // pred_region
          _
        $region28: #{lscgf_forward.3} parent=11 // pred_fallthru
          _
        // Predicated region
        $region29: #{lscgf_forward.3} parent=11 // pred_check
          %p418 = pneg %p155
        $region30: #{lscgf_forward.3} parent=11 // pred_check_branch
          %420 = sbr.rel (%p418) target = $region32
        $region31: #{lscgf_forward.3} parent=11 // pred_region
          _
        $region32: #{lscgf_forward.3} parent=11 // pred_fallthru
          _
        // Predicated region
        $region33: #{lscgf_forward.3} parent=11 // pred_check
          %p421 = pneg %p176
        $region34: #{lscgf_forward.3} parent=11 // pred_check_branch
          %423 = sbr.rel (%p421) target = $region36
        $region35: #{lscgf_forward.3} parent=11 // pred_region
          _
        $region36: #{lscgf_forward.3} parent=11 // pred_fallthru
          _
        // Predicated region
        $region37: #{lscgf_forward.3} parent=11 // pred_check
          %p424 = pneg %p197
        $region38: #{lscgf_forward.3} parent=11 // pred_check_branch
          %426 = sbr.rel (%p424) target = $region40
        $region39: #{lscgf_forward.3} parent=11 // pred_region
          _
        $region40: #{lscgf_forward.3} parent=11 // pred_fallthru
          _
        // Predicated region
        $region41: #{lscgf_forward.3} parent=11 // pred_check
          %p427 = pneg %p218
        $region42: #{lscgf_forward.3} parent=11 // pred_check_branch
          %429 = sbr.rel (%p427) target = $region44
        $region43: #{lscgf_forward.3} parent=11 // pred_region
          _
        $region44: #{lscgf_forward.3} parent=11 // pred_fallthru
          _
        // Predicated region
        $region45: #{lscgf_forward.3} parent=11 // pred_check
          %p430 = pneg %p239
        $region46: #{lscgf_forward.3} parent=11 // pred_check_branch
          %432 = sbr.rel (%p430) target = $region48
        $region47: #{lscgf_forward.3} parent=11 // pred_region
          _
        $region48: #{lscgf_forward.3} parent=11 // pred_fallthru
          _
        // Predicated region
        $region49: #{lscgf_forward.3} parent=11 // pred_check
          %p433 = pneg %p260
        $region50: #{lscgf_forward.3} parent=11 // pred_check_branch
          %435 = sbr.rel (%p433) target = $region52
        $region51: #{lscgf_forward.3} parent=11 // pred_region
          _
        $region52: #{lscgf_forward.3} parent=11 // pred_fallthru
          _
        // Predicated region
        $region53: #{lscgf_forward.3} parent=11 // pred_check
          %p436 = pneg %p281
        $region54: #{lscgf_forward.3} parent=11 // pred_check_branch
          %438 = sbr.rel (%p436) target = $region56
        $region55: #{lscgf_forward.3} parent=11 // pred_region
          _
        $region56: #{lscgf_forward.3} parent=11 // pred_fallthru
          _
        // Predicated region
        $region57: #{lscgf_forward.3} parent=11 // pred_check
          %p439 = pneg %p302
        $region58: #{lscgf_forward.3} parent=11 // pred_check_branch
          %441 = sbr.rel (%p439) target = $region60
        $region59: #{lscgf_forward.3} parent=11 // pred_region
          _
        $region60: #{lscgf_forward.3} parent=11 // pred_fallthru
          _
        // Predicated region
        $region61: #{lscgf_forward.3} parent=11 // pred_check
          %p442 = pneg %p323
        $region62: #{lscgf_forward.3} parent=11 // pred_check_branch
          %444 = sbr.rel (%p442) target = $region64
        $region63: #{lscgf_forward.3} parent=11 // pred_region
          _
        $region64: #{lscgf_forward.3} parent=11 // pred_fallthru
          _
        // Predicated region
        $region65: #{lscgf_forward.3} parent=11 // pred_check
          %p445 = pneg %p344
        $region66: #{lscgf_forward.3} parent=11 // pred_check_branch
          %447 = sbr.rel (%p445) target = $region68
        $region67: #{lscgf_forward.3} parent=11 // pred_region
          _
        $region68: #{lscgf_forward.3} parent=11 // pred_fallthru
          _
        // Predicated region
        $region69: #{lscgf_forward.3} parent=11 // pred_check
          %p448 = pneg %p365
        $region70: #{lscgf_forward.3} parent=11 // pred_check_branch
          %450 = sbr.rel (%p448) target = $region72
        $region71: #{lscgf_forward.3} parent=11 // pred_region
          _
        $region72: #{lscgf_forward.3} parent=11 // pred_fallthru
          _
      $region12: #{lscgf_forward.3} parent=5 // pred_fallthru
        _
      %p451 = scmp.lt.s32.totalorder %s24, 2
      // Predicated region
      $region73: #{lscgf_forward.3} parent=5 // pred_check
        %p452 = pneg %p451
      $region74: #{lscgf_forward.3} parent=5 // pred_check_branch
        %454 = sbr.rel (%p452) target = $region76
      $region75: #{lscgf_forward.3} parent=5 // pred_region
        // Predicated region
        $region77: #{lscgf_forward.3} parent=75 // pred_check
          %p455 = pneg %p44
        $region78: #{lscgf_forward.3} parent=75 // pred_check_branch
          %457 = sbr.rel (%p455) target = $region80
        $region79: #{lscgf_forward.3} parent=75 // pred_region
          %s458 = sand.u32 %s34, 1
          %s459 = sand.u32 %s34, 1
          %s460 = smul.addr %s459, 64
          %s461 = scalar_lea.vmem [#allocation5], %s460
          %s462 = smul.addr %s24, 8
          %s463 = scalar_lea.vmem %s0, %s462
          // Predicated region
          $region81: #{lscgf_forward.3} parent=79 // pred_check
            _
          $region82: #{lscgf_forward.3} parent=79 // pred_check_branch
            %465 = sbr.rel (0) target = $region84
          $region83: #{lscgf_forward.3} parent=79 // pred_region
            // Predicated region
            $region85: #{lscgf_forward.3} parent=83 // pred_check
              _
            $region86: #{lscgf_forward.3} parent=83 // pred_check_branch
              %467 = sbr.rel (0) target = $region88
            $region87: #{lscgf_forward.3} parent=83 // pred_region
              // Predicated region
              $region100: #{lscgf_forward.3} parent=87 // pred_check
                _
              $region101: #{lscgf_forward.3} parent=87 // pred_check_branch
                %497 = sbr.rel (0) target = $region103
              $region102: #{lscgf_forward.3} parent=87 // pred_region
                loop: start=0, step=1, limit=1
                $region104: #{lscgf_forward.3} parent=102 // loop_pre_header
                  _
                $region105: #{lscgf_forward.3} parent=102 // loop_header
                  %s499 = sphi 0, %s503
                  %p500 = scmp.ge.s32.totalorder %s499, 1
                  %s504 = sphi %s463, %s463
                  %s505 = sphi %s461, %s461
                $region106: #{lscgf_forward.3} parent=102 // loop_header_branch
                  %502 = sbr.rel (%p500) target = $region110
                $region107: #{lscgf_forward.3} parent=102 // loop_body
                  %v506 = vld [vmem:[%s504] sm:$0xff]
                  %507 = vst [vmem:[%s505] sm:$0xff] %v506
                  %v508 = vld [vmem:[%s504 + $0x10] sm:$0xff]
                  %509 = vst [vmem:[%s505 + $0x8] sm:$0xff] %v508
                  %v510 = vld [vmem:[%s504 + $0x20] sm:$0xff]
                  %511 = vst [vmem:[%s505 + $0x10] sm:$0xff] %v510
                  %v512 = vld [vmem:[%s504 + $0x30] sm:$0xff]
                  %513 = vst [vmem:[%s505 + $0x18] sm:$0xff] %v512
                  %v514 = vld [vmem:[%s504 + $0x40] sm:$0xff]
                  %515 = vst [vmem:[%s505 + $0x20] sm:$0xff] %v514
                  %v516 = vld [vmem:[%s504 + $0x50] sm:$0xff]
                  %517 = vst [vmem:[%s505 + $0x28] sm:$0xff] %v516
                  %v518 = vld [vmem:[%s504 + $0x60] sm:$0xff]
                  %519 = vst [vmem:[%s505 + $0x30] sm:$0xff] %v518
                  %v520 = vld [vmem:[%s504 + $0x70] sm:$0xff]
                  %521 = vst [vmem:[%s505 + $0x38] sm:$0xff] %v520
                $region108: #{lscgf_forward.3} parent=102 // loop_footer
                  %s503 = sadd.s32 1, %s499
                $region109: #{lscgf_forward.3} parent=102 // loop_footer_branch
                  %498 = sbr.rel target = $region105
                $region110: #{lscgf_forward.3} parent=102 // loop_exit
                  _
              $region103: #{lscgf_forward.3} parent=87 // pred_fallthru
                _
              // Predicated region
              $region111: #{lscgf_forward.3} parent=87 // pred_check
                _
              $region112: #{lscgf_forward.3} parent=87 // pred_check_branch
                %523 = sbr.rel target = $region114
              $region113: #{lscgf_forward.3} parent=87 // pred_region
                _
              $region114: #{lscgf_forward.3} parent=87 // pred_fallthru
                _
            $region88: #{lscgf_forward.3} parent=83 // pred_fallthru
              _
            // Predicated region
            $region89: #{lscgf_forward.3} parent=83 // pred_check
              _
            $region90: #{lscgf_forward.3} parent=83 // pred_check_branch
              %469 = sbr.rel target = $region92
            $region91: #{lscgf_forward.3} parent=83 // pred_region
              %s471 = ssub.s32 256, 1
              loop: start=0, step=1, limit=1
              $region93: #{lscgf_forward.3} parent=91 // loop_pre_header
                _
              $region94: #{lscgf_forward.3} parent=91 // loop_header
                %s473 = sphi 0, %s477
                %p474 = scmp.ge.s32.totalorder %s473, 1
                %s478 = sphi %s463, %s463
                %s479 = sphi %s461, %s461
              $region95: #{lscgf_forward.3} parent=91 // loop_header_branch
                %476 = sbr.rel (%p474) target = $region99
              $region96: #{lscgf_forward.3} parent=91 // loop_body
                %v480 = vld [vmem:[%s478] sm:%s471]
                %481 = vst [vmem:[%s479] sm:%s471] %v480
                %v482 = vld [vmem:[%s478 + $0x10] sm:%s471]
                %483 = vst [vmem:[%s479 + $0x8] sm:%s471] %v482
                %v484 = vld [vmem:[%s478 + $0x20] sm:%s471]
                %485 = vst [vmem:[%s479 + $0x10] sm:%s471] %v484
                %v486 = vld [vmem:[%s478 + $0x30] sm:%s471]
                %487 = vst [vmem:[%s479 + $0x18] sm:%s471] %v486
                %v488 = vld [vmem:[%s478 + $0x40] sm:%s471]
                %489 = vst [vmem:[%s479 + $0x20] sm:%s471] %v488
                %v490 = vld [vmem:[%s478 + $0x50] sm:%s471]
                %491 = vst [vmem:[%s479 + $0x28] sm:%s471] %v490
                %v492 = vld [vmem:[%s478 + $0x60] sm:%s471]
                %493 = vst [vmem:[%s479 + $0x30] sm:%s471] %v492
                %v494 = vld [vmem:[%s478 + $0x70] sm:%s471]
                %495 = vst [vmem:[%s479 + $0x38] sm:%s471] %v494
              $region97: #{lscgf_forward.3} parent=91 // loop_footer
                %s477 = sadd.s32 1, %s473
              $region98: #{lscgf_forward.3} parent=91 // loop_footer_branch
                %472 = sbr.rel target = $region94
              $region99: #{lscgf_forward.3} parent=91 // loop_exit
                _
            $region92: #{lscgf_forward.3} parent=83 // pred_fallthru
              _
          $region84: #{lscgf_forward.3} parent=79 // pred_fallthru
            _
          %524 = vnop
        $region80: #{lscgf_forward.3} parent=75 // pred_fallthru
          _
      $region76: #{lscgf_forward.3} parent=5 // pred_fallthru
        _
      %p525 = scmp.le.s32.totalorder 1, %s24
      %p526 = scmp.lt.s32.totalorder %s24, 3
      %p527 = pnand %p525, %p526
      %p528 = pneg %p527
      // Predicated region
      $region115: #{lscgf_forward.3} parent=5 // pred_check
        _
      $region116: #{lscgf_forward.3} parent=5 // pred_check_branch
        %530 = sbr.rel (%p527) target = $region118
      $region117: #{lscgf_forward.3} parent=5 // pred_region
        %s531 = ssub.s32 %s24, 1
        %s532 = sand.u32 %s37, 1
        %s533 = sand.u32 %s37, 1
        %s534 = smul.addr %s533, 64
        %s535 = scalar_lea.vmem [#allocation5], %s534
        // Predicated region
        $region119: #{lscgf_forward.3} parent=117 // pred_check
          %p536 = pneg %p50
        $region120: #{lscgf_forward.3} parent=117 // pred_check_branch
          %538 = sbr.rel (%p536) target = $region122
        $region121: #{lscgf_forward.3} parent=117 // pred_region
          _
        $region122: #{lscgf_forward.3} parent=117 // pred_fallthru
          _
        %s539 = sand.u32 %s37, 1
        %s540 = sand.u32 %s37, 1
        %s541 = smul.addr %s540, 64
        %s542 = scalar_lea.vmem [#allocation5], %s541
        %p543 = pneg %p50
        %p544 = pneg %p47
        %p545 = pneg %p71
        %p546 = pneg %p68
        %p547 = pneg %p92
        %p548 = pneg %p89
        %p549 = pneg %p113
        %p550 = pneg %p110
        %p551 = pneg %p134
        %p552 = pneg %p131
        %p553 = pneg %p155
        %p554 = pneg %p152
        %p555 = pneg %p176
        %p556 = pneg %p173
        %p557 = pneg %p197
        %p558 = pneg %p194
        %p559 = pneg %p218
        %p560 = pneg %p215
        %p561 = pneg %p239
        %p562 = pneg %p236
        %p563 = pneg %p260
        %p564 = pneg %p257
        %p565 = pneg %p281
        %p566 = pneg %p278
        %p567 = pneg %p302
        %p568 = pneg %p299
        %p569 = pneg %p323
        %p570 = pneg %p320
        %p571 = pneg %p344
        %p572 = pneg %p341
        %p573 = pneg %p365
        %p574 = pneg %p362
        %p575 = pneg %p391
        %p576 = pneg %p388
        %p577 = scmp.lt.s32.totalorder %s29, 1
        %s578 = scalar_select %p577, %s29, 1
        %s579 = smul.addr %s578, 8
        %s580 = scalar_lea.vmem %s16, %s579
        %p581 = scmp.lt.s32.totalorder %s29, 1
        %s582 = scalar_select %p581, %s29, 1
        %s583 = smul.addr %s582, 8
        %s584 = scalar_lea.vmem %s16, %s583
        %vm586 = vcmask 130048
        %587 = vst.msk [vmem:[#allocation2] sm:$0xff] %vm586, 0.0
        %588 = vst.msk [vmem:[#allocation2 + $0x8] sm:$0xff] %vm586, 0.0
        %589 = vst.msk [vmem:[#allocation3] sm:$0xff] %vm586, 0.0
        %v590 = vld [vmem:[%s1] sm:$0xff]
        loop: start=0, step=1, limit=8
        $region123: #{lscgf_forward.3} parent=117 // loop_pre_header
          _
        $region124: #{lscgf_forward.3} parent=117 // loop_header
          %s592 = sphi 0, %s596
          %p593 = scmp.ge.s32.totalorder %s592, 8
        $region125: #{lscgf_forward.3} parent=117 // loop_header_branch
          %595 = sbr.rel (%p593) target = $region129
        $region126: #{lscgf_forward.3} parent=117 // loop_body
          %s597 = smul.u32 %s592, 8
          %s598 = scalar_lea.vmem %s535, %s597 [#allocation5]
          %v599 = vld [vmem:[%s598] sm:$0xff]
          %v600 = vld [vmem:[#allocation2] sm:$0xff]
          %v601 = vld [vmem:[%s2] sm:$0xf]
          %v602 = vld [vmem:[%s2 + $0x4] sm:$0xf]
          %v603 = vld [vmem:[%s2 + $0x8] sm:$0xf]
          %v604 = vld [vmem:[%s2 + $0xc] sm:$0xf]
          %v605 = vld [vmem:[%s2 + $0x10] sm:$0xf]
          %v606 = vld [vmem:[%s2 + $0x14] sm:$0xf]
          %v607 = vld [vmem:[%s2 + $0x18] sm:$0xf]
          %v608 = vld [vmem:[%s2 + $0x1c] sm:$0xf]
          %v609 = vld [vmem:[%s2 + $0x20] sm:$0xf]
          %v610 = vld [vmem:[%s2 + $0x24] sm:$0xf]
          %v611 = vld [vmem:[%s2 + $0x28] sm:$0xf]
          %v612 = vld [vmem:[%s2 + $0x2c] sm:$0xf]
          %v613 = vld [vmem:[%s3] sm:$0x1]
          %v614 = vld [vmem:[%s4] sm:$0xf]
          %v615 = vld [vmem:[%s4 + $0x4] sm:$0xf]
          %v616 = vld [vmem:[%s4 + $0x8] sm:$0xf]
          %v617 = vld [vmem:[%s4 + $0xc] sm:$0xf]
          %v618 = vld [vmem:[%s4 + $0x10] sm:$0xf]
          %v619 = vld [vmem:[%s4 + $0x14] sm:$0xf]
          %v620 = vld [vmem:[%s4 + $0x18] sm:$0xf]
          %v621 = vld [vmem:[%s4 + $0x1c] sm:$0xf]
          %v622 = vld [vmem:[%s4 + $0x20] sm:$0xf]
          %v623 = vld [vmem:[%s4 + $0x24] sm:$0xf]
          %v624 = vld [vmem:[%s4 + $0x28] sm:$0xf]
          %v625 = vld [vmem:[%s4 + $0x2c] sm:$0xf]
          %v626 = vld [vmem:[%s5] sm:$0x1]
          %v627 = vld [vmem:[%s6] sm:$0xf]
          %v628 = vld [vmem:[%s6 + $0x4] sm:$0xf]
          %v629 = vld [vmem:[%s6 + $0x8] sm:$0xf]
          %v630 = vld [vmem:[%s6 + $0xc] sm:$0xf]
          %v631 = vld [vmem:[%s6 + $0x10] sm:$0xf]
          %v632 = vld [vmem:[%s6 + $0x14] sm:$0xf]
          %v633 = vld [vmem:[%s6 + $0x18] sm:$0xf]
          %v634 = vld [vmem:[%s6 + $0x1c] sm:$0xf]
          %v635 = vld [vmem:[%s6 + $0x20] sm:$0xf]
          %v636 = vld [vmem:[%s6 + $0x24] sm:$0xf]
          %v637 = vld [vmem:[%s6 + $0x28] sm:$0xf]
          %v638 = vld [vmem:[%s6 + $0x2c] sm:$0xf]
          %v639 = vld [vmem:[%s7] sm:$0x1]
          %641 = vrot.lane.b32.xlu0 %v600, 16
          %v642 = vpop.permute.xlu0 %641
          %v644 = vsel %vm586, %v599, %v642
          %vm645 = vcmask 64512
          %v647 = vsel %vm645, %v590, 0
          %649 = vmatpush.msra.mxu0 0.0
          %650 = vmatpush.msra.mxu0 0.0
          %651 = vmatpush.msra.mxu0 0.0
          %652 = vmatpush.msra.mxu0 0.0
          %653 = vmatpush.msra.mxu0 0.0
          %654 = vmatpush.msra.mxu0 0.0
          %655 = vmatpush.msra.mxu0 0.0
          %656 = vmatpush.msra.mxu0 0.0
          %657 = vmatpush.msra.mxu0 0.0
          %658 = vmatpush.msra.mxu0 0.0
          %659 = vmatpush.msra.mxu0 0.0
          %660 = vmatpush.msra.mxu0 0.0
          %661 = vmatpush.msra.mxu0 0.0
          %662 = vmatpush.msra.mxu0 0.0
          %663 = vmatpush.msra.mxu0 0.0
          %664 = vmatpush.msra.mxu0 %v644
          %665 = vmatmul.f32.gmra.mxu0 %v647
          %v666 = vpop.f32.mrf.mxu0
          %v667 = vadd.f32 0.0, %v666
          %668 = vdwg.mxu0
          %669 = vmatpush.msra.mxu0 0.0
          %670 = vmatpush.msra.mxu0 0.0
          %671 = vmatpush.msra.mxu0 0.0
          %672 = vmatpush.msra.mxu0 0.0
          %673 = vmatpush.msra.mxu0 0.0
          %674 = vmatpush.msra.mxu0 0.0
          %675 = vmatpush.msra.mxu0 0.0
          %676 = vmatpush.msra.mxu0 0.0
          %677 = vmatpush.msra.mxu0 0.0
          %678 = vmatpush.msra.mxu0 0.0
          %679 = vmatpush.msra.mxu0 0.0
          %680 = vmatpush.msra.mxu0 0.0
          %681 = vmatpush.msra.mxu0 0.0
          %682 = vmatpush.msra.mxu0 0.0
          %683 = vmatpush.msra.mxu0 0.0
          %684 = vmatpush.msra.mxu0 %v667
          %685 = vmatmul.f32.gmra.mxu0 %v647
          %v686 = vpop.f32.mrf.mxu0
          %v687 = vadd.f32 0.0, %v686
          %688 = vdwg.mxu0
          %v689 = vmul.f32 %v687, 2.0
          %v690 = vsub.f32 %v689, %v644
          %692 = vrot.lane.b32.xlu0 %v667, 32
          %v693 = vpop.permute.xlu0 %692
          %696 = vrot.lane.b32.xlu0 %v690, 64
          %v697 = vpop.permute.xlu0 %696
          %vm699 = vcmask 261120
          %v700 = vsel %vm699, %v644, %v693
          %vm701 = vcmask 523264
          %v702 = vsel %vm701, %v700, %v697
          %v703 = vpack.c.bf16 %v702, %v702
          %v705 = vperm.slane %v613, 0
          %v719 = vunpack.c.l.b16 %v601
          %v720 = vunpack.c.l.b16 %v602
          %v721 = vunpack.c.l.b16 %v603
          %v722 = vunpack.c.l.b16 %v604
          %v723 = vunpack.c.l.b16 %v605
          %v724 = vunpack.c.l.b16 %v606
          %v725 = vunpack.c.l.b16 %v607
          %v726 = vunpack.c.l.b16 %v608
          %v727 = vunpack.c.l.b16 %v609
          %v728 = vunpack.c.l.b16 %v610
          %v729 = vunpack.c.l.b16 %v611
          %v730 = vunpack.c.l.b16 %v612
          %v731 = vpack.c.b16 %v720, %v719
          %v732 = vpack.c.b16 %v722, %v721
          %v733 = vpack.c.b16 %v724, %v723
          %v734 = vpack.c.b16 %v726, %v725
          %v735 = vpack.c.b16 %v728, %v727
          %v736 = vpack.c.b16 %v730, %v729
          %vm743 = vcmask 785408
          %v745 = vsel %vm743, %v703, 0
          %747 = vmatpush.bf16.msra.mxu0 0
          %748 = vmatpush.bf16.msra.mxu0 0
          %749 = vmatpush.bf16.msra.mxu0 %v736
          %750 = vmatpush.bf16.msra.mxu0 %v735
          %751 = vmatpush.bf16.msra.mxu0 %v734
          %752 = vmatpush.bf16.msra.mxu0 %v733
          %753 = vmatpush.bf16.msra.mxu0 %v732
          %754 = vmatpush.bf16.msra.mxu0 %v731
          %755 = vmatmul.bf16.gmra.mxu0 %v745
          %v756 = vpop.f32.mrf.mxu0
          %v757 = vadd.f32 %v705, %v756
          %v758 = vpop.f32.mrf.mxu0
          %759 = vdwg.mxu0
          %v760 = vsub.f32 0.0, %v757
          %v761 = vmul.f32 %v760, 1.442695
          %v762 = vpow.pop %v761
          %v763 = vadd.f32 %v762, 1.0
          %v764 = vrcp.pop %v763
          %v765 = vmul.f32 %v763, %v764
          %v766 = vsub.f32 1.0, %v765
          %v767 = vmul.f32 %v764, %v766
          %v768 = vadd.f32 %v764, %v767
          %vm769 = vweird.f32 %v763
          %vm770 = vweird.f32 %v764
          %vm771 = vmor %vm769, %vm770
          %v772 = vsel %vm771, %v764, %v768
          %v773 = vand.u32 2147483647, %v763
          %vm774 = vcmp.eq.f32.partialorder %v773, 8.507059e+37
          %v775 = vand.u32 %v763, 2147483648
          %v776 = vor.u32 1.1754944e-38, %v775
          %v777 = vsel %vm774, %v776, %v772
          %v778 = vmul.f32 1.0, %v777
          %v780 = vperm.slane %v626, 0
          %v794 = vunpack.c.l.b16 %v614
          %v795 = vunpack.c.l.b16 %v615
          %v796 = vunpack.c.l.b16 %v616
          %v797 = vunpack.c.l.b16 %v617
          %v798 = vunpack.c.l.b16 %v618
          %v799 = vunpack.c.l.b16 %v619
          %v800 = vunpack.c.l.b16 %v620
          %v801 = vunpack.c.l.b16 %v621
          %v802 = vunpack.c.l.b16 %v622
          %v803 = vunpack.c.l.b16 %v623
          %v804 = vunpack.c.l.b16 %v624
          %v805 = vunpack.c.l.b16 %v625
          %v806 = vpack.c.b16 %v795, %v794
          %v807 = vpack.c.b16 %v797, %v796
          %v808 = vpack.c.b16 %v799, %v798
          %v809 = vpack.c.b16 %v801, %v800
          %v810 = vpack.c.b16 %v803, %v802
          %v811 = vpack.c.b16 %v805, %v804
          %818 = vmatpush.bf16.msra.mxu0 0
          %819 = vmatpush.bf16.msra.mxu0 0
          %820 = vmatpush.bf16.msra.mxu0 %v811
          %821 = vmatpush.bf16.msra.mxu0 %v810
          %822 = vmatpush.bf16.msra.mxu0 %v809
          %823 = vmatpush.bf16.msra.mxu0 %v808
          %824 = vmatpush.bf16.msra.mxu0 %v807
          %825 = vmatpush.bf16.msra.mxu0 %v806
          %826 = vmatmul.bf16.gmra.mxu0 %v745
          %v827 = vpop.f32.mrf.mxu0
          %v828 = vadd.f32 %v780, %v827
          %v829 = vpop.f32.mrf.mxu0
          %830 = vdwg.mxu0
          %v831 = vsub.f32 0.0, %v828
          %v832 = vmul.f32 %v831, 1.442695
          %v833 = vpow.pop %v832
          %v834 = vadd.f32 %v833, 1.0
          %v835 = vrcp.pop %v834
          %v836 = vmul.f32 %v834, %v835
          %v837 = vsub.f32 1.0, %v836
          %v838 = vmul.f32 %v835, %v837
          %v839 = vadd.f32 %v835, %v838
          %vm840 = vweird.f32 %v834
          %vm841 = vweird.f32 %v835
          %vm842 = vmor %vm840, %vm841
          %v843 = vsel %vm842, %v835, %v839
          %v844 = vand.u32 2147483647, %v834
          %vm845 = vcmp.eq.f32.partialorder %v844, 8.507059e+37
          %v846 = vand.u32 %v834, 2147483648
          %v847 = vor.u32 1.1754944e-38, %v846
          %v848 = vsel %vm845, %v847, %v843
          %v849 = vmul.f32 1.0, %v848
          %v850 = vmul.f32 %v778, %v600
          %852 = vrot.lane.b32.xlu0 %v850, 16
          %v853 = vpop.permute.xlu0 %852
          %v855 = vsel %vm586, %v599, %v853
          %856 = vmatpush.msra.mxu0 0.0
          %857 = vmatpush.msra.mxu0 0.0
          %858 = vmatpush.msra.mxu0 0.0
          %859 = vmatpush.msra.mxu0 0.0
          %860 = vmatpush.msra.mxu0 0.0
          %861 = vmatpush.msra.mxu0 0.0
          %862 = vmatpush.msra.mxu0 0.0
          %863 = vmatpush.msra.mxu0 0.0
          %864 = vmatpush.msra.mxu0 0.0
          %865 = vmatpush.msra.mxu0 0.0
          %866 = vmatpush.msra.mxu0 0.0
          %867 = vmatpush.msra.mxu0 0.0
          %868 = vmatpush.msra.mxu0 0.0
          %869 = vmatpush.msra.mxu0 0.0
          %870 = vmatpush.msra.mxu0 0.0
          %871 = vmatpush.msra.mxu0 %v855
          %872 = vmatmul.f32.gmra.mxu0 %v647
          %v873 = vpop.f32.mrf.mxu0
          %v874 = vadd.f32 0.0, %v873
          %875 = vdwg.mxu0
          %876 = vmatpush.msra.mxu0 0.0
          %877 = vmatpush.msra.mxu0 0.0
          %878 = vmatpush.msra.mxu0 0.0
          %879 = vmatpush.msra.mxu0 0.0
          %880 = vmatpush.msra.mxu0 0.0
          %881 = vmatpush.msra.mxu0 0.0
          %882 = vmatpush.msra.mxu0 0.0
          %883 = vmatpush.msra.mxu0 0.0
          %884 = vmatpush.msra.mxu0 0.0
          %885 = vmatpush.msra.mxu0 0.0
          %886 = vmatpush.msra.mxu0 0.0
          %887 = vmatpush.msra.mxu0 0.0
          %888 = vmatpush.msra.mxu0 0.0
          %889 = vmatpush.msra.mxu0 0.0
          %890 = vmatpush.msra.mxu0 0.0
          %891 = vmatpush.msra.mxu0 %v874
          %892 = vmatmul.f32.gmra.mxu0 %v647
          %v893 = vpop.f32.mrf.mxu0
          %v894 = vadd.f32 0.0, %v893
          %895 = vdwg.mxu0
          %v896 = vmul.f32 %v894, 2.0
          %v897 = vsub.f32 %v896, %v855
          %899 = vrot.lane.b32.xlu0 %v874, 32
          %v900 = vpop.permute.xlu0 %899
          %903 = vrot.lane.b32.xlu0 %v897, 64
          %v904 = vpop.permute.xlu0 %903
          %v906 = vsel %vm699, %v855, %v900
          %v907 = vsel %vm701, %v906, %v904
          %v908 = vpack.c.bf16 %v907, %v907
          %v910 = vperm.slane %v639, 0
          %v924 = vunpack.c.l.b16 %v627
          %v925 = vunpack.c.l.b16 %v628
          %v926 = vunpack.c.l.b16 %v629
          %v927 = vunpack.c.l.b16 %v630
          %v928 = vunpack.c.l.b16 %v631
          %v929 = vunpack.c.l.b16 %v632
          %v930 = vunpack.c.l.b16 %v633
          %v931 = vunpack.c.l.b16 %v634
          %v932 = vunpack.c.l.b16 %v635
          %v933 = vunpack.c.l.b16 %v636
          %v934 = vunpack.c.l.b16 %v637
          %v935 = vunpack.c.l.b16 %v638
          %v936 = vpack.c.b16 %v925, %v924
          %v937 = vpack.c.b16 %v927, %v926
          %v938 = vpack.c.b16 %v929, %v928
          %v939 = vpack.c.b16 %v931, %v930
          %v940 = vpack.c.b16 %v933, %v932
          %v941 = vpack.c.b16 %v935, %v934
          %v949 = vsel %vm743, %v908, 0
          %951 = vmatpush.bf16.msra.mxu0 0
          %952 = vmatpush.bf16.msra.mxu0 0
          %953 = vmatpush.bf16.msra.mxu0 %v941
          %954 = vmatpush.bf16.msra.mxu0 %v940
          %955 = vmatpush.bf16.msra.mxu0 %v939
          %956 = vmatpush.bf16.msra.mxu0 %v938
          %957 = vmatpush.bf16.msra.mxu0 %v937
          %958 = vmatpush.bf16.msra.mxu0 %v936
          %959 = vmatmul.bf16.gmra.mxu0 %v949
          %v960 = vpop.f32.mrf.mxu0
          %v961 = vadd.f32 %v910, %v960
          %v962 = vpop.f32.mrf.mxu0
          %963 = vdwg.mxu0
          %v964 = vtanh.pop %v961
          %v965 = vmul.f32 %v849, %v600
          %v966 = vsub.f32 1.0, %v849
          %v967 = vmul.f32 %v966, %v964
          %v968 = vadd.f32 %v965, %v967
          %969 = vst.msk [vmem:[#allocation2] sm:$0xff] %vm586, %v968
          %s970 = scalar_lea.vmem [#allocation2], 8
          %v971 = vld [vmem:[%s970] sm:$0xff]
          %s972 = scalar_lea.vmem %s2, 48
          %v973 = vld [vmem:[%s972] sm:$0xf]
          %v974 = vld [vmem:[%s972 + $0x4] sm:$0xf]
          %v975 = vld [vmem:[%s972 + $0x8] sm:$0xf]
          %v976 = vld [vmem:[%s972 + $0xc] sm:$0xf]
          %v977 = vld [vmem:[%s972 + $0x10] sm:$0xf]
          %v978 = vld [vmem:[%s972 + $0x14] sm:$0xf]
          %v979 = vld [vmem:[%s972 + $0x18] sm:$0xf]
          %v980 = vld [vmem:[%s972 + $0x1c] sm:$0xf]
          %v981 = vld [vmem:[%s972 + $0x20] sm:$0xf]
          %v982 = vld [vmem:[%s972 + $0x24] sm:$0xf]
          %v983 = vld [vmem:[%s972 + $0x28] sm:$0xf]
          %v984 = vld [vmem:[%s972 + $0x2c] sm:$0xf]
          %s985 = scalar_lea.vmem %s3, 1
          %v986 = vld [vmem:[%s985] sm:$0x1]
          %s987 = scalar_lea.vmem %s4, 48
          %v988 = vld [vmem:[%s987] sm:$0xf]
          %v989 = vld [vmem:[%s987 + $0x4] sm:$0xf]
          %v990 = vld [vmem:[%s987 + $0x8] sm:$0xf]
          %v991 = vld [vmem:[%s987 + $0xc] sm:$0xf]
          %v992 = vld [vmem:[%s987 + $0x10] sm:$0xf]
          %v993 = vld [vmem:[%s987 + $0x14] sm:$0xf]
          %v994 = vld [vmem:[%s987 + $0x18] sm:$0xf]
          %v995 = vld [vmem:[%s987 + $0x1c] sm:$0xf]
          %v996 = vld [vmem:[%s987 + $0x20] sm:$0xf]
          %v997 = vld [vmem:[%s987 + $0x24] sm:$0xf]
          %v998 = vld [vmem:[%s987 + $0x28] sm:$0xf]
          %v999 = vld [vmem:[%s987 + $0x2c] sm:$0xf]
          %s1000 = scalar_lea.vmem %s5, 1
          %v1001 = vld [vmem:[%s1000] sm:$0x1]
          %s1002 = scalar_lea.vmem %s6, 48
          %v1003 = vld [vmem:[%s1002] sm:$0xf]
          %v1004 = vld [vmem:[%s1002 + $0x4] sm:$0xf]
          %v1005 = vld [vmem:[%s1002 + $0x8] sm:$0xf]
          %v1006 = vld [vmem:[%s1002 + $0xc] sm:$0xf]
          %v1007 = vld [vmem:[%s1002 + $0x10] sm:$0xf]
          %v1008 = vld [vmem:[%s1002 + $0x14] sm:$0xf]
          %v1009 = vld [vmem:[%s1002 + $0x18] sm:$0xf]
          %v1010 = vld [vmem:[%s1002 + $0x1c] sm:$0xf]
          %v1011 = vld [vmem:[%s1002 + $0x20] sm:$0xf]
          %v1012 = vld [vmem:[%s1002 + $0x24] sm:$0xf]
          %v1013 = vld [vmem:[%s1002 + $0x28] sm:$0xf]
          %v1014 = vld [vmem:[%s1002 + $0x2c] sm:$0xf]
          %s1015 = scalar_lea.vmem %s7, 1
          %v1016 = vld [vmem:[%s1015] sm:$0x1]
          %1018 = vrot.lane.b32.xlu0 %v971, 16
          %v1019 = vpop.permute.xlu0 %1018
          %v1021 = vsel %vm586, %v968, %v1019
          %1022 = vmatpush.msra.mxu0 0.0
          %1023 = vmatpush.msra.mxu0 0.0
          %1024 = vmatpush.msra.mxu0 0.0
          %1025 = vmatpush.msra.mxu0 0.0
          %1026 = vmatpush.msra.mxu0 0.0
          %1027 = vmatpush.msra.mxu0 0.0
          %1028 = vmatpush.msra.mxu0 0.0
          %1029 = vmatpush.msra.mxu0 0.0
          %1030 = vmatpush.msra.mxu0 0.0
          %1031 = vmatpush.msra.mxu0 0.0
          %1032 = vmatpush.msra.mxu0 0.0
          %1033 = vmatpush.msra.mxu0 0.0
          %1034 = vmatpush.msra.mxu0 0.0
          %1035 = vmatpush.msra.mxu0 0.0
          %1036 = vmatpush.msra.mxu0 0.0
          %1037 = vmatpush.msra.mxu0 %v1021
          %1038 = vmatmul.f32.gmra.mxu0 %v647
          %v1039 = vpop.f32.mrf.mxu0
          %v1040 = vadd.f32 0.0, %v1039
          %1041 = vdwg.mxu0
          %1042 = vmatpush.msra.mxu0 0.0
          %1043 = vmatpush.msra.mxu0 0.0
          %1044 = vmatpush.msra.mxu0 0.0
          %1045 = vmatpush.msra.mxu0 0.0
          %1046 = vmatpush.msra.mxu0 0.0
          %1047 = vmatpush.msra.mxu0 0.0
          %1048 = vmatpush.msra.mxu0 0.0
          %1049 = vmatpush.msra.mxu0 0.0
          %1050 = vmatpush.msra.mxu0 0.0
          %1051 = vmatpush.msra.mxu0 0.0
          %1052 = vmatpush.msra.mxu0 0.0
          %1053 = vmatpush.msra.mxu0 0.0
          %1054 = vmatpush.msra.mxu0 0.0
          %1055 = vmatpush.msra.mxu0 0.0
          %1056 = vmatpush.msra.mxu0 0.0
          %1057 = vmatpush.msra.mxu0 %v1040
          %1058 = vmatmul.f32.gmra.mxu0 %v647
          %v1059 = vpop.f32.mrf.mxu0
          %v1060 = vadd.f32 0.0, %v1059
          %1061 = vdwg.mxu0
          %v1062 = vmul.f32 %v1060, 2.0
          %v1063 = vsub.f32 %v1062, %v1021
          %1065 = vrot.lane.b32.xlu0 %v1040, 32
          %v1066 = vpop.permute.xlu0 %1065
          %1069 = vrot.lane.b32.xlu0 %v1063, 64
          %v1070 = vpop.permute.xlu0 %1069
          %v1072 = vsel %vm699, %v1021, %v1066
          %v1073 = vsel %vm701, %v1072, %v1070
          %v1074 = vpack.c.bf16 %v1073, %v1073
          %v1076 = vperm.slane %v986, 0
          %v1090 = vunpack.c.l.b16 %v973
          %v1091 = vunpack.c.l.b16 %v974
          %v1092 = vunpack.c.l.b16 %v975
          %v1093 = vunpack.c.l.b16 %v976
          %v1094 = vunpack.c.l.b16 %v977
          %v1095 = vunpack.c.l.b16 %v978
          %v1096 = vunpack.c.l.b16 %v979
          %v1097 = vunpack.c.l.b16 %v980
          %v1098 = vunpack.c.l.b16 %v981
          %v1099 = vunpack.c.l.b16 %v982
          %v1100 = vunpack.c.l.b16 %v983
          %v1101 = vunpack.c.l.b16 %v984
          %v1102 = vpack.c.b16 %v1091, %v1090
          %v1103 = vpack.c.b16 %v1093, %v1092
          %v1104 = vpack.c.b16 %v1095, %v1094
          %v1105 = vpack.c.b16 %v1097, %v1096
          %v1106 = vpack.c.b16 %v1099, %v1098
          %v1107 = vpack.c.b16 %v1101, %v1100
          %v1115 = vsel %vm743, %v1074, 0
          %1117 = vmatpush.bf16.msra.mxu0 0
          %1118 = vmatpush.bf16.msra.mxu0 0
          %1119 = vmatpush.bf16.msra.mxu0 %v1107
          %1120 = vmatpush.bf16.msra.mxu0 %v1106
          %1121 = vmatpush.bf16.msra.mxu0 %v1105
          %1122 = vmatpush.bf16.msra.mxu0 %v1104
          %1123 = vmatpush.bf16.msra.mxu0 %v1103
          %1124 = vmatpush.bf16.msra.mxu0 %v1102
          %1125 = vmatmul.bf16.gmra.mxu0 %v1115
          %v1126 = vpop.f32.mrf.mxu0
          %v1127 = vadd.f32 %v1076, %v1126
          %v1128 = vpop.f32.mrf.mxu0
          %1129 = vdwg.mxu0
          %v1130 = vsub.f32 0.0, %v1127
          %v1131 = vmul.f32 %v1130, 1.442695
          %v1132 = vpow.pop %v1131
          %v1133 = vadd.f32 %v1132, 1.0
          %v1134 = vrcp.pop %v1133
          %v1135 = vmul.f32 %v1133, %v1134
          %v1136 = vsub.f32 1.0, %v1135
          %v1137 = vmul.f32 %v1134, %v1136
          %v1138 = vadd.f32 %v1134, %v1137
          %vm1139 = vweird.f32 %v1133
          %vm1140 = vweird.f32 %v1134
          %vm1141 = vmor %vm1139, %vm1140
          %v1142 = vsel %vm1141, %v1134, %v1138
          %v1143 = vand.u32 2147483647, %v1133
          %vm1144 = vcmp.eq.f32.partialorder %v1143, 8.507059e+37
          %v1145 = vand.u32 %v1133, 2147483648
          %v1146 = vor.u32 1.1754944e-38, %v1145
          %v1147 = vsel %vm1144, %v1146, %v1142
          %v1148 = vmul.f32 1.0, %v1147
          %v1150 = vperm.slane %v1001, 0
          %v1164 = vunpack.c.l.b16 %v988
          %v1165 = vunpack.c.l.b16 %v989
          %v1166 = vunpack.c.l.b16 %v990
          %v1167 = vunpack.c.l.b16 %v991
          %v1168 = vunpack.c.l.b16 %v992
          %v1169 = vunpack.c.l.b16 %v993
          %v1170 = vunpack.c.l.b16 %v994
          %v1171 = vunpack.c.l.b16 %v995
          %v1172 = vunpack.c.l.b16 %v996
          %v1173 = vunpack.c.l.b16 %v997
          %v1174 = vunpack.c.l.b16 %v998
          %v1175 = vunpack.c.l.b16 %v999
          %v1176 = vpack.c.b16 %v1165, %v1164
          %v1177 = vpack.c.b16 %v1167, %v1166
          %v1178 = vpack.c.b16 %v1169, %v1168
          %v1179 = vpack.c.b16 %v1171, %v1170
          %v1180 = vpack.c.b16 %v1173, %v1172
          %v1181 = vpack.c.b16 %v1175, %v1174
          %1188 = vmatpush.bf16.msra.mxu0 0
          %1189 = vmatpush.bf16.msra.mxu0 0
          %1190 = vmatpush.bf16.msra.mxu0 %v1181
          %1191 = vmatpush.bf16.msra.mxu0 %v1180
          %1192 = vmatpush.bf16.msra.mxu0 %v1179
          %1193 = vmatpush.bf16.msra.mxu0 %v1178
          %1194 = vmatpush.bf16.msra.mxu0 %v1177
          %1195 = vmatpush.bf16.msra.mxu0 %v1176
          %1196 = vmatmul.bf16.gmra.mxu0 %v1115
          %v1197 = vpop.f32.mrf.mxu0
          %v1198 = vadd.f32 %v1150, %v1197
          %v1199 = vpop.f32.mrf.mxu0
          %1200 = vdwg.mxu0
          %v1201 = vsub.f32 0.0, %v1198
          %v1202 = vmul.f32 %v1201, 1.442695
          %v1203 = vpow.pop %v1202
          %v1204 = vadd.f32 %v1203, 1.0
          %v1205 = vrcp.pop %v1204
          %v1206 = vmul.f32 %v1204, %v1205
          %v1207 = vsub.f32 1.0, %v1206
          %v1208 = vmul.f32 %v1205, %v1207
          %v1209 = vadd.f32 %v1205, %v1208
          %vm1210 = vweird.f32 %v1204
          %vm1211 = vweird.f32 %v1205
          %vm1212 = vmor %vm1210, %vm1211
          %v1213 = vsel %vm1212, %v1205, %v1209
          %v1214 = vand.u32 2147483647, %v1204
          %vm1215 = vcmp.eq.f32.partialorder %v1214, 8.507059e+37
          %v1216 = vand.u32 %v1204, 2147483648
          %v1217 = vor.u32 1.1754944e-38, %v1216
          %v1218 = vsel %vm1215, %v1217, %v1213
          %v1219 = vmul.f32 1.0, %v1218
          %v1220 = vmul.f32 %v1148, %v971
          %1222 = vrot.lane.b32.xlu0 %v1220, 16
          %v1223 = vpop.permute.xlu0 %1222
          %v1225 = vsel %vm586, %v968, %v1223
          %1226 = vmatpush.msra.mxu0 0.0
          %1227 = vmatpush.msra.mxu0 0.0
          %1228 = vmatpush.msra.mxu0 0.0
          %1229 = vmatpush.msra.mxu0 0.0
          %1230 = vmatpush.msra.mxu0 0.0
          %1231 = vmatpush.msra.mxu0 0.0
          %1232 = vmatpush.msra.mxu0 0.0
          %1233 = vmatpush.msra.mxu0 0.0
          %1234 = vmatpush.msra.mxu0 0.0
          %1235 = vmatpush.msra.mxu0 0.0
          %1236 = vmatpush.msra.mxu0 0.0
          %1237 = vmatpush.msra.mxu0 0.0
          %1238 = vmatpush.msra.mxu0 0.0
          %1239 = vmatpush.msra.mxu0 0.0
          %1240 = vmatpush.msra.mxu0 0.0
          %1241 = vmatpush.msra.mxu0 %v1225
          %1242 = vmatmul.f32.gmra.mxu0 %v647
          %v1243 = vpop.f32.mrf.mxu0
          %v1244 = vadd.f32 0.0, %v1243
          %1245 = vdwg.mxu0
          %1246 = vmatpush.msra.mxu0 0.0
          %1247 = vmatpush.msra.mxu0 0.0
          %1248 = vmatpush.msra.mxu0 0.0
          %1249 = vmatpush.msra.mxu0 0.0
          %1250 = vmatpush.msra.mxu0 0.0
          %1251 = vmatpush.msra.mxu0 0.0
          %1252 = vmatpush.msra.mxu0 0.0
          %1253 = vmatpush.msra.mxu0 0.0
          %1254 = vmatpush.msra.mxu0 0.0
          %1255 = vmatpush.msra.mxu0 0.0
          %1256 = vmatpush.msra.mxu0 0.0
          %1257 = vmatpush.msra.mxu0 0.0
          %1258 = vmatpush.msra.mxu0 0.0
          %1259 = vmatpush.msra.mxu0 0.0
          %1260 = vmatpush.msra.mxu0 0.0
          %1261 = vmatpush.msra.mxu0 %v1244
          %1262 = vmatmul.f32.gmra.mxu0 %v647
          %v1263 = vpop.f32.mrf.mxu0
          %v1264 = vadd.f32 0.0, %v1263
          %1265 = vdwg.mxu0
          %v1266 = vmul.f32 %v1264, 2.0
          %v1267 = vsub.f32 %v1266, %v1225
          %1269 = vrot.lane.b32.xlu0 %v1244, 32
          %v1270 = vpop.permute.xlu0 %1269
          %1273 = vrot.lane.b32.xlu0 %v1267, 64
          %v1274 = vpop.permute.xlu0 %1273
          %v1276 = vsel %vm699, %v1225, %v1270
          %v1277 = vsel %vm701, %v1276, %v1274
          %v1278 = vpack.c.bf16 %v1277, %v1277
          %v1280 = vperm.slane %v1016, 0
          %v1294 = vunpack.c.l.b16 %v1003
          %v1295 = vunpack.c.l.b16 %v1004
          %v1296 = vunpack.c.l.b16 %v1005
          %v1297 = vunpack.c.l.b16 %v1006
          %v1298 = vunpack.c.l.b16 %v1007
          %v1299 = vunpack.c.l.b16 %v1008
          %v1300 = vunpack.c.l.b16 %v1009
          %v1301 = vunpack.c.l.b16 %v1010
          %v1302 = vunpack.c.l.b16 %v1011
          %v1303 = vunpack.c.l.b16 %v1012
          %v1304 = vunpack.c.l.b16 %v1013
          %v1305 = vunpack.c.l.b16 %v1014
          %v1306 = vpack.c.b16 %v1295, %v1294
          %v1307 = vpack.c.b16 %v1297, %v1296
          %v1308 = vpack.c.b16 %v1299, %v1298
          %v1309 = vpack.c.b16 %v1301, %v1300
          %v1310 = vpack.c.b16 %v1303, %v1302
          %v1311 = vpack.c.b16 %v1305, %v1304
          %v1319 = vsel %vm743, %v1278, 0
          %1321 = vmatpush.bf16.msra.mxu0 0
          %1322 = vmatpush.bf16.msra.mxu0 0
          %1323 = vmatpush.bf16.msra.mxu0 %v1311
          %1324 = vmatpush.bf16.msra.mxu0 %v1310
          %1325 = vmatpush.bf16.msra.mxu0 %v1309
          %1326 = vmatpush.bf16.msra.mxu0 %v1308
          %1327 = vmatpush.bf16.msra.mxu0 %v1307
          %1328 = vmatpush.bf16.msra.mxu0 %v1306
          %1329 = vmatmul.bf16.gmra.mxu0 %v1319
          %v1330 = vpop.f32.mrf.mxu0
          %v1331 = vadd.f32 %v1280, %v1330
          %v1332 = vpop.f32.mrf.mxu0
          %1333 = vdwg.mxu0
          %v1334 = vtanh.pop %v1331
          %v1335 = vmul.f32 %v1219, %v971
          %v1336 = vsub.f32 1.0, %v1219
          %v1337 = vmul.f32 %v1336, %v1334
          %v1338 = vadd.f32 %v1335, %v1337
          %1339 = vst.msk [vmem:[%s970] sm:$0xff] %vm586, %v1338
        $region127: #{lscgf_forward.3} parent=117 // loop_footer
          %s596 = sadd.s32 1, %s592
        $region128: #{lscgf_forward.3} parent=117 // loop_footer_branch
          %591 = sbr.rel target = $region124
        $region129: #{lscgf_forward.3} parent=117 // loop_exit
          _
        %v1340 = vld [vmem:[#allocation3] sm:$0xff]
        %v1341 = vld [vmem:[#allocation2] sm:$0xff]
        %v1342 = vld [vmem:[%s8] sm:$0xf]
        %v1343 = vld [vmem:[%s8 + $0x4] sm:$0xf]
        %v1344 = vld [vmem:[%s8 + $0x8] sm:$0xf]
        %v1345 = vld [vmem:[%s8 + $0xc] sm:$0xf]
        %v1346 = vld [vmem:[%s8 + $0x10] sm:$0xf]
        %v1347 = vld [vmem:[%s8 + $0x14] sm:$0xf]
        %v1348 = vld [vmem:[%s8 + $0x18] sm:$0xf]
        %v1349 = vld [vmem:[%s8 + $0x1c] sm:$0xf]
        %v1350 = vld [vmem:[%s8 + $0x20] sm:$0xf]
        %v1351 = vld [vmem:[%s8 + $0x24] sm:$0xf]
        %v1352 = vld [vmem:[%s8 + $0x28] sm:$0xf]
        %v1353 = vld [vmem:[%s8 + $0x2c] sm:$0xf]
        %v1354 = vld [vmem:[%s9] sm:$0x1]
        %v1355 = vld [vmem:[%s10] sm:$0xf]
        %v1356 = vld [vmem:[%s10 + $0x4] sm:$0xf]
        %v1357 = vld [vmem:[%s10 + $0x8] sm:$0xf]
        %v1358 = vld [vmem:[%s10 + $0xc] sm:$0xf]
        %v1359 = vld [vmem:[%s10 + $0x10] sm:$0xf]
        %v1360 = vld [vmem:[%s10 + $0x14] sm:$0xf]
        %v1361 = vld [vmem:[%s10 + $0x18] sm:$0xf]
        %v1362 = vld [vmem:[%s10 + $0x1c] sm:$0xf]
        %v1363 = vld [vmem:[%s10 + $0x20] sm:$0xf]
        %v1364 = vld [vmem:[%s10 + $0x24] sm:$0xf]
        %v1365 = vld [vmem:[%s10 + $0x28] sm:$0xf]
        %v1366 = vld [vmem:[%s10 + $0x2c] sm:$0xf]
        %v1367 = vld [vmem:[%s11] sm:$0x1]
        %v1368 = vld [vmem:[%s12] sm:$0xf]
        %v1369 = vld [vmem:[%s12 + $0x4] sm:$0xf]
        %v1370 = vld [vmem:[%s12 + $0x8] sm:$0xf]
        %v1371 = vld [vmem:[%s12 + $0xc] sm:$0xf]
        %v1372 = vld [vmem:[%s12 + $0x10] sm:$0xf]
        %v1373 = vld [vmem:[%s12 + $0x14] sm:$0xf]
        %v1374 = vld [vmem:[%s12 + $0x18] sm:$0xf]
        %v1375 = vld [vmem:[%s12 + $0x1c] sm:$0xf]
        %v1376 = vld [vmem:[%s12 + $0x20] sm:$0xf]
        %v1377 = vld [vmem:[%s12 + $0x24] sm:$0xf]
        %v1378 = vld [vmem:[%s12 + $0x28] sm:$0xf]
        %v1379 = vld [vmem:[%s12 + $0x2c] sm:$0xf]
        %v1380 = vld [vmem:[%s13] sm:$0x1]
        %1382 = vrot.lane.b32.xlu0 %v1341, 16
        %v1383 = vpop.permute.xlu0 %1382
        %v1385 = vsel %vm586, %v1340, %v1383
        %vm1386 = vcmask 64512
        %v1388 = vsel %vm1386, %v590, 0
        %1390 = vmatpush.msra.mxu0 0.0
        %1391 = vmatpush.msra.mxu0 0.0
        %1392 = vmatpush.msra.mxu0 0.0
        %1393 = vmatpush.msra.mxu0 0.0
        %1394 = vmatpush.msra.mxu0 0.0
        %1395 = vmatpush.msra.mxu0 0.0
        %1396 = vmatpush.msra.mxu0 0.0
        %1397 = vmatpush.msra.mxu0 0.0
        %1398 = vmatpush.msra.mxu0 0.0
        %1399 = vmatpush.msra.mxu0 0.0
        %1400 = vmatpush.msra.mxu0 0.0
        %1401 = vmatpush.msra.mxu0 0.0
        %1402 = vmatpush.msra.mxu0 0.0
        %1403 = vmatpush.msra.mxu0 0.0
        %1404 = vmatpush.msra.mxu0 0.0
        %1405 = vmatpush.msra.mxu0 %v1385
        %1406 = vmatmul.f32.gmra.mxu0 %v1388
        %v1407 = vpop.f32.mrf.mxu0
        %v1408 = vadd.f32 0.0, %v1407
        %1409 = vdwg.mxu0
        %1410 = vmatpush.msra.mxu0 0.0
        %1411 = vmatpush.msra.mxu0 0.0
        %1412 = vmatpush.msra.mxu0 0.0
        %1413 = vmatpush.msra.mxu0 0.0
        %1414 = vmatpush.msra.mxu0 0.0
        %1415 = vmatpush.msra.mxu0 0.0
        %1416 = vmatpush.msra.mxu0 0.0
        %1417 = vmatpush.msra.mxu0 0.0
        %1418 = vmatpush.msra.mxu0 0.0
        %1419 = vmatpush.msra.mxu0 0.0
        %1420 = vmatpush.msra.mxu0 0.0
        %1421 = vmatpush.msra.mxu0 0.0
        %1422 = vmatpush.msra.mxu0 0.0
        %1423 = vmatpush.msra.mxu0 0.0
        %1424 = vmatpush.msra.mxu0 0.0
        %1425 = vmatpush.msra.mxu0 %v1408
        %1426 = vmatmul.f32.gmra.mxu0 %v1388
        %v1427 = vpop.f32.mrf.mxu0
        %v1428 = vadd.f32 0.0, %v1427
        %1429 = vdwg.mxu0
        %v1430 = vmul.f32 %v1428, 2.0
        %v1431 = vsub.f32 %v1430, %v1385
        %1433 = vrot.lane.b32.xlu0 %v1408, 32
        %v1434 = vpop.permute.xlu0 %1433
        %1437 = vrot.lane.b32.xlu0 %v1431, 64
        %v1438 = vpop.permute.xlu0 %1437
        %vm1440 = vcmask 261120
        %v1441 = vsel %vm1440, %v1385, %v1434
        %vm1442 = vcmask 523264
        %v1443 = vsel %vm1442, %v1441, %v1438
        %v1444 = vpack.c.bf16 %v1443, %v1443
        %v1446 = vperm.slane %v1354, 0
        %v1460 = vunpack.c.l.b16 %v1342
        %v1461 = vunpack.c.l.b16 %v1343
        %v1462 = vunpack.c.l.b16 %v1344
        %v1463 = vunpack.c.l.b16 %v1345
        %v1464 = vunpack.c.l.b16 %v1346
        %v1465 = vunpack.c.l.b16 %v1347
        %v1466 = vunpack.c.l.b16 %v1348
        %v1467 = vunpack.c.l.b16 %v1349
        %v1468 = vunpack.c.l.b16 %v1350
        %v1469 = vunpack.c.l.b16 %v1351
        %v1470 = vunpack.c.l.b16 %v1352
        %v1471 = vunpack.c.l.b16 %v1353
        %v1472 = vpack.c.b16 %v1461, %v1460
        %v1473 = vpack.c.b16 %v1463, %v1462
        %v1474 = vpack.c.b16 %v1465, %v1464
        %v1475 = vpack.c.b16 %v1467, %v1466
        %v1476 = vpack.c.b16 %v1469, %v1468
        %v1477 = vpack.c.b16 %v1471, %v1470
        %vm1484 = vcmask 785408
        %v1486 = vsel %vm1484, %v1444, 0
        %1488 = vmatpush.bf16.msra.mxu0 0
        %1489 = vmatpush.bf16.msra.mxu0 0
        %1490 = vmatpush.bf16.msra.mxu0 %v1477
        %1491 = vmatpush.bf16.msra.mxu0 %v1476
        %1492 = vmatpush.bf16.msra.mxu0 %v1475
        %1493 = vmatpush.bf16.msra.mxu0 %v1474
        %1494 = vmatpush.bf16.msra.mxu0 %v1473
        %1495 = vmatpush.bf16.msra.mxu0 %v1472
        %1496 = vmatmul.bf16.gmra.mxu0 %v1486
        %v1497 = vpop.f32.mrf.mxu0
        %v1498 = vadd.f32 %v1446, %v1497
        %v1499 = vpop.f32.mrf.mxu0
        %1500 = vdwg.mxu0
        %v1501 = vsub.f32 0.0, %v1498
        %v1502 = vmul.f32 %v1501, 1.442695
        %v1503 = vpow.pop %v1502
        %v1504 = vadd.f32 %v1503, 1.0
        %v1505 = vrcp.pop %v1504
        %v1506 = vmul.f32 %v1504, %v1505
        %v1507 = vsub.f32 1.0, %v1506
        %v1508 = vmul.f32 %v1505, %v1507
        %v1509 = vadd.f32 %v1505, %v1508
        %vm1510 = vweird.f32 %v1504
        %vm1511 = vweird.f32 %v1505
        %vm1512 = vmor %vm1510, %vm1511
        %v1513 = vsel %vm1512, %v1505, %v1509
        %v1514 = vand.u32 2147483647, %v1504
        %vm1515 = vcmp.eq.f32.partialorder %v1514, 8.507059e+37
        %v1516 = vand.u32 %v1504, 2147483648
        %v1517 = vor.u32 1.1754944e-38, %v1516
        %v1518 = vsel %vm1515, %v1517, %v1513
        %v1519 = vmul.f32 1.0, %v1518
        %v1521 = vperm.slane %v1367, 0
        %v1535 = vunpack.c.l.b16 %v1355
        %v1536 = vunpack.c.l.b16 %v1356
        %v1537 = vunpack.c.l.b16 %v1357
        %v1538 = vunpack.c.l.b16 %v1358
        %v1539 = vunpack.c.l.b16 %v1359
        %v1540 = vunpack.c.l.b16 %v1360
        %v1541 = vunpack.c.l.b16 %v1361
        %v1542 = vunpack.c.l.b16 %v1362
        %v1543 = vunpack.c.l.b16 %v1363
        %v1544 = vunpack.c.l.b16 %v1364
        %v1545 = vunpack.c.l.b16 %v1365
        %v1546 = vunpack.c.l.b16 %v1366
        %v1547 = vpack.c.b16 %v1536, %v1535
        %v1548 = vpack.c.b16 %v1538, %v1537
        %v1549 = vpack.c.b16 %v1540, %v1539
        %v1550 = vpack.c.b16 %v1542, %v1541
        %v1551 = vpack.c.b16 %v1544, %v1543
        %v1552 = vpack.c.b16 %v1546, %v1545
        %1559 = vmatpush.bf16.msra.mxu0 0
        %1560 = vmatpush.bf16.msra.mxu0 0
        %1561 = vmatpush.bf16.msra.mxu0 %v1552
        %1562 = vmatpush.bf16.msra.mxu0 %v1551
        %1563 = vmatpush.bf16.msra.mxu0 %v1550
        %1564 = vmatpush.bf16.msra.mxu0 %v1549
        %1565 = vmatpush.bf16.msra.mxu0 %v1548
        %1566 = vmatpush.bf16.msra.mxu0 %v1547
        %1567 = vmatmul.bf16.gmra.mxu0 %v1486
        %v1568 = vpop.f32.mrf.mxu0
        %v1569 = vadd.f32 %v1521, %v1568
        %v1570 = vpop.f32.mrf.mxu0
        %1571 = vdwg.mxu0
        %v1572 = vsub.f32 0.0, %v1569
        %v1573 = vmul.f32 %v1572, 1.442695
        %v1574 = vpow.pop %v1573
        %v1575 = vadd.f32 %v1574, 1.0
        %v1576 = vrcp.pop %v1575
        %v1577 = vmul.f32 %v1575, %v1576
        %v1578 = vsub.f32 1.0, %v1577
        %v1579 = vmul.f32 %v1576, %v1578
        %v1580 = vadd.f32 %v1576, %v1579
        %vm1581 = vweird.f32 %v1575
        %vm1582 = vweird.f32 %v1576
        %vm1583 = vmor %vm1581, %vm1582
        %v1584 = vsel %vm1583, %v1576, %v1580
        %v1585 = vand.u32 2147483647, %v1575
        %vm1586 = vcmp.eq.f32.partialorder %v1585, 8.507059e+37
        %v1587 = vand.u32 %v1575, 2147483648
        %v1588 = vor.u32 1.1754944e-38, %v1587
        %v1589 = vsel %vm1586, %v1588, %v1584
        %v1590 = vmul.f32 1.0, %v1589
        %v1591 = vmul.f32 %v1519, %v1341
        %1593 = vrot.lane.b32.xlu0 %v1591, 16
        %v1594 = vpop.permute.xlu0 %1593
        %v1596 = vsel %vm586, %v1340, %v1594
        %1597 = vmatpush.msra.mxu0 0.0
        %1598 = vmatpush.msra.mxu0 0.0
        %1599 = vmatpush.msra.mxu0 0.0
        %1600 = vmatpush.msra.mxu0 0.0
        %1601 = vmatpush.msra.mxu0 0.0
        %1602 = vmatpush.msra.mxu0 0.0
        %1603 = vmatpush.msra.mxu0 0.0
        %1604 = vmatpush.msra.mxu0 0.0
        %1605 = vmatpush.msra.mxu0 0.0
        %1606 = vmatpush.msra.mxu0 0.0
        %1607 = vmatpush.msra.mxu0 0.0
        %1608 = vmatpush.msra.mxu0 0.0
        %1609 = vmatpush.msra.mxu0 0.0
        %1610 = vmatpush.msra.mxu0 0.0
        %1611 = vmatpush.msra.mxu0 0.0
        %1612 = vmatpush.msra.mxu0 %v1596
        %1613 = vmatmul.f32.gmra.mxu0 %v1388
        %v1614 = vpop.f32.mrf.mxu0
        %v1615 = vadd.f32 0.0, %v1614
        %1616 = vdwg.mxu0
        %1617 = vmatpush.msra.mxu0 0.0
        %1618 = vmatpush.msra.mxu0 0.0
        %1619 = vmatpush.msra.mxu0 0.0
        %1620 = vmatpush.msra.mxu0 0.0
        %1621 = vmatpush.msra.mxu0 0.0
        %1622 = vmatpush.msra.mxu0 0.0
        %1623 = vmatpush.msra.mxu0 0.0
        %1624 = vmatpush.msra.mxu0 0.0
        %1625 = vmatpush.msra.mxu0 0.0
        %1626 = vmatpush.msra.mxu0 0.0
        %1627 = vmatpush.msra.mxu0 0.0
        %1628 = vmatpush.msra.mxu0 0.0
        %1629 = vmatpush.msra.mxu0 0.0
        %1630 = vmatpush.msra.mxu0 0.0
        %1631 = vmatpush.msra.mxu0 0.0
        %1632 = vmatpush.msra.mxu0 %v1615
        %1633 = vmatmul.f32.gmra.mxu0 %v1388
        %v1634 = vpop.f32.mrf.mxu0
        %v1635 = vadd.f32 0.0, %v1634
        %1636 = vdwg.mxu0
        %v1637 = vmul.f32 %v1635, 2.0
        %v1638 = vsub.f32 %v1637, %v1596
        %1640 = vrot.lane.b32.xlu0 %v1615, 32
        %v1641 = vpop.permute.xlu0 %1640
        %1644 = vrot.lane.b32.xlu0 %v1638, 64
        %v1645 = vpop.permute.xlu0 %1644
        %v1647 = vsel %vm1440, %v1596, %v1641
        %v1648 = vsel %vm1442, %v1647, %v1645
        %v1649 = vpack.c.bf16 %v1648, %v1648
        %v1651 = vperm.slane %v1380, 0
        %v1665 = vunpack.c.l.b16 %v1368
        %v1666 = vunpack.c.l.b16 %v1369
        %v1667 = vunpack.c.l.b16 %v1370
        %v1668 = vunpack.c.l.b16 %v1371
        %v1669 = vunpack.c.l.b16 %v1372
        %v1670 = vunpack.c.l.b16 %v1373
        %v1671 = vunpack.c.l.b16 %v1374
        %v1672 = vunpack.c.l.b16 %v1375
        %v1673 = vunpack.c.l.b16 %v1376
        %v1674 = vunpack.c.l.b16 %v1377
        %v1675 = vunpack.c.l.b16 %v1378
        %v1676 = vunpack.c.l.b16 %v1379
        %v1677 = vpack.c.b16 %v1666, %v1665
        %v1678 = vpack.c.b16 %v1668, %v1667
        %v1679 = vpack.c.b16 %v1670, %v1669
        %v1680 = vpack.c.b16 %v1672, %v1671
        %v1681 = vpack.c.b16 %v1674, %v1673
        %v1682 = vpack.c.b16 %v1676, %v1675
        %v1690 = vsel %vm1484, %v1649, 0
        %1692 = vmatpush.bf16.msra.mxu0 0
        %1693 = vmatpush.bf16.msra.mxu0 0
        %1694 = vmatpush.bf16.msra.mxu0 %v1682
        %1695 = vmatpush.bf16.msra.mxu0 %v1681
        %1696 = vmatpush.bf16.msra.mxu0 %v1680
        %1697 = vmatpush.bf16.msra.mxu0 %v1679
        %1698 = vmatpush.bf16.msra.mxu0 %v1678
        %1699 = vmatpush.bf16.msra.mxu0 %v1677
        %1700 = vmatmul.bf16.gmra.mxu0 %v1690
        %v1701 = vpop.f32.mrf.mxu0
        %v1702 = vadd.f32 %v1651, %v1701
        %v1703 = vpop.f32.mrf.mxu0
        %1704 = vdwg.mxu0
        %v1705 = vtanh.pop %v1702
        %v1706 = vmul.f32 %v1590, %v1341
        %v1707 = vsub.f32 1.0, %v1590
        %v1708 = vmul.f32 %v1707, %v1705
        %v1709 = vadd.f32 %v1706, %v1708
        %1710 = vst.msk [vmem:[#allocation2] sm:$0xff] %vm586, %v1709
        %s1711 = scalar_lea.vmem [#allocation2], 8
        %v1712 = vld [vmem:[%s1711] sm:$0xff]
        %s1713 = scalar_lea.vmem %s8, 48
        %v1714 = vld [vmem:[%s1713] sm:$0xf]
        %v1715 = vld [vmem:[%s1713 + $0x4] sm:$0xf]
        %v1716 = vld [vmem:[%s1713 + $0x8] sm:$0xf]
        %v1717 = vld [vmem:[%s1713 + $0xc] sm:$0xf]
        %v1718 = vld [vmem:[%s1713 + $0x10] sm:$0xf]
        %v1719 = vld [vmem:[%s1713 + $0x14] sm:$0xf]
        %v1720 = vld [vmem:[%s1713 + $0x18] sm:$0xf]
        %v1721 = vld [vmem:[%s1713 + $0x1c] sm:$0xf]
        %v1722 = vld [vmem:[%s1713 + $0x20] sm:$0xf]
        %v1723 = vld [vmem:[%s1713 + $0x24] sm:$0xf]
        %v1724 = vld [vmem:[%s1713 + $0x28] sm:$0xf]
        %v1725 = vld [vmem:[%s1713 + $0x2c] sm:$0xf]
        %s1726 = scalar_lea.vmem %s9, 1
        %v1727 = vld [vmem:[%s1726] sm:$0x1]
        %s1728 = scalar_lea.vmem %s10, 48
        %v1729 = vld [vmem:[%s1728] sm:$0xf]
        %v1730 = vld [vmem:[%s1728 + $0x4] sm:$0xf]
        %v1731 = vld [vmem:[%s1728 + $0x8] sm:$0xf]
        %v1732 = vld [vmem:[%s1728 + $0xc] sm:$0xf]
        %v1733 = vld [vmem:[%s1728 + $0x10] sm:$0xf]
        %v1734 = vld [vmem:[%s1728 + $0x14] sm:$0xf]
        %v1735 = vld [vmem:[%s1728 + $0x18] sm:$0xf]
        %v1736 = vld [vmem:[%s1728 + $0x1c] sm:$0xf]
        %v1737 = vld [vmem:[%s1728 + $0x20] sm:$0xf]
        %v1738 = vld [vmem:[%s1728 + $0x24] sm:$0xf]
        %v1739 = vld [vmem:[%s1728 + $0x28] sm:$0xf]
        %v1740 = vld [vmem:[%s1728 + $0x2c] sm:$0xf]
        %s1741 = scalar_lea.vmem %s11, 1
        %v1742 = vld [vmem:[%s1741] sm:$0x1]
        %s1743 = scalar_lea.vmem %s12, 48
        %v1744 = vld [vmem:[%s1743] sm:$0xf]
        %v1745 = vld [vmem:[%s1743 + $0x4] sm:$0xf]
        %v1746 = vld [vmem:[%s1743 + $0x8] sm:$0xf]
        %v1747 = vld [vmem:[%s1743 + $0xc] sm:$0xf]
        %v1748 = vld [vmem:[%s1743 + $0x10] sm:$0xf]
        %v1749 = vld [vmem:[%s1743 + $0x14] sm:$0xf]
        %v1750 = vld [vmem:[%s1743 + $0x18] sm:$0xf]
        %v1751 = vld [vmem:[%s1743 + $0x1c] sm:$0xf]
        %v1752 = vld [vmem:[%s1743 + $0x20] sm:$0xf]
        %v1753 = vld [vmem:[%s1743 + $0x24] sm:$0xf]
        %v1754 = vld [vmem:[%s1743 + $0x28] sm:$0xf]
        %v1755 = vld [vmem:[%s1743 + $0x2c] sm:$0xf]
        %s1756 = scalar_lea.vmem %s13, 1
        %v1757 = vld [vmem:[%s1756] sm:$0x1]
        %1759 = vrot.lane.b32.xlu0 %v1712, 16
        %v1760 = vpop.permute.xlu0 %1759
        %v1762 = vsel %vm586, %v1709, %v1760
        %1763 = vmatpush.msra.mxu0 0.0
        %1764 = vmatpush.msra.mxu0 0.0
        %1765 = vmatpush.msra.mxu0 0.0
        %1766 = vmatpush.msra.mxu0 0.0
        %1767 = vmatpush.msra.mxu0 0.0
        %1768 = vmatpush.msra.mxu0 0.0
        %1769 = vmatpush.msra.mxu0 0.0
        %1770 = vmatpush.msra.mxu0 0.0
        %1771 = vmatpush.msra.mxu0 0.0
        %1772 = vmatpush.msra.mxu0 0.0
        %1773 = vmatpush.msra.mxu0 0.0
        %1774 = vmatpush.msra.mxu0 0.0
        %1775 = vmatpush.msra.mxu0 0.0
        %1776 = vmatpush.msra.mxu0 0.0
        %1777 = vmatpush.msra.mxu0 0.0
        %1778 = vmatpush.msra.mxu0 %v1762
        %1779 = vmatmul.f32.gmra.mxu0 %v1388
        %v1780 = vpop.f32.mrf.mxu0
        %v1781 = vadd.f32 0.0, %v1780
        %1782 = vdwg.mxu0
        %1783 = vmatpush.msra.mxu0 0.0
        %1784 = vmatpush.msra.mxu0 0.0
        %1785 = vmatpush.msra.mxu0 0.0
        %1786 = vmatpush.msra.mxu0 0.0
        %1787 = vmatpush.msra.mxu0 0.0
        %1788 = vmatpush.msra.mxu0 0.0
        %1789 = vmatpush.msra.mxu0 0.0
        %1790 = vmatpush.msra.mxu0 0.0
        %1791 = vmatpush.msra.mxu0 0.0
        %1792 = vmatpush.msra.mxu0 0.0
        %1793 = vmatpush.msra.mxu0 0.0
        %1794 = vmatpush.msra.mxu0 0.0
        %1795 = vmatpush.msra.mxu0 0.0
        %1796 = vmatpush.msra.mxu0 0.0
        %1797 = vmatpush.msra.mxu0 0.0
        %1798 = vmatpush.msra.mxu0 %v1781
        %1799 = vmatmul.f32.gmra.mxu0 %v1388
        %v1800 = vpop.f32.mrf.mxu0
        %v1801 = vadd.f32 0.0, %v1800
        %1802 = vdwg.mxu0
        %v1803 = vmul.f32 %v1801, 2.0
        %v1804 = vsub.f32 %v1803, %v1762
        %1806 = vrot.lane.b32.xlu0 %v1781, 32
        %v1807 = vpop.permute.xlu0 %1806
        %1810 = vrot.lane.b32.xlu0 %v1804, 64
        %v1811 = vpop.permute.xlu0 %1810
        %v1813 = vsel %vm1440, %v1762, %v1807
        %v1814 = vsel %vm1442, %v1813, %v1811
        %v1815 = vpack.c.bf16 %v1814, %v1814
        %v1817 = vperm.slane %v1727, 0
        %v1831 = vunpack.c.l.b16 %v1714
        %v1832 = vunpack.c.l.b16 %v1715
        %v1833 = vunpack.c.l.b16 %v1716
        %v1834 = vunpack.c.l.b16 %v1717
        %v1835 = vunpack.c.l.b16 %v1718
        %v1836 = vunpack.c.l.b16 %v1719
        %v1837 = vunpack.c.l.b16 %v1720
        %v1838 = vunpack.c.l.b16 %v1721
        %v1839 = vunpack.c.l.b16 %v1722
        %v1840 = vunpack.c.l.b16 %v1723
        %v1841 = vunpack.c.l.b16 %v1724
        %v1842 = vunpack.c.l.b16 %v1725
        %v1843 = vpack.c.b16 %v1832, %v1831
        %v1844 = vpack.c.b16 %v1834, %v1833
        %v1845 = vpack.c.b16 %v1836, %v1835
        %v1846 = vpack.c.b16 %v1838, %v1837
        %v1847 = vpack.c.b16 %v1840, %v1839
        %v1848 = vpack.c.b16 %v1842, %v1841
        %v1856 = vsel %vm1484, %v1815, 0
        %1858 = vmatpush.bf16.msra.mxu0 0
        %1859 = vmatpush.bf16.msra.mxu0 0
        %1860 = vmatpush.bf16.msra.mxu0 %v1848
        %1861 = vmatpush.bf16.msra.mxu0 %v1847
        %1862 = vmatpush.bf16.msra.mxu0 %v1846
        %1863 = vmatpush.bf16.msra.mxu0 %v1845
        %1864 = vmatpush.bf16.msra.mxu0 %v1844
        %1865 = vmatpush.bf16.msra.mxu0 %v1843
        %1866 = vmatmul.bf16.gmra.mxu0 %v1856
        %v1867 = vpop.f32.mrf.mxu0
        %v1868 = vadd.f32 %v1817, %v1867
        %v1869 = vpop.f32.mrf.mxu0
        %1870 = vdwg.mxu0
        %v1871 = vsub.f32 0.0, %v1868
        %v1872 = vmul.f32 %v1871, 1.442695
        %v1873 = vpow.pop %v1872
        %v1874 = vadd.f32 %v1873, 1.0
        %v1875 = vrcp.pop %v1874
        %v1876 = vmul.f32 %v1874, %v1875
        %v1877 = vsub.f32 1.0, %v1876
        %v1878 = vmul.f32 %v1875, %v1877
        %v1879 = vadd.f32 %v1875, %v1878
        %vm1880 = vweird.f32 %v1874
        %vm1881 = vweird.f32 %v1875
        %vm1882 = vmor %vm1880, %vm1881
        %v1883 = vsel %vm1882, %v1875, %v1879
        %v1884 = vand.u32 2147483647, %v1874
        %vm1885 = vcmp.eq.f32.partialorder %v1884, 8.507059e+37
        %v1886 = vand.u32 %v1874, 2147483648
        %v1887 = vor.u32 1.1754944e-38, %v1886
        %v1888 = vsel %vm1885, %v1887, %v1883
        %v1889 = vmul.f32 1.0, %v1888
        %v1891 = vperm.slane %v1742, 0
        %v1905 = vunpack.c.l.b16 %v1729
        %v1906 = vunpack.c.l.b16 %v1730
        %v1907 = vunpack.c.l.b16 %v1731
        %v1908 = vunpack.c.l.b16 %v1732
        %v1909 = vunpack.c.l.b16 %v1733
        %v1910 = vunpack.c.l.b16 %v1734
        %v1911 = vunpack.c.l.b16 %v1735
        %v1912 = vunpack.c.l.b16 %v1736
        %v1913 = vunpack.c.l.b16 %v1737
        %v1914 = vunpack.c.l.b16 %v1738
        %v1915 = vunpack.c.l.b16 %v1739
        %v1916 = vunpack.c.l.b16 %v1740
        %v1917 = vpack.c.b16 %v1906, %v1905
        %v1918 = vpack.c.b16 %v1908, %v1907
        %v1919 = vpack.c.b16 %v1910, %v1909
        %v1920 = vpack.c.b16 %v1912, %v1911
        %v1921 = vpack.c.b16 %v1914, %v1913
        %v1922 = vpack.c.b16 %v1916, %v1915
        %1929 = vmatpush.bf16.msra.mxu0 0
        %1930 = vmatpush.bf16.msra.mxu0 0
        %1931 = vmatpush.bf16.msra.mxu0 %v1922
        %1932 = vmatpush.bf16.msra.mxu0 %v1921
        %1933 = vmatpush.bf16.msra.mxu0 %v1920
        %1934 = vmatpush.bf16.msra.mxu0 %v1919
        %1935 = vmatpush.bf16.msra.mxu0 %v1918
        %1936 = vmatpush.bf16.msra.mxu0 %v1917
        %1937 = vmatmul.bf16.gmra.mxu0 %v1856
        %v1938 = vpop.f32.mrf.mxu0
        %v1939 = vadd.f32 %v1891, %v1938
        %v1940 = vpop.f32.mrf.mxu0
        %1941 = vdwg.mxu0
        %v1942 = vsub.f32 0.0, %v1939
        %v1943 = vmul.f32 %v1942, 1.442695
        %v1944 = vpow.pop %v1943
        %v1945 = vadd.f32 %v1944, 1.0
        %v1946 = vrcp.pop %v1945
        %v1947 = vmul.f32 %v1945, %v1946
        %v1948 = vsub.f32 1.0, %v1947
        %v1949 = vmul.f32 %v1946, %v1948
        %v1950 = vadd.f32 %v1946, %v1949
        %vm1951 = vweird.f32 %v1945
        %vm1952 = vweird.f32 %v1946
        %vm1953 = vmor %vm1951, %vm1952
        %v1954 = vsel %vm1953, %v1946, %v1950
        %v1955 = vand.u32 2147483647, %v1945
        %vm1956 = vcmp.eq.f32.partialorder %v1955, 8.507059e+37
        %v1957 = vand.u32 %v1945, 2147483648
        %v1958 = vor.u32 1.1754944e-38, %v1957
        %v1959 = vsel %vm1956, %v1958, %v1954
        %v1960 = vmul.f32 1.0, %v1959
        %v1961 = vmul.f32 %v1889, %v1712
        %1963 = vrot.lane.b32.xlu0 %v1961, 16
        %v1964 = vpop.permute.xlu0 %1963
        %v1966 = vsel %vm586, %v1709, %v1964
        %1967 = vmatpush.msra.mxu0 0.0
        %1968 = vmatpush.msra.mxu0 0.0
        %1969 = vmatpush.msra.mxu0 0.0
        %1970 = vmatpush.msra.mxu0 0.0
        %1971 = vmatpush.msra.mxu0 0.0
        %1972 = vmatpush.msra.mxu0 0.0
        %1973 = vmatpush.msra.mxu0 0.0
        %1974 = vmatpush.msra.mxu0 0.0
        %1975 = vmatpush.msra.mxu0 0.0
        %1976 = vmatpush.msra.mxu0 0.0
        %1977 = vmatpush.msra.mxu0 0.0
        %1978 = vmatpush.msra.mxu0 0.0
        %1979 = vmatpush.msra.mxu0 0.0
        %1980 = vmatpush.msra.mxu0 0.0
        %1981 = vmatpush.msra.mxu0 0.0
        %1982 = vmatpush.msra.mxu0 %v1966
        %1983 = vmatmul.f32.gmra.mxu0 %v1388
        %v1984 = vpop.f32.mrf.mxu0
        %v1985 = vadd.f32 0.0, %v1984
        %1986 = vdwg.mxu0
        %1987 = vmatpush.msra.mxu0 0.0
        %1988 = vmatpush.msra.mxu0 0.0
        %1989 = vmatpush.msra.mxu0 0.0
        %1990 = vmatpush.msra.mxu0 0.0
        %1991 = vmatpush.msra.mxu0 0.0
        %1992 = vmatpush.msra.mxu0 0.0
        %1993 = vmatpush.msra.mxu0 0.0
        %1994 = vmatpush.msra.mxu0 0.0
        %1995 = vmatpush.msra.mxu0 0.0
        %1996 = vmatpush.msra.mxu0 0.0
        %1997 = vmatpush.msra.mxu0 0.0
        %1998 = vmatpush.msra.mxu0 0.0
        %1999 = vmatpush.msra.mxu0 0.0
        %2000 = vmatpush.msra.mxu0 0.0
        %2001 = vmatpush.msra.mxu0 0.0
        %2002 = vmatpush.msra.mxu0 %v1985
        %2003 = vmatmul.f32.gmra.mxu0 %v1388
        %v2004 = vpop.f32.mrf.mxu0
        %v2005 = vadd.f32 0.0, %v2004
        %2006 = vdwg.mxu0
        %v2007 = vmul.f32 %v2005, 2.0
        %v2008 = vsub.f32 %v2007, %v1966
        %2010 = vrot.lane.b32.xlu0 %v1985, 32
        %v2011 = vpop.permute.xlu0 %2010
        %2014 = vrot.lane.b32.xlu0 %v2008, 64
        %v2015 = vpop.permute.xlu0 %2014
        %v2017 = vsel %vm1440, %v1966, %v2011
        %v2018 = vsel %vm1442, %v2017, %v2015
        %v2019 = vpack.c.bf16 %v2018, %v2018
        %v2021 = vperm.slane %v1757, 0
        %v2035 = vunpack.c.l.b16 %v1744
        %v2036 = vunpack.c.l.b16 %v1745
        %v2037 = vunpack.c.l.b16 %v1746
        %v2038 = vunpack.c.l.b16 %v1747
        %v2039 = vunpack.c.l.b16 %v1748
        %v2040 = vunpack.c.l.b16 %v1749
        %v2041 = vunpack.c.l.b16 %v1750
        %v2042 = vunpack.c.l.b16 %v1751
        %v2043 = vunpack.c.l.b16 %v1752
        %v2044 = vunpack.c.l.b16 %v1753
        %v2045 = vunpack.c.l.b16 %v1754
        %v2046 = vunpack.c.l.b16 %v1755
        %v2047 = vpack.c.b16 %v2036, %v2035
        %v2048 = vpack.c.b16 %v2038, %v2037
        %v2049 = vpack.c.b16 %v2040, %v2039
        %v2050 = vpack.c.b16 %v2042, %v2041
        %v2051 = vpack.c.b16 %v2044, %v2043
        %v2052 = vpack.c.b16 %v2046, %v2045
        %v2060 = vsel %vm1484, %v2019, 0
        %2062 = vmatpush.bf16.msra.mxu0 0
        %2063 = vmatpush.bf16.msra.mxu0 0
        %2064 = vmatpush.bf16.msra.mxu0 %v2052
        %2065 = vmatpush.bf16.msra.mxu0 %v2051
        %2066 = vmatpush.bf16.msra.mxu0 %v2050
        %2067 = vmatpush.bf16.msra.mxu0 %v2049
        %2068 = vmatpush.bf16.msra.mxu0 %v2048
        %2069 = vmatpush.bf16.msra.mxu0 %v2047
        %2070 = vmatmul.bf16.gmra.mxu0 %v2060
        %v2071 = vpop.f32.mrf.mxu0
        %v2072 = vadd.f32 %v2021, %v2071
        %v2073 = vpop.f32.mrf.mxu0
        %2074 = vdwg.mxu0
        %v2075 = vtanh.pop %v2072
        %v2076 = vmul.f32 %v1960, %v1712
        %v2077 = vsub.f32 1.0, %v1960
        %v2078 = vmul.f32 %v2077, %v2075
        %v2079 = vadd.f32 %v2076, %v2078
        %2080 = vst.msk [vmem:[%s1711] sm:$0xff] %vm586, %v2079
        %v2081 = vld [vmem:[%s14] sm:$0xff]
        %v2082 = vld [vmem:[%s14 + $0x8] sm:$0xff]
        %v2083 = vld [vmem:[#allocation4] sm:$0x1]
        %v2085 = vperm.slane %v2083, 0
        %v2088 = vsel %vm586, %v2079, 0
        %2090 = vmatpush.msra.mxu0 0.0
        %2091 = vmatpush.msra.mxu0 0.0
        %2092 = vmatpush.msra.mxu0 0.0
        %2093 = vmatpush.msra.mxu0 0.0
        %2094 = vmatpush.msra.mxu0 0.0
        %2095 = vmatpush.msra.mxu0 0.0
        %2096 = vmatpush.msra.mxu0 0.0
        %2097 = vmatpush.msra.mxu0 0.0
        %2098 = vmatpush.msra.mxu0 0.0
        %2099 = vmatpush.msra.mxu0 0.0
        %2100 = vmatpush.msra.mxu0 0.0
        %2101 = vmatpush.msra.mxu0 0.0
        %2102 = vmatpush.msra.mxu0 0.0
        %2103 = vmatpush.msra.mxu0 0.0
        %2104 = vmatpush.msra.mxu0 %v2082
        %2105 = vmatpush.msra.mxu0 %v2081
        %2106 = vmatmul.f32.gmra.mxu0 %v2088
        %v2107 = vpop.f32.mrf.mxu0
        %v2108 = vadd.f32 %v2085, %v2107
        %2109 = vdwg.mxu0
        %vm2110 = vcmask 7168
        %2111 = vst.msk [vmem:[%s584] sm:$0xff] %vm2110, %v2108
        %2112 = vst.msk [vmem:[#allocation3] sm:$0xff] %vm2110, %v2108
        %v2113 = vld [vmem:[#allocation3] sm:$0xff]
        %v2114 = vld [vmem:[#allocation2] sm:$0xff]
        %v2115 = vld [vmem:[%s8] sm:$0xf]
        %v2116 = vld [vmem:[%s8 + $0x4] sm:$0xf]
        %v2117 = vld [vmem:[%s8 + $0x8] sm:$0xf]
        %v2118 = vld [vmem:[%s8 + $0xc] sm:$0xf]
        %v2119 = vld [vmem:[%s8 + $0x10] sm:$0xf]
        %v2120 = vld [vmem:[%s8 + $0x14] sm:$0xf]
        %v2121 = vld [vmem:[%s8 + $0x18] sm:$0xf]
        %v2122 = vld [vmem:[%s8 + $0x1c] sm:$0xf]
        %v2123 = vld [vmem:[%s8 + $0x20] sm:$0xf]
        %v2124 = vld [vmem:[%s8 + $0x24] sm:$0xf]
        %v2125 = vld [vmem:[%s8 + $0x28] sm:$0xf]
        %v2126 = vld [vmem:[%s8 + $0x2c] sm:$0xf]
        %v2127 = vld [vmem:[%s9] sm:$0x1]
        %v2128 = vld [vmem:[%s10] sm:$0xf]
        %v2129 = vld [vmem:[%s10 + $0x4] sm:$0xf]
        %v2130 = vld [vmem:[%s10 + $0x8] sm:$0xf]
        %v2131 = vld [vmem:[%s10 + $0xc] sm:$0xf]
        %v2132 = vld [vmem:[%s10 + $0x10] sm:$0xf]
        %v2133 = vld [vmem:[%s10 + $0x14] sm:$0xf]
        %v2134 = vld [vmem:[%s10 + $0x18] sm:$0xf]
        %v2135 = vld [vmem:[%s10 + $0x1c] sm:$0xf]
        %v2136 = vld [vmem:[%s10 + $0x20] sm:$0xf]
        %v2137 = vld [vmem:[%s10 + $0x24] sm:$0xf]
        %v2138 = vld [vmem:[%s10 + $0x28] sm:$0xf]
        %v2139 = vld [vmem:[%s10 + $0x2c] sm:$0xf]
        %v2140 = vld [vmem:[%s11] sm:$0x1]
        %v2141 = vld [vmem:[%s12] sm:$0xf]
        %v2142 = vld [vmem:[%s12 + $0x4] sm:$0xf]
        %v2143 = vld [vmem:[%s12 + $0x8] sm:$0xf]
        %v2144 = vld [vmem:[%s12 + $0xc] sm:$0xf]
        %v2145 = vld [vmem:[%s12 + $0x10] sm:$0xf]
        %v2146 = vld [vmem:[%s12 + $0x14] sm:$0xf]
        %v2147 = vld [vmem:[%s12 + $0x18] sm:$0xf]
        %v2148 = vld [vmem:[%s12 + $0x1c] sm:$0xf]
        %v2149 = vld [vmem:[%s12 + $0x20] sm:$0xf]
        %v2150 = vld [vmem:[%s12 + $0x24] sm:$0xf]
        %v2151 = vld [vmem:[%s12 + $0x28] sm:$0xf]
        %v2152 = vld [vmem:[%s12 + $0x2c] sm:$0xf]
        %v2153 = vld [vmem:[%s13] sm:$0x1]
        %2155 = vrot.lane.b32.xlu0 %v2114, 16
        %v2156 = vpop.permute.xlu0 %2155
        %v2158 = vsel %vm586, %v2113, %v2156
        %2159 = vmatpush.msra.mxu0 0.0
        %2160 = vmatpush.msra.mxu0 0.0
        %2161 = vmatpush.msra.mxu0 0.0
        %2162 = vmatpush.msra.mxu0 0.0
        %2163 = vmatpush.msra.mxu0 0.0
        %2164 = vmatpush.msra.mxu0 0.0
        %2165 = vmatpush.msra.mxu0 0.0
        %2166 = vmatpush.msra.mxu0 0.0
        %2167 = vmatpush.msra.mxu0 0.0
        %2168 = vmatpush.msra.mxu0 0.0
        %2169 = vmatpush.msra.mxu0 0.0
        %2170 = vmatpush.msra.mxu0 0.0
        %2171 = vmatpush.msra.mxu0 0.0
        %2172 = vmatpush.msra.mxu0 0.0
        %2173 = vmatpush.msra.mxu0 0.0
        %2174 = vmatpush.msra.mxu0 %v2158
        %2175 = vmatmul.f32.gmra.mxu0 %v1388
        %v2176 = vpop.f32.mrf.mxu0
        %v2177 = vadd.f32 0.0, %v2176
        %2178 = vdwg.mxu0
        %2179 = vmatpush.msra.mxu0 0.0
        %2180 = vmatpush.msra.mxu0 0.0
        %2181 = vmatpush.msra.mxu0 0.0
        %2182 = vmatpush.msra.mxu0 0.0
        %2183 = vmatpush.msra.mxu0 0.0
        %2184 = vmatpush.msra.mxu0 0.0
        %2185 = vmatpush.msra.mxu0 0.0
        %2186 = vmatpush.msra.mxu0 0.0
        %2187 = vmatpush.msra.mxu0 0.0
        %2188 = vmatpush.msra.mxu0 0.0
        %2189 = vmatpush.msra.mxu0 0.0
        %2190 = vmatpush.msra.mxu0 0.0
        %2191 = vmatpush.msra.mxu0 0.0
        %2192 = vmatpush.msra.mxu0 0.0
        %2193 = vmatpush.msra.mxu0 0.0
        %2194 = vmatpush.msra.mxu0 %v2177
        %2195 = vmatmul.f32.gmra.mxu0 %v1388
        %v2196 = vpop.f32.mrf.mxu0
        %v2197 = vadd.f32 0.0, %v2196
        %2198 = vdwg.mxu0
        %v2199 = vmul.f32 %v2197, 2.0
        %v2200 = vsub.f32 %v2199, %v2158
        %2202 = vrot.lane.b32.xlu0 %v2177, 32
        %v2203 = vpop.permute.xlu0 %2202
        %2206 = vrot.lane.b32.xlu0 %v2200, 64
        %v2207 = vpop.permute.xlu0 %2206
        %v2209 = vsel %vm1440, %v2158, %v2203
        %v2210 = vsel %vm1442, %v2209, %v2207
        %v2211 = vpack.c.bf16 %v2210, %v2210
        %v2213 = vperm.slane %v2127, 0
        %v2227 = vunpack.c.l.b16 %v2115
        %v2228 = vunpack.c.l.b16 %v2116
        %v2229 = vunpack.c.l.b16 %v2117
        %v2230 = vunpack.c.l.b16 %v2118
        %v2231 = vunpack.c.l.b16 %v2119
        %v2232 = vunpack.c.l.b16 %v2120
        %v2233 = vunpack.c.l.b16 %v2121
        %v2234 = vunpack.c.l.b16 %v2122
        %v2235 = vunpack.c.l.b16 %v2123
        %v2236 = vunpack.c.l.b16 %v2124
        %v2237 = vunpack.c.l.b16 %v2125
        %v2238 = vunpack.c.l.b16 %v2126
        %v2239 = vpack.c.b16 %v2228, %v2227
        %v2240 = vpack.c.b16 %v2230, %v2229
        %v2241 = vpack.c.b16 %v2232, %v2231
        %v2242 = vpack.c.b16 %v2234, %v2233
        %v2243 = vpack.c.b16 %v2236, %v2235
        %v2244 = vpack.c.b16 %v2238, %v2237
        %v2252 = vsel %vm1484, %v2211, 0
        %2254 = vmatpush.bf16.msra.mxu0 0
        %2255 = vmatpush.bf16.msra.mxu0 0
        %2256 = vmatpush.bf16.msra.mxu0 %v2244
        %2257 = vmatpush.bf16.msra.mxu0 %v2243
        %2258 = vmatpush.bf16.msra.mxu0 %v2242
        %2259 = vmatpush.bf16.msra.mxu0 %v2241
        %2260 = vmatpush.bf16.msra.mxu0 %v2240
        %2261 = vmatpush.bf16.msra.mxu0 %v2239
        %2262 = vmatmul.bf16.gmra.mxu0 %v2252
        %v2263 = vpop.f32.mrf.mxu0
        %v2264 = vadd.f32 %v2213, %v2263
        %v2265 = vpop.f32.mrf.mxu0
        %2266 = vdwg.mxu0
        %v2267 = vsub.f32 0.0, %v2264
        %v2268 = vmul.f32 %v2267, 1.442695
        %v2269 = vpow.pop %v2268
        %v2270 = vadd.f32 %v2269, 1.0
        %v2271 = vrcp.pop %v2270
        %v2272 = vmul.f32 %v2270, %v2271
        %v2273 = vsub.f32 1.0, %v2272
        %v2274 = vmul.f32 %v2271, %v2273
        %v2275 = vadd.f32 %v2271, %v2274
        %vm2276 = vweird.f32 %v2270
        %vm2277 = vweird.f32 %v2271
        %vm2278 = vmor %vm2276, %vm2277
        %v2279 = vsel %vm2278, %v2271, %v2275
        %v2280 = vand.u32 2147483647, %v2270
        %vm2281 = vcmp.eq.f32.partialorder %v2280, 8.507059e+37
        %v2282 = vand.u32 %v2270, 2147483648
        %v2283 = vor.u32 1.1754944e-38, %v2282
        %v2284 = vsel %vm2281, %v2283, %v2279
        %v2285 = vmul.f32 1.0, %v2284
        %v2287 = vperm.slane %v2140, 0
        %v2301 = vunpack.c.l.b16 %v2128
        %v2302 = vunpack.c.l.b16 %v2129
        %v2303 = vunpack.c.l.b16 %v2130
        %v2304 = vunpack.c.l.b16 %v2131
        %v2305 = vunpack.c.l.b16 %v2132
        %v2306 = vunpack.c.l.b16 %v2133
        %v2307 = vunpack.c.l.b16 %v2134
        %v2308 = vunpack.c.l.b16 %v2135
        %v2309 = vunpack.c.l.b16 %v2136
        %v2310 = vunpack.c.l.b16 %v2137
        %v2311 = vunpack.c.l.b16 %v2138
        %v2312 = vunpack.c.l.b16 %v2139
        %v2313 = vpack.c.b16 %v2302, %v2301
        %v2314 = vpack.c.b16 %v2304, %v2303
        %v2315 = vpack.c.b16 %v2306, %v2305
        %v2316 = vpack.c.b16 %v2308, %v2307
        %v2317 = vpack.c.b16 %v2310, %v2309
        %v2318 = vpack.c.b16 %v2312, %v2311
        %2325 = vmatpush.bf16.msra.mxu0 0
        %2326 = vmatpush.bf16.msra.mxu0 0
        %2327 = vmatpush.bf16.msra.mxu0 %v2318
        %2328 = vmatpush.bf16.msra.mxu0 %v2317
        %2329 = vmatpush.bf16.msra.mxu0 %v2316
        %2330 = vmatpush.bf16.msra.mxu0 %v2315
        %2331 = vmatpush.bf16.msra.mxu0 %v2314
        %2332 = vmatpush.bf16.msra.mxu0 %v2313
        %2333 = vmatmul.bf16.gmra.mxu0 %v2252
        %v2334 = vpop.f32.mrf.mxu0
        %v2335 = vadd.f32 %v2287, %v2334
        %v2336 = vpop.f32.mrf.mxu0
        %2337 = vdwg.mxu0
        %v2338 = vsub.f32 0.0, %v2335
        %v2339 = vmul.f32 %v2338, 1.442695
        %v2340 = vpow.pop %v2339
        %v2341 = vadd.f32 %v2340, 1.0
        %v2342 = vrcp.pop %v2341
        %v2343 = vmul.f32 %v2341, %v2342
        %v2344 = vsub.f32 1.0, %v2343
        %v2345 = vmul.f32 %v2342, %v2344
        %v2346 = vadd.f32 %v2342, %v2345
        %vm2347 = vweird.f32 %v2341
        %vm2348 = vweird.f32 %v2342
        %vm2349 = vmor %vm2347, %vm2348
        %v2350 = vsel %vm2349, %v2342, %v2346
        %v2351 = vand.u32 2147483647, %v2341
        %vm2352 = vcmp.eq.f32.partialorder %v2351, 8.507059e+37
        %v2353 = vand.u32 %v2341, 2147483648
        %v2354 = vor.u32 1.1754944e-38, %v2353
        %v2355 = vsel %vm2352, %v2354, %v2350
        %v2356 = vmul.f32 1.0, %v2355
        %v2357 = vmul.f32 %v2285, %v2114
        %2359 = vrot.lane.b32.xlu0 %v2357, 16
        %v2360 = vpop.permute.xlu0 %2359
        %v2362 = vsel %vm586, %v2113, %v2360
        %2363 = vmatpush.msra.mxu0 0.0
        %2364 = vmatpush.msra.mxu0 0.0
        %2365 = vmatpush.msra.mxu0 0.0
        %2366 = vmatpush.msra.mxu0 0.0
        %2367 = vmatpush.msra.mxu0 0.0
        %2368 = vmatpush.msra.mxu0 0.0
        %2369 = vmatpush.msra.mxu0 0.0
        %2370 = vmatpush.msra.mxu0 0.0
        %2371 = vmatpush.msra.mxu0 0.0
        %2372 = vmatpush.msra.mxu0 0.0
        %2373 = vmatpush.msra.mxu0 0.0
        %2374 = vmatpush.msra.mxu0 0.0
        %2375 = vmatpush.msra.mxu0 0.0
        %2376 = vmatpush.msra.mxu0 0.0
        %2377 = vmatpush.msra.mxu0 0.0
        %2378 = vmatpush.msra.mxu0 %v2362
        %2379 = vmatmul.f32.gmra.mxu0 %v1388
        %v2380 = vpop.f32.mrf.mxu0
        %v2381 = vadd.f32 0.0, %v2380
        %2382 = vdwg.mxu0
        %2383 = vmatpush.msra.mxu0 0.0
        %2384 = vmatpush.msra.mxu0 0.0
        %2385 = vmatpush.msra.mxu0 0.0
        %2386 = vmatpush.msra.mxu0 0.0
        %2387 = vmatpush.msra.mxu0 0.0
        %2388 = vmatpush.msra.mxu0 0.0
        %2389 = vmatpush.msra.mxu0 0.0
        %2390 = vmatpush.msra.mxu0 0.0
        %2391 = vmatpush.msra.mxu0 0.0
        %2392 = vmatpush.msra.mxu0 0.0
        %2393 = vmatpush.msra.mxu0 0.0
        %2394 = vmatpush.msra.mxu0 0.0
        %2395 = vmatpush.msra.mxu0 0.0
        %2396 = vmatpush.msra.mxu0 0.0
        %2397 = vmatpush.msra.mxu0 0.0
        %2398 = vmatpush.msra.mxu0 %v2381
        %2399 = vmatmul.f32.gmra.mxu0 %v1388
        %v2400 = vpop.f32.mrf.mxu0
        %v2401 = vadd.f32 0.0, %v2400
        %2402 = vdwg.mxu0
        %v2403 = vmul.f32 %v2401, 2.0
        %v2404 = vsub.f32 %v2403, %v2362
        %2406 = vrot.lane.b32.xlu0 %v2381, 32
        %v2407 = vpop.permute.xlu0 %2406
        %2410 = vrot.lane.b32.xlu0 %v2404, 64
        %v2411 = vpop.permute.xlu0 %2410
        %v2413 = vsel %vm1440, %v2362, %v2407
        %v2414 = vsel %vm1442, %v2413, %v2411
        %v2415 = vpack.c.bf16 %v2414, %v2414
        %v2417 = vperm.slane %v2153, 0
        %v2431 = vunpack.c.l.b16 %v2141
        %v2432 = vunpack.c.l.b16 %v2142
        %v2433 = vunpack.c.l.b16 %v2143
        %v2434 = vunpack.c.l.b16 %v2144
        %v2435 = vunpack.c.l.b16 %v2145
        %v2436 = vunpack.c.l.b16 %v2146
        %v2437 = vunpack.c.l.b16 %v2147
        %v2438 = vunpack.c.l.b16 %v2148
        %v2439 = vunpack.c.l.b16 %v2149
        %v2440 = vunpack.c.l.b16 %v2150
        %v2441 = vunpack.c.l.b16 %v2151
        %v2442 = vunpack.c.l.b16 %v2152
        %v2443 = vpack.c.b16 %v2432, %v2431
        %v2444 = vpack.c.b16 %v2434, %v2433
        %v2445 = vpack.c.b16 %v2436, %v2435
        %v2446 = vpack.c.b16 %v2438, %v2437
        %v2447 = vpack.c.b16 %v2440, %v2439
        %v2448 = vpack.c.b16 %v2442, %v2441
        %v2456 = vsel %vm1484, %v2415, 0
        %2458 = vmatpush.bf16.msra.mxu0 0
        %2459 = vmatpush.bf16.msra.mxu0 0
        %2460 = vmatpush.bf16.msra.mxu0 %v2448
        %2461 = vmatpush.bf16.msra.mxu0 %v2447
        %2462 = vmatpush.bf16.msra.mxu0 %v2446
        %2463 = vmatpush.bf16.msra.mxu0 %v2445
        %2464 = vmatpush.bf16.msra.mxu0 %v2444
        %2465 = vmatpush.bf16.msra.mxu0 %v2443
        %2466 = vmatmul.bf16.gmra.mxu0 %v2456
        %v2467 = vpop.f32.mrf.mxu0
        %v2468 = vadd.f32 %v2417, %v2467
        %v2469 = vpop.f32.mrf.mxu0
        %2470 = vdwg.mxu0
        %v2471 = vtanh.pop %v2468
        %v2472 = vmul.f32 %v2356, %v2114
        %v2473 = vsub.f32 1.0, %v2356
        %v2474 = vmul.f32 %v2473, %v2471
        %v2475 = vadd.f32 %v2472, %v2474
        %2476 = vst.msk [vmem:[#allocation2] sm:$0xff] %vm586, %v2475
        %v2477 = vld [vmem:[%s1711] sm:$0xff]
        %v2478 = vld [vmem:[%s1713] sm:$0xf]
        %v2479 = vld [vmem:[%s1713 + $0x4] sm:$0xf]
        %v2480 = vld [vmem:[%s1713 + $0x8] sm:$0xf]
        %v2481 = vld [vmem:[%s1713 + $0xc] sm:$0xf]
        %v2482 = vld [vmem:[%s1713 + $0x10] sm:$0xf]
        %v2483 = vld [vmem:[%s1713 + $0x14] sm:$0xf]
        %v2484 = vld [vmem:[%s1713 + $0x18] sm:$0xf]
        %v2485 = vld [vmem:[%s1713 + $0x1c] sm:$0xf]
        %v2486 = vld [vmem:[%s1713 + $0x20] sm:$0xf]
        %v2487 = vld [vmem:[%s1713 + $0x24] sm:$0xf]
        %v2488 = vld [vmem:[%s1713 + $0x28] sm:$0xf]
        %v2489 = vld [vmem:[%s1713 + $0x2c] sm:$0xf]
        %v2490 = vld [vmem:[%s1726] sm:$0x1]
        %v2491 = vld [vmem:[%s1728] sm:$0xf]
        %v2492 = vld [vmem:[%s1728 + $0x4] sm:$0xf]
        %v2493 = vld [vmem:[%s1728 + $0x8] sm:$0xf]
        %v2494 = vld [vmem:[%s1728 + $0xc] sm:$0xf]
        %v2495 = vld [vmem:[%s1728 + $0x10] sm:$0xf]
        %v2496 = vld [vmem:[%s1728 + $0x14] sm:$0xf]
        %v2497 = vld [vmem:[%s1728 + $0x18] sm:$0xf]
        %v2498 = vld [vmem:[%s1728 + $0x1c] sm:$0xf]
        %v2499 = vld [vmem:[%s1728 + $0x20] sm:$0xf]
        %v2500 = vld [vmem:[%s1728 + $0x24] sm:$0xf]
        %v2501 = vld [vmem:[%s1728 + $0x28] sm:$0xf]
        %v2502 = vld [vmem:[%s1728 + $0x2c] sm:$0xf]
        %v2503 = vld [vmem:[%s1741] sm:$0x1]
        %v2504 = vld [vmem:[%s1743] sm:$0xf]
        %v2505 = vld [vmem:[%s1743 + $0x4] sm:$0xf]
        %v2506 = vld [vmem:[%s1743 + $0x8] sm:$0xf]
        %v2507 = vld [vmem:[%s1743 + $0xc] sm:$0xf]
        %v2508 = vld [vmem:[%s1743 + $0x10] sm:$0xf]
        %v2509 = vld [vmem:[%s1743 + $0x14] sm:$0xf]
        %v2510 = vld [vmem:[%s1743 + $0x18] sm:$0xf]
        %v2511 = vld [vmem:[%s1743 + $0x1c] sm:$0xf]
        %v2512 = vld [vmem:[%s1743 + $0x20] sm:$0xf]
        %v2513 = vld [vmem:[%s1743 + $0x24] sm:$0xf]
        %v2514 = vld [vmem:[%s1743 + $0x28] sm:$0xf]
        %v2515 = vld [vmem:[%s1743 + $0x2c] sm:$0xf]
        %v2516 = vld [vmem:[%s1756] sm:$0x1]
        %2518 = vrot.lane.b32.xlu0 %v2477, 16
        %v2519 = vpop.permute.xlu0 %2518
        %v2521 = vsel %vm586, %v2475, %v2519
        %2522 = vmatpush.msra.mxu0 0.0
        %2523 = vmatpush.msra.mxu0 0.0
        %2524 = vmatpush.msra.mxu0 0.0
        %2525 = vmatpush.msra.mxu0 0.0
        %2526 = vmatpush.msra.mxu0 0.0
        %2527 = vmatpush.msra.mxu0 0.0
        %2528 = vmatpush.msra.mxu0 0.0
        %2529 = vmatpush.msra.mxu0 0.0
        %2530 = vmatpush.msra.mxu0 0.0
        %2531 = vmatpush.msra.mxu0 0.0
        %2532 = vmatpush.msra.mxu0 0.0
        %2533 = vmatpush.msra.mxu0 0.0
        %2534 = vmatpush.msra.mxu0 0.0
        %2535 = vmatpush.msra.mxu0 0.0
        %2536 = vmatpush.msra.mxu0 0.0
        %2537 = vmatpush.msra.mxu0 %v2521
        %2538 = vmatmul.f32.gmra.mxu0 %v1388
        %v2539 = vpop.f32.mrf.mxu0
        %v2540 = vadd.f32 0.0, %v2539
        %2541 = vdwg.mxu0
        %2542 = vmatpush.msra.mxu0 0.0
        %2543 = vmatpush.msra.mxu0 0.0
        %2544 = vmatpush.msra.mxu0 0.0
        %2545 = vmatpush.msra.mxu0 0.0
        %2546 = vmatpush.msra.mxu0 0.0
        %2547 = vmatpush.msra.mxu0 0.0
        %2548 = vmatpush.msra.mxu0 0.0
        %2549 = vmatpush.msra.mxu0 0.0
        %2550 = vmatpush.msra.mxu0 0.0
        %2551 = vmatpush.msra.mxu0 0.0
        %2552 = vmatpush.msra.mxu0 0.0
        %2553 = vmatpush.msra.mxu0 0.0
        %2554 = vmatpush.msra.mxu0 0.0
        %2555 = vmatpush.msra.mxu0 0.0
        %2556 = vmatpush.msra.mxu0 0.0
        %2557 = vmatpush.msra.mxu0 %v2540
        %2558 = vmatmul.f32.gmra.mxu0 %v1388
        %v2559 = vpop.f32.mrf.mxu0
        %v2560 = vadd.f32 0.0, %v2559
        %2561 = vdwg.mxu0
        %v2562 = vmul.f32 %v2560, 2.0
        %v2563 = vsub.f32 %v2562, %v2521
        %2565 = vrot.lane.b32.xlu0 %v2540, 32
        %v2566 = vpop.permute.xlu0 %2565
        %2569 = vrot.lane.b32.xlu0 %v2563, 64
        %v2570 = vpop.permute.xlu0 %2569
        %v2572 = vsel %vm1440, %v2521, %v2566
        %v2573 = vsel %vm1442, %v2572, %v2570
        %v2574 = vpack.c.bf16 %v2573, %v2573
        %v2576 = vperm.slane %v2490, 0
        %v2590 = vunpack.c.l.b16 %v2478
        %v2591 = vunpack.c.l.b16 %v2479
        %v2592 = vunpack.c.l.b16 %v2480
        %v2593 = vunpack.c.l.b16 %v2481
        %v2594 = vunpack.c.l.b16 %v2482
        %v2595 = vunpack.c.l.b16 %v2483
        %v2596 = vunpack.c.l.b16 %v2484
        %v2597 = vunpack.c.l.b16 %v2485
        %v2598 = vunpack.c.l.b16 %v2486
        %v2599 = vunpack.c.l.b16 %v2487
        %v2600 = vunpack.c.l.b16 %v2488
        %v2601 = vunpack.c.l.b16 %v2489
        %v2602 = vpack.c.b16 %v2591, %v2590
        %v2603 = vpack.c.b16 %v2593, %v2592
        %v2604 = vpack.c.b16 %v2595, %v2594
        %v2605 = vpack.c.b16 %v2597, %v2596
        %v2606 = vpack.c.b16 %v2599, %v2598
        %v2607 = vpack.c.b16 %v2601, %v2600
        %v2615 = vsel %vm1484, %v2574, 0
        %2617 = vmatpush.bf16.msra.mxu0 0
        %2618 = vmatpush.bf16.msra.mxu0 0
        %2619 = vmatpush.bf16.msra.mxu0 %v2607
        %2620 = vmatpush.bf16.msra.mxu0 %v2606
        %2621 = vmatpush.bf16.msra.mxu0 %v2605
        %2622 = vmatpush.bf16.msra.mxu0 %v2604
        %2623 = vmatpush.bf16.msra.mxu0 %v2603
        %2624 = vmatpush.bf16.msra.mxu0 %v2602
        %2625 = vmatmul.bf16.gmra.mxu0 %v2615
        %v2626 = vpop.f32.mrf.mxu0
        %v2627 = vadd.f32 %v2576, %v2626
        %v2628 = vpop.f32.mrf.mxu0
        %2629 = vdwg.mxu0
        %v2630 = vsub.f32 0.0, %v2627
        %v2631 = vmul.f32 %v2630, 1.442695
        %v2632 = vpow.pop %v2631
        %v2633 = vadd.f32 %v2632, 1.0
        %v2634 = vrcp.pop %v2633
        %v2635 = vmul.f32 %v2633, %v2634
        %v2636 = vsub.f32 1.0, %v2635
        %v2637 = vmul.f32 %v2634, %v2636
        %v2638 = vadd.f32 %v2634, %v2637
        %vm2639 = vweird.f32 %v2633
        %vm2640 = vweird.f32 %v2634
        %vm2641 = vmor %vm2639, %vm2640
        %v2642 = vsel %vm2641, %v2634, %v2638
        %v2643 = vand.u32 2147483647, %v2633
        %vm2644 = vcmp.eq.f32.partialorder %v2643, 8.507059e+37
        %v2645 = vand.u32 %v2633, 2147483648
        %v2646 = vor.u32 1.1754944e-38, %v2645
        %v2647 = vsel %vm2644, %v2646, %v2642
        %v2648 = vmul.f32 1.0, %v2647
        %v2650 = vperm.slane %v2503, 0
        %v2664 = vunpack.c.l.b16 %v2491
        %v2665 = vunpack.c.l.b16 %v2492
        %v2666 = vunpack.c.l.b16 %v2493
        %v2667 = vunpack.c.l.b16 %v2494
        %v2668 = vunpack.c.l.b16 %v2495
        %v2669 = vunpack.c.l.b16 %v2496
        %v2670 = vunpack.c.l.b16 %v2497
        %v2671 = vunpack.c.l.b16 %v2498
        %v2672 = vunpack.c.l.b16 %v2499
        %v2673 = vunpack.c.l.b16 %v2500
        %v2674 = vunpack.c.l.b16 %v2501
        %v2675 = vunpack.c.l.b16 %v2502
        %v2676 = vpack.c.b16 %v2665, %v2664
        %v2677 = vpack.c.b16 %v2667, %v2666
        %v2678 = vpack.c.b16 %v2669, %v2668
        %v2679 = vpack.c.b16 %v2671, %v2670
        %v2680 = vpack.c.b16 %v2673, %v2672
        %v2681 = vpack.c.b16 %v2675, %v2674
        %2688 = vmatpush.bf16.msra.mxu0 0
        %2689 = vmatpush.bf16.msra.mxu0 0
        %2690 = vmatpush.bf16.msra.mxu0 %v2681
        %2691 = vmatpush.bf16.msra.mxu0 %v2680
        %2692 = vmatpush.bf16.msra.mxu0 %v2679
        %2693 = vmatpush.bf16.msra.mxu0 %v2678
        %2694 = vmatpush.bf16.msra.mxu0 %v2677
        %2695 = vmatpush.bf16.msra.mxu0 %v2676
        %2696 = vmatmul.bf16.gmra.mxu0 %v2615
        %v2697 = vpop.f32.mrf.mxu0
        %v2698 = vadd.f32 %v2650, %v2697
        %v2699 = vpop.f32.mrf.mxu0
        %2700 = vdwg.mxu0
        %v2701 = vsub.f32 0.0, %v2698
        %v2702 = vmul.f32 %v2701, 1.442695
        %v2703 = vpow.pop %v2702
        %v2704 = vadd.f32 %v2703, 1.0
        %v2705 = vrcp.pop %v2704
        %v2706 = vmul.f32 %v2704, %v2705
        %v2707 = vsub.f32 1.0, %v2706
        %v2708 = vmul.f32 %v2705, %v2707
        %v2709 = vadd.f32 %v2705, %v2708
        %vm2710 = vweird.f32 %v2704
        %vm2711 = vweird.f32 %v2705
        %vm2712 = vmor %vm2710, %vm2711
        %v2713 = vsel %vm2712, %v2705, %v2709
        %v2714 = vand.u32 2147483647, %v2704
        %vm2715 = vcmp.eq.f32.partialorder %v2714, 8.507059e+37
        %v2716 = vand.u32 %v2704, 2147483648
        %v2717 = vor.u32 1.1754944e-38, %v2716
        %v2718 = vsel %vm2715, %v2717, %v2713
        %v2719 = vmul.f32 1.0, %v2718
        %v2720 = vmul.f32 %v2648, %v2477
        %2722 = vrot.lane.b32.xlu0 %v2720, 16
        %v2723 = vpop.permute.xlu0 %2722
        %v2725 = vsel %vm586, %v2475, %v2723
        %2726 = vmatpush.msra.mxu0 0.0
        %2727 = vmatpush.msra.mxu0 0.0
        %2728 = vmatpush.msra.mxu0 0.0
        %2729 = vmatpush.msra.mxu0 0.0
        %2730 = vmatpush.msra.mxu0 0.0
        %2731 = vmatpush.msra.mxu0 0.0
        %2732 = vmatpush.msra.mxu0 0.0
        %2733 = vmatpush.msra.mxu0 0.0
        %2734 = vmatpush.msra.mxu0 0.0
        %2735 = vmatpush.msra.mxu0 0.0
        %2736 = vmatpush.msra.mxu0 0.0
        %2737 = vmatpush.msra.mxu0 0.0
        %2738 = vmatpush.msra.mxu0 0.0
        %2739 = vmatpush.msra.mxu0 0.0
        %2740 = vmatpush.msra.mxu0 0.0
        %2741 = vmatpush.msra.mxu0 %v2725
        %2742 = vmatmul.f32.gmra.mxu0 %v1388
        %v2743 = vpop.f32.mrf.mxu0
        %v2744 = vadd.f32 0.0, %v2743
        %2745 = vdwg.mxu0
        %2746 = vmatpush.msra.mxu0 0.0
        %2747 = vmatpush.msra.mxu0 0.0
        %2748 = vmatpush.msra.mxu0 0.0
        %2749 = vmatpush.msra.mxu0 0.0
        %2750 = vmatpush.msra.mxu0 0.0
        %2751 = vmatpush.msra.mxu0 0.0
        %2752 = vmatpush.msra.mxu0 0.0
        %2753 = vmatpush.msra.mxu0 0.0
        %2754 = vmatpush.msra.mxu0 0.0
        %2755 = vmatpush.msra.mxu0 0.0
        %2756 = vmatpush.msra.mxu0 0.0
        %2757 = vmatpush.msra.mxu0 0.0
        %2758 = vmatpush.msra.mxu0 0.0
        %2759 = vmatpush.msra.mxu0 0.0
        %2760 = vmatpush.msra.mxu0 0.0
        %2761 = vmatpush.msra.mxu0 %v2744
        %2762 = vmatmul.f32.gmra.mxu0 %v1388
        %v2763 = vpop.f32.mrf.mxu0
        %v2764 = vadd.f32 0.0, %v2763
        %2765 = vdwg.mxu0
        %v2766 = vmul.f32 %v2764, 2.0
        %v2767 = vsub.f32 %v2766, %v2725
        %2769 = vrot.lane.b32.xlu0 %v2744, 32
        %v2770 = vpop.permute.xlu0 %2769
        %2773 = vrot.lane.b32.xlu0 %v2767, 64
        %v2774 = vpop.permute.xlu0 %2773
        %v2776 = vsel %vm1440, %v2725, %v2770
        %v2777 = vsel %vm1442, %v2776, %v2774
        %v2778 = vpack.c.bf16 %v2777, %v2777
        %v2780 = vperm.slane %v2516, 0
        %v2794 = vunpack.c.l.b16 %v2504
        %v2795 = vunpack.c.l.b16 %v2505
        %v2796 = vunpack.c.l.b16 %v2506
        %v2797 = vunpack.c.l.b16 %v2507
        %v2798 = vunpack.c.l.b16 %v2508
        %v2799 = vunpack.c.l.b16 %v2509
        %v2800 = vunpack.c.l.b16 %v2510
        %v2801 = vunpack.c.l.b16 %v2511
        %v2802 = vunpack.c.l.b16 %v2512
        %v2803 = vunpack.c.l.b16 %v2513
        %v2804 = vunpack.c.l.b16 %v2514
        %v2805 = vunpack.c.l.b16 %v2515
        %v2806 = vpack.c.b16 %v2795, %v2794
        %v2807 = vpack.c.b16 %v2797, %v2796
        %v2808 = vpack.c.b16 %v2799, %v2798
        %v2809 = vpack.c.b16 %v2801, %v2800
        %v2810 = vpack.c.b16 %v2803, %v2802
        %v2811 = vpack.c.b16 %v2805, %v2804
        %v2819 = vsel %vm1484, %v2778, 0
        %2821 = vmatpush.bf16.msra.mxu0 0
        %2822 = vmatpush.bf16.msra.mxu0 0
        %2823 = vmatpush.bf16.msra.mxu0 %v2811
        %2824 = vmatpush.bf16.msra.mxu0 %v2810
        %2825 = vmatpush.bf16.msra.mxu0 %v2809
        %2826 = vmatpush.bf16.msra.mxu0 %v2808
        %2827 = vmatpush.bf16.msra.mxu0 %v2807
        %2828 = vmatpush.bf16.msra.mxu0 %v2806
        %2829 = vmatmul.bf16.gmra.mxu0 %v2819
        %v2830 = vpop.f32.mrf.mxu0
        %v2831 = vadd.f32 %v2780, %v2830
        %v2832 = vpop.f32.mrf.mxu0
        %2833 = vdwg.mxu0
        %v2834 = vtanh.pop %v2831
        %v2835 = vmul.f32 %v2719, %v2477
        %v2836 = vsub.f32 1.0, %v2719
        %v2837 = vmul.f32 %v2836, %v2834
        %v2838 = vadd.f32 %v2835, %v2837
        %2839 = vst.msk [vmem:[%s1711] sm:$0xff] %vm586, %v2838
        %v2840 = vld [vmem:[%s14] sm:$0xff]
        %v2841 = vld [vmem:[%s14 + $0x8] sm:$0xff]
        %v2842 = vld [vmem:[#allocation4] sm:$0x1]
        %v2844 = vperm.slane %v2842, 0
        %v2847 = vsel %vm586, %v2838, 0
        %2849 = vmatpush.msra.mxu0 0.0
        %2850 = vmatpush.msra.mxu0 0.0
        %2851 = vmatpush.msra.mxu0 0.0
        %2852 = vmatpush.msra.mxu0 0.0
        %2853 = vmatpush.msra.mxu0 0.0
        %2854 = vmatpush.msra.mxu0 0.0
        %2855 = vmatpush.msra.mxu0 0.0
        %2856 = vmatpush.msra.mxu0 0.0
        %2857 = vmatpush.msra.mxu0 0.0
        %2858 = vmatpush.msra.mxu0 0.0
        %2859 = vmatpush.msra.mxu0 0.0
        %2860 = vmatpush.msra.mxu0 0.0
        %2861 = vmatpush.msra.mxu0 0.0
        %2862 = vmatpush.msra.mxu0 0.0
        %2863 = vmatpush.msra.mxu0 %v2841
        %2864 = vmatpush.msra.mxu0 %v2840
        %2865 = vmatmul.f32.gmra.mxu0 %v2847
        %v2866 = vpop.f32.mrf.mxu0
        %v2867 = vadd.f32 %v2844, %v2866
        %2868 = vdwg.mxu0
        %2870 = vrot.lane.b32.xlu0 %v2867, 1
        %v2871 = vpop.permute.xlu0 %2870
        %vm2873 = vcmask 15368
        %2874 = vst.msk [vmem:[%s584] sm:$0xff] %vm2873, %v2871
        %2875 = vst.msk [vmem:[#allocation3] sm:$0xff] %vm2110, %v2867
        %v2876 = vld [vmem:[#allocation3] sm:$0xff]
        %v2877 = vld [vmem:[#allocation2] sm:$0xff]
        %v2878 = vld [vmem:[%s8] sm:$0xf]
        %v2879 = vld [vmem:[%s8 + $0x4] sm:$0xf]
        %v2880 = vld [vmem:[%s8 + $0x8] sm:$0xf]
        %v2881 = vld [vmem:[%s8 + $0xc] sm:$0xf]
        %v2882 = vld [vmem:[%s8 + $0x10] sm:$0xf]
        %v2883 = vld [vmem:[%s8 + $0x14] sm:$0xf]
        %v2884 = vld [vmem:[%s8 + $0x18] sm:$0xf]
        %v2885 = vld [vmem:[%s8 + $0x1c] sm:$0xf]
        %v2886 = vld [vmem:[%s8 + $0x20] sm:$0xf]
        %v2887 = vld [vmem:[%s8 + $0x24] sm:$0xf]
        %v2888 = vld [vmem:[%s8 + $0x28] sm:$0xf]
        %v2889 = vld [vmem:[%s8 + $0x2c] sm:$0xf]
        %v2890 = vld [vmem:[%s9] sm:$0x1]
        %v2891 = vld [vmem:[%s10] sm:$0xf]
        %v2892 = vld [vmem:[%s10 + $0x4] sm:$0xf]
        %v2893 = vld [vmem:[%s10 + $0x8] sm:$0xf]
        %v2894 = vld [vmem:[%s10 + $0xc] sm:$0xf]
        %v2895 = vld [vmem:[%s10 + $0x10] sm:$0xf]
        %v2896 = vld [vmem:[%s10 + $0x14] sm:$0xf]
        %v2897 = vld [vmem:[%s10 + $0x18] sm:$0xf]
        %v2898 = vld [vmem:[%s10 + $0x1c] sm:$0xf]
        %v2899 = vld [vmem:[%s10 + $0x20] sm:$0xf]
        %v2900 = vld [vmem:[%s10 + $0x24] sm:$0xf]
        %v2901 = vld [vmem:[%s10 + $0x28] sm:$0xf]
        %v2902 = vld [vmem:[%s10 + $0x2c] sm:$0xf]
        %v2903 = vld [vmem:[%s11] sm:$0x1]
        %v2904 = vld [vmem:[%s12] sm:$0xf]
        %v2905 = vld [vmem:[%s12 + $0x4] sm:$0xf]
        %v2906 = vld [vmem:[%s12 + $0x8] sm:$0xf]
        %v2907 = vld [vmem:[%s12 + $0xc] sm:$0xf]
        %v2908 = vld [vmem:[%s12 + $0x10] sm:$0xf]
        %v2909 = vld [vmem:[%s12 + $0x14] sm:$0xf]
        %v2910 = vld [vmem:[%s12 + $0x18] sm:$0xf]
        %v2911 = vld [vmem:[%s12 + $0x1c] sm:$0xf]
        %v2912 = vld [vmem:[%s12 + $0x20] sm:$0xf]
        %v2913 = vld [vmem:[%s12 + $0x24] sm:$0xf]
        %v2914 = vld [vmem:[%s12 + $0x28] sm:$0xf]
        %v2915 = vld [vmem:[%s12 + $0x2c] sm:$0xf]
        %v2916 = vld [vmem:[%s13] sm:$0x1]
        %2918 = vrot.lane.b32.xlu0 %v2877, 16
        %v2919 = vpop.permute.xlu0 %2918
        %v2921 = vsel %vm586, %v2876, %v2919
        %2922 = vmatpush.msra.mxu0 0.0
        %2923 = vmatpush.msra.mxu0 0.0
        %2924 = vmatpush.msra.mxu0 0.0
        %2925 = vmatpush.msra.mxu0 0.0
        %2926 = vmatpush.msra.mxu0 0.0
        %2927 = vmatpush.msra.mxu0 0.0
        %2928 = vmatpush.msra.mxu0 0.0
        %2929 = vmatpush.msra.mxu0 0.0
        %2930 = vmatpush.msra.mxu0 0.0
        %2931 = vmatpush.msra.mxu0 0.0
        %2932 = vmatpush.msra.mxu0 0.0
        %2933 = vmatpush.msra.mxu0 0.0
        %2934 = vmatpush.msra.mxu0 0.0
        %2935 = vmatpush.msra.mxu0 0.0
        %2936 = vmatpush.msra.mxu0 0.0
        %2937 = vmatpush.msra.mxu0 %v2921
        %2938 = vmatmul.f32.gmra.mxu0 %v1388
        %v2939 = vpop.f32.mrf.mxu0
        %v2940 = vadd.f32 0.0, %v2939
        %2941 = vdwg.mxu0
        %2942 = vmatpush.msra.mxu0 0.0
        %2943 = vmatpush.msra.mxu0 0.0
        %2944 = vmatpush.msra.mxu0 0.0
        %2945 = vmatpush.msra.mxu0 0.0
        %2946 = vmatpush.msra.mxu0 0.0
        %2947 = vmatpush.msra.mxu0 0.0
        %2948 = vmatpush.msra.mxu0 0.0
        %2949 = vmatpush.msra.mxu0 0.0
        %2950 = vmatpush.msra.mxu0 0.0
        %2951 = vmatpush.msra.mxu0 0.0
        %2952 = vmatpush.msra.mxu0 0.0
        %2953 = vmatpush.msra.mxu0 0.0
        %2954 = vmatpush.msra.mxu0 0.0
        %2955 = vmatpush.msra.mxu0 0.0
        %2956 = vmatpush.msra.mxu0 0.0
        %2957 = vmatpush.msra.mxu0 %v2940
        %2958 = vmatmul.f32.gmra.mxu0 %v1388
        %v2959 = vpop.f32.mrf.mxu0
        %v2960 = vadd.f32 0.0, %v2959
        %2961 = vdwg.mxu0
        %v2962 = vmul.f32 %v2960, 2.0
        %v2963 = vsub.f32 %v2962, %v2921
        %2965 = vrot.lane.b32.xlu0 %v2940, 32
        %v2966 = vpop.permute.xlu0 %2965
        %2969 = vrot.lane.b32.xlu0 %v2963, 64
        %v2970 = vpop.permute.xlu0 %2969
        %v2972 = vsel %vm1440, %v2921, %v2966
        %v2973 = vsel %vm1442, %v2972, %v2970
        %v2974 = vpack.c.bf16 %v2973, %v2973
        %v2976 = vperm.slane %v2890, 0
        %v2990 = vunpack.c.l.b16 %v2878
        %v2991 = vunpack.c.l.b16 %v2879
        %v2992 = vunpack.c.l.b16 %v2880
        %v2993 = vunpack.c.l.b16 %v2881
        %v2994 = vunpack.c.l.b16 %v2882
        %v2995 = vunpack.c.l.b16 %v2883
        %v2996 = vunpack.c.l.b16 %v2884
        %v2997 = vunpack.c.l.b16 %v2885
        %v2998 = vunpack.c.l.b16 %v2886
        %v2999 = vunpack.c.l.b16 %v2887
        %v3000 = vunpack.c.l.b16 %v2888
        %v3001 = vunpack.c.l.b16 %v2889
        %v3002 = vpack.c.b16 %v2991, %v2990
        %v3003 = vpack.c.b16 %v2993, %v2992
        %v3004 = vpack.c.b16 %v2995, %v2994
        %v3005 = vpack.c.b16 %v2997, %v2996
        %v3006 = vpack.c.b16 %v2999, %v2998
        %v3007 = vpack.c.b16 %v3001, %v3000
        %v3015 = vsel %vm1484, %v2974, 0
        %3017 = vmatpush.bf16.msra.mxu0 0
        %3018 = vmatpush.bf16.msra.mxu0 0
        %3019 = vmatpush.bf16.msra.mxu0 %v3007
        %3020 = vmatpush.bf16.msra.mxu0 %v3006
        %3021 = vmatpush.bf16.msra.mxu0 %v3005
        %3022 = vmatpush.bf16.msra.mxu0 %v3004
        %3023 = vmatpush.bf16.msra.mxu0 %v3003
        %3024 = vmatpush.bf16.msra.mxu0 %v3002
        %3025 = vmatmul.bf16.gmra.mxu0 %v3015
        %v3026 = vpop.f32.mrf.mxu0
        %v3027 = vadd.f32 %v2976, %v3026
        %v3028 = vpop.f32.mrf.mxu0
        %3029 = vdwg.mxu0
        %v3030 = vsub.f32 0.0, %v3027
        %v3031 = vmul.f32 %v3030, 1.442695
        %v3032 = vpow.pop %v3031
        %v3033 = vadd.f32 %v3032, 1.0
        %v3034 = vrcp.pop %v3033
        %v3035 = vmul.f32 %v3033, %v3034
        %v3036 = vsub.f32 1.0, %v3035
        %v3037 = vmul.f32 %v3034, %v3036
        %v3038 = vadd.f32 %v3034, %v3037
        %vm3039 = vweird.f32 %v3033
        %vm3040 = vweird.f32 %v3034
        %vm3041 = vmor %vm3039, %vm3040
        %v3042 = vsel %vm3041, %v3034, %v3038
        %v3043 = vand.u32 2147483647, %v3033
        %vm3044 = vcmp.eq.f32.partialorder %v3043, 8.507059e+37
        %v3045 = vand.u32 %v3033, 2147483648
        %v3046 = vor.u32 1.1754944e-38, %v3045
        %v3047 = vsel %vm3044, %v3046, %v3042
        %v3048 = vmul.f32 1.0, %v3047
        %v3050 = vperm.slane %v2903, 0
        %v3064 = vunpack.c.l.b16 %v2891
        %v3065 = vunpack.c.l.b16 %v2892
        %v3066 = vunpack.c.l.b16 %v2893
        %v3067 = vunpack.c.l.b16 %v2894
        %v3068 = vunpack.c.l.b16 %v2895
        %v3069 = vunpack.c.l.b16 %v2896
        %v3070 = vunpack.c.l.b16 %v2897
        %v3071 = vunpack.c.l.b16 %v2898
        %v3072 = vunpack.c.l.b16 %v2899
        %v3073 = vunpack.c.l.b16 %v2900
        %v3074 = vunpack.c.l.b16 %v2901
        %v3075 = vunpack.c.l.b16 %v2902
        %v3076 = vpack.c.b16 %v3065, %v3064
        %v3077 = vpack.c.b16 %v3067, %v3066
        %v3078 = vpack.c.b16 %v3069, %v3068
        %v3079 = vpack.c.b16 %v3071, %v3070
        %v3080 = vpack.c.b16 %v3073, %v3072
        %v3081 = vpack.c.b16 %v3075, %v3074
        %3088 = vmatpush.bf16.msra.mxu0 0
        %3089 = vmatpush.bf16.msra.mxu0 0
        %3090 = vmatpush.bf16.msra.mxu0 %v3081
        %3091 = vmatpush.bf16.msra.mxu0 %v3080
        %3092 = vmatpush.bf16.msra.mxu0 %v3079
        %3093 = vmatpush.bf16.msra.mxu0 %v3078
        %3094 = vmatpush.bf16.msra.mxu0 %v3077
        %3095 = vmatpush.bf16.msra.mxu0 %v3076
        %3096 = vmatmul.bf16.gmra.mxu0 %v3015
        %v3097 = vpop.f32.mrf.mxu0
        %v3098 = vadd.f32 %v3050, %v3097
        %v3099 = vpop.f32.mrf.mxu0
        %3100 = vdwg.mxu0
        %v3101 = vsub.f32 0.0, %v3098
        %v3102 = vmul.f32 %v3101, 1.442695
        %v3103 = vpow.pop %v3102
        %v3104 = vadd.f32 %v3103, 1.0
        %v3105 = vrcp.pop %v3104
        %v3106 = vmul.f32 %v3104, %v3105
        %v3107 = vsub.f32 1.0, %v3106
        %v3108 = vmul.f32 %v3105, %v3107
        %v3109 = vadd.f32 %v3105, %v3108
        %vm3110 = vweird.f32 %v3104
        %vm3111 = vweird.f32 %v3105
        %vm3112 = vmor %vm3110, %vm3111
        %v3113 = vsel %vm3112, %v3105, %v3109
        %v3114 = vand.u32 2147483647, %v3104
        %vm3115 = vcmp.eq.f32.partialorder %v3114, 8.507059e+37
        %v3116 = vand.u32 %v3104, 2147483648
        %v3117 = vor.u32 1.1754944e-38, %v3116
        %v3118 = vsel %vm3115, %v3117, %v3113
        %v3119 = vmul.f32 1.0, %v3118
        %v3120 = vmul.f32 %v3048, %v2877
        %3122 = vrot.lane.b32.xlu0 %v3120, 16
        %v3123 = vpop.permute.xlu0 %3122
        %v3125 = vsel %vm586, %v2876, %v3123
        %3126 = vmatpush.msra.mxu0 0.0
        %3127 = vmatpush.msra.mxu0 0.0
        %3128 = vmatpush.msra.mxu0 0.0
        %3129 = vmatpush.msra.mxu0 0.0
        %3130 = vmatpush.msra.mxu0 0.0
        %3131 = vmatpush.msra.mxu0 0.0
        %3132 = vmatpush.msra.mxu0 0.0
        %3133 = vmatpush.msra.mxu0 0.0
        %3134 = vmatpush.msra.mxu0 0.0
        %3135 = vmatpush.msra.mxu0 0.0
        %3136 = vmatpush.msra.mxu0 0.0
        %3137 = vmatpush.msra.mxu0 0.0
        %3138 = vmatpush.msra.mxu0 0.0
        %3139 = vmatpush.msra.mxu0 0.0
        %3140 = vmatpush.msra.mxu0 0.0
        %3141 = vmatpush.msra.mxu0 %v3125
        %3142 = vmatmul.f32.gmra.mxu0 %v1388
        %v3143 = vpop.f32.mrf.mxu0
        %v3144 = vadd.f32 0.0, %v3143
        %3145 = vdwg.mxu0
        %3146 = vmatpush.msra.mxu0 0.0
        %3147 = vmatpush.msra.mxu0 0.0
        %3148 = vmatpush.msra.mxu0 0.0
        %3149 = vmatpush.msra.mxu0 0.0
        %3150 = vmatpush.msra.mxu0 0.0
        %3151 = vmatpush.msra.mxu0 0.0
        %3152 = vmatpush.msra.mxu0 0.0
        %3153 = vmatpush.msra.mxu0 0.0
        %3154 = vmatpush.msra.mxu0 0.0
        %3155 = vmatpush.msra.mxu0 0.0
        %3156 = vmatpush.msra.mxu0 0.0
        %3157 = vmatpush.msra.mxu0 0.0
        %3158 = vmatpush.msra.mxu0 0.0
        %3159 = vmatpush.msra.mxu0 0.0
        %3160 = vmatpush.msra.mxu0 0.0
        %3161 = vmatpush.msra.mxu0 %v3144
        %3162 = vmatmul.f32.gmra.mxu0 %v1388
        %v3163 = vpop.f32.mrf.mxu0
        %v3164 = vadd.f32 0.0, %v3163
        %3165 = vdwg.mxu0
        %v3166 = vmul.f32 %v3164, 2.0
        %v3167 = vsub.f32 %v3166, %v3125
        %3169 = vrot.lane.b32.xlu0 %v3144, 32
        %v3170 = vpop.permute.xlu0 %3169
        %3173 = vrot.lane.b32.xlu0 %v3167, 64
        %v3174 = vpop.permute.xlu0 %3173
        %v3176 = vsel %vm1440, %v3125, %v3170
        %v3177 = vsel %vm1442, %v3176, %v3174
        %v3178 = vpack.c.bf16 %v3177, %v3177
        %v3180 = vperm.slane %v2916, 0
        %v3194 = vunpack.c.l.b16 %v2904
        %v3195 = vunpack.c.l.b16 %v2905
        %v3196 = vunpack.c.l.b16 %v2906
        %v3197 = vunpack.c.l.b16 %v2907
        %v3198 = vunpack.c.l.b16 %v2908
        %v3199 = vunpack.c.l.b16 %v2909
        %v3200 = vunpack.c.l.b16 %v2910
        %v3201 = vunpack.c.l.b16 %v2911
        %v3202 = vunpack.c.l.b16 %v2912
        %v3203 = vunpack.c.l.b16 %v2913
        %v3204 = vunpack.c.l.b16 %v2914
        %v3205 = vunpack.c.l.b16 %v2915
        %v3206 = vpack.c.b16 %v3195, %v3194
        %v3207 = vpack.c.b16 %v3197, %v3196
        %v3208 = vpack.c.b16 %v3199, %v3198
        %v3209 = vpack.c.b16 %v3201, %v3200
        %v3210 = vpack.c.b16 %v3203, %v3202
        %v3211 = vpack.c.b16 %v3205, %v3204
        %v3219 = vsel %vm1484, %v3178, 0
        %3221 = vmatpush.bf16.msra.mxu0 0
        %3222 = vmatpush.bf16.msra.mxu0 0
        %3223 = vmatpush.bf16.msra.mxu0 %v3211
        %3224 = vmatpush.bf16.msra.mxu0 %v3210
        %3225 = vmatpush.bf16.msra.mxu0 %v3209
        %3226 = vmatpush.bf16.msra.mxu0 %v3208
        %3227 = vmatpush.bf16.msra.mxu0 %v3207
        %3228 = vmatpush.bf16.msra.mxu0 %v3206
        %3229 = vmatmul.bf16.gmra.mxu0 %v3219
        %v3230 = vpop.f32.mrf.mxu0
        %v3231 = vadd.f32 %v3180, %v3230
        %v3232 = vpop.f32.mrf.mxu0
        %3233 = vdwg.mxu0
        %v3234 = vtanh.pop %v3231
        %v3235 = vmul.f32 %v3119, %v2877
        %v3236 = vsub.f32 1.0, %v3119
        %v3237 = vmul.f32 %v3236, %v3234
        %v3238 = vadd.f32 %v3235, %v3237
        %3239 = vst.msk [vmem:[#allocation2] sm:$0xff] %vm586, %v3238
        %v3240 = vld [vmem:[%s1711] sm:$0xff]
        %v3241 = vld [vmem:[%s1713] sm:$0xf]
        %v3242 = vld [vmem:[%s1713 + $0x4] sm:$0xf]
        %v3243 = vld [vmem:[%s1713 + $0x8] sm:$0xf]
        %v3244 = vld [vmem:[%s1713 + $0xc] sm:$0xf]
        %v3245 = vld [vmem:[%s1713 + $0x10] sm:$0xf]
        %v3246 = vld [vmem:[%s1713 + $0x14] sm:$0xf]
        %v3247 = vld [vmem:[%s1713 + $0x18] sm:$0xf]
        %v3248 = vld [vmem:[%s1713 + $0x1c] sm:$0xf]
        %v3249 = vld [vmem:[%s1713 + $0x20] sm:$0xf]
        %v3250 = vld [vmem:[%s1713 + $0x24] sm:$0xf]
        %v3251 = vld [vmem:[%s1713 + $0x28] sm:$0xf]
        %v3252 = vld [vmem:[%s1713 + $0x2c] sm:$0xf]
        %v3253 = vld [vmem:[%s1726] sm:$0x1]
        %v3254 = vld [vmem:[%s1728] sm:$0xf]
        %v3255 = vld [vmem:[%s1728 + $0x4] sm:$0xf]
        %v3256 = vld [vmem:[%s1728 + $0x8] sm:$0xf]
        %v3257 = vld [vmem:[%s1728 + $0xc] sm:$0xf]
        %v3258 = vld [vmem:[%s1728 + $0x10] sm:$0xf]
        %v3259 = vld [vmem:[%s1728 + $0x14] sm:$0xf]
        %v3260 = vld [vmem:[%s1728 + $0x18] sm:$0xf]
        %v3261 = vld [vmem:[%s1728 + $0x1c] sm:$0xf]
        %v3262 = vld [vmem:[%s1728 + $0x20] sm:$0xf]
        %v3263 = vld [vmem:[%s1728 + $0x24] sm:$0xf]
        %v3264 = vld [vmem:[%s1728 + $0x28] sm:$0xf]
        %v3265 = vld [vmem:[%s1728 + $0x2c] sm:$0xf]
        %v3266 = vld [vmem:[%s1741] sm:$0x1]
        %v3267 = vld [vmem:[%s1743] sm:$0xf]
        %v3268 = vld [vmem:[%s1743 + $0x4] sm:$0xf]
        %v3269 = vld [vmem:[%s1743 + $0x8] sm:$0xf]
        %v3270 = vld [vmem:[%s1743 + $0xc] sm:$0xf]
        %v3271 = vld [vmem:[%s1743 + $0x10] sm:$0xf]
        %v3272 = vld [vmem:[%s1743 + $0x14] sm:$0xf]
        %v3273 = vld [vmem:[%s1743 + $0x18] sm:$0xf]
        %v3274 = vld [vmem:[%s1743 + $0x1c] sm:$0xf]
        %v3275 = vld [vmem:[%s1743 + $0x20] sm:$0xf]
        %v3276 = vld [vmem:[%s1743 + $0x24] sm:$0xf]
        %v3277 = vld [vmem:[%s1743 + $0x28] sm:$0xf]
        %v3278 = vld [vmem:[%s1743 + $0x2c] sm:$0xf]
        %v3279 = vld [vmem:[%s1756] sm:$0x1]
        %3281 = vrot.lane.b32.xlu0 %v3240, 16
        %v3282 = vpop.permute.xlu0 %3281
        %v3284 = vsel %vm586, %v3238, %v3282
        %3285 = vmatpush.msra.mxu0 0.0
        %3286 = vmatpush.msra.mxu0 0.0
        %3287 = vmatpush.msra.mxu0 0.0
        %3288 = vmatpush.msra.mxu0 0.0
        %3289 = vmatpush.msra.mxu0 0.0
        %3290 = vmatpush.msra.mxu0 0.0
        %3291 = vmatpush.msra.mxu0 0.0
        %3292 = vmatpush.msra.mxu0 0.0
        %3293 = vmatpush.msra.mxu0 0.0
        %3294 = vmatpush.msra.mxu0 0.0
        %3295 = vmatpush.msra.mxu0 0.0
        %3296 = vmatpush.msra.mxu0 0.0
        %3297 = vmatpush.msra.mxu0 0.0
        %3298 = vmatpush.msra.mxu0 0.0
        %3299 = vmatpush.msra.mxu0 0.0
        %3300 = vmatpush.msra.mxu0 %v3284
        %3301 = vmatmul.f32.gmra.mxu0 %v1388
        %v3302 = vpop.f32.mrf.mxu0
        %v3303 = vadd.f32 0.0, %v3302
        %3304 = vdwg.mxu0
        %3305 = vmatpush.msra.mxu0 0.0
        %3306 = vmatpush.msra.mxu0 0.0
        %3307 = vmatpush.msra.mxu0 0.0
        %3308 = vmatpush.msra.mxu0 0.0
        %3309 = vmatpush.msra.mxu0 0.0
        %3310 = vmatpush.msra.mxu0 0.0
        %3311 = vmatpush.msra.mxu0 0.0
        %3312 = vmatpush.msra.mxu0 0.0
        %3313 = vmatpush.msra.mxu0 0.0
        %3314 = vmatpush.msra.mxu0 0.0
        %3315 = vmatpush.msra.mxu0 0.0
        %3316 = vmatpush.msra.mxu0 0.0
        %3317 = vmatpush.msra.mxu0 0.0
        %3318 = vmatpush.msra.mxu0 0.0
        %3319 = vmatpush.msra.mxu0 0.0
        %3320 = vmatpush.msra.mxu0 %v3303
        %3321 = vmatmul.f32.gmra.mxu0 %v1388
        %v3322 = vpop.f32.mrf.mxu0
        %v3323 = vadd.f32 0.0, %v3322
        %3324 = vdwg.mxu0
        %v3325 = vmul.f32 %v3323, 2.0
        %v3326 = vsub.f32 %v3325, %v3284
        %3328 = vrot.lane.b32.xlu0 %v3303, 32
        %v3329 = vpop.permute.xlu0 %3328
        %3332 = vrot.lane.b32.xlu0 %v3326, 64
        %v3333 = vpop.permute.xlu0 %3332
        %v3335 = vsel %vm1440, %v3284, %v3329
        %v3336 = vsel %vm1442, %v3335, %v3333
        %v3337 = vpack.c.bf16 %v3336, %v3336
        %v3339 = vperm.slane %v3253, 0
        %v3353 = vunpack.c.l.b16 %v3241
        %v3354 = vunpack.c.l.b16 %v3242
        %v3355 = vunpack.c.l.b16 %v3243
        %v3356 = vunpack.c.l.b16 %v3244
        %v3357 = vunpack.c.l.b16 %v3245
        %v3358 = vunpack.c.l.b16 %v3246
        %v3359 = vunpack.c.l.b16 %v3247
        %v3360 = vunpack.c.l.b16 %v3248
        %v3361 = vunpack.c.l.b16 %v3249
        %v3362 = vunpack.c.l.b16 %v3250
        %v3363 = vunpack.c.l.b16 %v3251
        %v3364 = vunpack.c.l.b16 %v3252
        %v3365 = vpack.c.b16 %v3354, %v3353
        %v3366 = vpack.c.b16 %v3356, %v3355
        %v3367 = vpack.c.b16 %v3358, %v3357
        %v3368 = vpack.c.b16 %v3360, %v3359
        %v3369 = vpack.c.b16 %v3362, %v3361
        %v3370 = vpack.c.b16 %v3364, %v3363
        %v3378 = vsel %vm1484, %v3337, 0
        %3380 = vmatpush.bf16.msra.mxu0 0
        %3381 = vmatpush.bf16.msra.mxu0 0
        %3382 = vmatpush.bf16.msra.mxu0 %v3370
        %3383 = vmatpush.bf16.msra.mxu0 %v3369
        %3384 = vmatpush.bf16.msra.mxu0 %v3368
        %3385 = vmatpush.bf16.msra.mxu0 %v3367
        %3386 = vmatpush.bf16.msra.mxu0 %v3366
        %3387 = vmatpush.bf16.msra.mxu0 %v3365
        %3388 = vmatmul.bf16.gmra.mxu0 %v3378
        %v3389 = vpop.f32.mrf.mxu0
        %v3390 = vadd.f32 %v3339, %v3389
        %v3391 = vpop.f32.mrf.mxu0
        %3392 = vdwg.mxu0
        %v3393 = vsub.f32 0.0, %v3390
        %v3394 = vmul.f32 %v3393, 1.442695
        %v3395 = vpow.pop %v3394
        %v3396 = vadd.f32 %v3395, 1.0
        %v3397 = vrcp.pop %v3396
        %v3398 = vmul.f32 %v3396, %v3397
        %v3399 = vsub.f32 1.0, %v3398
        %v3400 = vmul.f32 %v3397, %v3399
        %v3401 = vadd.f32 %v3397, %v3400
        %vm3402 = vweird.f32 %v3396
        %vm3403 = vweird.f32 %v3397
        %vm3404 = vmor %vm3402, %vm3403
        %v3405 = vsel %vm3404, %v3397, %v3401
        %v3406 = vand.u32 2147483647, %v3396
        %vm3407 = vcmp.eq.f32.partialorder %v3406, 8.507059e+37
        %v3408 = vand.u32 %v3396, 2147483648
        %v3409 = vor.u32 1.1754944e-38, %v3408
        %v3410 = vsel %vm3407, %v3409, %v3405
        %v3411 = vmul.f32 1.0, %v3410
        %v3413 = vperm.slane %v3266, 0
        %v3427 = vunpack.c.l.b16 %v3254
        %v3428 = vunpack.c.l.b16 %v3255
        %v3429 = vunpack.c.l.b16 %v3256
        %v3430 = vunpack.c.l.b16 %v3257
        %v3431 = vunpack.c.l.b16 %v3258
        %v3432 = vunpack.c.l.b16 %v3259
        %v3433 = vunpack.c.l.b16 %v3260
        %v3434 = vunpack.c.l.b16 %v3261
        %v3435 = vunpack.c.l.b16 %v3262
        %v3436 = vunpack.c.l.b16 %v3263
        %v3437 = vunpack.c.l.b16 %v3264
        %v3438 = vunpack.c.l.b16 %v3265
        %v3439 = vpack.c.b16 %v3428, %v3427
        %v3440 = vpack.c.b16 %v3430, %v3429
        %v3441 = vpack.c.b16 %v3432, %v3431
        %v3442 = vpack.c.b16 %v3434, %v3433
        %v3443 = vpack.c.b16 %v3436, %v3435
        %v3444 = vpack.c.b16 %v3438, %v3437
        %3451 = vmatpush.bf16.msra.mxu0 0
        %3452 = vmatpush.bf16.msra.mxu0 0
        %3453 = vmatpush.bf16.msra.mxu0 %v3444
        %3454 = vmatpush.bf16.msra.mxu0 %v3443
        %3455 = vmatpush.bf16.msra.mxu0 %v3442
        %3456 = vmatpush.bf16.msra.mxu0 %v3441
        %3457 = vmatpush.bf16.msra.mxu0 %v3440
        %3458 = vmatpush.bf16.msra.mxu0 %v3439
        %3459 = vmatmul.bf16.gmra.mxu0 %v3378
        %v3460 = vpop.f32.mrf.mxu0
        %v3461 = vadd.f32 %v3413, %v3460
        %v3462 = vpop.f32.mrf.mxu0
        %3463 = vdwg.mxu0
        %v3464 = vsub.f32 0.0, %v3461
        %v3465 = vmul.f32 %v3464, 1.442695
        %v3466 = vpow.pop %v3465
        %v3467 = vadd.f32 %v3466, 1.0
        %v3468 = vrcp.pop %v3467
        %v3469 = vmul.f32 %v3467, %v3468
        %v3470 = vsub.f32 1.0, %v3469
        %v3471 = vmul.f32 %v3468, %v3470
        %v3472 = vadd.f32 %v3468, %v3471
        %vm3473 = vweird.f32 %v3467
        %vm3474 = vweird.f32 %v3468
        %vm3475 = vmor %vm3473, %vm3474
        %v3476 = vsel %vm3475, %v3468, %v3472
        %v3477 = vand.u32 2147483647, %v3467
        %vm3478 = vcmp.eq.f32.partialorder %v3477, 8.507059e+37
        %v3479 = vand.u32 %v3467, 2147483648
        %v3480 = vor.u32 1.1754944e-38, %v3479
        %v3481 = vsel %vm3478, %v3480, %v3476
        %v3482 = vmul.f32 1.0, %v3481
        %v3483 = vmul.f32 %v3411, %v3240
        %3485 = vrot.lane.b32.xlu0 %v3483, 16
        %v3486 = vpop.permute.xlu0 %3485
        %v3488 = vsel %vm586, %v3238, %v3486
        %3489 = vmatpush.msra.mxu0 0.0
        %3490 = vmatpush.msra.mxu0 0.0
        %3491 = vmatpush.msra.mxu0 0.0
        %3492 = vmatpush.msra.mxu0 0.0
        %3493 = vmatpush.msra.mxu0 0.0
        %3494 = vmatpush.msra.mxu0 0.0
        %3495 = vmatpush.msra.mxu0 0.0
        %3496 = vmatpush.msra.mxu0 0.0
        %3497 = vmatpush.msra.mxu0 0.0
        %3498 = vmatpush.msra.mxu0 0.0
        %3499 = vmatpush.msra.mxu0 0.0
        %3500 = vmatpush.msra.mxu0 0.0
        %3501 = vmatpush.msra.mxu0 0.0
        %3502 = vmatpush.msra.mxu0 0.0
        %3503 = vmatpush.msra.mxu0 0.0
        %3504 = vmatpush.msra.mxu0 %v3488
        %3505 = vmatmul.f32.gmra.mxu0 %v1388
        %v3506 = vpop.f32.mrf.mxu0
        %v3507 = vadd.f32 0.0, %v3506
        %3508 = vdwg.mxu0
        %3509 = vmatpush.msra.mxu0 0.0
        %3510 = vmatpush.msra.mxu0 0.0
        %3511 = vmatpush.msra.mxu0 0.0
        %3512 = vmatpush.msra.mxu0 0.0
        %3513 = vmatpush.msra.mxu0 0.0
        %3514 = vmatpush.msra.mxu0 0.0
        %3515 = vmatpush.msra.mxu0 0.0
        %3516 = vmatpush.msra.mxu0 0.0
        %3517 = vmatpush.msra.mxu0 0.0
        %3518 = vmatpush.msra.mxu0 0.0
        %3519 = vmatpush.msra.mxu0 0.0
        %3520 = vmatpush.msra.mxu0 0.0
        %3521 = vmatpush.msra.mxu0 0.0
        %3522 = vmatpush.msra.mxu0 0.0
        %3523 = vmatpush.msra.mxu0 0.0
        %3524 = vmatpush.msra.mxu0 %v3507
        %3525 = vmatmul.f32.gmra.mxu0 %v1388
        %v3526 = vpop.f32.mrf.mxu0
        %v3527 = vadd.f32 0.0, %v3526
        %3528 = vdwg.mxu0
        %v3529 = vmul.f32 %v3527, 2.0
        %v3530 = vsub.f32 %v3529, %v3488
        %3532 = vrot.lane.b32.xlu0 %v3507, 32
        %v3533 = vpop.permute.xlu0 %3532
        %3536 = vrot.lane.b32.xlu0 %v3530, 64
        %v3537 = vpop.permute.xlu0 %3536
        %v3539 = vsel %vm1440, %v3488, %v3533
        %v3540 = vsel %vm1442, %v3539, %v3537
        %v3541 = vpack.c.bf16 %v3540, %v3540
        %v3543 = vperm.slane %v3279, 0
        %v3557 = vunpack.c.l.b16 %v3267
        %v3558 = vunpack.c.l.b16 %v3268
        %v3559 = vunpack.c.l.b16 %v3269
        %v3560 = vunpack.c.l.b16 %v3270
        %v3561 = vunpack.c.l.b16 %v3271
        %v3562 = vunpack.c.l.b16 %v3272
        %v3563 = vunpack.c.l.b16 %v3273
        %v3564 = vunpack.c.l.b16 %v3274
        %v3565 = vunpack.c.l.b16 %v3275
        %v3566 = vunpack.c.l.b16 %v3276
        %v3567 = vunpack.c.l.b16 %v3277
        %v3568 = vunpack.c.l.b16 %v3278
        %v3569 = vpack.c.b16 %v3558, %v3557
        %v3570 = vpack.c.b16 %v3560, %v3559
        %v3571 = vpack.c.b16 %v3562, %v3561
        %v3572 = vpack.c.b16 %v3564, %v3563
        %v3573 = vpack.c.b16 %v3566, %v3565
        %v3574 = vpack.c.b16 %v3568, %v3567
        %v3582 = vsel %vm1484, %v3541, 0
        %3584 = vmatpush.bf16.msra.mxu0 0
        %3585 = vmatpush.bf16.msra.mxu0 0
        %3586 = vmatpush.bf16.msra.mxu0 %v3574
        %3587 = vmatpush.bf16.msra.mxu0 %v3573
        %3588 = vmatpush.bf16.msra.mxu0 %v3572
        %3589 = vmatpush.bf16.msra.mxu0 %v3571
        %3590 = vmatpush.bf16.msra.mxu0 %v3570
        %3591 = vmatpush.bf16.msra.mxu0 %v3569
        %3592 = vmatmul.bf16.gmra.mxu0 %v3582
        %v3593 = vpop.f32.mrf.mxu0
        %v3594 = vadd.f32 %v3543, %v3593
        %v3595 = vpop.f32.mrf.mxu0
        %3596 = vdwg.mxu0
        %v3597 = vtanh.pop %v3594
        %v3598 = vmul.f32 %v3482, %v3240
        %v3599 = vsub.f32 1.0, %v3482
        %v3600 = vmul.f32 %v3599, %v3597
        %v3601 = vadd.f32 %v3598, %v3600
        %3602 = vst.msk [vmem:[%s1711] sm:$0xff] %vm586, %v3601
        %v3603 = vld [vmem:[%s14] sm:$0xff]
        %v3604 = vld [vmem:[%s14 + $0x8] sm:$0xff]
        %v3605 = vld [vmem:[#allocation4] sm:$0x1]
        %v3607 = vperm.slane %v3605, 0
        %v3610 = vsel %vm586, %v3601, 0
        %3612 = vmatpush.msra.mxu0 0.0
        %3613 = vmatpush.msra.mxu0 0.0
        %3614 = vmatpush.msra.mxu0 0.0
        %3615 = vmatpush.msra.mxu0 0.0
        %3616 = vmatpush.msra.mxu0 0.0
        %3617 = vmatpush.msra.mxu0 0.0
        %3618 = vmatpush.msra.mxu0 0.0
        %3619 = vmatpush.msra.mxu0 0.0
        %3620 = vmatpush.msra.mxu0 0.0
        %3621 = vmatpush.msra.mxu0 0.0
        %3622 = vmatpush.msra.mxu0 0.0
        %3623 = vmatpush.msra.mxu0 0.0
        %3624 = vmatpush.msra.mxu0 0.0
        %3625 = vmatpush.msra.mxu0 0.0
        %3626 = vmatpush.msra.mxu0 %v3604
        %3627 = vmatpush.msra.mxu0 %v3603
        %3628 = vmatmul.f32.gmra.mxu0 %v3610
        %v3629 = vpop.f32.mrf.mxu0
        %v3630 = vadd.f32 %v3607, %v3629
        %3631 = vdwg.mxu0
        %3633 = vrot.lane.b32.xlu0 %v3630, 2
        %v3634 = vpop.permute.xlu0 %3633
        %vm3636 = vcmask 23568
        %3637 = vst.msk [vmem:[%s584] sm:$0xff] %vm3636, %v3634
        %3638 = vst.msk [vmem:[#allocation3] sm:$0xff] %vm2110, %v3630
        %v3639 = vld [vmem:[#allocation3] sm:$0xff]
        %v3640 = vld [vmem:[#allocation2] sm:$0xff]
        %v3641 = vld [vmem:[%s8] sm:$0xf]
        %v3642 = vld [vmem:[%s8 + $0x4] sm:$0xf]
        %v3643 = vld [vmem:[%s8 + $0x8] sm:$0xf]
        %v3644 = vld [vmem:[%s8 + $0xc] sm:$0xf]
        %v3645 = vld [vmem:[%s8 + $0x10] sm:$0xf]
        %v3646 = vld [vmem:[%s8 + $0x14] sm:$0xf]
        %v3647 = vld [vmem:[%s8 + $0x18] sm:$0xf]
        %v3648 = vld [vmem:[%s8 + $0x1c] sm:$0xf]
        %v3649 = vld [vmem:[%s8 + $0x20] sm:$0xf]
        %v3650 = vld [vmem:[%s8 + $0x24] sm:$0xf]
        %v3651 = vld [vmem:[%s8 + $0x28] sm:$0xf]
        %v3652 = vld [vmem:[%s8 + $0x2c] sm:$0xf]
        %v3653 = vld [vmem:[%s9] sm:$0x1]
        %v3654 = vld [vmem:[%s10] sm:$0xf]
        %v3655 = vld [vmem:[%s10 + $0x4] sm:$0xf]
        %v3656 = vld [vmem:[%s10 + $0x8] sm:$0xf]
        %v3657 = vld [vmem:[%s10 + $0xc] sm:$0xf]
        %v3658 = vld [vmem:[%s10 + $0x10] sm:$0xf]
        %v3659 = vld [vmem:[%s10 + $0x14] sm:$0xf]
        %v3660 = vld [vmem:[%s10 + $0x18] sm:$0xf]
        %v3661 = vld [vmem:[%s10 + $0x1c] sm:$0xf]
        %v3662 = vld [vmem:[%s10 + $0x20] sm:$0xf]
        %v3663 = vld [vmem:[%s10 + $0x24] sm:$0xf]
        %v3664 = vld [vmem:[%s10 + $0x28] sm:$0xf]
        %v3665 = vld [vmem:[%s10 + $0x2c] sm:$0xf]
        %v3666 = vld [vmem:[%s11] sm:$0x1]
        %v3667 = vld [vmem:[%s12] sm:$0xf]
        %v3668 = vld [vmem:[%s12 + $0x4] sm:$0xf]
        %v3669 = vld [vmem:[%s12 + $0x8] sm:$0xf]
        %v3670 = vld [vmem:[%s12 + $0xc] sm:$0xf]
        %v3671 = vld [vmem:[%s12 + $0x10] sm:$0xf]
        %v3672 = vld [vmem:[%s12 + $0x14] sm:$0xf]
        %v3673 = vld [vmem:[%s12 + $0x18] sm:$0xf]
        %v3674 = vld [vmem:[%s12 + $0x1c] sm:$0xf]
        %v3675 = vld [vmem:[%s12 + $0x20] sm:$0xf]
        %v3676 = vld [vmem:[%s12 + $0x24] sm:$0xf]
        %v3677 = vld [vmem:[%s12 + $0x28] sm:$0xf]
        %v3678 = vld [vmem:[%s12 + $0x2c] sm:$0xf]
        %v3679 = vld [vmem:[%s13] sm:$0x1]
        %3681 = vrot.lane.b32.xlu0 %v3640, 16
        %v3682 = vpop.permute.xlu0 %3681
        %v3684 = vsel %vm586, %v3639, %v3682
        %3685 = vmatpush.msra.mxu0 0.0
        %3686 = vmatpush.msra.mxu0 0.0
        %3687 = vmatpush.msra.mxu0 0.0
        %3688 = vmatpush.msra.mxu0 0.0
        %3689 = vmatpush.msra.mxu0 0.0
        %3690 = vmatpush.msra.mxu0 0.0
        %3691 = vmatpush.msra.mxu0 0.0
        %3692 = vmatpush.msra.mxu0 0.0
        %3693 = vmatpush.msra.mxu0 0.0
        %3694 = vmatpush.msra.mxu0 0.0
        %3695 = vmatpush.msra.mxu0 0.0
        %3696 = vmatpush.msra.mxu0 0.0
        %3697 = vmatpush.msra.mxu0 0.0
        %3698 = vmatpush.msra.mxu0 0.0
        %3699 = vmatpush.msra.mxu0 0.0
        %3700 = vmatpush.msra.mxu0 %v3684
        %3701 = vmatmul.f32.gmra.mxu0 %v1388
        %v3702 = vpop.f32.mrf.mxu0
        %v3703 = vadd.f32 0.0, %v3702
        %3704 = vdwg.mxu0
        %3705 = vmatpush.msra.mxu0 0.0
        %3706 = vmatpush.msra.mxu0 0.0
        %3707 = vmatpush.msra.mxu0 0.0
        %3708 = vmatpush.msra.mxu0 0.0
        %3709 = vmatpush.msra.mxu0 0.0
        %3710 = vmatpush.msra.mxu0 0.0
        %3711 = vmatpush.msra.mxu0 0.0
        %3712 = vmatpush.msra.mxu0 0.0
        %3713 = vmatpush.msra.mxu0 0.0
        %3714 = vmatpush.msra.mxu0 0.0
        %3715 = vmatpush.msra.mxu0 0.0
        %3716 = vmatpush.msra.mxu0 0.0
        %3717 = vmatpush.msra.mxu0 0.0
        %3718 = vmatpush.msra.mxu0 0.0
        %3719 = vmatpush.msra.mxu0 0.0
        %3720 = vmatpush.msra.mxu0 %v3703
        %3721 = vmatmul.f32.gmra.mxu0 %v1388
        %v3722 = vpop.f32.mrf.mxu0
        %v3723 = vadd.f32 0.0, %v3722
        %3724 = vdwg.mxu0
        %v3725 = vmul.f32 %v3723, 2.0
        %v3726 = vsub.f32 %v3725, %v3684
        %3728 = vrot.lane.b32.xlu0 %v3703, 32
        %v3729 = vpop.permute.xlu0 %3728
        %3732 = vrot.lane.b32.xlu0 %v3726, 64
        %v3733 = vpop.permute.xlu0 %3732
        %v3735 = vsel %vm1440, %v3684, %v3729
        %v3736 = vsel %vm1442, %v3735, %v3733
        %v3737 = vpack.c.bf16 %v3736, %v3736
        %v3739 = vperm.slane %v3653, 0
        %v3753 = vunpack.c.l.b16 %v3641
        %v3754 = vunpack.c.l.b16 %v3642
        %v3755 = vunpack.c.l.b16 %v3643
        %v3756 = vunpack.c.l.b16 %v3644
        %v3757 = vunpack.c.l.b16 %v3645
        %v3758 = vunpack.c.l.b16 %v3646
        %v3759 = vunpack.c.l.b16 %v3647
        %v3760 = vunpack.c.l.b16 %v3648
        %v3761 = vunpack.c.l.b16 %v3649
        %v3762 = vunpack.c.l.b16 %v3650
        %v3763 = vunpack.c.l.b16 %v3651
        %v3764 = vunpack.c.l.b16 %v3652
        %v3765 = vpack.c.b16 %v3754, %v3753
        %v3766 = vpack.c.b16 %v3756, %v3755
        %v3767 = vpack.c.b16 %v3758, %v3757
        %v3768 = vpack.c.b16 %v3760, %v3759
        %v3769 = vpack.c.b16 %v3762, %v3761
        %v3770 = vpack.c.b16 %v3764, %v3763
        %v3778 = vsel %vm1484, %v3737, 0
        %3780 = vmatpush.bf16.msra.mxu0 0
        %3781 = vmatpush.bf16.msra.mxu0 0
        %3782 = vmatpush.bf16.msra.mxu0 %v3770
        %3783 = vmatpush.bf16.msra.mxu0 %v3769
        %3784 = vmatpush.bf16.msra.mxu0 %v3768
        %3785 = vmatpush.bf16.msra.mxu0 %v3767
        %3786 = vmatpush.bf16.msra.mxu0 %v3766
        %3787 = vmatpush.bf16.msra.mxu0 %v3765
        %3788 = vmatmul.bf16.gmra.mxu0 %v3778
        %v3789 = vpop.f32.mrf.mxu0
        %v3790 = vadd.f32 %v3739, %v3789
        %v3791 = vpop.f32.mrf.mxu0
        %3792 = vdwg.mxu0
        %v3793 = vsub.f32 0.0, %v3790
        %v3794 = vmul.f32 %v3793, 1.442695
        %v3795 = vpow.pop %v3794
        %v3796 = vadd.f32 %v3795, 1.0
        %v3797 = vrcp.pop %v3796
        %v3798 = vmul.f32 %v3796, %v3797
        %v3799 = vsub.f32 1.0, %v3798
        %v3800 = vmul.f32 %v3797, %v3799
        %v3801 = vadd.f32 %v3797, %v3800
        %vm3802 = vweird.f32 %v3796
        %vm3803 = vweird.f32 %v3797
        %vm3804 = vmor %vm3802, %vm3803
        %v3805 = vsel %vm3804, %v3797, %v3801
        %v3806 = vand.u32 2147483647, %v3796
        %vm3807 = vcmp.eq.f32.partialorder %v3806, 8.507059e+37
        %v3808 = vand.u32 %v3796, 2147483648
        %v3809 = vor.u32 1.1754944e-38, %v3808
        %v3810 = vsel %vm3807, %v3809, %v3805
        %v3811 = vmul.f32 1.0, %v3810
        %v3813 = vperm.slane %v3666, 0
        %v3827 = vunpack.c.l.b16 %v3654
        %v3828 = vunpack.c.l.b16 %v3655
        %v3829 = vunpack.c.l.b16 %v3656
        %v3830 = vunpack.c.l.b16 %v3657
        %v3831 = vunpack.c.l.b16 %v3658
        %v3832 = vunpack.c.l.b16 %v3659
        %v3833 = vunpack.c.l.b16 %v3660
        %v3834 = vunpack.c.l.b16 %v3661
        %v3835 = vunpack.c.l.b16 %v3662
        %v3836 = vunpack.c.l.b16 %v3663
        %v3837 = vunpack.c.l.b16 %v3664
        %v3838 = vunpack.c.l.b16 %v3665
        %v3839 = vpack.c.b16 %v3828, %v3827
        %v3840 = vpack.c.b16 %v3830, %v3829
        %v3841 = vpack.c.b16 %v3832, %v3831
        %v3842 = vpack.c.b16 %v3834, %v3833
        %v3843 = vpack.c.b16 %v3836, %v3835
        %v3844 = vpack.c.b16 %v3838, %v3837
        %3851 = vmatpush.bf16.msra.mxu0 0
        %3852 = vmatpush.bf16.msra.mxu0 0
        %3853 = vmatpush.bf16.msra.mxu0 %v3844
        %3854 = vmatpush.bf16.msra.mxu0 %v3843
        %3855 = vmatpush.bf16.msra.mxu0 %v3842
        %3856 = vmatpush.bf16.msra.mxu0 %v3841
        %3857 = vmatpush.bf16.msra.mxu0 %v3840
        %3858 = vmatpush.bf16.msra.mxu0 %v3839
        %3859 = vmatmul.bf16.gmra.mxu0 %v3778
        %v3860 = vpop.f32.mrf.mxu0
        %v3861 = vadd.f32 %v3813, %v3860
        %v3862 = vpop.f32.mrf.mxu0
        %3863 = vdwg.mxu0
        %v3864 = vsub.f32 0.0, %v3861
        %v3865 = vmul.f32 %v3864, 1.442695
        %v3866 = vpow.pop %v3865
        %v3867 = vadd.f32 %v3866, 1.0
        %v3868 = vrcp.pop %v3867
        %v3869 = vmul.f32 %v3867, %v3868
        %v3870 = vsub.f32 1.0, %v3869
        %v3871 = vmul.f32 %v3868, %v3870
        %v3872 = vadd.f32 %v3868, %v3871
        %vm3873 = vweird.f32 %v3867
        %vm3874 = vweird.f32 %v3868
        %vm3875 = vmor %vm3873, %vm3874
        %v3876 = vsel %vm3875, %v3868, %v3872
        %v3877 = vand.u32 2147483647, %v3867
        %vm3878 = vcmp.eq.f32.partialorder %v3877, 8.507059e+37
        %v3879 = vand.u32 %v3867, 2147483648
        %v3880 = vor.u32 1.1754944e-38, %v3879
        %v3881 = vsel %vm3878, %v3880, %v3876
        %v3882 = vmul.f32 1.0, %v3881
        %v3883 = vmul.f32 %v3811, %v3640
        %3885 = vrot.lane.b32.xlu0 %v3883, 16
        %v3886 = vpop.permute.xlu0 %3885
        %v3888 = vsel %vm586, %v3639, %v3886
        %3889 = vmatpush.msra.mxu0 0.0
        %3890 = vmatpush.msra.mxu0 0.0
        %3891 = vmatpush.msra.mxu0 0.0
        %3892 = vmatpush.msra.mxu0 0.0
        %3893 = vmatpush.msra.mxu0 0.0
        %3894 = vmatpush.msra.mxu0 0.0
        %3895 = vmatpush.msra.mxu0 0.0
        %3896 = vmatpush.msra.mxu0 0.0
        %3897 = vmatpush.msra.mxu0 0.0
        %3898 = vmatpush.msra.mxu0 0.0
        %3899 = vmatpush.msra.mxu0 0.0
        %3900 = vmatpush.msra.mxu0 0.0
        %3901 = vmatpush.msra.mxu0 0.0
        %3902 = vmatpush.msra.mxu0 0.0
        %3903 = vmatpush.msra.mxu0 0.0
        %3904 = vmatpush.msra.mxu0 %v3888
        %3905 = vmatmul.f32.gmra.mxu0 %v1388
        %v3906 = vpop.f32.mrf.mxu0
        %v3907 = vadd.f32 0.0, %v3906
        %3908 = vdwg.mxu0
        %3909 = vmatpush.msra.mxu0 0.0
        %3910 = vmatpush.msra.mxu0 0.0
        %3911 = vmatpush.msra.mxu0 0.0
        %3912 = vmatpush.msra.mxu0 0.0
        %3913 = vmatpush.msra.mxu0 0.0
        %3914 = vmatpush.msra.mxu0 0.0
        %3915 = vmatpush.msra.mxu0 0.0
        %3916 = vmatpush.msra.mxu0 0.0
        %3917 = vmatpush.msra.mxu0 0.0
        %3918 = vmatpush.msra.mxu0 0.0
        %3919 = vmatpush.msra.mxu0 0.0
        %3920 = vmatpush.msra.mxu0 0.0
        %3921 = vmatpush.msra.mxu0 0.0
        %3922 = vmatpush.msra.mxu0 0.0
        %3923 = vmatpush.msra.mxu0 0.0
        %3924 = vmatpush.msra.mxu0 %v3907
        %3925 = vmatmul.f32.gmra.mxu0 %v1388
        %v3926 = vpop.f32.mrf.mxu0
        %v3927 = vadd.f32 0.0, %v3926
        %3928 = vdwg.mxu0
        %v3929 = vmul.f32 %v3927, 2.0
        %v3930 = vsub.f32 %v3929, %v3888
        %3932 = vrot.lane.b32.xlu0 %v3907, 32
        %v3933 = vpop.permute.xlu0 %3932
        %3936 = vrot.lane.b32.xlu0 %v3930, 64
        %v3937 = vpop.permute.xlu0 %3936
        %v3939 = vsel %vm1440, %v3888, %v3933
        %v3940 = vsel %vm1442, %v3939, %v3937
        %v3941 = vpack.c.bf16 %v3940, %v3940
        %v3943 = vperm.slane %v3679, 0
        %v3957 = vunpack.c.l.b16 %v3667
        %v3958 = vunpack.c.l.b16 %v3668
        %v3959 = vunpack.c.l.b16 %v3669
        %v3960 = vunpack.c.l.b16 %v3670
        %v3961 = vunpack.c.l.b16 %v3671
        %v3962 = vunpack.c.l.b16 %v3672
        %v3963 = vunpack.c.l.b16 %v3673
        %v3964 = vunpack.c.l.b16 %v3674
        %v3965 = vunpack.c.l.b16 %v3675
        %v3966 = vunpack.c.l.b16 %v3676
        %v3967 = vunpack.c.l.b16 %v3677
        %v3968 = vunpack.c.l.b16 %v3678
        %v3969 = vpack.c.b16 %v3958, %v3957
        %v3970 = vpack.c.b16 %v3960, %v3959
        %v3971 = vpack.c.b16 %v3962, %v3961
        %v3972 = vpack.c.b16 %v3964, %v3963
        %v3973 = vpack.c.b16 %v3966, %v3965
        %v3974 = vpack.c.b16 %v3968, %v3967
        %v3982 = vsel %vm1484, %v3941, 0
        %3984 = vmatpush.bf16.msra.mxu0 0
        %3985 = vmatpush.bf16.msra.mxu0 0
        %3986 = vmatpush.bf16.msra.mxu0 %v3974
        %3987 = vmatpush.bf16.msra.mxu0 %v3973
        %3988 = vmatpush.bf16.msra.mxu0 %v3972
        %3989 = vmatpush.bf16.msra.mxu0 %v3971
        %3990 = vmatpush.bf16.msra.mxu0 %v3970
        %3991 = vmatpush.bf16.msra.mxu0 %v3969
        %3992 = vmatmul.bf16.gmra.mxu0 %v3982
        %v3993 = vpop.f32.mrf.mxu0
        %v3994 = vadd.f32 %v3943, %v3993
        %v3995 = vpop.f32.mrf.mxu0
        %3996 = vdwg.mxu0
        %v3997 = vtanh.pop %v3994
        %v3998 = vmul.f32 %v3882, %v3640
        %v3999 = vsub.f32 1.0, %v3882
        %v4000 = vmul.f32 %v3999, %v3997
        %v4001 = vadd.f32 %v3998, %v4000
        %4002 = vst.msk [vmem:[#allocation2] sm:$0xff] %vm586, %v4001
        %v4003 = vld [vmem:[%s1711] sm:$0xff]
        %v4004 = vld [vmem:[%s1713] sm:$0xf]
        %v4005 = vld [vmem:[%s1713 + $0x4] sm:$0xf]
        %v4006 = vld [vmem:[%s1713 + $0x8] sm:$0xf]
        %v4007 = vld [vmem:[%s1713 + $0xc] sm:$0xf]
        %v4008 = vld [vmem:[%s1713 + $0x10] sm:$0xf]
        %v4009 = vld [vmem:[%s1713 + $0x14] sm:$0xf]
        %v4010 = vld [vmem:[%s1713 + $0x18] sm:$0xf]
        %v4011 = vld [vmem:[%s1713 + $0x1c] sm:$0xf]
        %v4012 = vld [vmem:[%s1713 + $0x20] sm:$0xf]
        %v4013 = vld [vmem:[%s1713 + $0x24] sm:$0xf]
        %v4014 = vld [vmem:[%s1713 + $0x28] sm:$0xf]
        %v4015 = vld [vmem:[%s1713 + $0x2c] sm:$0xf]
        %v4016 = vld [vmem:[%s1726] sm:$0x1]
        %v4017 = vld [vmem:[%s1728] sm:$0xf]
        %v4018 = vld [vmem:[%s1728 + $0x4] sm:$0xf]
        %v4019 = vld [vmem:[%s1728 + $0x8] sm:$0xf]
        %v4020 = vld [vmem:[%s1728 + $0xc] sm:$0xf]
        %v4021 = vld [vmem:[%s1728 + $0x10] sm:$0xf]
        %v4022 = vld [vmem:[%s1728 + $0x14] sm:$0xf]
        %v4023 = vld [vmem:[%s1728 + $0x18] sm:$0xf]
        %v4024 = vld [vmem:[%s1728 + $0x1c] sm:$0xf]
        %v4025 = vld [vmem:[%s1728 + $0x20] sm:$0xf]
        %v4026 = vld [vmem:[%s1728 + $0x24] sm:$0xf]
        %v4027 = vld [vmem:[%s1728 + $0x28] sm:$0xf]
        %v4028 = vld [vmem:[%s1728 + $0x2c] sm:$0xf]
        %v4029 = vld [vmem:[%s1741] sm:$0x1]
        %v4030 = vld [vmem:[%s1743] sm:$0xf]
        %v4031 = vld [vmem:[%s1743 + $0x4] sm:$0xf]
        %v4032 = vld [vmem:[%s1743 + $0x8] sm:$0xf]
        %v4033 = vld [vmem:[%s1743 + $0xc] sm:$0xf]
        %v4034 = vld [vmem:[%s1743 + $0x10] sm:$0xf]
        %v4035 = vld [vmem:[%s1743 + $0x14] sm:$0xf]
        %v4036 = vld [vmem:[%s1743 + $0x18] sm:$0xf]
        %v4037 = vld [vmem:[%s1743 + $0x1c] sm:$0xf]
        %v4038 = vld [vmem:[%s1743 + $0x20] sm:$0xf]
        %v4039 = vld [vmem:[%s1743 + $0x24] sm:$0xf]
        %v4040 = vld [vmem:[%s1743 + $0x28] sm:$0xf]
        %v4041 = vld [vmem:[%s1743 + $0x2c] sm:$0xf]
        %v4042 = vld [vmem:[%s1756] sm:$0x1]
        %4044 = vrot.lane.b32.xlu0 %v4003, 16
        %v4045 = vpop.permute.xlu0 %4044
        %v4047 = vsel %vm586, %v4001, %v4045
        %4048 = vmatpush.msra.mxu0 0.0
        %4049 = vmatpush.msra.mxu0 0.0
        %4050 = vmatpush.msra.mxu0 0.0
        %4051 = vmatpush.msra.mxu0 0.0
        %4052 = vmatpush.msra.mxu0 0.0
        %4053 = vmatpush.msra.mxu0 0.0
        %4054 = vmatpush.msra.mxu0 0.0
        %4055 = vmatpush.msra.mxu0 0.0
        %4056 = vmatpush.msra.mxu0 0.0
        %4057 = vmatpush.msra.mxu0 0.0
        %4058 = vmatpush.msra.mxu0 0.0
        %4059 = vmatpush.msra.mxu0 0.0
        %4060 = vmatpush.msra.mxu0 0.0
        %4061 = vmatpush.msra.mxu0 0.0
        %4062 = vmatpush.msra.mxu0 0.0
        %4063 = vmatpush.msra.mxu0 %v4047
        %4064 = vmatmul.f32.gmra.mxu0 %v1388
        %v4065 = vpop.f32.mrf.mxu0
        %v4066 = vadd.f32 0.0, %v4065
        %4067 = vdwg.mxu0
        %4068 = vmatpush.msra.mxu0 0.0
        %4069 = vmatpush.msra.mxu0 0.0
        %4070 = vmatpush.msra.mxu0 0.0
        %4071 = vmatpush.msra.mxu0 0.0
        %4072 = vmatpush.msra.mxu0 0.0
        %4073 = vmatpush.msra.mxu0 0.0
        %4074 = vmatpush.msra.mxu0 0.0
        %4075 = vmatpush.msra.mxu0 0.0
        %4076 = vmatpush.msra.mxu0 0.0
        %4077 = vmatpush.msra.mxu0 0.0
        %4078 = vmatpush.msra.mxu0 0.0
        %4079 = vmatpush.msra.mxu0 0.0
        %4080 = vmatpush.msra.mxu0 0.0
        %4081 = vmatpush.msra.mxu0 0.0
        %4082 = vmatpush.msra.mxu0 0.0
        %4083 = vmatpush.msra.mxu0 %v4066
        %4084 = vmatmul.f32.gmra.mxu0 %v1388
        %v4085 = vpop.f32.mrf.mxu0
        %v4086 = vadd.f32 0.0, %v4085
        %4087 = vdwg.mxu0
        %v4088 = vmul.f32 %v4086, 2.0
        %v4089 = vsub.f32 %v4088, %v4047
        %4091 = vrot.lane.b32.xlu0 %v4066, 32
        %v4092 = vpop.permute.xlu0 %4091
        %4095 = vrot.lane.b32.xlu0 %v4089, 64
        %v4096 = vpop.permute.xlu0 %4095
        %v4098 = vsel %vm1440, %v4047, %v4092
        %v4099 = vsel %vm1442, %v4098, %v4096
        %v4100 = vpack.c.bf16 %v4099, %v4099
        %v4102 = vperm.slane %v4016, 0
        %v4116 = vunpack.c.l.b16 %v4004
        %v4117 = vunpack.c.l.b16 %v4005
        %v4118 = vunpack.c.l.b16 %v4006
        %v4119 = vunpack.c.l.b16 %v4007
        %v4120 = vunpack.c.l.b16 %v4008
        %v4121 = vunpack.c.l.b16 %v4009
        %v4122 = vunpack.c.l.b16 %v4010
        %v4123 = vunpack.c.l.b16 %v4011
        %v4124 = vunpack.c.l.b16 %v4012
        %v4125 = vunpack.c.l.b16 %v4013
        %v4126 = vunpack.c.l.b16 %v4014
        %v4127 = vunpack.c.l.b16 %v4015
        %v4128 = vpack.c.b16 %v4117, %v4116
        %v4129 = vpack.c.b16 %v4119, %v4118
        %v4130 = vpack.c.b16 %v4121, %v4120
        %v4131 = vpack.c.b16 %v4123, %v4122
        %v4132 = vpack.c.b16 %v4125, %v4124
        %v4133 = vpack.c.b16 %v4127, %v4126
        %v4141 = vsel %vm1484, %v4100, 0
        %4143 = vmatpush.bf16.msra.mxu0 0
        %4144 = vmatpush.bf16.msra.mxu0 0
        %4145 = vmatpush.bf16.msra.mxu0 %v4133
        %4146 = vmatpush.bf16.msra.mxu0 %v4132
        %4147 = vmatpush.bf16.msra.mxu0 %v4131
        %4148 = vmatpush.bf16.msra.mxu0 %v4130
        %4149 = vmatpush.bf16.msra.mxu0 %v4129
        %4150 = vmatpush.bf16.msra.mxu0 %v4128
        %4151 = vmatmul.bf16.gmra.mxu0 %v4141
        %v4152 = vpop.f32.mrf.mxu0
        %v4153 = vadd.f32 %v4102, %v4152
        %v4154 = vpop.f32.mrf.mxu0
        %4155 = vdwg.mxu0
        %v4156 = vsub.f32 0.0, %v4153
        %v4157 = vmul.f32 %v4156, 1.442695
        %v4158 = vpow.pop %v4157
        %v4159 = vadd.f32 %v4158, 1.0
        %v4160 = vrcp.pop %v4159
        %v4161 = vmul.f32 %v4159, %v4160
        %v4162 = vsub.f32 1.0, %v4161
        %v4163 = vmul.f32 %v4160, %v4162
        %v4164 = vadd.f32 %v4160, %v4163
        %vm4165 = vweird.f32 %v4159
        %vm4166 = vweird.f32 %v4160
        %vm4167 = vmor %vm4165, %vm4166
        %v4168 = vsel %vm4167, %v4160, %v4164
        %v4169 = vand.u32 2147483647, %v4159
        %vm4170 = vcmp.eq.f32.partialorder %v4169, 8.507059e+37
        %v4171 = vand.u32 %v4159, 2147483648
        %v4172 = vor.u32 1.1754944e-38, %v4171
        %v4173 = vsel %vm4170, %v4172, %v4168
        %v4174 = vmul.f32 1.0, %v4173
        %v4176 = vperm.slane %v4029, 0
        %v4190 = vunpack.c.l.b16 %v4017
        %v4191 = vunpack.c.l.b16 %v4018
        %v4192 = vunpack.c.l.b16 %v4019
        %v4193 = vunpack.c.l.b16 %v4020
        %v4194 = vunpack.c.l.b16 %v4021
        %v4195 = vunpack.c.l.b16 %v4022
        %v4196 = vunpack.c.l.b16 %v4023
        %v4197 = vunpack.c.l.b16 %v4024
        %v4198 = vunpack.c.l.b16 %v4025
        %v4199 = vunpack.c.l.b16 %v4026
        %v4200 = vunpack.c.l.b16 %v4027
        %v4201 = vunpack.c.l.b16 %v4028
        %v4202 = vpack.c.b16 %v4191, %v4190
        %v4203 = vpack.c.b16 %v4193, %v4192
        %v4204 = vpack.c.b16 %v4195, %v4194
        %v4205 = vpack.c.b16 %v4197, %v4196
        %v4206 = vpack.c.b16 %v4199, %v4198
        %v4207 = vpack.c.b16 %v4201, %v4200
        %4214 = vmatpush.bf16.msra.mxu0 0
        %4215 = vmatpush.bf16.msra.mxu0 0
        %4216 = vmatpush.bf16.msra.mxu0 %v4207
        %4217 = vmatpush.bf16.msra.mxu0 %v4206
        %4218 = vmatpush.bf16.msra.mxu0 %v4205
        %4219 = vmatpush.bf16.msra.mxu0 %v4204
        %4220 = vmatpush.bf16.msra.mxu0 %v4203
        %4221 = vmatpush.bf16.msra.mxu0 %v4202
        %4222 = vmatmul.bf16.gmra.mxu0 %v4141
        %v4223 = vpop.f32.mrf.mxu0
        %v4224 = vadd.f32 %v4176, %v4223
        %v4225 = vpop.f32.mrf.mxu0
        %4226 = vdwg.mxu0
        %v4227 = vsub.f32 0.0, %v4224
        %v4228 = vmul.f32 %v4227, 1.442695
        %v4229 = vpow.pop %v4228
        %v4230 = vadd.f32 %v4229, 1.0
        %v4231 = vrcp.pop %v4230
        %v4232 = vmul.f32 %v4230, %v4231
        %v4233 = vsub.f32 1.0, %v4232
        %v4234 = vmul.f32 %v4231, %v4233
        %v4235 = vadd.f32 %v4231, %v4234
        %vm4236 = vweird.f32 %v4230
        %vm4237 = vweird.f32 %v4231
        %vm4238 = vmor %vm4236, %vm4237
        %v4239 = vsel %vm4238, %v4231, %v4235
        %v4240 = vand.u32 2147483647, %v4230
        %vm4241 = vcmp.eq.f32.partialorder %v4240, 8.507059e+37
        %v4242 = vand.u32 %v4230, 2147483648
        %v4243 = vor.u32 1.1754944e-38, %v4242
        %v4244 = vsel %vm4241, %v4243, %v4239
        %v4245 = vmul.f32 1.0, %v4244
        %v4246 = vmul.f32 %v4174, %v4003
        %4248 = vrot.lane.b32.xlu0 %v4246, 16
        %v4249 = vpop.permute.xlu0 %4248
        %v4251 = vsel %vm586, %v4001, %v4249
        %4252 = vmatpush.msra.mxu0 0.0
        %4253 = vmatpush.msra.mxu0 0.0
        %4254 = vmatpush.msra.mxu0 0.0
        %4255 = vmatpush.msra.mxu0 0.0
        %4256 = vmatpush.msra.mxu0 0.0
        %4257 = vmatpush.msra.mxu0 0.0
        %4258 = vmatpush.msra.mxu0 0.0
        %4259 = vmatpush.msra.mxu0 0.0
        %4260 = vmatpush.msra.mxu0 0.0
        %4261 = vmatpush.msra.mxu0 0.0
        %4262 = vmatpush.msra.mxu0 0.0
        %4263 = vmatpush.msra.mxu0 0.0
        %4264 = vmatpush.msra.mxu0 0.0
        %4265 = vmatpush.msra.mxu0 0.0
        %4266 = vmatpush.msra.mxu0 0.0
        %4267 = vmatpush.msra.mxu0 %v4251
        %4268 = vmatmul.f32.gmra.mxu0 %v1388
        %v4269 = vpop.f32.mrf.mxu0
        %v4270 = vadd.f32 0.0, %v4269
        %4271 = vdwg.mxu0
        %4272 = vmatpush.msra.mxu0 0.0
        %4273 = vmatpush.msra.mxu0 0.0
        %4274 = vmatpush.msra.mxu0 0.0
        %4275 = vmatpush.msra.mxu0 0.0
        %4276 = vmatpush.msra.mxu0 0.0
        %4277 = vmatpush.msra.mxu0 0.0
        %4278 = vmatpush.msra.mxu0 0.0
        %4279 = vmatpush.msra.mxu0 0.0
        %4280 = vmatpush.msra.mxu0 0.0
        %4281 = vmatpush.msra.mxu0 0.0
        %4282 = vmatpush.msra.mxu0 0.0
        %4283 = vmatpush.msra.mxu0 0.0
        %4284 = vmatpush.msra.mxu0 0.0
        %4285 = vmatpush.msra.mxu0 0.0
        %4286 = vmatpush.msra.mxu0 0.0
        %4287 = vmatpush.msra.mxu0 %v4270
        %4288 = vmatmul.f32.gmra.mxu0 %v1388
        %v4289 = vpop.f32.mrf.mxu0
        %v4290 = vadd.f32 0.0, %v4289
        %4291 = vdwg.mxu0
        %v4292 = vmul.f32 %v4290, 2.0
        %v4293 = vsub.f32 %v4292, %v4251
        %4295 = vrot.lane.b32.xlu0 %v4270, 32
        %v4296 = vpop.permute.xlu0 %4295
        %4299 = vrot.lane.b32.xlu0 %v4293, 64
        %v4300 = vpop.permute.xlu0 %4299
        %v4302 = vsel %vm1440, %v4251, %v4296
        %v4303 = vsel %vm1442, %v4302, %v4300
        %v4304 = vpack.c.bf16 %v4303, %v4303
        %v4306 = vperm.slane %v4042, 0
        %v4320 = vunpack.c.l.b16 %v4030
        %v4321 = vunpack.c.l.b16 %v4031
        %v4322 = vunpack.c.l.b16 %v4032
        %v4323 = vunpack.c.l.b16 %v4033
        %v4324 = vunpack.c.l.b16 %v4034
        %v4325 = vunpack.c.l.b16 %v4035
        %v4326 = vunpack.c.l.b16 %v4036
        %v4327 = vunpack.c.l.b16 %v4037
        %v4328 = vunpack.c.l.b16 %v4038
        %v4329 = vunpack.c.l.b16 %v4039
        %v4330 = vunpack.c.l.b16 %v4040
        %v4331 = vunpack.c.l.b16 %v4041
        %v4332 = vpack.c.b16 %v4321, %v4320
        %v4333 = vpack.c.b16 %v4323, %v4322
        %v4334 = vpack.c.b16 %v4325, %v4324
        %v4335 = vpack.c.b16 %v4327, %v4326
        %v4336 = vpack.c.b16 %v4329, %v4328
        %v4337 = vpack.c.b16 %v4331, %v4330
        %v4345 = vsel %vm1484, %v4304, 0
        %4347 = vmatpush.bf16.msra.mxu0 0
        %4348 = vmatpush.bf16.msra.mxu0 0
        %4349 = vmatpush.bf16.msra.mxu0 %v4337
        %4350 = vmatpush.bf16.msra.mxu0 %v4336
        %4351 = vmatpush.bf16.msra.mxu0 %v4335
        %4352 = vmatpush.bf16.msra.mxu0 %v4334
        %4353 = vmatpush.bf16.msra.mxu0 %v4333
        %4354 = vmatpush.bf16.msra.mxu0 %v4332
        %4355 = vmatmul.bf16.gmra.mxu0 %v4345
        %v4356 = vpop.f32.mrf.mxu0
        %v4357 = vadd.f32 %v4306, %v4356
        %v4358 = vpop.f32.mrf.mxu0
        %4359 = vdwg.mxu0
        %v4360 = vtanh.pop %v4357
        %v4361 = vmul.f32 %v4245, %v4003
        %v4362 = vsub.f32 1.0, %v4245
        %v4363 = vmul.f32 %v4362, %v4360
        %v4364 = vadd.f32 %v4361, %v4363
        %4365 = vst.msk [vmem:[%s1711] sm:$0xff] %vm586, %v4364
        %v4366 = vld [vmem:[%s14] sm:$0xff]
        %v4367 = vld [vmem:[%s14 + $0x8] sm:$0xff]
        %v4368 = vld [vmem:[#allocation4] sm:$0x1]
        %v4370 = vperm.slane %v4368, 0
        %v4373 = vsel %vm586, %v4364, 0
        %4375 = vmatpush.msra.mxu0 0.0
        %4376 = vmatpush.msra.mxu0 0.0
        %4377 = vmatpush.msra.mxu0 0.0
        %4378 = vmatpush.msra.mxu0 0.0
        %4379 = vmatpush.msra.mxu0 0.0
        %4380 = vmatpush.msra.mxu0 0.0
        %4381 = vmatpush.msra.mxu0 0.0
        %4382 = vmatpush.msra.mxu0 0.0
        %4383 = vmatpush.msra.mxu0 0.0
        %4384 = vmatpush.msra.mxu0 0.0
        %4385 = vmatpush.msra.mxu0 0.0
        %4386 = vmatpush.msra.mxu0 0.0
        %4387 = vmatpush.msra.mxu0 0.0
        %4388 = vmatpush.msra.mxu0 0.0
        %4389 = vmatpush.msra.mxu0 %v4367
        %4390 = vmatpush.msra.mxu0 %v4366
        %4391 = vmatmul.f32.gmra.mxu0 %v4373
        %v4392 = vpop.f32.mrf.mxu0
        %v4393 = vadd.f32 %v4370, %v4392
        %4394 = vdwg.mxu0
        %4396 = vrot.lane.b32.xlu0 %v4393, 3
        %v4397 = vpop.permute.xlu0 %4396
        %vm4399 = vcmask 31768
        %4400 = vst.msk [vmem:[%s584] sm:$0xff] %vm4399, %v4397
        %4401 = vst.msk [vmem:[#allocation3] sm:$0xff] %vm2110, %v4393
        %p4402 = scmp.lt.s32.totalorder %s29, 1
        %s4403 = scalar_select %p4402, %s29, 1
        %s4404 = smul.addr %s4403, 8
        %s4405 = scalar_lea.vmem %s16, %s4404
        // Predicated region
        $region130: #{lscgf_forward.3} parent=117 // pred_check
          %p4406 = pneg %p388
        $region131: #{lscgf_forward.3} parent=117 // pred_check_branch
          %4408 = sbr.rel (%p4406) target = $region133
        $region132: #{lscgf_forward.3} parent=117 // pred_region
          _
        $region133: #{lscgf_forward.3} parent=117 // pred_fallthru
          _
      $region118: #{lscgf_forward.3} parent=5 // pred_fallthru
        _
      %p4409 = scmp.le.s32.totalorder 2, %s24
      // Predicated region
      $region134: #{lscgf_forward.3} parent=5 // pred_check
        %p4410 = pneg %p4409
      $region135: #{lscgf_forward.3} parent=5 // pred_check_branch
        %4412 = sbr.rel (%p4410) target = $region137
      $region136: #{lscgf_forward.3} parent=5 // pred_region
        %s4413 = ssub.s32 %s24, 2
        // Predicated region
        $region138: #{lscgf_forward.3} parent=136 // pred_check
          %p4414 = pneg %p394
        $region139: #{lscgf_forward.3} parent=136 // pred_check_branch
          %4416 = sbr.rel (%p4414) target = $region141
        $region140: #{lscgf_forward.3} parent=136 // pred_region
          %p4417 = scmp.lt.s32.totalorder %s30, 1
          %s4418 = scalar_select %p4417, %s30, 1
          %s4419 = smul.addr %s4418, 8
          %s4420 = scalar_lea.vmem %s16, %s4419
        $region141: #{lscgf_forward.3} parent=136 // pred_fallthru
          _
      $region137: #{lscgf_forward.3} parent=5 // pred_fallthru
        _
    $region6: #{lscgf_forward.3} parent=1 // loop_footer
      %s28 = sadd.s32 1, %s24
    $region7: #{lscgf_forward.3} parent=1 // loop_footer_branch
      %23 = sbr.rel target = $region3
    $region8: #{lscgf_forward.3} parent=1 // loop_exit
      _

</llo_original>
